<compile_context>
chip_gen: v6e
topology: v6e:2x2x1
jax: 0.10.0
libtpu: 0.0.40
codegen_flags: <defaults>
</compile_context>

<pallas_src>
import functools

import jax
import jax.numpy as jnp
from jax import lax
from jax.experimental import pallas as pl
from jax.experimental.pallas import tpu as pltpu

NEG_INF = -1e30


def _speller_kernel(
    eos_idx, B, T, H, C, V, S,
    # --- inputs (whole arrays, VMEM resident) ---
    listener_ref,     # (B, T, C)    bf16
    abias_ref,        # (B, 1, T)    f32  additive attention mask (0 valid / -1e30 pad)
    ew0_ref,          # (V, 4H)      bf16 embedding folded into layer-0 input gates
    w0r_ref,          # (C+H, 4H)    bf16 fused [Wih0(ctx part); Whh0]
    b0_ref,           # (1, 4H)      f32
    w1_ref,           # (2H, 4H)     bf16 fused [Wih1; Whh1]
    b1_ref,           # (1, 4H)      f32
    wcdq_ref,         # (H+C, H+C)   bf16 fused [Wcd | [Wq; 0]]
    bcd_ref,          # (1, H)       f32
    unembed_t_ref,    # (H, V)       bf16 tied embedding weight, transposed
    bun_ref,          # (1, V)       f32
    q0_ref,           # (1, C)       f32 initial query = inith[1] @ Wq
    h0i_ref, c0i_ref, h1i_ref, c1i_ref,   # (1, H) f32 initial hidden / cell
    # --- outputs (VMEM resident for the whole decode) ---
    out_ref,          # (S, B, V) f32
    attn_ref,         # (S, B, T) f32
):
    f32 = jnp.float32
    bf16 = jnp.bfloat16

    # ---- tiny step-invariant values hoisted into vregs (iota, biases, init state) ----
    v_iota = lax.broadcasted_iota(jnp.int32, (B, V), 1)
    b0b = jnp.broadcast_to(b0_ref[...], (B, 4 * H))
    b1b = jnp.broadcast_to(b1_ref[...], (B, 4 * H))
    bcdb = jnp.broadcast_to(bcd_ref[...], (B, H))
    bunb = jnp.broadcast_to(bun_ref[...], (B, V))

    h0 = jnp.broadcast_to(h0i_ref[...], (B, H))
    c0 = jnp.broadcast_to(c0i_ref[...], (B, H))
    h1 = jnp.broadcast_to(h1i_ref[...], (B, H))
    c1 = jnp.broadcast_to(c1i_ref[...], (B, H))
    q0 = jnp.broadcast_to(q0_ref[...], (B, C))
    char_oh0 = (v_iota == eos_idx).astype(bf16)          # start token = EOS

    def step(s, carry):
        h0, c0, h1, c1, q, char_oh = carry

        # Re-load large step-invariant arrays each step: VMEM vld is ~free and
        # this avoids a vreg live range spanning all S iterations (spills at
        # production (B, T, C)).
        listener = listener_ref[...]                      # (B, T, C) bf16
        abias = abias_ref[...]                            # (B, 1, T) f32

        # ---- masked dot-product attention (MXU einsums); query `q` was produced
        #      by the previous step's fused character-distribution matmul ----
        q3 = q[:, None, :].astype(bf16)                   # (B, 1, C)
        energy = jnp.einsum('bqc,btc->bqt', q3, listener,
                            preferred_element_type=f32) + abias      # (B, 1, T)
        m = jnp.max(energy, axis=-1, keepdims=True)
        p = jnp.exp(energy - m)
        denom = jnp.sum(p, axis=-1, keepdims=True)
        attn3 = p * pl.reciprocal(denom, approx=True)                 # (B, 1, T)
        context3 = jnp.einsum('bqt,btc->bqc', attn3.astype(bf16), listener,
                              preferred_element_type=f32)            # (B, 1, C)
        attn = jnp.sum(attn3, axis=1)                                 # (B, T)
        context = jnp.sum(context3, axis=1)                           # (B, C)

        # ---- LSTMCell layer 0 (gate order i,f,g,o); embedding lookup folded in ----
        x0 = jnp.concatenate([context, h0], axis=1).astype(bf16)     # (B, C+H)
        g0 = (jnp.dot(char_oh, ew0_ref[...], preferred_element_type=f32)
              + jnp.dot(x0, w0r_ref[...], preferred_element_type=f32)
              + b0b)                                                  # (B, 4H)
        sig0 = jax.nn.sigmoid(g0)                                     # whole-slab EUP
        tnh0 = jnp.tanh(g0)
        c0n = sig0[:, H:2 * H] * c0 + sig0[:, 0:H] * tnh0[:, 2 * H:3 * H]
        h0n = sig0[:, 3 * H:4 * H] * jnp.tanh(c0n)

        # ---- LSTMCell layer 1, fused input+recurrent matmul ----
        x1 = jnp.concatenate([h0n, h1], axis=1).astype(bf16)          # (B, 2H)
        g1 = jnp.dot(x1, w1_ref[...], preferred_element_type=f32) + b1b
        sig1 = jax.nn.sigmoid(g1)
        tnh1 = jnp.tanh(g1)
        c1n = sig1[:, H:2 * H] * c1 + sig1[:, 0:H] * tnh1[:, 2 * H:3 * H]
        h1n = sig1[:, 3 * H:4 * H] * jnp.tanh(c1n)

        # ---- character distribution + NEXT step's attention query in one matmul ----
        cat = jnp.concatenate([h1n, context], axis=1).astype(bf16)    # (B, H+C)
        both = jnp.dot(cat, wcdq_ref[...], preferred_element_type=f32)  # (B, H+C)
        q_next = both[:, H:H + C]                                     # (B, C) = h1n @ Wq
        hid = both[:, 0:H] + bcdb
        hid = jnp.where(hid > 0, hid, 0.2 * hid)                      # LeakyReLU(0.2)
        logits = jnp.dot(hid.astype(bf16), unembed_t_ref[...],
                         preferred_element_type=f32) + bunb           # (B, V)

        out_ref[s] = logits
        attn_ref[s] = attn

        # ---- greedy next char: argmax(log_softmax) == argmax(logits), first max wins ----
        maxval = jnp.max(logits, axis=-1, keepdims=True)
        amax = jnp.min(jnp.where(logits == maxval, v_iota, V),
                       axis=-1, keepdims=True)                        # (B, 1) int32
        char_oh_next = (v_iota == amax).astype(bf16)

        return (h0n, c0n, h1n, c1n, q_next, char_oh_next)

    # S (max_steps) is static: fully unroll for cross-iteration scheduling.
    lax.fori_loop(0, S, step, (h0, c0, h1, c1, q0, char_oh0), unroll=True)


def speller_forward(listener_output, lengths, params, *, max_steps, eos_idx):
    """Returns (logits (B, max_steps, V), attentions (B, max_steps, T))."""
    B0, T, C = listener_output.shape
    V, H = params["embed"].shape
    assert params["wq"].shape == (H, C)

    f32 = jnp.float32
    bf16 = jnp.bfloat16

    # Pad batch to a full f32 sublane tile (8). Per-step latency is identical up
    # to B=8 on every unit, so this is free occupancy; padded rows are dropped.
    B = max(8, -(-B0 // 8) * 8)
    lengths = lengths.astype(jnp.int32)
    if B != B0:
        listener_output = jnp.pad(listener_output, ((0, B - B0), (0, 0), (0, 0)))
        lengths = jnp.concatenate([lengths, jnp.full((B - B0,), T, jnp.int32)])

    embed = params["embed"].astype(f32)                               # (V, H)
    wih0_t = params["wih0"].T.astype(f32)                             # (H+C, 4H)

    # Fold the embedding lookup into the layer-0 gate matmul.
    ew0 = jnp.dot(embed, wih0_t[:H, :]).astype(bf16)                  # (V, 4H)
    w0r = jnp.concatenate([wih0_t[H:, :], params["whh0"].T], axis=0).astype(bf16)  # (C+H, 4H)
    w1 = jnp.concatenate([params["wih1"].T, params["whh1"].T], axis=0).astype(bf16)  # (2H, 4H)
    b0 = (params["bih0"] + params["bhh0"]).reshape(1, 4 * H).astype(f32)
    b1 = (params["bih1"] + params["bhh1"]).reshape(1, 4 * H).astype(f32)

    # Fuse the next-step query projection into the character-distribution matmul.
    wq_pad = jnp.concatenate([params["wq"].astype(f32), jnp.zeros((C, C), f32)], axis=0)  # (H+C, C)
    wcdq = jnp.concatenate([params["wcd"].T.astype(f32), wq_pad], axis=1).astype(bf16)    # (H+C, H+C)
    q0 = jnp.dot(params["inith"][1].astype(f32), params["wq"].astype(f32))                # (1, C)

    # Step-invariant additive attention mask, computed once here.
    valid = jnp.arange(T, dtype=jnp.int32)[None, :] < lengths.reshape(B, 1)
    abias = jnp.where(valid, 0.0, NEG_INF).astype(f32)[:, None, :]    # (B, 1, T)

    args = (
        listener_output.astype(bf16),            # (B, T, C)
        abias,                                   # (B, 1, T)
        ew0, w0r, b0,
        w1, b1,
        wcdq,
        params["bcd"].reshape(1, H).astype(f32),
        embed.T.astype(bf16),                    # (H, V) tied unembed weight
        params["bun"].reshape(1, V).astype(f32),
        q0.astype(f32),
        params["inith"][0].astype(f32),
        params["initc"][0].astype(f32),
        params["inith"][1].astype(f32),
        params["initc"][1].astype(f32),
    )

    kernel = functools.partial(_speller_kernel, eos_idx, B, T, H, C, V, max_steps)

    vmem_spec = pl.BlockSpec(memory_space=pltpu.MemorySpace.VMEM)
    out_sbv, attn_sbt = pl.pallas_call(
        kernel,
        out_shape=(
            jax.ShapeDtypeStruct((max_steps, B, V), f32),
            jax.ShapeDtypeStruct((max_steps, B, T), f32),
        ),
        in_specs=[vmem_spec] * len(args),
        out_specs=(vmem_spec, vmem_spec),
        compiler_params=pltpu.CompilerParams(vmem_limit_bytes=32 * 1024 * 1024),
    )(*args)

    # PyTorch layout: torch.stack(outputs, dim=1) -> (B, S, V); attentions likewise.
    # TODO(synk): at production S*B*T keep (S,B,*) as the external contract (or
    #             stage chunked writeback) to avoid this extra HBM pass.
    logits = jnp.transpose(out_sbv, (1, 0, 2))[:B0]
    attns = jnp.transpose(attn_sbt, (1, 0, 2))[:B0]
    return logits, attns


def init_params(key, H, C, V):
    """Deterministic synthetic parameters (shapes from Speller.__init__; embed_size == hidden_size)."""
    ks = jax.random.split(key, 20)
    u = lambda k, shape, s=0.1: jax.random.uniform(k, shape, jnp.float32, -s, s)
    return dict(
        embed=u(ks[0], (V, H)),               # nn.Embedding(output_size, embed_size) == tied unembed weight
        wq=u(ks[1], (H, C)),                  # synthetic attention query projection
        wih0=u(ks[2], (4 * H, H + C)),        # LSTMCell(embed+context, hidden)
        whh0=u(ks[3], (4 * H, H)),
        bih0=u(ks[4], (4 * H,)),
        bhh0=u(ks[5], (4 * H,)),
        wih1=u(ks[6], (4 * H, H)),            # LSTMCell(hidden, hidden)
        whh1=u(ks[7], (4 * H, H)),
        bih1=u(ks[8], (4 * H,)),
        bhh1=u(ks[9], (4 * H,)),
        wcd=u(ks[10], (H, H + C)),            # Linear(hidden+context, hidden)
        bcd=u(ks[11], (H,)),
        bun=u(ks[12], (V,)),                  # unembed bias
        inith=[jax.random.uniform(ks[13], (1, H)), jax.random.uniform(ks[14], (1, H))],
        initc=[jax.random.uniform(ks[15], (1, H)), jax.random.uniform(ks[16], (1, H))],
    )


if __name__ == "__main__":
    B, T = 2, 8            # batch, listener timesteps
    H = 32                 # hidden_size == embed_size (weight tying)
    C = 32                 # context_size (listener feature dim)
    V = 48                 # output_size (character vocab)
    MAX_STEPS = 6
    EOS_IDX = 0

    key = jax.random.PRNGKey(0)
    k_list, k_par = jax.random.split(key)
    listener_output = jax.random.normal(k_list, (B, T, C), jnp.float32)
    lengths = jnp.array([T, 5], jnp.int32)
    params = init_params(k_par, H, C, V)

    logits, attentions = speller_forward(
        listener_output, lengths, params, max_steps=MAX_STEPS, eos_idx=EOS_IDX
    )
    jax.block_until_ready((logits, attentions))
    assert logits.shape == (B, MAX_STEPS, V)
    assert attentions.shape == (B, MAX_STEPS, T)
    print("KERNEL_OK")
</pallas_src>

<mosaic_0001>
module attributes {stable_mosaic.version = 11 : i64} {
  func.func @_speller_kernel(%arg0: memref<8x8x32xbf16, #tpu.memory_space<vmem>>, %arg1: memref<8x1x8xf32, #tpu.memory_space<vmem>>, %arg2: memref<48x128xbf16, #tpu.memory_space<vmem>>, %arg3: memref<64x128xbf16, #tpu.memory_space<vmem>>, %arg4: memref<1x128xf32, #tpu.memory_space<vmem>>, %arg5: memref<64x128xbf16, #tpu.memory_space<vmem>>, %arg6: memref<1x128xf32, #tpu.memory_space<vmem>>, %arg7: memref<64x64xbf16, #tpu.memory_space<vmem>>, %arg8: memref<1x32xf32, #tpu.memory_space<vmem>>, %arg9: memref<32x48xbf16, #tpu.memory_space<vmem>>, %arg10: memref<1x48xf32, #tpu.memory_space<vmem>>, %arg11: memref<1x32xf32, #tpu.memory_space<vmem>>, %arg12: memref<1x32xf32, #tpu.memory_space<vmem>>, %arg13: memref<1x32xf32, #tpu.memory_space<vmem>>, %arg14: memref<1x32xf32, #tpu.memory_space<vmem>>, %arg15: memref<1x32xf32, #tpu.memory_space<vmem>>, %arg16: memref<6x8x48xf32, #tpu.memory_space<vmem>>, %arg17: memref<6x8x8xf32, #tpu.memory_space<vmem>>) attributes {dimension_semantics = [], scalar_prefetch = 0 : i64, scratch_operands = 0 : i64, tpu.core_type = #tpu.core_type<tc>} {
    %0 = tpu.iota {dimensions = array<i32: 1>} : vector<8x48xi32>
    %c0 = arith.constant 0 : index
    %c0_0 = arith.constant 0 : index
    %1 = vector.load %arg4[%c0, %c0_0] : memref<1x128xf32, #tpu.memory_space<vmem>>, vector<1x128xf32>
    %2 = vector.shape_cast %1 : vector<1x128xf32> to vector<1x128xf32>
    %3 = vector.broadcast %2 : vector<1x128xf32> to vector<8x128xf32>
    %c0_1 = arith.constant 0 : index
    %c0_2 = arith.constant 0 : index
    %4 = vector.load %arg6[%c0_1, %c0_2] : memref<1x128xf32, #tpu.memory_space<vmem>>, vector<1x128xf32>
    %5 = vector.shape_cast %4 : vector<1x128xf32> to vector<1x128xf32>
    %6 = vector.broadcast %5 : vector<1x128xf32> to vector<8x128xf32>
    %c0_3 = arith.constant 0 : index
    %c0_4 = arith.constant 0 : index
    %7 = vector.load %arg8[%c0_3, %c0_4] : memref<1x32xf32, #tpu.memory_space<vmem>>, vector<1x32xf32>
    %8 = vector.shape_cast %7 : vector<1x32xf32> to vector<1x32xf32>
    %9 = vector.broadcast %8 : vector<1x32xf32> to vector<8x32xf32>
    %c0_5 = arith.constant 0 : index
    %c0_6 = arith.constant 0 : index
    %10 = vector.load %arg10[%c0_5, %c0_6] : memref<1x48xf32, #tpu.memory_space<vmem>>, vector<1x48xf32>
    %11 = vector.shape_cast %10 : vector<1x48xf32> to vector<1x48xf32>
    %12 = vector.broadcast %11 : vector<1x48xf32> to vector<8x48xf32>
    %c0_7 = arith.constant 0 : index
    %c0_8 = arith.constant 0 : index
    %13 = vector.load %arg12[%c0_7, %c0_8] : memref<1x32xf32, #tpu.memory_space<vmem>>, vector<1x32xf32>
    %14 = vector.shape_cast %13 : vector<1x32xf32> to vector<1x32xf32>
    %15 = vector.broadcast %14 : vector<1x32xf32> to vector<8x32xf32>
    %c0_9 = arith.constant 0 : index
    %c0_10 = arith.constant 0 : index
    %16 = vector.load %arg13[%c0_9, %c0_10] : memref<1x32xf32, #tpu.memory_space<vmem>>, vector<1x32xf32>
    %17 = vector.shape_cast %16 : vector<1x32xf32> to vector<1x32xf32>
    %18 = vector.broadcast %17 : vector<1x32xf32> to vector<8x32xf32>
    %c0_11 = arith.constant 0 : index
    %c0_12 = arith.constant 0 : index
    %19 = vector.load %arg14[%c0_11, %c0_12] : memref<1x32xf32, #tpu.memory_space<vmem>>, vector<1x32xf32>
    %20 = vector.shape_cast %19 : vector<1x32xf32> to vector<1x32xf32>
    %21 = vector.broadcast %20 : vector<1x32xf32> to vector<8x32xf32>
    %c0_13 = arith.constant 0 : index
    %c0_14 = arith.constant 0 : index
    %22 = vector.load %arg15[%c0_13, %c0_14] : memref<1x32xf32, #tpu.memory_space<vmem>>, vector<1x32xf32>
    %23 = vector.shape_cast %22 : vector<1x32xf32> to vector<1x32xf32>
    %24 = vector.broadcast %23 : vector<1x32xf32> to vector<8x32xf32>
    %c0_15 = arith.constant 0 : index
    %c0_16 = arith.constant 0 : index
    %25 = vector.load %arg11[%c0_15, %c0_16] : memref<1x32xf32, #tpu.memory_space<vmem>>, vector<1x32xf32>
    %26 = vector.shape_cast %25 : vector<1x32xf32> to vector<1x32xf32>
    %27 = vector.broadcast %26 : vector<1x32xf32> to vector<8x32xf32>
    %c0_i32 = arith.constant 0 : i32
    %28 = vector.broadcast %c0_i32 : i32 to vector<8x48xi32>
    %29 = arith.cmpi eq, %0, %28 : vector<8x48xi32>
    %30 = arith.extui %29 : vector<8x48xi1> to vector<8x48xi32>
    %31 = arith.sitofp %30 : vector<8x48xi32> to vector<8x48xf32>
    %32 = arith.truncf %31 : vector<8x48xf32> to vector<8x48xbf16>
    %c0_i32_17 = arith.constant 0 : i32
    %c0_18 = arith.constant 0 : index
    %c0_19 = arith.constant 0 : index
    %c0_20 = arith.constant 0 : index
    %33 = vector.load %arg0[%c0_18, %c0_19, %c0_20] : memref<8x8x32xbf16, #tpu.memory_space<vmem>>, vector<8x8x32xbf16>
    %c0_21 = arith.constant 0 : index
    %c0_22 = arith.constant 0 : index
    %c0_23 = arith.constant 0 : index
    %34 = vector.load %arg1[%c0_21, %c0_22, %c0_23] : memref<8x1x8xf32, #tpu.memory_space<vmem>>, vector<8x1x8xf32>
    %35 = vector.shape_cast %27 : vector<8x32xf32> to vector<8x1x32xf32>
    %36 = arith.truncf %35 : vector<8x1x32xf32> to vector<8x1x32xbf16>
    "tpu.trace_start"() <{level = 10 : i32, message = "bqc,btc->bqt"}> : () -> ()
    %cst = arith.constant dense<0.000000e+00> : vector<8x1x8xf32>
    %37 = tpu.matmul %36, %33, %cst {dimension_numbers = #tpu.dot_dimension_numbers<[2], [2], [1], [1], [0, 0, 0, 1, 1, 1], [0], [0]>} : vector<8x1x32xbf16>, vector<8x8x32xbf16>, vector<8x1x8xf32> -> vector<8x1x8xf32>
    "tpu.trace_stop"() : () -> ()
    %38 = arith.addf %37, %34 : vector<8x1x8xf32>
    %cst_24 = arith.constant dense<0xFF800000> : vector<8x1xf32>
    %39 = vector.multi_reduction <maximumf>, %38, %cst_24 [2] : vector<8x1x8xf32> to vector<8x1xf32>
    %40 = vector.shape_cast %39 : vector<8x1xf32> to vector<8x1x1xf32>
    %41 = vector.broadcast %40 : vector<8x1x1xf32> to vector<8x1x8xf32>
    %42 = arith.subf %38, %41 : vector<8x1x8xf32>
    %43 = math.exp %42 : vector<8x1x8xf32>
    %cst_25 = arith.constant dense<0.000000e+00> : vector<8x1xf32>
    %44 = vector.multi_reduction <add>, %43, %cst_25 [2] : vector<8x1x8xf32> to vector<8x1xf32>
    %45 = vector.shape_cast %44 : vector<8x1xf32> to vector<8x1x1xf32>
    %46 = tpu.reciprocal %45 {approx = true} : vector<8x1x1xf32> -> vector<8x1x1xf32>
    %47 = vector.broadcast %46 : vector<8x1x1xf32> to vector<8x1x8xf32>
    %48 = arith.mulf %43, %47 : vector<8x1x8xf32>
    %49 = arith.truncf %48 : vector<8x1x8xf32> to vector<8x1x8xbf16>
    "tpu.trace_start"() <{level = 10 : i32, message = "bqt,btc->bqc"}> : () -> ()
    %cst_26 = arith.constant dense<0.000000e+00> : vector<8x1x32xf32>
    %50 = tpu.matmul %49, %33, %cst_26 {dimension_numbers = #tpu.dot_dimension_numbers<[2], [1], [1], [2], [0, 0, 0, 1, 1, 2], [0], [0]>} : vector<8x1x8xbf16>, vector<8x8x32xbf16>, vector<8x1x32xf32> -> vector<8x1x32xf32>
    "tpu.trace_stop"() : () -> ()
    %cst_27 = arith.constant dense<0.000000e+00> : vector<8x8xf32>
    %51 = vector.multi_reduction <add>, %48, %cst_27 [1] : vector<8x1x8xf32> to vector<8x8xf32>
    %cst_28 = arith.constant dense<0.000000e+00> : vector<8x32xf32>
    %52 = vector.multi_reduction <add>, %50, %cst_28 [1] : vector<8x1x32xf32> to vector<8x32xf32>
    %53 = tpu.concatenate %52, %15 in 1 : vector<8x32xf32>, vector<8x32xf32> -> vector<8x64xf32>
    %54 = arith.truncf %53 : vector<8x64xf32> to vector<8x64xbf16>
    %c0_29 = arith.constant 0 : index
    %c0_30 = arith.constant 0 : index
    %55 = vector.load %arg2[%c0_29, %c0_30] : memref<48x128xbf16, #tpu.memory_space<vmem>>, vector<48x128xbf16>
    %cst_31 = arith.constant dense<0.000000e+00> : vector<8x128xf32>
    %56 = tpu.matmul %32, %55, %cst_31 {dimension_numbers = #tpu.dot_dimension_numbers<[1], [0], [0], [1], [0, 0, 1, 1], [], []>} : vector<8x48xbf16>, vector<48x128xbf16>, vector<8x128xf32> -> vector<8x128xf32>
    %c0_32 = arith.constant 0 : index
    %c0_33 = arith.constant 0 : index
    %57 = vector.load %arg3[%c0_32, %c0_33] : memref<64x128xbf16, #tpu.memory_space<vmem>>, vector<64x128xbf16>
    %cst_34 = arith.constant dense<0.000000e+00> : vector<8x128xf32>
    %58 = tpu.matmul %54, %57, %cst_34 {dimension_numbers = #tpu.dot_dimension_numbers<[1], [0], [0], [1], [0, 0, 1, 1], [], []>} : vector<8x64xbf16>, vector<64x128xbf16>, vector<8x128xf32> -> vector<8x128xf32>
    %59 = arith.addf %56, %58 : vector<8x128xf32>
    %60 = arith.addf %59, %3 : vector<8x128xf32>
    %61 = arith.negf %60 : vector<8x128xf32>
    %62 = math.exp %61 : vector<8x128xf32>
    %cst_35 = arith.constant 1.000000e+00 : f32
    %63 = vector.broadcast %cst_35 : f32 to vector<8x128xf32>
    %64 = arith.addf %63, %62 : vector<8x128xf32>
    %65 = arith.divf %63, %64 : vector<8x128xf32>
    %66 = math.tanh %60 : vector<8x128xf32>
    %67 = vector.extract_strided_slice %65 {offsets = [0, 32], sizes = [8, 32], strides = [1, 1]} : vector<8x128xf32> to vector<8x32xf32>
    %68 = arith.mulf %67, %18 : vector<8x32xf32>
    %69 = vector.extract_strided_slice %65 {offsets = [0, 0], sizes = [8, 32], strides = [1, 1]} : vector<8x128xf32> to vector<8x32xf32>
    %70 = vector.extract_strided_slice %66 {offsets = [0, 64], sizes = [8, 32], strides = [1, 1]} : vector<8x128xf32> to vector<8x32xf32>
    %71 = arith.mulf %69, %70 : vector<8x32xf32>
    %72 = arith.addf %68, %71 : vector<8x32xf32>
    %73 = vector.extract_strided_slice %65 {offsets = [0, 96], sizes = [8, 32], strides = [1, 1]} : vector<8x128xf32> to vector<8x32xf32>
    %74 = math.tanh %72 : vector<8x32xf32>
    %75 = arith.mulf %73, %74 : vector<8x32xf32>
    %76 = tpu.concatenate %75, %21 in 1 : vector<8x32xf32>, vector<8x32xf32> -> vector<8x64xf32>
    %77 = arith.truncf %76 : vector<8x64xf32> to vector<8x64xbf16>
    %c0_36 = arith.constant 0 : index
    %c0_37 = arith.constant 0 : index
    %78 = vector.load %arg5[%c0_36, %c0_37] : memref<64x128xbf16, #tpu.memory_space<vmem>>, vector<64x128xbf16>
    %cst_38 = arith.constant dense<0.000000e+00> : vector<8x128xf32>
    %79 = tpu.matmul %77, %78, %cst_38 {dimension_numbers = #tpu.dot_dimension_numbers<[1], [0], [0], [1], [0, 0, 1, 1], [], []>} : vector<8x64xbf16>, vector<64x128xbf16>, vector<8x128xf32> -> vector<8x128xf32>
    %80 = arith.addf %79, %6 : vector<8x128xf32>
    %81 = arith.negf %80 : vector<8x128xf32>
    %82 = math.exp %81 : vector<8x128xf32>
    %cst_39 = arith.constant 1.000000e+00 : f32
    %83 = vector.broadcast %cst_39 : f32 to vector<8x128xf32>
    %84 = arith.addf %83, %82 : vector<8x128xf32>
    %85 = arith.divf %83, %84 : vector<8x128xf32>
    %86 = math.tanh %80 : vector<8x128xf32>
    %87 = vector.extract_strided_slice %85 {offsets = [0, 32], sizes = [8, 32], strides = [1, 1]} : vector<8x128xf32> to vector<8x32xf32>
    %88 = arith.mulf %87, %24 : vector<8x32xf32>
    %89 = vector.extract_strided_slice %85 {offsets = [0, 0], sizes = [8, 32], strides = [1, 1]} : vector<8x128xf32> to vector<8x32xf32>
    %90 = vector.extract_strided_slice %86 {offsets = [0, 64], sizes = [8, 32], strides = [1, 1]} : vector<8x128xf32> to vector<8x32xf32>
    %91 = arith.mulf %89, %90 : vector<8x32xf32>
    %92 = arith.addf %88, %91 : vector<8x32xf32>
    %93 = vector.extract_strided_slice %85 {offsets = [0, 96], sizes = [8, 32], strides = [1, 1]} : vector<8x128xf32> to vector<8x32xf32>
    %94 = math.tanh %92 : vector<8x32xf32>
    %95 = arith.mulf %93, %94 : vector<8x32xf32>
    %96 = tpu.concatenate %95, %52 in 1 : vector<8x32xf32>, vector<8x32xf32> -> vector<8x64xf32>
    %97 = arith.truncf %96 : vector<8x64xf32> to vector<8x64xbf16>
    %c0_40 = arith.constant 0 : index
    %c0_41 = arith.constant 0 : index
    %98 = vector.load %arg7[%c0_40, %c0_41] : memref<64x64xbf16, #tpu.memory_space<vmem>>, vector<64x64xbf16>
    %cst_42 = arith.constant dense<0.000000e+00> : vector<8x64xf32>
    %99 = tpu.matmul %97, %98, %cst_42 {dimension_numbers = #tpu.dot_dimension_numbers<[1], [0], [0], [1], [0, 0, 1, 1], [], []>} : vector<8x64xbf16>, vector<64x64xbf16>, vector<8x64xf32> -> vector<8x64xf32>
    %100 = vector.extract_strided_slice %99 {offsets = [0, 32], sizes = [8, 32], strides = [1, 1]} : vector<8x64xf32> to vector<8x32xf32>
    %101 = vector.extract_strided_slice %99 {offsets = [0, 0], sizes = [8, 32], strides = [1, 1]} : vector<8x64xf32> to vector<8x32xf32>
    %102 = arith.addf %101, %9 : vector<8x32xf32>
    %cst_43 = arith.constant 0.000000e+00 : f32
    %103 = vector.broadcast %cst_43 : f32 to vector<8x32xf32>
    %104 = arith.cmpf ogt, %102, %103 : vector<8x32xf32>
    %cst_44 = arith.constant 2.000000e-01 : f32
    %105 = vector.broadcast %cst_44 : f32 to vector<8x32xf32>
    %106 = arith.mulf %105, %102 : vector<8x32xf32>
    %107 = arith.select %104, %102, %106 : vector<8x32xi1>, vector<8x32xf32>
    %108 = arith.truncf %107 : vector<8x32xf32> to vector<8x32xbf16>
    %c0_45 = arith.constant 0 : index
    %c0_46 = arith.constant 0 : index
    %109 = vector.load %arg9[%c0_45, %c0_46] : memref<32x48xbf16, #tpu.memory_space<vmem>>, vector<32x48xbf16>
    %cst_47 = arith.constant dense<0.000000e+00> : vector<8x48xf32>
    %110 = tpu.matmul %108, %109, %cst_47 {dimension_numbers = #tpu.dot_dimension_numbers<[1], [0], [0], [1], [0, 0, 1, 1], [], []>} : vector<8x32xbf16>, vector<32x48xbf16>, vector<8x48xf32> -> vector<8x48xf32>
    %111 = arith.addf %110, %12 : vector<8x48xf32>
    %112 = arith.index_cast %c0_i32_17 : i32 to index
    %c0_48 = arith.constant 0 : index
    %c0_49 = arith.constant 0 : index
    %113 = vector.load %arg16[%112, %c0_48, %c0_49] : memref<6x8x48xf32, #tpu.memory_space<vmem>>, vector<1x8x48xf32>
    %114 = vector.shape_cast %113 : vector<1x8x48xf32> to vector<8x48xf32>
    %115 = vector.shape_cast %111 : vector<8x48xf32> to vector<1x8x48xf32>
    tpu.vector_store %arg16[%112, %c0_48, %c0_49], %115 {strides = array<i32>} : memref<6x8x48xf32, #tpu.memory_space<vmem>>, vector<1x8x48xf32>,
    %116 = arith.index_cast %c0_i32_17 : i32 to index
    %c0_50 = arith.constant 0 : index
    %c0_51 = arith.constant 0 : index
    %117 = vector.load %arg17[%116, %c0_50, %c0_51] : memref<6x8x8xf32, #tpu.memory_space<vmem>>, vector<1x8x8xf32>
    %118 = vector.shape_cast %117 : vector<1x8x8xf32> to vector<8x8xf32>
    %119 = vector.shape_cast %51 : vector<8x8xf32> to vector<1x8x8xf32>
    tpu.vector_store %arg17[%116, %c0_50, %c0_51], %119 {strides = array<i32>} : memref<6x8x8xf32, #tpu.memory_space<vmem>>, vector<1x8x8xf32>,
    %cst_52 = arith.constant dense<0xFF800000> : vector<8xf32>
    %120 = vector.multi_reduction <maximumf>, %111, %cst_52 [1] : vector<8x48xf32> to vector<8xf32>
    %121 = vector.shape_cast %120 : vector<8xf32> to vector<8x1xf32>
    %122 = vector.broadcast %121 : vector<8x1xf32> to vector<8x48xf32>
    %123 = arith.cmpf oeq, %111, %122 : vector<8x48xf32>
    %c48_i32 = arith.constant 48 : i32
    %124 = vector.broadcast %c48_i32 : i32 to vector<8x48xi32>
    %125 = arith.select %123, %0, %124 : vector<8x48xi1>, vector<8x48xi32>
    %cst_53 = arith.constant dense<2147483647> : vector<8xi32>
    %126 = vector.multi_reduction <minsi>, %125, %cst_53 [1] : vector<8x48xi32> to vector<8xi32>
    %127 = vector.shape_cast %126 : vector<8xi32> to vector<8x1xi32>
    %128 = vector.broadcast %127 : vector<8x1xi32> to vector<8x48xi32>
    %129 = arith.cmpi eq, %0, %128 : vector<8x48xi32>
    %130 = arith.extui %129 : vector<8x48xi1> to vector<8x48xi32>
    %131 = arith.sitofp %130 : vector<8x48xi32> to vector<8x48xf32>
    %132 = arith.truncf %131 : vector<8x48xf32> to vector<8x48xbf16>
    %c1_i32 = arith.constant 1 : i32
    %c0_54 = arith.constant 0 : index
    %c0_55 = arith.constant 0 : index
    %c0_56 = arith.constant 0 : index
    %133 = vector.load %arg0[%c0_54, %c0_55, %c0_56] : memref<8x8x32xbf16, #tpu.memory_space<vmem>>, vector<8x8x32xbf16>
    %c0_57 = arith.constant 0 : index
    %c0_58 = arith.constant 0 : index
    %c0_59 = arith.constant 0 : index
    %134 = vector.load %arg1[%c0_57, %c0_58, %c0_59] : memref<8x1x8xf32, #tpu.memory_space<vmem>>, vector<8x1x8xf32>
    %135 = vector.shape_cast %100 : vector<8x32xf32> to vector<8x1x32xf32>
    %136 = arith.truncf %135 : vector<8x1x32xf32> to vector<8x1x32xbf16>
    "tpu.trace_start"() <{level = 10 : i32, message = "bqc,btc->bqt"}> : () -> ()
    %cst_60 = arith.constant dense<0.000000e+00> : vector<8x1x8xf32>
    %137 = tpu.matmul %136, %133, %cst_60 {dimension_numbers = #tpu.dot_dimension_numbers<[2], [2], [1], [1], [0, 0, 0, 1, 1, 1], [0], [0]>} : vector<8x1x32xbf16>, vector<8x8x32xbf16>, vector<8x1x8xf32> -> vector<8x1x8xf32>
    "tpu.trace_stop"() : () -> ()
    %138 = arith.addf %137, %134 : vector<8x1x8xf32>
    %cst_61 = arith.constant dense<0xFF800000> : vector<8x1xf32>
    %139 = vector.multi_reduction <maximumf>, %138, %cst_61 [2] : vector<8x1x8xf32> to vector<8x1xf32>
    %140 = vector.shape_cast %139 : vector<8x1xf32> to vector<8x1x1xf32>
    %141 = vector.broadcast %140 : vector<8x1x1xf32> to vector<8x1x8xf32>
    %142 = arith.subf %138, %141 : vector<8x1x8xf32>
    %143 = math.exp %142 : vector<8x1x8xf32>
    %cst_62 = arith.constant dense<0.000000e+00> : vector<8x1xf32>
    %144 = vector.multi_reduction <add>, %143, %cst_62 [2] : vector<8x1x8xf32> to vector<8x1xf32>
    %145 = vector.shape_cast %144 : vector<8x1xf32> to vector<8x1x1xf32>
    %146 = tpu.reciprocal %145 {approx = true} : vector<8x1x1xf32> -> vector<8x1x1xf32>
    %147 = vector.broadcast %146 : vector<8x1x1xf32> to vector<8x1x8xf32>
    %148 = arith.mulf %143, %147 : vector<8x1x8xf32>
    %149 = arith.truncf %148 : vector<8x1x8xf32> to vector<8x1x8xbf16>
    "tpu.trace_start"() <{level = 10 : i32, message = "bqt,btc->bqc"}> : () -> ()
    %cst_63 = arith.constant dense<0.000000e+00> : vector<8x1x32xf32>
    %150 = tpu.matmul %149, %133, %cst_63 {dimension_numbers = #tpu.dot_dimension_numbers<[2], [1], [1], [2], [0, 0, 0, 1, 1, 2], [0], [0]>} : vector<8x1x8xbf16>, vector<8x8x32xbf16>, vector<8x1x32xf32> -> vector<8x1x32xf32>
    "tpu.trace_stop"() : () -> ()
    %cst_64 = arith.constant dense<0.000000e+00> : vector<8x8xf32>
    %151 = vector.multi_reduction <add>, %148, %cst_64 [1] : vector<8x1x8xf32> to vector<8x8xf32>
    %cst_65 = arith.constant dense<0.000000e+00> : vector<8x32xf32>
    %152 = vector.multi_reduction <add>, %150, %cst_65 [1] : vector<8x1x32xf32> to vector<8x32xf32>
    %153 = tpu.concatenate %152, %75 in 1 : vector<8x32xf32>, vector<8x32xf32> -> vector<8x64xf32>
    %154 = arith.truncf %153 : vector<8x64xf32> to vector<8x64xbf16>
    %c0_66 = arith.constant 0 : index
    %c0_67 = arith.constant 0 : index
    %155 = vector.load %arg2[%c0_66, %c0_67] : memref<48x128xbf16, #tpu.memory_space<vmem>>, vector<48x128xbf16>
    %cst_68 = arith.constant dense<0.000000e+00> : vector<8x128xf32>
    %156 = tpu.matmul %132, %155, %cst_68 {dimension_numbers = #tpu.dot_dimension_numbers<[1], [0], [0], [1], [0, 0, 1, 1], [], []>} : vector<8x48xbf16>, vector<48x128xbf16>, vector<8x128xf32> -> vector<8x128xf32>
    %c0_69 = arith.constant 0 : index
    %c0_70 = arith.constant 0 : index
    %157 = vector.load %arg3[%c0_69, %c0_70] : memref<64x128xbf16, #tpu.memory_space<vmem>>, vector<64x128xbf16>
    %cst_71 = arith.constant dense<0.000000e+00> : vector<8x128xf32>
    %158 = tpu.matmul %154, %157, %cst_71 {dimension_numbers = #tpu.dot_dimension_numbers<[1], [0], [0], [1], [0, 0, 1, 1], [], []>} : vector<8x64xbf16>, vector<64x128xbf16>, vector<8x128xf32> -> vector<8x128xf32>
    %159 = arith.addf %156, %158 : vector<8x128xf32>
    %160 = arith.addf %159, %3 : vector<8x128xf32>
    %161 = arith.negf %160 : vector<8x128xf32>
    %162 = math.exp %161 : vector<8x128xf32>
    %cst_72 = arith.constant 1.000000e+00 : f32
    %163 = vector.broadcast %cst_72 : f32 to vector<8x128xf32>
    %164 = arith.addf %163, %162 : vector<8x128xf32>
    %165 = arith.divf %163, %164 : vector<8x128xf32>
    %166 = math.tanh %160 : vector<8x128xf32>
    %167 = vector.extract_strided_slice %165 {offsets = [0, 32], sizes = [8, 32], strides = [1, 1]} : vector<8x128xf32> to vector<8x32xf32>
    %168 = arith.mulf %167, %72 : vector<8x32xf32>
    %169 = vector.extract_strided_slice %165 {offsets = [0, 0], sizes = [8, 32], strides = [1, 1]} : vector<8x128xf32> to vector<8x32xf32>
    %170 = vector.extract_strided_slice %166 {offsets = [0, 64], sizes = [8, 32], strides = [1, 1]} : vector<8x128xf32> to vector<8x32xf32>
    %171 = arith.mulf %169, %170 : vector<8x32xf32>
    %172 = arith.addf %168, %171 : vector<8x32xf32>
    %173 = vector.extract_strided_slice %165 {offsets = [0, 96], sizes = [8, 32], strides = [1, 1]} : vector<8x128xf32> to vector<8x32xf32>
    %174 = math.tanh %172 : vector<8x32xf32>
    %175 = arith.mulf %173, %174 : vector<8x32xf32>
    %176 = tpu.concatenate %175, %95 in 1 : vector<8x32xf32>, vector<8x32xf32> -> vector<8x64xf32>
    %177 = arith.truncf %176 : vector<8x64xf32> to vector<8x64xbf16>
    %c0_73 = arith.constant 0 : index
    %c0_74 = arith.constant 0 : index
    %178 = vector.load %arg5[%c0_73, %c0_74] : memref<64x128xbf16, #tpu.memory_space<vmem>>, vector<64x128xbf16>
    %cst_75 = arith.constant dense<0.000000e+00> : vector<8x128xf32>
    %179 = tpu.matmul %177, %178, %cst_75 {dimension_numbers = #tpu.dot_dimension_numbers<[1], [0], [0], [1], [0, 0, 1, 1], [], []>} : vector<8x64xbf16>, vector<64x128xbf16>, vector<8x128xf32> -> vector<8x128xf32>
    %180 = arith.addf %179, %6 : vector<8x128xf32>
    %181 = arith.negf %180 : vector<8x128xf32>
    %182 = math.exp %181 : vector<8x128xf32>
    %cst_76 = arith.constant 1.000000e+00 : f32
    %183 = vector.broadcast %cst_76 : f32 to vector<8x128xf32>
    %184 = arith.addf %183, %182 : vector<8x128xf32>
    %185 = arith.divf %183, %184 : vector<8x128xf32>
    %186 = math.tanh %180 : vector<8x128xf32>
    %187 = vector.extract_strided_slice %185 {offsets = [0, 32], sizes = [8, 32], strides = [1, 1]} : vector<8x128xf32> to vector<8x32xf32>
    %188 = arith.mulf %187, %92 : vector<8x32xf32>
    %189 = vector.extract_strided_slice %185 {offsets = [0, 0], sizes = [8, 32], strides = [1, 1]} : vector<8x128xf32> to vector<8x32xf32>
    %190 = vector.extract_strided_slice %186 {offsets = [0, 64], sizes = [8, 32], strides = [1, 1]} : vector<8x128xf32> to vector<8x32xf32>
    %191 = arith.mulf %189, %190 : vector<8x32xf32>
    %192 = arith.addf %188, %191 : vector<8x32xf32>
    %193 = vector.extract_strided_slice %185 {offsets = [0, 96], sizes = [8, 32], strides = [1, 1]} : vector<8x128xf32> to vector<8x32xf32>
    %194 = math.tanh %192 : vector<8x32xf32>
    %195 = arith.mulf %193, %194 : vector<8x32xf32>
    %196 = tpu.concatenate %195, %152 in 1 : vector<8x32xf32>, vector<8x32xf32> -> vector<8x64xf32>
    %197 = arith.truncf %196 : vector<8x64xf32> to vector<8x64xbf16>
    %c0_77 = arith.constant 0 : index
    %c0_78 = arith.constant 0 : index
    %198 = vector.load %arg7[%c0_77, %c0_78] : memref<64x64xbf16, #tpu.memory_space<vmem>>, vector<64x64xbf16>
    %cst_79 = arith.constant dense<0.000000e+00> : vector<8x64xf32>
    %199 = tpu.matmul %197, %198, %cst_79 {dimension_numbers = #tpu.dot_dimension_numbers<[1], [0], [0], [1], [0, 0, 1, 1], [], []>} : vector<8x64xbf16>, vector<64x64xbf16>, vector<8x64xf32> -> vector<8x64xf32>
    %200 = vector.extract_strided_slice %199 {offsets = [0, 32], sizes = [8, 32], strides = [1, 1]} : vector<8x64xf32> to vector<8x32xf32>
    %201 = vector.extract_strided_slice %199 {offsets = [0, 0], sizes = [8, 32], strides = [1, 1]} : vector<8x64xf32> to vector<8x32xf32>
    %202 = arith.addf %201, %9 : vector<8x32xf32>
    %cst_80 = arith.constant 0.000000e+00 : f32
    %203 = vector.broadcast %cst_80 : f32 to vector<8x32xf32>
    %204 = arith.cmpf ogt, %202, %203 : vector<8x32xf32>
    %cst_81 = arith.constant 2.000000e-01 : f32
    %205 = vector.broadcast %cst_81 : f32 to vector<8x32xf32>
    %206 = arith.mulf %205, %202 : vector<8x32xf32>
    %207 = arith.select %204, %202, %206 : vector<8x32xi1>, vector<8x32xf32>
    %208 = arith.truncf %207 : vector<8x32xf32> to vector<8x32xbf16>
    %c0_82 = arith.constant 0 : index
    %c0_83 = arith.constant 0 : index
    %209 = vector.load %arg9[%c0_82, %c0_83] : memref<32x48xbf16, #tpu.memory_space<vmem>>, vector<32x48xbf16>
    %cst_84 = arith.constant dense<0.000000e+00> : vector<8x48xf32>
    %210 = tpu.matmul %208, %209, %cst_84 {dimension_numbers = #tpu.dot_dimension_numbers<[1], [0], [0], [1], [0, 0, 1, 1], [], []>} : vector<8x32xbf16>, vector<32x48xbf16>, vector<8x48xf32> -> vector<8x48xf32>
    %211 = arith.addf %210, %12 : vector<8x48xf32>
    %212 = arith.index_cast %c1_i32 : i32 to index
    %c0_85 = arith.constant 0 : index
    %c0_86 = arith.constant 0 : index
    %213 = vector.load %arg16[%212, %c0_85, %c0_86] : memref<6x8x48xf32, #tpu.memory_space<vmem>>, vector<1x8x48xf32>
    %214 = vector.shape_cast %213 : vector<1x8x48xf32> to vector<8x48xf32>
    %215 = vector.shape_cast %211 : vector<8x48xf32> to vector<1x8x48xf32>
    tpu.vector_store %arg16[%212, %c0_85, %c0_86], %215 {strides = array<i32>} : memref<6x8x48xf32, #tpu.memory_space<vmem>>, vector<1x8x48xf32>,
    %216 = arith.index_cast %c1_i32 : i32 to index
    %c0_87 = arith.constant 0 : index
    %c0_88 = arith.constant 0 : index
    %217 = vector.load %arg17[%216, %c0_87, %c0_88] : memref<6x8x8xf32, #tpu.memory_space<vmem>>, vector<1x8x8xf32>
    %218 = vector.shape_cast %217 : vector<1x8x8xf32> to vector<8x8xf32>
    %219 = vector.shape_cast %151 : vector<8x8xf32> to vector<1x8x8xf32>
    tpu.vector_store %arg17[%216, %c0_87, %c0_88], %219 {strides = array<i32>} : memref<6x8x8xf32, #tpu.memory_space<vmem>>, vector<1x8x8xf32>,
    %cst_89 = arith.constant dense<0xFF800000> : vector<8xf32>
    %220 = vector.multi_reduction <maximumf>, %211, %cst_89 [1] : vector<8x48xf32> to vector<8xf32>
    %221 = vector.shape_cast %220 : vector<8xf32> to vector<8x1xf32>
    %222 = vector.broadcast %221 : vector<8x1xf32> to vector<8x48xf32>
    %223 = arith.cmpf oeq, %211, %222 : vector<8x48xf32>
    %c48_i32_90 = arith.constant 48 : i32
    %224 = vector.broadcast %c48_i32_90 : i32 to vector<8x48xi32>
    %225 = arith.select %223, %0, %224 : vector<8x48xi1>, vector<8x48xi32>
    %cst_91 = arith.constant dense<2147483647> : vector<8xi32>
    %226 = vector.multi_reduction <minsi>, %225, %cst_91 [1] : vector<8x48xi32> to vector<8xi32>
    %227 = vector.shape_cast %226 : vector<8xi32> to vector<8x1xi32>
    %228 = vector.broadcast %227 : vector<8x1xi32> to vector<8x48xi32>
    %229 = arith.cmpi eq, %0, %228 : vector<8x48xi32>
    %230 = arith.extui %229 : vector<8x48xi1> to vector<8x48xi32>
    %231 = arith.sitofp %230 : vector<8x48xi32> to vector<8x48xf32>
    %232 = arith.truncf %231 : vector<8x48xf32> to vector<8x48xbf16>
    %c2_i32 = arith.constant 2 : i32
    %c0_92 = arith.constant 0 : index
    %c0_93 = arith.constant 0 : index
    %c0_94 = arith.constant 0 : index
    %233 = vector.load %arg0[%c0_92, %c0_93, %c0_94] : memref<8x8x32xbf16, #tpu.memory_space<vmem>>, vector<8x8x32xbf16>
    %c0_95 = arith.constant 0 : index
    %c0_96 = arith.constant 0 : index
    %c0_97 = arith.constant 0 : index
    %234 = vector.load %arg1[%c0_95, %c0_96, %c0_97] : memref<8x1x8xf32, #tpu.memory_space<vmem>>, vector<8x1x8xf32>
    %235 = vector.shape_cast %200 : vector<8x32xf32> to vector<8x1x32xf32>
    %236 = arith.truncf %235 : vector<8x1x32xf32> to vector<8x1x32xbf16>
    "tpu.trace_start"() <{level = 10 : i32, message = "bqc,btc->bqt"}> : () -> ()
    %cst_98 = arith.constant dense<0.000000e+00> : vector<8x1x8xf32>
    %237 = tpu.matmul %236, %233, %cst_98 {dimension_numbers = #tpu.dot_dimension_numbers<[2], [2], [1], [1], [0, 0, 0, 1, 1, 1], [0], [0]>} : vector<8x1x32xbf16>, vector<8x8x32xbf16>, vector<8x1x8xf32> -> vector<8x1x8xf32>
    "tpu.trace_stop"() : () -> ()
    %238 = arith.addf %237, %234 : vector<8x1x8xf32>
    %cst_99 = arith.constant dense<0xFF800000> : vector<8x1xf32>
    %239 = vector.multi_reduction <maximumf>, %238, %cst_99 [2] : vector<8x1x8xf32> to vector<8x1xf32>
    %240 = vector.shape_cast %239 : vector<8x1xf32> to vector<8x1x1xf32>
    %241 = vector.broadcast %240 : vector<8x1x1xf32> to vector<8x1x8xf32>
    %242 = arith.subf %238, %241 : vector<8x1x8xf32>
    %243 = math.exp %242 : vector<8x1x8xf32>
    %cst_100 = arith.constant dense<0.000000e+00> : vector<8x1xf32>
    %244 = vector.multi_reduction <add>, %243, %cst_100 [2] : vector<8x1x8xf32> to vector<8x1xf32>
    %245 = vector.shape_cast %244 : vector<8x1xf32> to vector<8x1x1xf32>
    %246 = tpu.reciprocal %245 {approx = true} : vector<8x1x1xf32> -> vector<8x1x1xf32>
    %247 = vector.broadcast %246 : vector<8x1x1xf32> to vector<8x1x8xf32>
    %248 = arith.mulf %243, %247 : vector<8x1x8xf32>
    %249 = arith.truncf %248 : vector<8x1x8xf32> to vector<8x1x8xbf16>
    "tpu.trace_start"() <{level = 10 : i32, message = "bqt,btc->bqc"}> : () -> ()
    %cst_101 = arith.constant dense<0.000000e+00> : vector<8x1x32xf32>
    %250 = tpu.matmul %249, %233, %cst_101 {dimension_numbers = #tpu.dot_dimension_numbers<[2], [1], [1], [2], [0, 0, 0, 1, 1, 2], [0], [0]>} : vector<8x1x8xbf16>, vector<8x8x32xbf16>, vector<8x1x32xf32> -> vector<8x1x32xf32>
    "tpu.trace_stop"() : () -> ()
    %cst_102 = arith.constant dense<0.000000e+00> : vector<8x8xf32>
    %251 = vector.multi_reduction <add>, %248, %cst_102 [1] : vector<8x1x8xf32> to vector<8x8xf32>
    %cst_103 = arith.constant dense<0.000000e+00> : vector<8x32xf32>
    %252 = vector.multi_reduction <add>, %250, %cst_103 [1] : vector<8x1x32xf32> to vector<8x32xf32>
    %253 = tpu.concatenate %252, %175 in 1 : vector<8x32xf32>, vector<8x32xf32> -> vector<8x64xf32>
    %254 = arith.truncf %253 : vector<8x64xf32> to vector<8x64xbf16>
    %c0_104 = arith.constant 0 : index
    %c0_105 = arith.constant 0 : index
    %255 = vector.load %arg2[%c0_104, %c0_105] : memref<48x128xbf16, #tpu.memory_space<vmem>>, vector<48x128xbf16>
    %cst_106 = arith.constant dense<0.000000e+00> : vector<8x128xf32>
    %256 = tpu.matmul %232, %255, %cst_106 {dimension_numbers = #tpu.dot_dimension_numbers<[1], [0], [0], [1], [0, 0, 1, 1], [], []>} : vector<8x48xbf16>, vector<48x128xbf16>, vector<8x128xf32> -> vector<8x128xf32>
    %c0_107 = arith.constant 0 : index
    %c0_108 = arith.constant 0 : index
    %257 = vector.load %arg3[%c0_107, %c0_108] : memref<64x128xbf16, #tpu.memory_space<vmem>>, vector<64x128xbf16>
    %cst_109 = arith.constant dense<0.000000e+00> : vector<8x128xf32>
    %258 = tpu.matmul %254, %257, %cst_109 {dimension_numbers = #tpu.dot_dimension_numbers<[1], [0], [0], [1], [0, 0, 1, 1], [], []>} : vector<8x64xbf16>, vector<64x128xbf16>, vector<8x128xf32> -> vector<8x128xf32>
    %259 = arith.addf %256, %258 : vector<8x128xf32>
    %260 = arith.addf %259, %3 : vector<8x128xf32>
    %261 = arith.negf %260 : vector<8x128xf32>
    %262 = math.exp %261 : vector<8x128xf32>
    %cst_110 = arith.constant 1.000000e+00 : f32
    %263 = vector.broadcast %cst_110 : f32 to vector<8x128xf32>
    %264 = arith.addf %263, %262 : vector<8x128xf32>
    %265 = arith.divf %263, %264 : vector<8x128xf32>
    %266 = math.tanh %260 : vector<8x128xf32>
    %267 = vector.extract_strided_slice %265 {offsets = [0, 32], sizes = [8, 32], strides = [1, 1]} : vector<8x128xf32> to vector<8x32xf32>
    %268 = arith.mulf %267, %172 : vector<8x32xf32>
    %269 = vector.extract_strided_slice %265 {offsets = [0, 0], sizes = [8, 32], strides = [1, 1]} : vector<8x128xf32> to vector<8x32xf32>
    %270 = vector.extract_strided_slice %266 {offsets = [0, 64], sizes = [8, 32], strides = [1, 1]} : vector<8x128xf32> to vector<8x32xf32>
    %271 = arith.mulf %269, %270 : vector<8x32xf32>
    %272 = arith.addf %268, %271 : vector<8x32xf32>
    %273 = vector.extract_strided_slice %265 {offsets = [0, 96], sizes = [8, 32], strides = [1, 1]} : vector<8x128xf32> to vector<8x32xf32>
    %274 = math.tanh %272 : vector<8x32xf32>
    %275 = arith.mulf %273, %274 : vector<8x32xf32>
    %276 = tpu.concatenate %275, %195 in 1 : vector<8x32xf32>, vector<8x32xf32> -> vector<8x64xf32>
    %277 = arith.truncf %276 : vector<8x64xf32> to vector<8x64xbf16>
    %c0_111 = arith.constant 0 : index
    %c0_112 = arith.constant 0 : index
    %278 = vector.load %arg5[%c0_111, %c0_112] : memref<64x128xbf16, #tpu.memory_space<vmem>>, vector<64x128xbf16>
    %cst_113 = arith.constant dense<0.000000e+00> : vector<8x128xf32>
    %279 = tpu.matmul %277, %278, %cst_113 {dimension_numbers = #tpu.dot_dimension_numbers<[1], [0], [0], [1], [0, 0, 1, 1], [], []>} : vector<8x64xbf16>, vector<64x128xbf16>, vector<8x128xf32> -> vector<8x128xf32>
    %280 = arith.addf %279, %6 : vector<8x128xf32>
    %281 = arith.negf %280 : vector<8x128xf32>
    %282 = math.exp %281 : vector<8x128xf32>
    %cst_114 = arith.constant 1.000000e+00 : f32
    %283 = vector.broadcast %cst_114 : f32 to vector<8x128xf32>
    %284 = arith.addf %283, %282 : vector<8x128xf32>
    %285 = arith.divf %283, %284 : vector<8x128xf32>
    %286 = math.tanh %280 : vector<8x128xf32>
    %287 = vector.extract_strided_slice %285 {offsets = [0, 32], sizes = [8, 32], strides = [1, 1]} : vector<8x128xf32> to vector<8x32xf32>
    %288 = arith.mulf %287, %192 : vector<8x32xf32>
    %289 = vector.extract_strided_slice %285 {offsets = [0, 0], sizes = [8, 32], strides = [1, 1]} : vector<8x128xf32> to vector<8x32xf32>
    %290 = vector.extract_strided_slice %286 {offsets = [0, 64], sizes = [8, 32], strides = [1, 1]} : vector<8x128xf32> to vector<8x32xf32>
    %291 = arith.mulf %289, %290 : vector<8x32xf32>
    %292 = arith.addf %288, %291 : vector<8x32xf32>
    %293 = vector.extract_strided_slice %285 {offsets = [0, 96], sizes = [8, 32], strides = [1, 1]} : vector<8x128xf32> to vector<8x32xf32>
    %294 = math.tanh %292 : vector<8x32xf32>
    %295 = arith.mulf %293, %294 : vector<8x32xf32>
    %296 = tpu.concatenate %295, %252 in 1 : vector<8x32xf32>, vector<8x32xf32> -> vector<8x64xf32>
    %297 = arith.truncf %296 : vector<8x64xf32> to vector<8x64xbf16>
    %c0_115 = arith.constant 0 : index
    %c0_116 = arith.constant 0 : index
    %298 = vector.load %arg7[%c0_115, %c0_116] : memref<64x64xbf16, #tpu.memory_space<vmem>>, vector<64x64xbf16>
    %cst_117 = arith.constant dense<0.000000e+00> : vector<8x64xf32>
    %299 = tpu.matmul %297, %298, %cst_117 {dimension_numbers = #tpu.dot_dimension_numbers<[1], [0], [0], [1], [0, 0, 1, 1], [], []>} : vector<8x64xbf16>, vector<64x64xbf16>, vector<8x64xf32> -> vector<8x64xf32>
    %300 = vector.extract_strided_slice %299 {offsets = [0, 32], sizes = [8, 32], strides = [1, 1]} : vector<8x64xf32> to vector<8x32xf32>
    %301 = vector.extract_strided_slice %299 {offsets = [0, 0], sizes = [8, 32], strides = [1, 1]} : vector<8x64xf32> to vector<8x32xf32>
    %302 = arith.addf %301, %9 : vector<8x32xf32>
    %cst_118 = arith.constant 0.000000e+00 : f32
    %303 = vector.broadcast %cst_118 : f32 to vector<8x32xf32>
    %304 = arith.cmpf ogt, %302, %303 : vector<8x32xf32>
    %cst_119 = arith.constant 2.000000e-01 : f32
    %305 = vector.broadcast %cst_119 : f32 to vector<8x32xf32>
    %306 = arith.mulf %305, %302 : vector<8x32xf32>
    %307 = arith.select %304, %302, %306 : vector<8x32xi1>, vector<8x32xf32>
    %308 = arith.truncf %307 : vector<8x32xf32> to vector<8x32xbf16>
    %c0_120 = arith.constant 0 : index
    %c0_121 = arith.constant 0 : index
    %309 = vector.load %arg9[%c0_120, %c0_121] : memref<32x48xbf16, #tpu.memory_space<vmem>>, vector<32x48xbf16>
    %cst_122 = arith.constant dense<0.000000e+00> : vector<8x48xf32>
    %310 = tpu.matmul %308, %309, %cst_122 {dimension_numbers = #tpu.dot_dimension_numbers<[1], [0], [0], [1], [0, 0, 1, 1], [], []>} : vector<8x32xbf16>, vector<32x48xbf16>, vector<8x48xf32> -> vector<8x48xf32>
    %311 = arith.addf %310, %12 : vector<8x48xf32>
    %312 = arith.index_cast %c2_i32 : i32 to index
    %c0_123 = arith.constant 0 : index
    %c0_124 = arith.constant 0 : index
    %313 = vector.load %arg16[%312, %c0_123, %c0_124] : memref<6x8x48xf32, #tpu.memory_space<vmem>>, vector<1x8x48xf32>
    %314 = vector.shape_cast %313 : vector<1x8x48xf32> to vector<8x48xf32>
    %315 = vector.shape_cast %311 : vector<8x48xf32> to vector<1x8x48xf32>
    tpu.vector_store %arg16[%312, %c0_123, %c0_124], %315 {strides = array<i32>} : memref<6x8x48xf32, #tpu.memory_space<vmem>>, vector<1x8x48xf32>,
    %316 = arith.index_cast %c2_i32 : i32 to index
    %c0_125 = arith.constant 0 : index
    %c0_126 = arith.constant 0 : index
    %317 = vector.load %arg17[%316, %c0_125, %c0_126] : memref<6x8x8xf32, #tpu.memory_space<vmem>>, vector<1x8x8xf32>
    %318 = vector.shape_cast %317 : vector<1x8x8xf32> to vector<8x8xf32>
    %319 = vector.shape_cast %251 : vector<8x8xf32> to vector<1x8x8xf32>
    tpu.vector_store %arg17[%316, %c0_125, %c0_126], %319 {strides = array<i32>} : memref<6x8x8xf32, #tpu.memory_space<vmem>>, vector<1x8x8xf32>,
    %cst_127 = arith.constant dense<0xFF800000> : vector<8xf32>
    %320 = vector.multi_reduction <maximumf>, %311, %cst_127 [1] : vector<8x48xf32> to vector<8xf32>
    %321 = vector.shape_cast %320 : vector<8xf32> to vector<8x1xf32>
    %322 = vector.broadcast %321 : vector<8x1xf32> to vector<8x48xf32>
    %323 = arith.cmpf oeq, %311, %322 : vector<8x48xf32>
    %c48_i32_128 = arith.constant 48 : i32
    %324 = vector.broadcast %c48_i32_128 : i32 to vector<8x48xi32>
    %325 = arith.select %323, %0, %324 : vector<8x48xi1>, vector<8x48xi32>
    %cst_129 = arith.constant dense<2147483647> : vector<8xi32>
    %326 = vector.multi_reduction <minsi>, %325, %cst_129 [1] : vector<8x48xi32> to vector<8xi32>
    %327 = vector.shape_cast %326 : vector<8xi32> to vector<8x1xi32>
    %328 = vector.broadcast %327 : vector<8x1xi32> to vector<8x48xi32>
    %329 = arith.cmpi eq, %0, %328 : vector<8x48xi32>
    %330 = arith.extui %329 : vector<8x48xi1> to vector<8x48xi32>
    %331 = arith.sitofp %330 : vector<8x48xi32> to vector<8x48xf32>
    %332 = arith.truncf %331 : vector<8x48xf32> to vector<8x48xbf16>
    %c3_i32 = arith.constant 3 : i32
    %c0_130 = arith.constant 0 : index
    %c0_131 = arith.constant 0 : index
    %c0_132 = arith.constant 0 : index
    %333 = vector.load %arg0[%c0_130, %c0_131, %c0_132] : memref<8x8x32xbf16, #tpu.memory_space<vmem>>, vector<8x8x32xbf16>
    %c0_133 = arith.constant 0 : index
    %c0_134 = arith.constant 0 : index
    %c0_135 = arith.constant 0 : index
    %334 = vector.load %arg1[%c0_133, %c0_134, %c0_135] : memref<8x1x8xf32, #tpu.memory_space<vmem>>, vector<8x1x8xf32>
    %335 = vector.shape_cast %300 : vector<8x32xf32> to vector<8x1x32xf32>
    %336 = arith.truncf %335 : vector<8x1x32xf32> to vector<8x1x32xbf16>
    "tpu.trace_start"() <{level = 10 : i32, message = "bqc,btc->bqt"}> : () -> ()
    %cst_136 = arith.constant dense<0.000000e+00> : vector<8x1x8xf32>
    %337 = tpu.matmul %336, %333, %cst_136 {dimension_numbers = #tpu.dot_dimension_numbers<[2], [2], [1], [1], [0, 0, 0, 1, 1, 1], [0], [0]>} : vector<8x1x32xbf16>, vector<8x8x32xbf16>, vector<8x1x8xf32> -> vector<8x1x8xf32>
    "tpu.trace_stop"() : () -> ()
    %338 = arith.addf %337, %334 : vector<8x1x8xf32>
    %cst_137 = arith.constant dense<0xFF800000> : vector<8x1xf32>
    %339 = vector.multi_reduction <maximumf>, %338, %cst_137 [2] : vector<8x1x8xf32> to vector<8x1xf32>
    %340 = vector.shape_cast %339 : vector<8x1xf32> to vector<8x1x1xf32>
    %341 = vector.broadcast %340 : vector<8x1x1xf32> to vector<8x1x8xf32>
    %342 = arith.subf %338, %341 : vector<8x1x8xf32>
    %343 = math.exp %342 : vector<8x1x8xf32>
    %cst_138 = arith.constant dense<0.000000e+00> : vector<8x1xf32>
    %344 = vector.multi_reduction <add>, %343, %cst_138 [2] : vector<8x1x8xf32> to vector<8x1xf32>
    %345 = vector.shape_cast %344 : vector<8x1xf32> to vector<8x1x1xf32>
    %346 = tpu.reciprocal %345 {approx = true} : vector<8x1x1xf32> -> vector<8x1x1xf32>
    %347 = vector.broadcast %346 : vector<8x1x1xf32> to vector<8x1x8xf32>
    %348 = arith.mulf %343, %347 : vector<8x1x8xf32>
    %349 = arith.truncf %348 : vector<8x1x8xf32> to vector<8x1x8xbf16>
    "tpu.trace_start"() <{level = 10 : i32, message = "bqt,btc->bqc"}> : () -> ()
    %cst_139 = arith.constant dense<0.000000e+00> : vector<8x1x32xf32>
    %350 = tpu.matmul %349, %333, %cst_139 {dimension_numbers = #tpu.dot_dimension_numbers<[2], [1], [1], [2], [0, 0, 0, 1, 1, 2], [0], [0]>} : vector<8x1x8xbf16>, vector<8x8x32xbf16>, vector<8x1x32xf32> -> vector<8x1x32xf32>
    "tpu.trace_stop"() : () -> ()
    %cst_140 = arith.constant dense<0.000000e+00> : vector<8x8xf32>
    %351 = vector.multi_reduction <add>, %348, %cst_140 [1] : vector<8x1x8xf32> to vector<8x8xf32>
    %cst_141 = arith.constant dense<0.000000e+00> : vector<8x32xf32>
    %352 = vector.multi_reduction <add>, %350, %cst_141 [1] : vector<8x1x32xf32> to vector<8x32xf32>
    %353 = tpu.concatenate %352, %275 in 1 : vector<8x32xf32>, vector<8x32xf32> -> vector<8x64xf32>
    %354 = arith.truncf %353 : vector<8x64xf32> to vector<8x64xbf16>
    %c0_142 = arith.constant 0 : index
    %c0_143 = arith.constant 0 : index
    %355 = vector.load %arg2[%c0_142, %c0_143] : memref<48x128xbf16, #tpu.memory_space<vmem>>, vector<48x128xbf16>
    %cst_144 = arith.constant dense<0.000000e+00> : vector<8x128xf32>
    %356 = tpu.matmul %332, %355, %cst_144 {dimension_numbers = #tpu.dot_dimension_numbers<[1], [0], [0], [1], [0, 0, 1, 1], [], []>} : vector<8x48xbf16>, vector<48x128xbf16>, vector<8x128xf32> -> vector<8x128xf32>
    %c0_145 = arith.constant 0 : index
    %c0_146 = arith.constant 0 : index
    %357 = vector.load %arg3[%c0_145, %c0_146] : memref<64x128xbf16, #tpu.memory_space<vmem>>, vector<64x128xbf16>
    %cst_147 = arith.constant dense<0.000000e+00> : vector<8x128xf32>
    %358 = tpu.matmul %354, %357, %cst_147 {dimension_numbers = #tpu.dot_dimension_numbers<[1], [0], [0], [1], [0, 0, 1, 1], [], []>} : vector<8x64xbf16>, vector<64x128xbf16>, vector<8x128xf32> -> vector<8x128xf32>
    %359 = arith.addf %356, %358 : vector<8x128xf32>
    %360 = arith.addf %359, %3 : vector<8x128xf32>
    %361 = arith.negf %360 : vector<8x128xf32>
    %362 = math.exp %361 : vector<8x128xf32>
    %cst_148 = arith.constant 1.000000e+00 : f32
    %363 = vector.broadcast %cst_148 : f32 to vector<8x128xf32>
    %364 = arith.addf %363, %362 : vector<8x128xf32>
    %365 = arith.divf %363, %364 : vector<8x128xf32>
    %366 = math.tanh %360 : vector<8x128xf32>
    %367 = vector.extract_strided_slice %365 {offsets = [0, 32], sizes = [8, 32], strides = [1, 1]} : vector<8x128xf32> to vector<8x32xf32>
    %368 = arith.mulf %367, %272 : vector<8x32xf32>
    %369 = vector.extract_strided_slice %365 {offsets = [0, 0], sizes = [8, 32], strides = [1, 1]} : vector<8x128xf32> to vector<8x32xf32>
    %370 = vector.extract_strided_slice %366 {offsets = [0, 64], sizes = [8, 32], strides = [1, 1]} : vector<8x128xf32> to vector<8x32xf32>
    %371 = arith.mulf %369, %370 : vector<8x32xf32>
    %372 = arith.addf %368, %371 : vector<8x32xf32>
    %373 = vector.extract_strided_slice %365 {offsets = [0, 96], sizes = [8, 32], strides = [1, 1]} : vector<8x128xf32> to vector<8x32xf32>
    %374 = math.tanh %372 : vector<8x32xf32>
    %375 = arith.mulf %373, %374 : vector<8x32xf32>
    %376 = tpu.concatenate %375, %295 in 1 : vector<8x32xf32>, vector<8x32xf32> -> vector<8x64xf32>
    %377 = arith.truncf %376 : vector<8x64xf32> to vector<8x64xbf16>
    %c0_149 = arith.constant 0 : index
    %c0_150 = arith.constant 0 : index
    %378 = vector.load %arg5[%c0_149, %c0_150] : memref<64x128xbf16, #tpu.memory_space<vmem>>, vector<64x128xbf16>
    %cst_151 = arith.constant dense<0.000000e+00> : vector<8x128xf32>
    %379 = tpu.matmul %377, %378, %cst_151 {dimension_numbers = #tpu.dot_dimension_numbers<[1], [0], [0], [1], [0, 0, 1, 1], [], []>} : vector<8x64xbf16>, vector<64x128xbf16>, vector<8x128xf32> -> vector<8x128xf32>
    %380 = arith.addf %379, %6 : vector<8x128xf32>
    %381 = arith.negf %380 : vector<8x128xf32>
    %382 = math.exp %381 : vector<8x128xf32>
    %cst_152 = arith.constant 1.000000e+00 : f32
    %383 = vector.broadcast %cst_152 : f32 to vector<8x128xf32>
    %384 = arith.addf %383, %382 : vector<8x128xf32>
    %385 = arith.divf %383, %384 : vector<8x128xf32>
    %386 = math.tanh %380 : vector<8x128xf32>
    %387 = vector.extract_strided_slice %385 {offsets = [0, 32], sizes = [8, 32], strides = [1, 1]} : vector<8x128xf32> to vector<8x32xf32>
    %388 = arith.mulf %387, %292 : vector<8x32xf32>
    %389 = vector.extract_strided_slice %385 {offsets = [0, 0], sizes = [8, 32], strides = [1, 1]} : vector<8x128xf32> to vector<8x32xf32>
    %390 = vector.extract_strided_slice %386 {offsets = [0, 64], sizes = [8, 32], strides = [1, 1]} : vector<8x128xf32> to vector<8x32xf32>
    %391 = arith.mulf %389, %390 : vector<8x32xf32>
    %392 = arith.addf %388, %391 : vector<8x32xf32>
    %393 = vector.extract_strided_slice %385 {offsets = [0, 96], sizes = [8, 32], strides = [1, 1]} : vector<8x128xf32> to vector<8x32xf32>
    %394 = math.tanh %392 : vector<8x32xf32>
    %395 = arith.mulf %393, %394 : vector<8x32xf32>
    %396 = tpu.concatenate %395, %352 in 1 : vector<8x32xf32>, vector<8x32xf32> -> vector<8x64xf32>
    %397 = arith.truncf %396 : vector<8x64xf32> to vector<8x64xbf16>
    %c0_153 = arith.constant 0 : index
    %c0_154 = arith.constant 0 : index
    %398 = vector.load %arg7[%c0_153, %c0_154] : memref<64x64xbf16, #tpu.memory_space<vmem>>, vector<64x64xbf16>
    %cst_155 = arith.constant dense<0.000000e+00> : vector<8x64xf32>
    %399 = tpu.matmul %397, %398, %cst_155 {dimension_numbers = #tpu.dot_dimension_numbers<[1], [0], [0], [1], [0, 0, 1, 1], [], []>} : vector<8x64xbf16>, vector<64x64xbf16>, vector<8x64xf32> -> vector<8x64xf32>
    %400 = vector.extract_strided_slice %399 {offsets = [0, 32], sizes = [8, 32], strides = [1, 1]} : vector<8x64xf32> to vector<8x32xf32>
    %401 = vector.extract_strided_slice %399 {offsets = [0, 0], sizes = [8, 32], strides = [1, 1]} : vector<8x64xf32> to vector<8x32xf32>
    %402 = arith.addf %401, %9 : vector<8x32xf32>
    %cst_156 = arith.constant 0.000000e+00 : f32
    %403 = vector.broadcast %cst_156 : f32 to vector<8x32xf32>
    %404 = arith.cmpf ogt, %402, %403 : vector<8x32xf32>
    %cst_157 = arith.constant 2.000000e-01 : f32
    %405 = vector.broadcast %cst_157 : f32 to vector<8x32xf32>
    %406 = arith.mulf %405, %402 : vector<8x32xf32>
    %407 = arith.select %404, %402, %406 : vector<8x32xi1>, vector<8x32xf32>
    %408 = arith.truncf %407 : vector<8x32xf32> to vector<8x32xbf16>
    %c0_158 = arith.constant 0 : index
    %c0_159 = arith.constant 0 : index
    %409 = vector.load %arg9[%c0_158, %c0_159] : memref<32x48xbf16, #tpu.memory_space<vmem>>, vector<32x48xbf16>
    %cst_160 = arith.constant dense<0.000000e+00> : vector<8x48xf32>
    %410 = tpu.matmul %408, %409, %cst_160 {dimension_numbers = #tpu.dot_dimension_numbers<[1], [0], [0], [1], [0, 0, 1, 1], [], []>} : vector<8x32xbf16>, vector<32x48xbf16>, vector<8x48xf32> -> vector<8x48xf32>
    %411 = arith.addf %410, %12 : vector<8x48xf32>
    %412 = arith.index_cast %c3_i32 : i32 to index
    %c0_161 = arith.constant 0 : index
    %c0_162 = arith.constant 0 : index
    %413 = vector.load %arg16[%412, %c0_161, %c0_162] : memref<6x8x48xf32, #tpu.memory_space<vmem>>, vector<1x8x48xf32>
    %414 = vector.shape_cast %413 : vector<1x8x48xf32> to vector<8x48xf32>
    %415 = vector.shape_cast %411 : vector<8x48xf32> to vector<1x8x48xf32>
    tpu.vector_store %arg16[%412, %c0_161, %c0_162], %415 {strides = array<i32>} : memref<6x8x48xf32, #tpu.memory_space<vmem>>, vector<1x8x48xf32>,
    %416 = arith.index_cast %c3_i32 : i32 to index
    %c0_163 = arith.constant 0 : index
    %c0_164 = arith.constant 0 : index
    %417 = vector.load %arg17[%416, %c0_163, %c0_164] : memref<6x8x8xf32, #tpu.memory_space<vmem>>, vector<1x8x8xf32>
    %418 = vector.shape_cast %417 : vector<1x8x8xf32> to vector<8x8xf32>
    %419 = vector.shape_cast %351 : vector<8x8xf32> to vector<1x8x8xf32>
    tpu.vector_store %arg17[%416, %c0_163, %c0_164], %419 {strides = array<i32>} : memref<6x8x8xf32, #tpu.memory_space<vmem>>, vector<1x8x8xf32>,
    %cst_165 = arith.constant dense<0xFF800000> : vector<8xf32>
    %420 = vector.multi_reduction <maximumf>, %411, %cst_165 [1] : vector<8x48xf32> to vector<8xf32>
    %421 = vector.shape_cast %420 : vector<8xf32> to vector<8x1xf32>
    %422 = vector.broadcast %421 : vector<8x1xf32> to vector<8x48xf32>
    %423 = arith.cmpf oeq, %411, %422 : vector<8x48xf32>
    %c48_i32_166 = arith.constant 48 : i32
    %424 = vector.broadcast %c48_i32_166 : i32 to vector<8x48xi32>
    %425 = arith.select %423, %0, %424 : vector<8x48xi1>, vector<8x48xi32>
    %cst_167 = arith.constant dense<2147483647> : vector<8xi32>
    %426 = vector.multi_reduction <minsi>, %425, %cst_167 [1] : vector<8x48xi32> to vector<8xi32>
    %427 = vector.shape_cast %426 : vector<8xi32> to vector<8x1xi32>
    %428 = vector.broadcast %427 : vector<8x1xi32> to vector<8x48xi32>
    %429 = arith.cmpi eq, %0, %428 : vector<8x48xi32>
    %430 = arith.extui %429 : vector<8x48xi1> to vector<8x48xi32>
    %431 = arith.sitofp %430 : vector<8x48xi32> to vector<8x48xf32>
    %432 = arith.truncf %431 : vector<8x48xf32> to vector<8x48xbf16>
    %c4_i32 = arith.constant 4 : i32
    %c0_168 = arith.constant 0 : index
    %c0_169 = arith.constant 0 : index
    %c0_170 = arith.constant 0 : index
    %433 = vector.load %arg0[%c0_168, %c0_169, %c0_170] : memref<8x8x32xbf16, #tpu.memory_space<vmem>>, vector<8x8x32xbf16>
    %c0_171 = arith.constant 0 : index
    %c0_172 = arith.constant 0 : index
    %c0_173 = arith.constant 0 : index
    %434 = vector.load %arg1[%c0_171, %c0_172, %c0_173] : memref<8x1x8xf32, #tpu.memory_space<vmem>>, vector<8x1x8xf32>
    %435 = vector.shape_cast %400 : vector<8x32xf32> to vector<8x1x32xf32>
    %436 = arith.truncf %435 : vector<8x1x32xf32> to vector<8x1x32xbf16>
    "tpu.trace_start"() <{level = 10 : i32, message = "bqc,btc->bqt"}> : () -> ()
    %cst_174 = arith.constant dense<0.000000e+00> : vector<8x1x8xf32>
    %437 = tpu.matmul %436, %433, %cst_174 {dimension_numbers = #tpu.dot_dimension_numbers<[2], [2], [1], [1], [0, 0, 0, 1, 1, 1], [0], [0]>} : vector<8x1x32xbf16>, vector<8x8x32xbf16>, vector<8x1x8xf32> -> vector<8x1x8xf32>
    "tpu.trace_stop"() : () -> ()
    %438 = arith.addf %437, %434 : vector<8x1x8xf32>
    %cst_175 = arith.constant dense<0xFF800000> : vector<8x1xf32>
    %439 = vector.multi_reduction <maximumf>, %438, %cst_175 [2] : vector<8x1x8xf32> to vector<8x1xf32>
    %440 = vector.shape_cast %439 : vector<8x1xf32> to vector<8x1x1xf32>
    %441 = vector.broadcast %440 : vector<8x1x1xf32> to vector<8x1x8xf32>
    %442 = arith.subf %438, %441 : vector<8x1x8xf32>
    %443 = math.exp %442 : vector<8x1x8xf32>
    %cst_176 = arith.constant dense<0.000000e+00> : vector<8x1xf32>
    %444 = vector.multi_reduction <add>, %443, %cst_176 [2] : vector<8x1x8xf32> to vector<8x1xf32>
    %445 = vector.shape_cast %444 : vector<8x1xf32> to vector<8x1x1xf32>
    %446 = tpu.reciprocal %445 {approx = true} : vector<8x1x1xf32> -> vector<8x1x1xf32>
    %447 = vector.broadcast %446 : vector<8x1x1xf32> to vector<8x1x8xf32>
    %448 = arith.mulf %443, %447 : vector<8x1x8xf32>
    %449 = arith.truncf %448 : vector<8x1x8xf32> to vector<8x1x8xbf16>
    "tpu.trace_start"() <{level = 10 : i32, message = "bqt,btc->bqc"}> : () -> ()
    %cst_177 = arith.constant dense<0.000000e+00> : vector<8x1x32xf32>
    %450 = tpu.matmul %449, %433, %cst_177 {dimension_numbers = #tpu.dot_dimension_numbers<[2], [1], [1], [2], [0, 0, 0, 1, 1, 2], [0], [0]>} : vector<8x1x8xbf16>, vector<8x8x32xbf16>, vector<8x1x32xf32> -> vector<8x1x32xf32>
    "tpu.trace_stop"() : () -> ()
    %cst_178 = arith.constant dense<0.000000e+00> : vector<8x8xf32>
    %451 = vector.multi_reduction <add>, %448, %cst_178 [1] : vector<8x1x8xf32> to vector<8x8xf32>
    %cst_179 = arith.constant dense<0.000000e+00> : vector<8x32xf32>
    %452 = vector.multi_reduction <add>, %450, %cst_179 [1] : vector<8x1x32xf32> to vector<8x32xf32>
    %453 = tpu.concatenate %452, %375 in 1 : vector<8x32xf32>, vector<8x32xf32> -> vector<8x64xf32>
    %454 = arith.truncf %453 : vector<8x64xf32> to vector<8x64xbf16>
    %c0_180 = arith.constant 0 : index
    %c0_181 = arith.constant 0 : index
    %455 = vector.load %arg2[%c0_180, %c0_181] : memref<48x128xbf16, #tpu.memory_space<vmem>>, vector<48x128xbf16>
    %cst_182 = arith.constant dense<0.000000e+00> : vector<8x128xf32>
    %456 = tpu.matmul %432, %455, %cst_182 {dimension_numbers = #tpu.dot_dimension_numbers<[1], [0], [0], [1], [0, 0, 1, 1], [], []>} : vector<8x48xbf16>, vector<48x128xbf16>, vector<8x128xf32> -> vector<8x128xf32>
    %c0_183 = arith.constant 0 : index
    %c0_184 = arith.constant 0 : index
    %457 = vector.load %arg3[%c0_183, %c0_184] : memref<64x128xbf16, #tpu.memory_space<vmem>>, vector<64x128xbf16>
    %cst_185 = arith.constant dense<0.000000e+00> : vector<8x128xf32>
    %458 = tpu.matmul %454, %457, %cst_185 {dimension_numbers = #tpu.dot_dimension_numbers<[1], [0], [0], [1], [0, 0, 1, 1], [], []>} : vector<8x64xbf16>, vector<64x128xbf16>, vector<8x128xf32> -> vector<8x128xf32>
    %459 = arith.addf %456, %458 : vector<8x128xf32>
    %460 = arith.addf %459, %3 : vector<8x128xf32>
    %461 = arith.negf %460 : vector<8x128xf32>
    %462 = math.exp %461 : vector<8x128xf32>
    %cst_186 = arith.constant 1.000000e+00 : f32
    %463 = vector.broadcast %cst_186 : f32 to vector<8x128xf32>
    %464 = arith.addf %463, %462 : vector<8x128xf32>
    %465 = arith.divf %463, %464 : vector<8x128xf32>
    %466 = math.tanh %460 : vector<8x128xf32>
    %467 = vector.extract_strided_slice %465 {offsets = [0, 32], sizes = [8, 32], strides = [1, 1]} : vector<8x128xf32> to vector<8x32xf32>
    %468 = arith.mulf %467, %372 : vector<8x32xf32>
    %469 = vector.extract_strided_slice %465 {offsets = [0, 0], sizes = [8, 32], strides = [1, 1]} : vector<8x128xf32> to vector<8x32xf32>
    %470 = vector.extract_strided_slice %466 {offsets = [0, 64], sizes = [8, 32], strides = [1, 1]} : vector<8x128xf32> to vector<8x32xf32>
    %471 = arith.mulf %469, %470 : vector<8x32xf32>
    %472 = arith.addf %468, %471 : vector<8x32xf32>
    %473 = vector.extract_strided_slice %465 {offsets = [0, 96], sizes = [8, 32], strides = [1, 1]} : vector<8x128xf32> to vector<8x32xf32>
    %474 = math.tanh %472 : vector<8x32xf32>
    %475 = arith.mulf %473, %474 : vector<8x32xf32>
    %476 = tpu.concatenate %475, %395 in 1 : vector<8x32xf32>, vector<8x32xf32> -> vector<8x64xf32>
    %477 = arith.truncf %476 : vector<8x64xf32> to vector<8x64xbf16>
    %c0_187 = arith.constant 0 : index
    %c0_188 = arith.constant 0 : index
    %478 = vector.load %arg5[%c0_187, %c0_188] : memref<64x128xbf16, #tpu.memory_space<vmem>>, vector<64x128xbf16>
    %cst_189 = arith.constant dense<0.000000e+00> : vector<8x128xf32>
    %479 = tpu.matmul %477, %478, %cst_189 {dimension_numbers = #tpu.dot_dimension_numbers<[1], [0], [0], [1], [0, 0, 1, 1], [], []>} : vector<8x64xbf16>, vector<64x128xbf16>, vector<8x128xf32> -> vector<8x128xf32>
    %480 = arith.addf %479, %6 : vector<8x128xf32>
    %481 = arith.negf %480 : vector<8x128xf32>
    %482 = math.exp %481 : vector<8x128xf32>
    %cst_190 = arith.constant 1.000000e+00 : f32
    %483 = vector.broadcast %cst_190 : f32 to vector<8x128xf32>
    %484 = arith.addf %483, %482 : vector<8x128xf32>
    %485 = arith.divf %483, %484 : vector<8x128xf32>
    %486 = math.tanh %480 : vector<8x128xf32>
    %487 = vector.extract_strided_slice %485 {offsets = [0, 32], sizes = [8, 32], strides = [1, 1]} : vector<8x128xf32> to vector<8x32xf32>
    %488 = arith.mulf %487, %392 : vector<8x32xf32>
    %489 = vector.extract_strided_slice %485 {offsets = [0, 0], sizes = [8, 32], strides = [1, 1]} : vector<8x128xf32> to vector<8x32xf32>
    %490 = vector.extract_strided_slice %486 {offsets = [0, 64], sizes = [8, 32], strides = [1, 1]} : vector<8x128xf32> to vector<8x32xf32>
    %491 = arith.mulf %489, %490 : vector<8x32xf32>
    %492 = arith.addf %488, %491 : vector<8x32xf32>
    %493 = vector.extract_strided_slice %485 {offsets = [0, 96], sizes = [8, 32], strides = [1, 1]} : vector<8x128xf32> to vector<8x32xf32>
    %494 = math.tanh %492 : vector<8x32xf32>
    %495 = arith.mulf %493, %494 : vector<8x32xf32>
    %496 = tpu.concatenate %495, %452 in 1 : vector<8x32xf32>, vector<8x32xf32> -> vector<8x64xf32>
    %497 = arith.truncf %496 : vector<8x64xf32> to vector<8x64xbf16>
    %c0_191 = arith.constant 0 : index
    %c0_192 = arith.constant 0 : index
    %498 = vector.load %arg7[%c0_191, %c0_192] : memref<64x64xbf16, #tpu.memory_space<vmem>>, vector<64x64xbf16>
    %cst_193 = arith.constant dense<0.000000e+00> : vector<8x64xf32>
    %499 = tpu.matmul %497, %498, %cst_193 {dimension_numbers = #tpu.dot_dimension_numbers<[1], [0], [0], [1], [0, 0, 1, 1], [], []>} : vector<8x64xbf16>, vector<64x64xbf16>, vector<8x64xf32> -> vector<8x64xf32>
    %500 = vector.extract_strided_slice %499 {offsets = [0, 32], sizes = [8, 32], strides = [1, 1]} : vector<8x64xf32> to vector<8x32xf32>
    %501 = vector.extract_strided_slice %499 {offsets = [0, 0], sizes = [8, 32], strides = [1, 1]} : vector<8x64xf32> to vector<8x32xf32>
    %502 = arith.addf %501, %9 : vector<8x32xf32>
    %cst_194 = arith.constant 0.000000e+00 : f32
    %503 = vector.broadcast %cst_194 : f32 to vector<8x32xf32>
    %504 = arith.cmpf ogt, %502, %503 : vector<8x32xf32>
    %cst_195 = arith.constant 2.000000e-01 : f32
    %505 = vector.broadcast %cst_195 : f32 to vector<8x32xf32>
    %506 = arith.mulf %505, %502 : vector<8x32xf32>
    %507 = arith.select %504, %502, %506 : vector<8x32xi1>, vector<8x32xf32>
    %508 = arith.truncf %507 : vector<8x32xf32> to vector<8x32xbf16>
    %c0_196 = arith.constant 0 : index
    %c0_197 = arith.constant 0 : index
    %509 = vector.load %arg9[%c0_196, %c0_197] : memref<32x48xbf16, #tpu.memory_space<vmem>>, vector<32x48xbf16>
    %cst_198 = arith.constant dense<0.000000e+00> : vector<8x48xf32>
    %510 = tpu.matmul %508, %509, %cst_198 {dimension_numbers = #tpu.dot_dimension_numbers<[1], [0], [0], [1], [0, 0, 1, 1], [], []>} : vector<8x32xbf16>, vector<32x48xbf16>, vector<8x48xf32> -> vector<8x48xf32>
    %511 = arith.addf %510, %12 : vector<8x48xf32>
    %512 = arith.index_cast %c4_i32 : i32 to index
    %c0_199 = arith.constant 0 : index
    %c0_200 = arith.constant 0 : index
    %513 = vector.load %arg16[%512, %c0_199, %c0_200] : memref<6x8x48xf32, #tpu.memory_space<vmem>>, vector<1x8x48xf32>
    %514 = vector.shape_cast %513 : vector<1x8x48xf32> to vector<8x48xf32>
    %515 = vector.shape_cast %511 : vector<8x48xf32> to vector<1x8x48xf32>
    tpu.vector_store %arg16[%512, %c0_199, %c0_200], %515 {strides = array<i32>} : memref<6x8x48xf32, #tpu.memory_space<vmem>>, vector<1x8x48xf32>,
    %516 = arith.index_cast %c4_i32 : i32 to index
    %c0_201 = arith.constant 0 : index
    %c0_202 = arith.constant 0 : index
    %517 = vector.load %arg17[%516, %c0_201, %c0_202] : memref<6x8x8xf32, #tpu.memory_space<vmem>>, vector<1x8x8xf32>
    %518 = vector.shape_cast %517 : vector<1x8x8xf32> to vector<8x8xf32>
    %519 = vector.shape_cast %451 : vector<8x8xf32> to vector<1x8x8xf32>
    tpu.vector_store %arg17[%516, %c0_201, %c0_202], %519 {strides = array<i32>} : memref<6x8x8xf32, #tpu.memory_space<vmem>>, vector<1x8x8xf32>,
    %cst_203 = arith.constant dense<0xFF800000> : vector<8xf32>
    %520 = vector.multi_reduction <maximumf>, %511, %cst_203 [1] : vector<8x48xf32> to vector<8xf32>
    %521 = vector.shape_cast %520 : vector<8xf32> to vector<8x1xf32>
    %522 = vector.broadcast %521 : vector<8x1xf32> to vector<8x48xf32>
    %523 = arith.cmpf oeq, %511, %522 : vector<8x48xf32>
    %c48_i32_204 = arith.constant 48 : i32
    %524 = vector.broadcast %c48_i32_204 : i32 to vector<8x48xi32>
    %525 = arith.select %523, %0, %524 : vector<8x48xi1>, vector<8x48xi32>
    %cst_205 = arith.constant dense<2147483647> : vector<8xi32>
    %526 = vector.multi_reduction <minsi>, %525, %cst_205 [1] : vector<8x48xi32> to vector<8xi32>
    %527 = vector.shape_cast %526 : vector<8xi32> to vector<8x1xi32>
    %528 = vector.broadcast %527 : vector<8x1xi32> to vector<8x48xi32>
    %529 = arith.cmpi eq, %0, %528 : vector<8x48xi32>
    %530 = arith.extui %529 : vector<8x48xi1> to vector<8x48xi32>
    %531 = arith.sitofp %530 : vector<8x48xi32> to vector<8x48xf32>
    %532 = arith.truncf %531 : vector<8x48xf32> to vector<8x48xbf16>
    %c5_i32 = arith.constant 5 : i32
    %c0_206 = arith.constant 0 : index
    %c0_207 = arith.constant 0 : index
    %c0_208 = arith.constant 0 : index
    %533 = vector.load %arg0[%c0_206, %c0_207, %c0_208] : memref<8x8x32xbf16, #tpu.memory_space<vmem>>, vector<8x8x32xbf16>
    %c0_209 = arith.constant 0 : index
    %c0_210 = arith.constant 0 : index
    %c0_211 = arith.constant 0 : index
    %534 = vector.load %arg1[%c0_209, %c0_210, %c0_211] : memref<8x1x8xf32, #tpu.memory_space<vmem>>, vector<8x1x8xf32>
    %535 = vector.shape_cast %500 : vector<8x32xf32> to vector<8x1x32xf32>
    %536 = arith.truncf %535 : vector<8x1x32xf32> to vector<8x1x32xbf16>
    "tpu.trace_start"() <{level = 10 : i32, message = "bqc,btc->bqt"}> : () -> ()
    %cst_212 = arith.constant dense<0.000000e+00> : vector<8x1x8xf32>
    %537 = tpu.matmul %536, %533, %cst_212 {dimension_numbers = #tpu.dot_dimension_numbers<[2], [2], [1], [1], [0, 0, 0, 1, 1, 1], [0], [0]>} : vector<8x1x32xbf16>, vector<8x8x32xbf16>, vector<8x1x8xf32> -> vector<8x1x8xf32>
    "tpu.trace_stop"() : () -> ()
    %538 = arith.addf %537, %534 : vector<8x1x8xf32>
    %cst_213 = arith.constant dense<0xFF800000> : vector<8x1xf32>
    %539 = vector.multi_reduction <maximumf>, %538, %cst_213 [2] : vector<8x1x8xf32> to vector<8x1xf32>
    %540 = vector.shape_cast %539 : vector<8x1xf32> to vector<8x1x1xf32>
    %541 = vector.broadcast %540 : vector<8x1x1xf32> to vector<8x1x8xf32>
    %542 = arith.subf %538, %541 : vector<8x1x8xf32>
    %543 = math.exp %542 : vector<8x1x8xf32>
    %cst_214 = arith.constant dense<0.000000e+00> : vector<8x1xf32>
    %544 = vector.multi_reduction <add>, %543, %cst_214 [2] : vector<8x1x8xf32> to vector<8x1xf32>
    %545 = vector.shape_cast %544 : vector<8x1xf32> to vector<8x1x1xf32>
    %546 = tpu.reciprocal %545 {approx = true} : vector<8x1x1xf32> -> vector<8x1x1xf32>
    %547 = vector.broadcast %546 : vector<8x1x1xf32> to vector<8x1x8xf32>
    %548 = arith.mulf %543, %547 : vector<8x1x8xf32>
    %549 = arith.truncf %548 : vector<8x1x8xf32> to vector<8x1x8xbf16>
    "tpu.trace_start"() <{level = 10 : i32, message = "bqt,btc->bqc"}> : () -> ()
    %cst_215 = arith.constant dense<0.000000e+00> : vector<8x1x32xf32>
    %550 = tpu.matmul %549, %533, %cst_215 {dimension_numbers = #tpu.dot_dimension_numbers<[2], [1], [1], [2], [0, 0, 0, 1, 1, 2], [0], [0]>} : vector<8x1x8xbf16>, vector<8x8x32xbf16>, vector<8x1x32xf32> -> vector<8x1x32xf32>
    "tpu.trace_stop"() : () -> ()
    %cst_216 = arith.constant dense<0.000000e+00> : vector<8x8xf32>
    %551 = vector.multi_reduction <add>, %548, %cst_216 [1] : vector<8x1x8xf32> to vector<8x8xf32>
    %cst_217 = arith.constant dense<0.000000e+00> : vector<8x32xf32>
    %552 = vector.multi_reduction <add>, %550, %cst_217 [1] : vector<8x1x32xf32> to vector<8x32xf32>
    %553 = tpu.concatenate %552, %475 in 1 : vector<8x32xf32>, vector<8x32xf32> -> vector<8x64xf32>
    %554 = arith.truncf %553 : vector<8x64xf32> to vector<8x64xbf16>
    %c0_218 = arith.constant 0 : index
    %c0_219 = arith.constant 0 : index
    %555 = vector.load %arg2[%c0_218, %c0_219] : memref<48x128xbf16, #tpu.memory_space<vmem>>, vector<48x128xbf16>
    %cst_220 = arith.constant dense<0.000000e+00> : vector<8x128xf32>
    %556 = tpu.matmul %532, %555, %cst_220 {dimension_numbers = #tpu.dot_dimension_numbers<[1], [0], [0], [1], [0, 0, 1, 1], [], []>} : vector<8x48xbf16>, vector<48x128xbf16>, vector<8x128xf32> -> vector<8x128xf32>
    %c0_221 = arith.constant 0 : index
    %c0_222 = arith.constant 0 : index
    %557 = vector.load %arg3[%c0_221, %c0_222] : memref<64x128xbf16, #tpu.memory_space<vmem>>, vector<64x128xbf16>
    %cst_223 = arith.constant dense<0.000000e+00> : vector<8x128xf32>
    %558 = tpu.matmul %554, %557, %cst_223 {dimension_numbers = #tpu.dot_dimension_numbers<[1], [0], [0], [1], [0, 0, 1, 1], [], []>} : vector<8x64xbf16>, vector<64x128xbf16>, vector<8x128xf32> -> vector<8x128xf32>
    %559 = arith.addf %556, %558 : vector<8x128xf32>
    %560 = arith.addf %559, %3 : vector<8x128xf32>
    %561 = arith.negf %560 : vector<8x128xf32>
    %562 = math.exp %561 : vector<8x128xf32>
    %cst_224 = arith.constant 1.000000e+00 : f32
    %563 = vector.broadcast %cst_224 : f32 to vector<8x128xf32>
    %564 = arith.addf %563, %562 : vector<8x128xf32>
    %565 = arith.divf %563, %564 : vector<8x128xf32>
    %566 = math.tanh %560 : vector<8x128xf32>
    %567 = vector.extract_strided_slice %565 {offsets = [0, 32], sizes = [8, 32], strides = [1, 1]} : vector<8x128xf32> to vector<8x32xf32>
    %568 = arith.mulf %567, %472 : vector<8x32xf32>
    %569 = vector.extract_strided_slice %565 {offsets = [0, 0], sizes = [8, 32], strides = [1, 1]} : vector<8x128xf32> to vector<8x32xf32>
    %570 = vector.extract_strided_slice %566 {offsets = [0, 64], sizes = [8, 32], strides = [1, 1]} : vector<8x128xf32> to vector<8x32xf32>
    %571 = arith.mulf %569, %570 : vector<8x32xf32>
    %572 = arith.addf %568, %571 : vector<8x32xf32>
    %573 = vector.extract_strided_slice %565 {offsets = [0, 96], sizes = [8, 32], strides = [1, 1]} : vector<8x128xf32> to vector<8x32xf32>
    %574 = math.tanh %572 : vector<8x32xf32>
    %575 = arith.mulf %573, %574 : vector<8x32xf32>
    %576 = tpu.concatenate %575, %495 in 1 : vector<8x32xf32>, vector<8x32xf32> -> vector<8x64xf32>
    %577 = arith.truncf %576 : vector<8x64xf32> to vector<8x64xbf16>
    %c0_225 = arith.constant 0 : index
    %c0_226 = arith.constant 0 : index
    %578 = vector.load %arg5[%c0_225, %c0_226] : memref<64x128xbf16, #tpu.memory_space<vmem>>, vector<64x128xbf16>
    %cst_227 = arith.constant dense<0.000000e+00> : vector<8x128xf32>
    %579 = tpu.matmul %577, %578, %cst_227 {dimension_numbers = #tpu.dot_dimension_numbers<[1], [0], [0], [1], [0, 0, 1, 1], [], []>} : vector<8x64xbf16>, vector<64x128xbf16>, vector<8x128xf32> -> vector<8x128xf32>
    %580 = arith.addf %579, %6 : vector<8x128xf32>
    %581 = arith.negf %580 : vector<8x128xf32>
    %582 = math.exp %581 : vector<8x128xf32>
    %cst_228 = arith.constant 1.000000e+00 : f32
    %583 = vector.broadcast %cst_228 : f32 to vector<8x128xf32>
    %584 = arith.addf %583, %582 : vector<8x128xf32>
    %585 = arith.divf %583, %584 : vector<8x128xf32>
    %586 = math.tanh %580 : vector<8x128xf32>
    %587 = vector.extract_strided_slice %585 {offsets = [0, 32], sizes = [8, 32], strides = [1, 1]} : vector<8x128xf32> to vector<8x32xf32>
    %588 = arith.mulf %587, %492 : vector<8x32xf32>
    %589 = vector.extract_strided_slice %585 {offsets = [0, 0], sizes = [8, 32], strides = [1, 1]} : vector<8x128xf32> to vector<8x32xf32>
    %590 = vector.extract_strided_slice %586 {offsets = [0, 64], sizes = [8, 32], strides = [1, 1]} : vector<8x128xf32> to vector<8x32xf32>
    %591 = arith.mulf %589, %590 : vector<8x32xf32>
    %592 = arith.addf %588, %591 : vector<8x32xf32>
    %593 = vector.extract_strided_slice %585 {offsets = [0, 96], sizes = [8, 32], strides = [1, 1]} : vector<8x128xf32> to vector<8x32xf32>
    %594 = math.tanh %592 : vector<8x32xf32>
    %595 = arith.mulf %593, %594 : vector<8x32xf32>
    %596 = tpu.concatenate %595, %552 in 1 : vector<8x32xf32>, vector<8x32xf32> -> vector<8x64xf32>
    %597 = arith.truncf %596 : vector<8x64xf32> to vector<8x64xbf16>
    %c0_229 = arith.constant 0 : index
    %c0_230 = arith.constant 0 : index
    %598 = vector.load %arg7[%c0_229, %c0_230] : memref<64x64xbf16, #tpu.memory_space<vmem>>, vector<64x64xbf16>
    %cst_231 = arith.constant dense<0.000000e+00> : vector<8x64xf32>
    %599 = tpu.matmul %597, %598, %cst_231 {dimension_numbers = #tpu.dot_dimension_numbers<[1], [0], [0], [1], [0, 0, 1, 1], [], []>} : vector<8x64xbf16>, vector<64x64xbf16>, vector<8x64xf32> -> vector<8x64xf32>
    %600 = vector.extract_strided_slice %599 {offsets = [0, 32], sizes = [8, 32], strides = [1, 1]} : vector<8x64xf32> to vector<8x32xf32>
    %601 = vector.extract_strided_slice %599 {offsets = [0, 0], sizes = [8, 32], strides = [1, 1]} : vector<8x64xf32> to vector<8x32xf32>
    %602 = arith.addf %601, %9 : vector<8x32xf32>
    %cst_232 = arith.constant 0.000000e+00 : f32
    %603 = vector.broadcast %cst_232 : f32 to vector<8x32xf32>
    %604 = arith.cmpf ogt, %602, %603 : vector<8x32xf32>
    %cst_233 = arith.constant 2.000000e-01 : f32
    %605 = vector.broadcast %cst_233 : f32 to vector<8x32xf32>
    %606 = arith.mulf %605, %602 : vector<8x32xf32>
    %607 = arith.select %604, %602, %606 : vector<8x32xi1>, vector<8x32xf32>
    %608 = arith.truncf %607 : vector<8x32xf32> to vector<8x32xbf16>
    %c0_234 = arith.constant 0 : index
    %c0_235 = arith.constant 0 : index
    %609 = vector.load %arg9[%c0_234, %c0_235] : memref<32x48xbf16, #tpu.memory_space<vmem>>, vector<32x48xbf16>
    %cst_236 = arith.constant dense<0.000000e+00> : vector<8x48xf32>
    %610 = tpu.matmul %608, %609, %cst_236 {dimension_numbers = #tpu.dot_dimension_numbers<[1], [0], [0], [1], [0, 0, 1, 1], [], []>} : vector<8x32xbf16>, vector<32x48xbf16>, vector<8x48xf32> -> vector<8x48xf32>
    %611 = arith.addf %610, %12 : vector<8x48xf32>
    %612 = arith.index_cast %c5_i32 : i32 to index
    %c0_237 = arith.constant 0 : index
    %c0_238 = arith.constant 0 : index
    %613 = vector.load %arg16[%612, %c0_237, %c0_238] : memref<6x8x48xf32, #tpu.memory_space<vmem>>, vector<1x8x48xf32>
    %614 = vector.shape_cast %613 : vector<1x8x48xf32> to vector<8x48xf32>
    %615 = vector.shape_cast %611 : vector<8x48xf32> to vector<1x8x48xf32>
    tpu.vector_store %arg16[%612, %c0_237, %c0_238], %615 {strides = array<i32>} : memref<6x8x48xf32, #tpu.memory_space<vmem>>, vector<1x8x48xf32>,
    %616 = arith.index_cast %c5_i32 : i32 to index
    %c0_239 = arith.constant 0 : index
    %c0_240 = arith.constant 0 : index
    %617 = vector.load %arg17[%616, %c0_239, %c0_240] : memref<6x8x8xf32, #tpu.memory_space<vmem>>, vector<1x8x8xf32>
    %618 = vector.shape_cast %617 : vector<1x8x8xf32> to vector<8x8xf32>
    %619 = vector.shape_cast %551 : vector<8x8xf32> to vector<1x8x8xf32>
    tpu.vector_store %arg17[%616, %c0_239, %c0_240], %619 {strides = array<i32>} : memref<6x8x8xf32, #tpu.memory_space<vmem>>, vector<1x8x8xf32>,
    %cst_241 = arith.constant dense<0xFF800000> : vector<8xf32>
    %620 = vector.multi_reduction <maximumf>, %611, %cst_241 [1] : vector<8x48xf32> to vector<8xf32>
    %621 = vector.shape_cast %620 : vector<8xf32> to vector<8x1xf32>
    %622 = vector.broadcast %621 : vector<8x1xf32> to vector<8x48xf32>
    %623 = arith.cmpf oeq, %611, %622 : vector<8x48xf32>
    %c48_i32_242 = arith.constant 48 : i32
    %624 = vector.broadcast %c48_i32_242 : i32 to vector<8x48xi32>
    %625 = arith.select %623, %0, %624 : vector<8x48xi1>, vector<8x48xi32>
    %cst_243 = arith.constant dense<2147483647> : vector<8xi32>
    %626 = vector.multi_reduction <minsi>, %625, %cst_243 [1] : vector<8x48xi32> to vector<8xi32>
    %627 = vector.shape_cast %626 : vector<8xi32> to vector<8x1xi32>
    %628 = vector.broadcast %627 : vector<8x1xi32> to vector<8x48xi32>
    %629 = arith.cmpi eq, %0, %628 : vector<8x48xi32>
    %630 = arith.extui %629 : vector<8x48xi1> to vector<8x48xi32>
    %631 = arith.sitofp %630 : vector<8x48xi32> to vector<8x48xf32>
    %632 = arith.truncf %631 : vector<8x48xf32> to vector<8x48xbf16>
    %c6_i32 = arith.constant 6 : i32
    return
  }
}

</mosaic_0001>

<llo_original>
// kernel: tpu_custom_call.1
$region0: #{tpu_custom_call.1}
  #allocation0 [shape = 'u32[]', space=smem, size = 0x4, offset = 0x4, fixed_abs, tag = 'smem constant byte address 0x4 - core index']
  #allocation1 [shape = 'u32[144,128]{1,0:T(1,128)}', space=vmem, size = 0x12000, scoped, tag = 'internal scratch']
  %s0 = inlined_call_operand.hbm [shape: bf16[8,8,32], index: 0, kind: input, shape index: {}]
  %s1 = inlined_call_operand.hbm [shape: f32[8,1,8], index: 1, kind: input, shape index: {}]
  %s2 = inlined_call_operand.hbm [shape: bf16[48,128], index: 2, kind: input, shape index: {}]
  %s3 = inlined_call_operand.hbm [shape: bf16[64,128], index: 3, kind: input, shape index: {}]
  %s4 = inlined_call_operand.hbm [shape: f32[1,128], index: 4, kind: input, shape index: {}]
  %s5 = inlined_call_operand.hbm [shape: bf16[64,128], index: 5, kind: input, shape index: {}]
  %s6 = inlined_call_operand.hbm [shape: f32[1,128], index: 6, kind: input, shape index: {}]
  %s7 = inlined_call_operand.hbm [shape: bf16[64,64], index: 7, kind: input, shape index: {}]
  %s8 = inlined_call_operand.hbm [shape: f32[1,32], index: 8, kind: input, shape index: {}]
  %s9 = inlined_call_operand.vmem [shape: bf16[32,48], index: 9, kind: input, shape index: {}]
  %s10 = inlined_call_operand.vmem [shape: f32[1,48], index: 10, kind: input, shape index: {}]
  %s11 = inlined_call_operand.vmem [shape: f32[1,32], index: 11, kind: input, shape index: {}]
  %s12 = inlined_call_operand.vmem [shape: f32[1,32], index: 12, kind: input, shape index: {}]
  %s13 = inlined_call_operand.vmem [shape: f32[1,32], index: 13, kind: input, shape index: {}]
  %s14 = inlined_call_operand.vmem [shape: f32[1,32], index: 14, kind: input, shape index: {}]
  %s15 = inlined_call_operand.vmem [shape: f32[1,32], index: 15, kind: input, shape index: {}]
  %s16 = inlined_call_operand.hbm [shape: f32[6,8,48], index: 16, kind: output, shape index: {0}]
  %s17 = inlined_call_operand.hbm [shape: f32[6,8,8], index: 17, kind: output, shape index: {1}]
  %18 = xla_tuple %s16, %s17
  %s19 = sld [smem:[#allocation0]]
  $region118: #{tpu_custom_call.1} parent=0
    _
  %s21 = ssub.s32 1, %s19
  %s22 = scalar_select 0, %s21, %s19
  $region1: #{tpu_custom_call.1} parent=0
    #allocation2 [shape = 'u8[16384]{0}', space=vmem, size = 0x4000, scoped, tag = 'input window, operand 0, single buffered']
    #allocation3 [shape = 's32[1]{0}', space=sflag, size = 0x4, scoped, tag = 'scoped memory for tpu_custom_call.1']
    #allocation4 [shape = 's32[1]{0}', space=sflag, size = 0x4, scoped, tag = 'scoped memory for tpu_custom_call.1']
    #allocation5 [shape = 'u8[4096]{0}', space=vmem, size = 0x1000, scoped, tag = 'input window, operand 1, single buffered']
    #allocation6 [shape = 's32[1]{0}', space=sflag, size = 0x4, scoped, tag = 'scoped memory for tpu_custom_call.1']
    #allocation7 [shape = 'u8[12288]{0}', space=vmem, size = 0x3000, scoped, tag = 'input window, operand 2, single buffered']
    #allocation8 [shape = 'u8[16384]{0}', space=vmem, size = 0x4000, scoped, tag = 'input window, operand 3, single buffered']
    #allocation9 [shape = 's32[1]{0}', space=sflag, size = 0x4, scoped, tag = 'scoped memory for tpu_custom_call.1']
    #allocation10 [shape = 'u8[512]{0}', space=vmem, size = 0x400, scoped, tag = 'input window, operand 4, single buffered']
    #allocation11 [shape = 'u8[16384]{0}', space=vmem, size = 0x4000, scoped, tag = 'input window, operand 5, single buffered']
    #allocation12 [shape = 's32[1]{0}', space=sflag, size = 0x4, scoped, tag = 'scoped memory for tpu_custom_call.1']
    #allocation13 [shape = 'u8[512]{0}', space=vmem, size = 0x400, scoped, tag = 'input window, operand 6, single buffered']
    #allocation14 [shape = 'u8[16384]{0}', space=vmem, size = 0x4000, scoped, tag = 'input window, operand 7, single buffered']
    #allocation15 [shape = 's32[1]{0}', space=sflag, size = 0x4, scoped, tag = 'scoped memory for tpu_custom_call.1']
    #allocation16 [shape = 'u8[512]{0}', space=vmem, size = 0x400, scoped, tag = 'input window, operand 8, single buffered']
    #allocation17 [shape = 'u8[24576]{0}', space=vmem, size = 0x6000, scoped, tag = 'output window, operand 0, single buffered']
    #allocation18 [shape = 'u8[24576]{0}', space=vmem, size = 0x6000, scoped, tag = 'output window, operand 1, single buffered']
    #allocation19 [shape = 's32[1]{0}', space=sflag, size = 0x4, scoped, tag = 'scoped memory for tpu_custom_call.1']
    %23 = vsyncpa [#allocation3], 0
    %24 = vsyncpa [#allocation6], 0
    %25 = vsyncpa [#allocation9], 0
    %26 = vsyncpa [#allocation12], 0
    %27 = vsyncpa [#allocation15], 0
    %28 = vsyncpa [#allocation4], 0
    %29 = vsyncpa [#allocation19], 0
    // Predicated region
    $region2: #{tpu_custom_call.1} parent=1 // pred_check
      _
    $region3: #{tpu_custom_call.1} parent=1 // pred_check_branch
      %31 = sbr.rel (0) target = $region5
    $region4: #{tpu_custom_call.1} parent=1 // pred_region
      %s33 = ssub.s32 512, 512
      %34 = vsyncadd [#allocation3], %s33
      %s35 = sshll.u32 [#allocation2], 4
      %s36 = int_to_ptr.vmem [resolvable:$true] %s35
      %41 = dma.hbm_to_vmem [thread:$0]  %s0, 512, %s36, [#allocation3], 64, 64, 4
    $region5: #{tpu_custom_call.1} parent=1 // pred_fallthru
      _
    // Predicated region
    $region6: #{tpu_custom_call.1} parent=1 // pred_check
      _
    $region7: #{tpu_custom_call.1} parent=1 // pred_check_branch
      %43 = sbr.rel (0) target = $region9
    $region8: #{tpu_custom_call.1} parent=1 // pred_region
      %s45 = ssub.s32 128, 128
      %46 = vsyncadd [#allocation6], %s45
      %s47 = sshll.u32 [#allocation5], 4
      %s48 = int_to_ptr.vmem [resolvable:$true] %s47
      %53 = dma.hbm_to_vmem [thread:$0]  %s1, 128, %s48, [#allocation6], 16, 16, 1
    $region9: #{tpu_custom_call.1} parent=1 // pred_fallthru
      _
    // Predicated region
    $region10: #{tpu_custom_call.1} parent=1 // pred_check
      _
    $region11: #{tpu_custom_call.1} parent=1 // pred_check_branch
      %55 = sbr.rel (0) target = $region13
    $region12: #{tpu_custom_call.1} parent=1 // pred_region
      %s57 = ssub.s32 384, 384
      %58 = vsyncadd [#allocation6], %s57
      %s59 = sshll.u32 [#allocation7], 4
      %s60 = int_to_ptr.vmem [resolvable:$true] %s59
      %65 = dma.hbm_to_vmem [thread:$0]  %s2, 384, %s60, [#allocation6], 64, 64, 4
    $region13: #{tpu_custom_call.1} parent=1 // pred_fallthru
      _
    // Predicated region
    $region14: #{tpu_custom_call.1} parent=1 // pred_check
      _
    $region15: #{tpu_custom_call.1} parent=1 // pred_check_branch
      %67 = sbr.rel (0) target = $region17
    $region16: #{tpu_custom_call.1} parent=1 // pred_region
      %s69 = ssub.s32 512, 512
      %70 = vsyncadd [#allocation9], %s69
      %s71 = sshll.u32 [#allocation8], 4
      %s72 = int_to_ptr.vmem [resolvable:$true] %s71
      %77 = dma.hbm_to_vmem [thread:$0]  %s3, 512, %s72, [#allocation9], 64, 64, 4
    $region17: #{tpu_custom_call.1} parent=1 // pred_fallthru
      _
    // Predicated region
    $region18: #{tpu_custom_call.1} parent=1 // pred_check
      _
    $region19: #{tpu_custom_call.1} parent=1 // pred_check_branch
      %79 = sbr.rel (0) target = $region21
    $region20: #{tpu_custom_call.1} parent=1 // pred_region
      %s81 = ssub.s32 16, 16
      %82 = vsyncadd [#allocation9], %s81
      %s84 = sshll.u32 [#allocation10], 4
      %s85 = int_to_ptr.vmem [resolvable:$true] %s84
      %87 = dma.hbm_to_vmem [thread:$0]  %s4, 16, %s85, [#allocation9]
    $region21: #{tpu_custom_call.1} parent=1 // pred_fallthru
      _
    // Predicated region
    $region22: #{tpu_custom_call.1} parent=1 // pred_check
      _
    $region23: #{tpu_custom_call.1} parent=1 // pred_check_branch
      %89 = sbr.rel (0) target = $region25
    $region24: #{tpu_custom_call.1} parent=1 // pred_region
      %s91 = ssub.s32 512, 512
      %92 = vsyncadd [#allocation12], %s91
      %s93 = sshll.u32 [#allocation11], 4
      %s94 = int_to_ptr.vmem [resolvable:$true] %s93
      %99 = dma.hbm_to_vmem [thread:$0]  %s5, 512, %s94, [#allocation12], 64, 64, 4
    $region25: #{tpu_custom_call.1} parent=1 // pred_fallthru
      _
    // Predicated region
    $region26: #{tpu_custom_call.1} parent=1 // pred_check
      _
    $region27: #{tpu_custom_call.1} parent=1 // pred_check_branch
      %101 = sbr.rel (0) target = $region29
    $region28: #{tpu_custom_call.1} parent=1 // pred_region
      %s103 = ssub.s32 16, 16
      %104 = vsyncadd [#allocation12], %s103
      %s106 = sshll.u32 [#allocation13], 4
      %s107 = int_to_ptr.vmem [resolvable:$true] %s106
      %109 = dma.hbm_to_vmem [thread:$0]  %s6, 16, %s107, [#allocation12]
    $region29: #{tpu_custom_call.1} parent=1 // pred_fallthru
      _
    // Predicated region
    $region30: #{tpu_custom_call.1} parent=1 // pred_check
      _
    $region31: #{tpu_custom_call.1} parent=1 // pred_check_branch
      %111 = sbr.rel (0) target = $region33
    $region32: #{tpu_custom_call.1} parent=1 // pred_region
      %s113 = ssub.s32 512, 512
      %114 = vsyncadd [#allocation15], %s113
      %s115 = sshll.u32 [#allocation14], 4
      %s116 = int_to_ptr.vmem [resolvable:$true] %s115
      %121 = dma.hbm_to_vmem [thread:$0]  %s7, 512, %s116, [#allocation15], 64, 64, 4
    $region33: #{tpu_custom_call.1} parent=1 // pred_fallthru
      _
    // Predicated region
    $region34: #{tpu_custom_call.1} parent=1 // pred_check
      _
    $region35: #{tpu_custom_call.1} parent=1 // pred_check_branch
      %123 = sbr.rel (0) target = $region37
    $region36: #{tpu_custom_call.1} parent=1 // pred_region
      %s125 = ssub.s32 16, 16
      %126 = vsyncadd [#allocation15], %s125
      %s128 = sshll.u32 [#allocation16], 4
      %s129 = int_to_ptr.vmem [resolvable:$true] %s128
      %131 = dma.hbm_to_vmem [thread:$0]  %s8, 16, %s129, [#allocation15]
    $region37: #{tpu_custom_call.1} parent=1 // pred_fallthru
      _
    // Predicated region
    $region38: #{tpu_custom_call.1} parent=1 // pred_check
      _
    $region39: #{tpu_custom_call.1} parent=1 // pred_check_branch
      %133 = sbr.rel (0) target = $region41
    $region40: #{tpu_custom_call.1} parent=1 // pred_region
      _
    $region41: #{tpu_custom_call.1} parent=1 // pred_fallthru
      _
    // Predicated region
    $region42: #{tpu_custom_call.1} parent=1 // pred_check
      _
    $region43: #{tpu_custom_call.1} parent=1 // pred_check_branch
      %135 = sbr.rel (0) target = $region45
    $region44: #{tpu_custom_call.1} parent=1 // pred_region
      _
    $region45: #{tpu_custom_call.1} parent=1 // pred_fallthru
      _
    // Predicated region
    $region46: #{tpu_custom_call.1} parent=1 // pred_check
      _
    $region47: #{tpu_custom_call.1} parent=1 // pred_check_branch
      %137 = sbr.rel (0) target = $region49
    $region48: #{tpu_custom_call.1} parent=1 // pred_region
      _
    $region49: #{tpu_custom_call.1} parent=1 // pred_fallthru
      _
    // Predicated region
    $region50: #{tpu_custom_call.1} parent=1 // pred_check
      _
    $region51: #{tpu_custom_call.1} parent=1 // pred_check_branch
      %139 = sbr.rel (0) target = $region53
    $region52: #{tpu_custom_call.1} parent=1 // pred_region
      _
    $region53: #{tpu_custom_call.1} parent=1 // pred_fallthru
      _
    // Predicated region
    $region54: #{tpu_custom_call.1} parent=1 // pred_check
      _
    $region55: #{tpu_custom_call.1} parent=1 // pred_check_branch
      %141 = sbr.rel (0) target = $region57
    $region56: #{tpu_custom_call.1} parent=1 // pred_region
      _
    $region57: #{tpu_custom_call.1} parent=1 // pred_fallthru
      _
    // Predicated region
    $region58: #{tpu_custom_call.1} parent=1 // pred_check
      _
    $region59: #{tpu_custom_call.1} parent=1 // pred_check_branch
      %143 = sbr.rel (0) target = $region61
    $region60: #{tpu_custom_call.1} parent=1 // pred_region
      _
    $region61: #{tpu_custom_call.1} parent=1 // pred_fallthru
      _
    // Predicated region
    $region62: #{tpu_custom_call.1} parent=1 // pred_check
      _
    $region63: #{tpu_custom_call.1} parent=1 // pred_check_branch
      %145 = sbr.rel (0) target = $region65
    $region64: #{tpu_custom_call.1} parent=1 // pred_region
      _
    $region65: #{tpu_custom_call.1} parent=1 // pred_fallthru
      _
    // Predicated region
    $region66: #{tpu_custom_call.1} parent=1 // pred_check
      _
    $region67: #{tpu_custom_call.1} parent=1 // pred_check_branch
      %147 = sbr.rel (0) target = $region69
    $region68: #{tpu_custom_call.1} parent=1 // pred_region
      %148 = dma.done [#allocation3], 512
    $region69: #{tpu_custom_call.1} parent=1 // pred_fallthru
      _
    // Predicated region
    $region70: #{tpu_custom_call.1} parent=1 // pred_check
      _
    $region71: #{tpu_custom_call.1} parent=1 // pred_check_branch
      %150 = sbr.rel (0) target = $region73
    $region72: #{tpu_custom_call.1} parent=1 // pred_region
      %151 = dma.done [#allocation6], 128
    $region73: #{tpu_custom_call.1} parent=1 // pred_fallthru
      _
    // Predicated region
    $region74: #{tpu_custom_call.1} parent=1 // pred_check
      _
    $region75: #{tpu_custom_call.1} parent=1 // pred_check_branch
      %153 = sbr.rel (0) target = $region77
    $region76: #{tpu_custom_call.1} parent=1 // pred_region
      %154 = dma.done [#allocation6], 384
    $region77: #{tpu_custom_call.1} parent=1 // pred_fallthru
      _
    // Predicated region
    $region78: #{tpu_custom_call.1} parent=1 // pred_check
      _
    $region79: #{tpu_custom_call.1} parent=1 // pred_check_branch
      %156 = sbr.rel (0) target = $region81
    $region80: #{tpu_custom_call.1} parent=1 // pred_region
      %157 = dma.done [#allocation9], 512
    $region81: #{tpu_custom_call.1} parent=1 // pred_fallthru
      _
    // Predicated region
    $region82: #{tpu_custom_call.1} parent=1 // pred_check
      _
    $region83: #{tpu_custom_call.1} parent=1 // pred_check_branch
      %159 = sbr.rel (0) target = $region85
    $region84: #{tpu_custom_call.1} parent=1 // pred_region
      %160 = dma.done [#allocation9], 16
    $region85: #{tpu_custom_call.1} parent=1 // pred_fallthru
      _
    // Predicated region
    $region86: #{tpu_custom_call.1} parent=1 // pred_check
      _
    $region87: #{tpu_custom_call.1} parent=1 // pred_check_branch
      %162 = sbr.rel (0) target = $region89
    $region88: #{tpu_custom_call.1} parent=1 // pred_region
      %163 = dma.done [#allocation12], 512
    $region89: #{tpu_custom_call.1} parent=1 // pred_fallthru
      _
    // Predicated region
    $region90: #{tpu_custom_call.1} parent=1 // pred_check
      _
    $region91: #{tpu_custom_call.1} parent=1 // pred_check_branch
      %165 = sbr.rel (0) target = $region93
    $region92: #{tpu_custom_call.1} parent=1 // pred_region
      %166 = dma.done [#allocation12], 16
    $region93: #{tpu_custom_call.1} parent=1 // pred_fallthru
      _
    // Predicated region
    $region94: #{tpu_custom_call.1} parent=1 // pred_check
      _
    $region95: #{tpu_custom_call.1} parent=1 // pred_check_branch
      %168 = sbr.rel (0) target = $region97
    $region96: #{tpu_custom_call.1} parent=1 // pred_region
      %169 = dma.done [#allocation15], 512
    $region97: #{tpu_custom_call.1} parent=1 // pred_fallthru
      _
    // Predicated region
    $region98: #{tpu_custom_call.1} parent=1 // pred_check
      _
    $region99: #{tpu_custom_call.1} parent=1 // pred_check_branch
      %171 = sbr.rel (0) target = $region101
    $region100: #{tpu_custom_call.1} parent=1 // pred_region
      %172 = dma.done [#allocation15], 16
    $region101: #{tpu_custom_call.1} parent=1 // pred_fallthru
      _
    %v174 = vlaneseq
    %v175 = vand.u32 %v174, 127
    %v176 = vld [vmem:[#allocation10] sm:$0x1]
    %v178 = vlaneseq
    %v179 = vshrl.u32 %v178, 7
    %v180 = vsub.s32 0, %v179
    %v181 = vrot.slane %v176, %v180
    %v183 = vld [vmem:[#allocation13] sm:$0x1]
    %v185 = vlaneseq
    %v186 = vshrl.u32 %v185, 7
    %v187 = vsub.s32 0, %v186
    %v188 = vrot.slane %v183, %v187
    %v190 = vld [vmem:[#allocation16] sm:$0x1]
    %v192 = vlaneseq
    %v193 = vshrl.u32 %v192, 7
    %v194 = vsub.s32 0, %v193
    %v195 = vrot.slane %v190, %v194
    %v197 = vld [vmem:[%s10] sm:$0x1]
    %v199 = vlaneseq
    %v200 = vshrl.u32 %v199, 7
    %v201 = vsub.s32 0, %v200
    %v202 = vrot.slane %v197, %v201
    %v204 = vld [vmem:[%s12] sm:$0x1]
    %v206 = vlaneseq
    %v207 = vshrl.u32 %v206, 7
    %v208 = vsub.s32 0, %v207
    %v209 = vrot.slane %v204, %v208
    %v210 = vld [vmem:[%s13] sm:$0x1]
    %v212 = vlaneseq
    %v213 = vshrl.u32 %v212, 7
    %v214 = vsub.s32 0, %v213
    %v215 = vrot.slane %v210, %v214
    %v216 = vld [vmem:[%s14] sm:$0x1]
    %v218 = vlaneseq
    %v219 = vshrl.u32 %v218, 7
    %v220 = vsub.s32 0, %v219
    %v221 = vrot.slane %v216, %v220
    %v222 = vld [vmem:[%s15] sm:$0x1]
    %v224 = vlaneseq
    %v225 = vshrl.u32 %v224, 7
    %v226 = vsub.s32 0, %v225
    %v227 = vrot.slane %v222, %v226
    %v228 = vld [vmem:[%s11] sm:$0x1]
    %v230 = vlaneseq
    %v231 = vshrl.u32 %v230, 7
    %v232 = vsub.s32 0, %v231
    %v233 = vrot.slane %v228, %v232
    %vm234 = vcmp.eq.s32.totalorder %v175, 0
    %v235 = vsel %vm234, 1, 0
    %v236 = vcvt.s32.f32 %v235
    %v237 = vpack.c.bf16 %v236, %v236
    %v238 = vld [vmem:[#allocation2] sm:$0xf]
    %v239 = vld [vmem:[#allocation2 + $0x4] sm:$0xf]
    %v240 = vld [vmem:[#allocation2 + $0x8] sm:$0xf]
    %v241 = vld [vmem:[#allocation2 + $0xc] sm:$0xf]
    %v242 = vld [vmem:[#allocation2 + $0x10] sm:$0xf]
    %v243 = vld [vmem:[#allocation2 + $0x14] sm:$0xf]
    %v244 = vld [vmem:[#allocation2 + $0x18] sm:$0xf]
    %v245 = vld [vmem:[#allocation2 + $0x1c] sm:$0xf]
    %v246 = vld [vmem:[#allocation5] sm:$0x1]
    %v247 = vld [vmem:[#allocation5 + $0x1] sm:$0x1]
    %v248 = vld [vmem:[#allocation5 + $0x2] sm:$0x1]
    %v249 = vld [vmem:[#allocation5 + $0x3] sm:$0x1]
    %v250 = vld [vmem:[#allocation5 + $0x4] sm:$0x1]
    %v251 = vld [vmem:[#allocation5 + $0x5] sm:$0x1]
    %v252 = vld [vmem:[#allocation5 + $0x6] sm:$0x1]
    %v253 = vld [vmem:[#allocation5 + $0x7] sm:$0x1]
    %v254 = vcombine.high %v233, %v233
    %v256 = vunpack.c.l.s4 1966171168
    %v257 = vunpack.c.0.s8 %v256
    %v258 = vlaneseq
    %v259 = vshrl.u32 %v258, 7
    %v260 = vsub.s32 %v257, %v259
    %v261 = vrot.slane %v233, %v260
    %v263 = vunpack.c.l.s4 1966171168
    %v264 = vunpack.c.0.s8 %v263
    %v265 = vlaneseq
    %v266 = vshrl.u32 %v265, 7
    %v267 = vsub.s32 %v264, %v266
    %v268 = vrot.slane %v254, %v267
    %v269 = vcombine.high %v261, %v261
    %v270 = vcombine.high %v268, %v268
    %v272 = vunpack.c.l.s4 1966171168
    %v273 = vunpack.c.0.s8 %v272
    %v274 = vlaneseq
    %v275 = vshrl.u32 %v274, 7
    %v276 = vsub.s32 %v273, %v275
    %v277 = vrot.slane %v261, %v276
    %v279 = vunpack.c.l.s4 1966171168
    %v280 = vunpack.c.0.s8 %v279
    %v281 = vlaneseq
    %v282 = vshrl.u32 %v281, 7
    %v283 = vsub.s32 %v280, %v282
    %v284 = vrot.slane %v268, %v283
    %v286 = vunpack.c.l.s4 1966171168
    %v287 = vunpack.c.0.s8 %v286
    %v288 = vlaneseq
    %v289 = vshrl.u32 %v288, 7
    %v290 = vsub.s32 %v287, %v289
    %v291 = vrot.slane %v269, %v290
    %v293 = vunpack.c.l.s4 1966171168
    %v294 = vunpack.c.0.s8 %v293
    %v295 = vlaneseq
    %v296 = vshrl.u32 %v295, 7
    %v297 = vsub.s32 %v294, %v296
    %v298 = vrot.slane %v270, %v297
    %v299 = vcombine.high %v277, %v277
    %v300 = vcombine.high %v284, %v284
    %v301 = vcombine.high %v291, %v291
    %v302 = vcombine.high %v298, %v298
    %v311 = vpack.c.bf16 %v277, %v277
    %v312 = vpack.c.bf16 %v291, %v291
    %v313 = vpack.c.bf16 %v299, %v299
    %v314 = vpack.c.bf16 %v301, %v301
    %v315 = vpack.c.bf16 %v284, %v284
    %v316 = vpack.c.bf16 %v298, %v298
    %v317 = vpack.c.bf16 %v300, %v300
    %v318 = vpack.c.bf16 %v302, %v302
    %vm319 = vcmask 261120
    %v321 = vsel %vm319, %v311, 0
    %v324 = vsel %vm319, %v238, 0
    %326 = vmatprep.subr.bf16.mxu0 0
    %327 = vmatpush1.bf16.xpose.msra.mxu0 0
    %328 = vmatprep.subr.bf16.mxu0 0
    %329 = vmatpush1.bf16.xpose.msra.mxu0 0
    %330 = vmatprep.subr.bf16.mxu0 0
    %331 = vmatpush1.bf16.xpose.msra.mxu0 0
    %332 = vmatprep.subr.bf16.mxu0 0
    %333 = vmatpush1.bf16.xpose.msra.mxu0 0
    %334 = vmatprep.subr.bf16.mxu0 0
    %335 = vmatpush1.bf16.xpose.msra.mxu0 0
    %336 = vmatprep.subr.bf16.mxu0 0
    %337 = vmatpush1.bf16.xpose.msra.mxu0 0
    %338 = vmatprep.subr.bf16.mxu0 0
    %339 = vmatpush1.bf16.xpose.msra.mxu0 0
    %340 = vmatprep.subr.bf16.mxu0 0
    %341 = vmatpush1.bf16.xpose.msra.mxu0 %v324
    %342 = vmatprep.subr.bf16.mxu0 0
    %343 = vmatpush2.bf16.xpose.msra.mxu0 0
    %344 = vmatprep.subr.bf16.mxu0 0
    %345 = vmatpush2.bf16.xpose.msra.mxu0 0
    %346 = vmatprep.subr.bf16.mxu0 0
    %347 = vmatpush2.bf16.xpose.msra.mxu0 0
    %348 = vmatprep.subr.bf16.mxu0 0
    %349 = vmatpush2.bf16.xpose.msra.mxu0 0
    %350 = vmatprep.subr.bf16.mxu0 0
    %351 = vmatpush2.bf16.xpose.msra.mxu0 0
    %352 = vmatprep.subr.bf16.mxu0 0
    %353 = vmatpush2.bf16.xpose.msra.mxu0 0
    %354 = vmatprep.subr.bf16.mxu0 0
    %355 = vmatpush2.bf16.xpose.msra.mxu0 0
    %356 = vmatprep.subr.bf16.mxu0 0
    %357 = vmatpush2.bf16.xpose.msra.mxu0 0
    %358 = vmatprep.mubr.bf16.mxu0 0
    %359 = vmatmul.mubr.bf16.gmra.mxu0 %v321
    %v360 = vpop.f32.mrf.mxu0
    %v361 = vadd.f32 %v246, %v360
    %v362 = vpop.f32.mrf.mxu0
    %v363 = vpop.f32.mrf.mxu0
    %v364 = vpop.f32.mrf.mxu0
    %365 = vdwg.mxu0
    %v367 = vsel %vm319, %v312, 0
    %v370 = vsel %vm319, %v239, 0
    %372 = vmatprep.subr.bf16.mxu0 0
    %373 = vmatpush1.bf16.xpose.msra.mxu0 0
    %374 = vmatprep.subr.bf16.mxu0 0
    %375 = vmatpush1.bf16.xpose.msra.mxu0 0
    %376 = vmatprep.subr.bf16.mxu0 0
    %377 = vmatpush1.bf16.xpose.msra.mxu0 0
    %378 = vmatprep.subr.bf16.mxu0 0
    %379 = vmatpush1.bf16.xpose.msra.mxu0 0
    %380 = vmatprep.subr.bf16.mxu0 0
    %381 = vmatpush1.bf16.xpose.msra.mxu0 0
    %382 = vmatprep.subr.bf16.mxu0 0
    %383 = vmatpush1.bf16.xpose.msra.mxu0 0
    %384 = vmatprep.subr.bf16.mxu0 0
    %385 = vmatpush1.bf16.xpose.msra.mxu0 0
    %386 = vmatprep.subr.bf16.mxu0 0
    %387 = vmatpush1.bf16.xpose.msra.mxu0 %v370
    %388 = vmatprep.subr.bf16.mxu0 0
    %389 = vmatpush2.bf16.xpose.msra.mxu0 0
    %390 = vmatprep.subr.bf16.mxu0 0
    %391 = vmatpush2.bf16.xpose.msra.mxu0 0
    %392 = vmatprep.subr.bf16.mxu0 0
    %393 = vmatpush2.bf16.xpose.msra.mxu0 0
    %394 = vmatprep.subr.bf16.mxu0 0
    %395 = vmatpush2.bf16.xpose.msra.mxu0 0
    %396 = vmatprep.subr.bf16.mxu0 0
    %397 = vmatpush2.bf16.xpose.msra.mxu0 0
    %398 = vmatprep.subr.bf16.mxu0 0
    %399 = vmatpush2.bf16.xpose.msra.mxu0 0
    %400 = vmatprep.subr.bf16.mxu0 0
    %401 = vmatpush2.bf16.xpose.msra.mxu0 0
    %402 = vmatprep.subr.bf16.mxu0 0
    %403 = vmatpush2.bf16.xpose.msra.mxu0 0
    %404 = vmatprep.mubr.bf16.mxu0 0
    %405 = vmatmul.mubr.bf16.gmra.mxu0 %v367
    %v406 = vpop.f32.mrf.mxu0
    %v407 = vadd.f32 %v247, %v406
    %v408 = vpop.f32.mrf.mxu0
    %v409 = vpop.f32.mrf.mxu0
    %v410 = vpop.f32.mrf.mxu0
    %411 = vdwg.mxu0
    %v413 = vsel %vm319, %v313, 0
    %v416 = vsel %vm319, %v240, 0
    %418 = vmatprep.subr.bf16.mxu0 0
    %419 = vmatpush1.bf16.xpose.msra.mxu0 0
    %420 = vmatprep.subr.bf16.mxu0 0
    %421 = vmatpush1.bf16.xpose.msra.mxu0 0
    %422 = vmatprep.subr.bf16.mxu0 0
    %423 = vmatpush1.bf16.xpose.msra.mxu0 0
    %424 = vmatprep.subr.bf16.mxu0 0
    %425 = vmatpush1.bf16.xpose.msra.mxu0 0
    %426 = vmatprep.subr.bf16.mxu0 0
    %427 = vmatpush1.bf16.xpose.msra.mxu0 0
    %428 = vmatprep.subr.bf16.mxu0 0
    %429 = vmatpush1.bf16.xpose.msra.mxu0 0
    %430 = vmatprep.subr.bf16.mxu0 0
    %431 = vmatpush1.bf16.xpose.msra.mxu0 0
    %432 = vmatprep.subr.bf16.mxu0 0
    %433 = vmatpush1.bf16.xpose.msra.mxu0 %v416
    %434 = vmatprep.subr.bf16.mxu0 0
    %435 = vmatpush2.bf16.xpose.msra.mxu0 0
    %436 = vmatprep.subr.bf16.mxu0 0
    %437 = vmatpush2.bf16.xpose.msra.mxu0 0
    %438 = vmatprep.subr.bf16.mxu0 0
    %439 = vmatpush2.bf16.xpose.msra.mxu0 0
    %440 = vmatprep.subr.bf16.mxu0 0
    %441 = vmatpush2.bf16.xpose.msra.mxu0 0
    %442 = vmatprep.subr.bf16.mxu0 0
    %443 = vmatpush2.bf16.xpose.msra.mxu0 0
    %444 = vmatprep.subr.bf16.mxu0 0
    %445 = vmatpush2.bf16.xpose.msra.mxu0 0
    %446 = vmatprep.subr.bf16.mxu0 0
    %447 = vmatpush2.bf16.xpose.msra.mxu0 0
    %448 = vmatprep.subr.bf16.mxu0 0
    %449 = vmatpush2.bf16.xpose.msra.mxu0 0
    %450 = vmatprep.mubr.bf16.mxu0 0
    %451 = vmatmul.mubr.bf16.gmra.mxu0 %v413
    %v452 = vpop.f32.mrf.mxu0
    %v453 = vadd.f32 %v248, %v452
    %v454 = vpop.f32.mrf.mxu0
    %v455 = vpop.f32.mrf.mxu0
    %v456 = vpop.f32.mrf.mxu0
    %457 = vdwg.mxu0
    %v459 = vsel %vm319, %v314, 0
    %v462 = vsel %vm319, %v241, 0
    %464 = vmatprep.subr.bf16.mxu0 0
    %465 = vmatpush1.bf16.xpose.msra.mxu0 0
    %466 = vmatprep.subr.bf16.mxu0 0
    %467 = vmatpush1.bf16.xpose.msra.mxu0 0
    %468 = vmatprep.subr.bf16.mxu0 0
    %469 = vmatpush1.bf16.xpose.msra.mxu0 0
    %470 = vmatprep.subr.bf16.mxu0 0
    %471 = vmatpush1.bf16.xpose.msra.mxu0 0
    %472 = vmatprep.subr.bf16.mxu0 0
    %473 = vmatpush1.bf16.xpose.msra.mxu0 0
    %474 = vmatprep.subr.bf16.mxu0 0
    %475 = vmatpush1.bf16.xpose.msra.mxu0 0
    %476 = vmatprep.subr.bf16.mxu0 0
    %477 = vmatpush1.bf16.xpose.msra.mxu0 0
    %478 = vmatprep.subr.bf16.mxu0 0
    %479 = vmatpush1.bf16.xpose.msra.mxu0 %v462
    %480 = vmatprep.subr.bf16.mxu0 0
    %481 = vmatpush2.bf16.xpose.msra.mxu0 0
    %482 = vmatprep.subr.bf16.mxu0 0
    %483 = vmatpush2.bf16.xpose.msra.mxu0 0
    %484 = vmatprep.subr.bf16.mxu0 0
    %485 = vmatpush2.bf16.xpose.msra.mxu0 0
    %486 = vmatprep.subr.bf16.mxu0 0
    %487 = vmatpush2.bf16.xpose.msra.mxu0 0
    %488 = vmatprep.subr.bf16.mxu0 0
    %489 = vmatpush2.bf16.xpose.msra.mxu0 0
    %490 = vmatprep.subr.bf16.mxu0 0
    %491 = vmatpush2.bf16.xpose.msra.mxu0 0
    %492 = vmatprep.subr.bf16.mxu0 0
    %493 = vmatpush2.bf16.xpose.msra.mxu0 0
    %494 = vmatprep.subr.bf16.mxu0 0
    %495 = vmatpush2.bf16.xpose.msra.mxu0 0
    %496 = vmatprep.mubr.bf16.mxu0 0
    %497 = vmatmul.mubr.bf16.gmra.mxu0 %v459
    %v498 = vpop.f32.mrf.mxu0
    %v499 = vadd.f32 %v249, %v498
    %v500 = vpop.f32.mrf.mxu0
    %v501 = vpop.f32.mrf.mxu0
    %v502 = vpop.f32.mrf.mxu0
    %503 = vdwg.mxu0
    %v505 = vsel %vm319, %v315, 0
    %v508 = vsel %vm319, %v242, 0
    %510 = vmatprep.subr.bf16.mxu0 0
    %511 = vmatpush1.bf16.xpose.msra.mxu0 0
    %512 = vmatprep.subr.bf16.mxu0 0
    %513 = vmatpush1.bf16.xpose.msra.mxu0 0
    %514 = vmatprep.subr.bf16.mxu0 0
    %515 = vmatpush1.bf16.xpose.msra.mxu0 0
    %516 = vmatprep.subr.bf16.mxu0 0
    %517 = vmatpush1.bf16.xpose.msra.mxu0 0
    %518 = vmatprep.subr.bf16.mxu0 0
    %519 = vmatpush1.bf16.xpose.msra.mxu0 0
    %520 = vmatprep.subr.bf16.mxu0 0
    %521 = vmatpush1.bf16.xpose.msra.mxu0 0
    %522 = vmatprep.subr.bf16.mxu0 0
    %523 = vmatpush1.bf16.xpose.msra.mxu0 0
    %524 = vmatprep.subr.bf16.mxu0 0
    %525 = vmatpush1.bf16.xpose.msra.mxu0 %v508
    %526 = vmatprep.subr.bf16.mxu0 0
    %527 = vmatpush2.bf16.xpose.msra.mxu0 0
    %528 = vmatprep.subr.bf16.mxu0 0
    %529 = vmatpush2.bf16.xpose.msra.mxu0 0
    %530 = vmatprep.subr.bf16.mxu0 0
    %531 = vmatpush2.bf16.xpose.msra.mxu0 0
    %532 = vmatprep.subr.bf16.mxu0 0
    %533 = vmatpush2.bf16.xpose.msra.mxu0 0
    %534 = vmatprep.subr.bf16.mxu0 0
    %535 = vmatpush2.bf16.xpose.msra.mxu0 0
    %536 = vmatprep.subr.bf16.mxu0 0
    %537 = vmatpush2.bf16.xpose.msra.mxu0 0
    %538 = vmatprep.subr.bf16.mxu0 0
    %539 = vmatpush2.bf16.xpose.msra.mxu0 0
    %540 = vmatprep.subr.bf16.mxu0 0
    %541 = vmatpush2.bf16.xpose.msra.mxu0 0
    %542 = vmatprep.mubr.bf16.mxu0 0
    %543 = vmatmul.mubr.bf16.gmra.mxu0 %v505
    %v544 = vpop.f32.mrf.mxu0
    %v545 = vadd.f32 %v250, %v544
    %v546 = vpop.f32.mrf.mxu0
    %v547 = vpop.f32.mrf.mxu0
    %v548 = vpop.f32.mrf.mxu0
    %549 = vdwg.mxu0
    %v551 = vsel %vm319, %v316, 0
    %v554 = vsel %vm319, %v243, 0
    %556 = vmatprep.subr.bf16.mxu0 0
    %557 = vmatpush1.bf16.xpose.msra.mxu0 0
    %558 = vmatprep.subr.bf16.mxu0 0
    %559 = vmatpush1.bf16.xpose.msra.mxu0 0
    %560 = vmatprep.subr.bf16.mxu0 0
    %561 = vmatpush1.bf16.xpose.msra.mxu0 0
    %562 = vmatprep.subr.bf16.mxu0 0
    %563 = vmatpush1.bf16.xpose.msra.mxu0 0
    %564 = vmatprep.subr.bf16.mxu0 0
    %565 = vmatpush1.bf16.xpose.msra.mxu0 0
    %566 = vmatprep.subr.bf16.mxu0 0
    %567 = vmatpush1.bf16.xpose.msra.mxu0 0
    %568 = vmatprep.subr.bf16.mxu0 0
    %569 = vmatpush1.bf16.xpose.msra.mxu0 0
    %570 = vmatprep.subr.bf16.mxu0 0
    %571 = vmatpush1.bf16.xpose.msra.mxu0 %v554
    %572 = vmatprep.subr.bf16.mxu0 0
    %573 = vmatpush2.bf16.xpose.msra.mxu0 0
    %574 = vmatprep.subr.bf16.mxu0 0
    %575 = vmatpush2.bf16.xpose.msra.mxu0 0
    %576 = vmatprep.subr.bf16.mxu0 0
    %577 = vmatpush2.bf16.xpose.msra.mxu0 0
    %578 = vmatprep.subr.bf16.mxu0 0
    %579 = vmatpush2.bf16.xpose.msra.mxu0 0
    %580 = vmatprep.subr.bf16.mxu0 0
    %581 = vmatpush2.bf16.xpose.msra.mxu0 0
    %582 = vmatprep.subr.bf16.mxu0 0
    %583 = vmatpush2.bf16.xpose.msra.mxu0 0
    %584 = vmatprep.subr.bf16.mxu0 0
    %585 = vmatpush2.bf16.xpose.msra.mxu0 0
    %586 = vmatprep.subr.bf16.mxu0 0
    %587 = vmatpush2.bf16.xpose.msra.mxu0 0
    %588 = vmatprep.mubr.bf16.mxu0 0
    %589 = vmatmul.mubr.bf16.gmra.mxu0 %v551
    %v590 = vpop.f32.mrf.mxu0
    %v591 = vadd.f32 %v251, %v590
    %v592 = vpop.f32.mrf.mxu0
    %v593 = vpop.f32.mrf.mxu0
    %v594 = vpop.f32.mrf.mxu0
    %595 = vdwg.mxu0
    %v597 = vsel %vm319, %v317, 0
    %v600 = vsel %vm319, %v244, 0
    %602 = vmatprep.subr.bf16.mxu0 0
    %603 = vmatpush1.bf16.xpose.msra.mxu0 0
    %604 = vmatprep.subr.bf16.mxu0 0
    %605 = vmatpush1.bf16.xpose.msra.mxu0 0
    %606 = vmatprep.subr.bf16.mxu0 0
    %607 = vmatpush1.bf16.xpose.msra.mxu0 0
    %608 = vmatprep.subr.bf16.mxu0 0
    %609 = vmatpush1.bf16.xpose.msra.mxu0 0
    %610 = vmatprep.subr.bf16.mxu0 0
    %611 = vmatpush1.bf16.xpose.msra.mxu0 0
    %612 = vmatprep.subr.bf16.mxu0 0
    %613 = vmatpush1.bf16.xpose.msra.mxu0 0
    %614 = vmatprep.subr.bf16.mxu0 0
    %615 = vmatpush1.bf16.xpose.msra.mxu0 0
    %616 = vmatprep.subr.bf16.mxu0 0
    %617 = vmatpush1.bf16.xpose.msra.mxu0 %v600
    %618 = vmatprep.subr.bf16.mxu0 0
    %619 = vmatpush2.bf16.xpose.msra.mxu0 0
    %620 = vmatprep.subr.bf16.mxu0 0
    %621 = vmatpush2.bf16.xpose.msra.mxu0 0
    %622 = vmatprep.subr.bf16.mxu0 0
    %623 = vmatpush2.bf16.xpose.msra.mxu0 0
    %624 = vmatprep.subr.bf16.mxu0 0
    %625 = vmatpush2.bf16.xpose.msra.mxu0 0
    %626 = vmatprep.subr.bf16.mxu0 0
    %627 = vmatpush2.bf16.xpose.msra.mxu0 0
    %628 = vmatprep.subr.bf16.mxu0 0
    %629 = vmatpush2.bf16.xpose.msra.mxu0 0
    %630 = vmatprep.subr.bf16.mxu0 0
    %631 = vmatpush2.bf16.xpose.msra.mxu0 0
    %632 = vmatprep.subr.bf16.mxu0 0
    %633 = vmatpush2.bf16.xpose.msra.mxu0 0
    %634 = vmatprep.mubr.bf16.mxu0 0
    %635 = vmatmul.mubr.bf16.gmra.mxu0 %v597
    %v636 = vpop.f32.mrf.mxu0
    %v637 = vadd.f32 %v252, %v636
    %v638 = vpop.f32.mrf.mxu0
    %v639 = vpop.f32.mrf.mxu0
    %v640 = vpop.f32.mrf.mxu0
    %641 = vdwg.mxu0
    %v643 = vsel %vm319, %v318, 0
    %v646 = vsel %vm319, %v245, 0
    %648 = vmatprep.subr.bf16.mxu0 0
    %649 = vmatpush1.bf16.xpose.msra.mxu0 0
    %650 = vmatprep.subr.bf16.mxu0 0
    %651 = vmatpush1.bf16.xpose.msra.mxu0 0
    %652 = vmatprep.subr.bf16.mxu0 0
    %653 = vmatpush1.bf16.xpose.msra.mxu0 0
    %654 = vmatprep.subr.bf16.mxu0 0
    %655 = vmatpush1.bf16.xpose.msra.mxu0 0
    %656 = vmatprep.subr.bf16.mxu0 0
    %657 = vmatpush1.bf16.xpose.msra.mxu0 0
    %658 = vmatprep.subr.bf16.mxu0 0
    %659 = vmatpush1.bf16.xpose.msra.mxu0 0
    %660 = vmatprep.subr.bf16.mxu0 0
    %661 = vmatpush1.bf16.xpose.msra.mxu0 0
    %662 = vmatprep.subr.bf16.mxu0 0
    %663 = vmatpush1.bf16.xpose.msra.mxu0 %v646
    %664 = vmatprep.subr.bf16.mxu0 0
    %665 = vmatpush2.bf16.xpose.msra.mxu0 0
    %666 = vmatprep.subr.bf16.mxu0 0
    %667 = vmatpush2.bf16.xpose.msra.mxu0 0
    %668 = vmatprep.subr.bf16.mxu0 0
    %669 = vmatpush2.bf16.xpose.msra.mxu0 0
    %670 = vmatprep.subr.bf16.mxu0 0
    %671 = vmatpush2.bf16.xpose.msra.mxu0 0
    %672 = vmatprep.subr.bf16.mxu0 0
    %673 = vmatpush2.bf16.xpose.msra.mxu0 0
    %674 = vmatprep.subr.bf16.mxu0 0
    %675 = vmatpush2.bf16.xpose.msra.mxu0 0
    %676 = vmatprep.subr.bf16.mxu0 0
    %677 = vmatpush2.bf16.xpose.msra.mxu0 0
    %678 = vmatprep.subr.bf16.mxu0 0
    %679 = vmatpush2.bf16.xpose.msra.mxu0 0
    %680 = vmatprep.mubr.bf16.mxu0 0
    %681 = vmatmul.mubr.bf16.gmra.mxu0 %v643
    %v682 = vpop.f32.mrf.mxu0
    %v683 = vadd.f32 %v253, %v682
    %v684 = vpop.f32.mrf.mxu0
    %v685 = vpop.f32.mrf.mxu0
    %v686 = vpop.f32.mrf.mxu0
    %687 = vdwg.mxu0
    %vm688 = vcmask 57344
    %v689 = vsel %vm688, %v361, -inf
    %690 = vmax.xlane.f32.xlu0 %v689
    %v691 = vpop.xlane.xlu0 %690
    %v692 = vsel %vm688, %v407, -inf
    %693 = vmax.xlane.f32.xlu0 %v692
    %v694 = vpop.xlane.xlu0 %693
    %v695 = vsel %vm688, %v453, -inf
    %696 = vmax.xlane.f32.xlu0 %v695
    %v697 = vpop.xlane.xlu0 %696
    %v698 = vsel %vm688, %v499, -inf
    %699 = vmax.xlane.f32.xlu0 %v698
    %v700 = vpop.xlane.xlu0 %699
    %v701 = vsel %vm688, %v545, -inf
    %702 = vmax.xlane.f32.xlu0 %v701
    %v703 = vpop.xlane.xlu0 %702
    %v704 = vsel %vm688, %v591, -inf
    %705 = vmax.xlane.f32.xlu0 %v704
    %v706 = vpop.xlane.xlu0 %705
    %v707 = vsel %vm688, %v637, -inf
    %708 = vmax.xlane.f32.xlu0 %v707
    %v709 = vpop.xlane.xlu0 %708
    %v710 = vsel %vm688, %v683, -inf
    %711 = vmax.xlane.f32.xlu0 %v710
    %v712 = vpop.xlane.xlu0 %711
    %v713 = vsub.f32 %v361, %v691
    %v714 = vsub.f32 %v407, %v694
    %v715 = vsub.f32 %v453, %v697
    %v716 = vsub.f32 %v499, %v700
    %v717 = vsub.f32 %v545, %v703
    %v718 = vsub.f32 %v591, %v706
    %v719 = vsub.f32 %v637, %v709
    %v720 = vsub.f32 %v683, %v712
    %v721 = vmul.f32 %v713, 1.442695
    %v722 = vpow.pop %v721
    %v723 = vmul.f32 %v714, 1.442695
    %v724 = vpow.pop %v723
    %v725 = vmul.f32 %v715, 1.442695
    %v726 = vpow.pop %v725
    %v727 = vmul.f32 %v716, 1.442695
    %v728 = vpow.pop %v727
    %v729 = vmul.f32 %v717, 1.442695
    %v730 = vpow.pop %v729
    %v731 = vmul.f32 %v718, 1.442695
    %v732 = vpow.pop %v731
    %v733 = vmul.f32 %v719, 1.442695
    %v734 = vpow.pop %v733
    %v735 = vmul.f32 %v720, 1.442695
    %v736 = vpow.pop %v735
    %v737 = vsel %vm688, %v722, 0.0
    %738 = vadd.xlane.f32.xlu0 %v737
    %v739 = vpop.xlane.xlu0 %738
    %v740 = vsel %vm688, %v724, 0.0
    %741 = vadd.xlane.f32.xlu0 %v740
    %v742 = vpop.xlane.xlu0 %741
    %v743 = vsel %vm688, %v726, 0.0
    %744 = vadd.xlane.f32.xlu0 %v743
    %v745 = vpop.xlane.xlu0 %744
    %v746 = vsel %vm688, %v728, 0.0
    %747 = vadd.xlane.f32.xlu0 %v746
    %v748 = vpop.xlane.xlu0 %747
    %v749 = vsel %vm688, %v730, 0.0
    %750 = vadd.xlane.f32.xlu0 %v749
    %v751 = vpop.xlane.xlu0 %750
    %v752 = vsel %vm688, %v732, 0.0
    %753 = vadd.xlane.f32.xlu0 %v752
    %v754 = vpop.xlane.xlu0 %753
    %v755 = vsel %vm688, %v734, 0.0
    %756 = vadd.xlane.f32.xlu0 %v755
    %v757 = vpop.xlane.xlu0 %756
    %v758 = vsel %vm688, %v736, 0.0
    %759 = vadd.xlane.f32.xlu0 %v758
    %v760 = vpop.xlane.xlu0 %759
    %v761 = vrcp.pop %v739
    %v762 = vrcp.pop %v742
    %v763 = vrcp.pop %v745
    %v764 = vrcp.pop %v748
    %v765 = vrcp.pop %v751
    %v766 = vrcp.pop %v754
    %v767 = vrcp.pop %v757
    %v768 = vrcp.pop %v760
    %v769 = vmul.f32 %v722, %v761
    %v770 = vmul.f32 %v724, %v762
    %v771 = vmul.f32 %v726, %v763
    %v772 = vmul.f32 %v728, %v764
    %v773 = vmul.f32 %v730, %v765
    %v774 = vmul.f32 %v732, %v766
    %v775 = vmul.f32 %v734, %v767
    %v776 = vmul.f32 %v736, %v768
    %v777 = vpack.c.bf16 %v769, %v769
    %v778 = vpack.c.bf16 %v770, %v770
    %v779 = vpack.c.bf16 %v771, %v771
    %v780 = vpack.c.bf16 %v772, %v772
    %v781 = vpack.c.bf16 %v773, %v773
    %v782 = vpack.c.bf16 %v774, %v774
    %v783 = vpack.c.bf16 %v775, %v775
    %v784 = vpack.c.bf16 %v776, %v776
    %vm785 = vcmask 64512
    %v787 = vsel %vm785, %v777, 0
    %vm789 = vcmask 1043456
    %v790 = vsel %vm789, %v238, 0
    %792 = vmatprep.subr.bf16.mxu0 0
    %793 = vmatpush1.bf16.msra.mxu0 0
    %794 = vmatprep.subr.bf16.mxu0 0
    %795 = vmatpush1.bf16.msra.mxu0 0
    %796 = vmatprep.subr.bf16.mxu0 0
    %797 = vmatpush1.bf16.msra.mxu0 0
    %798 = vmatprep.subr.bf16.mxu0 0
    %799 = vmatpush1.bf16.msra.mxu0 0
    %800 = vmatprep.subr.bf16.mxu0 0
    %801 = vmatpush1.bf16.msra.mxu0 0
    %802 = vmatprep.subr.bf16.mxu0 0
    %803 = vmatpush1.bf16.msra.mxu0 0
    %804 = vmatprep.subr.bf16.mxu0 0
    %805 = vmatpush1.bf16.msra.mxu0 0
    %806 = vmatprep.subr.bf16.mxu0 0
    %807 = vmatpush1.bf16.msra.mxu0 %v790
    %808 = vmatprep.subr.bf16.mxu0 0
    %809 = vmatpush2.bf16.msra.mxu0 0
    %810 = vmatprep.subr.bf16.mxu0 0
    %811 = vmatpush2.bf16.msra.mxu0 0
    %812 = vmatprep.subr.bf16.mxu0 0
    %813 = vmatpush2.bf16.msra.mxu0 0
    %814 = vmatprep.subr.bf16.mxu0 0
    %815 = vmatpush2.bf16.msra.mxu0 0
    %816 = vmatprep.subr.bf16.mxu0 0
    %817 = vmatpush2.bf16.msra.mxu0 0
    %818 = vmatprep.subr.bf16.mxu0 0
    %819 = vmatpush2.bf16.msra.mxu0 0
    %820 = vmatprep.subr.bf16.mxu0 0
    %821 = vmatpush2.bf16.msra.mxu0 0
    %822 = vmatprep.subr.bf16.mxu0 0
    %823 = vmatpush2.bf16.msra.mxu0 0
    %824 = vmatprep.mubr.bf16.mxu0 0
    %825 = vmatmul.mubr.bf16.gmra.mxu0 %v787
    %v826 = vpop.f32.mrf.mxu0
    %v827 = vadd.f32 0.0, %v826
    %v828 = vpop.f32.mrf.mxu0
    %v829 = vpop.f32.mrf.mxu0
    %v830 = vpop.f32.mrf.mxu0
    %831 = vdwg.mxu0
    %v833 = vsel %vm785, %v778, 0
    %v835 = vsel %vm789, %v239, 0
    %837 = vmatprep.subr.bf16.mxu0 0
    %838 = vmatpush1.bf16.msra.mxu0 0
    %839 = vmatprep.subr.bf16.mxu0 0
    %840 = vmatpush1.bf16.msra.mxu0 0
    %841 = vmatprep.subr.bf16.mxu0 0
    %842 = vmatpush1.bf16.msra.mxu0 0
    %843 = vmatprep.subr.bf16.mxu0 0
    %844 = vmatpush1.bf16.msra.mxu0 0
    %845 = vmatprep.subr.bf16.mxu0 0
    %846 = vmatpush1.bf16.msra.mxu0 0
    %847 = vmatprep.subr.bf16.mxu0 0
    %848 = vmatpush1.bf16.msra.mxu0 0
    %849 = vmatprep.subr.bf16.mxu0 0
    %850 = vmatpush1.bf16.msra.mxu0 0
    %851 = vmatprep.subr.bf16.mxu0 0
    %852 = vmatpush1.bf16.msra.mxu0 %v835
    %853 = vmatprep.subr.bf16.mxu0 0
    %854 = vmatpush2.bf16.msra.mxu0 0
    %855 = vmatprep.subr.bf16.mxu0 0
    %856 = vmatpush2.bf16.msra.mxu0 0
    %857 = vmatprep.subr.bf16.mxu0 0
    %858 = vmatpush2.bf16.msra.mxu0 0
    %859 = vmatprep.subr.bf16.mxu0 0
    %860 = vmatpush2.bf16.msra.mxu0 0
    %861 = vmatprep.subr.bf16.mxu0 0
    %862 = vmatpush2.bf16.msra.mxu0 0
    %863 = vmatprep.subr.bf16.mxu0 0
    %864 = vmatpush2.bf16.msra.mxu0 0
    %865 = vmatprep.subr.bf16.mxu0 0
    %866 = vmatpush2.bf16.msra.mxu0 0
    %867 = vmatprep.subr.bf16.mxu0 0
    %868 = vmatpush2.bf16.msra.mxu0 0
    %869 = vmatprep.mubr.bf16.mxu0 0
    %870 = vmatmul.mubr.bf16.gmra.mxu0 %v833
    %v871 = vpop.f32.mrf.mxu0
    %v872 = vadd.f32 0.0, %v871
    %v873 = vpop.f32.mrf.mxu0
    %v874 = vpop.f32.mrf.mxu0
    %v875 = vpop.f32.mrf.mxu0
    %876 = vdwg.mxu0
    %v878 = vsel %vm785, %v779, 0
    %v880 = vsel %vm789, %v240, 0
    %882 = vmatprep.subr.bf16.mxu0 0
    %883 = vmatpush1.bf16.msra.mxu0 0
    %884 = vmatprep.subr.bf16.mxu0 0
    %885 = vmatpush1.bf16.msra.mxu0 0
    %886 = vmatprep.subr.bf16.mxu0 0
    %887 = vmatpush1.bf16.msra.mxu0 0
    %888 = vmatprep.subr.bf16.mxu0 0
    %889 = vmatpush1.bf16.msra.mxu0 0
    %890 = vmatprep.subr.bf16.mxu0 0
    %891 = vmatpush1.bf16.msra.mxu0 0
    %892 = vmatprep.subr.bf16.mxu0 0
    %893 = vmatpush1.bf16.msra.mxu0 0
    %894 = vmatprep.subr.bf16.mxu0 0
    %895 = vmatpush1.bf16.msra.mxu0 0
    %896 = vmatprep.subr.bf16.mxu0 0
    %897 = vmatpush1.bf16.msra.mxu0 %v880
    %898 = vmatprep.subr.bf16.mxu0 0
    %899 = vmatpush2.bf16.msra.mxu0 0
    %900 = vmatprep.subr.bf16.mxu0 0
    %901 = vmatpush2.bf16.msra.mxu0 0
    %902 = vmatprep.subr.bf16.mxu0 0
    %903 = vmatpush2.bf16.msra.mxu0 0
    %904 = vmatprep.subr.bf16.mxu0 0
    %905 = vmatpush2.bf16.msra.mxu0 0
    %906 = vmatprep.subr.bf16.mxu0 0
    %907 = vmatpush2.bf16.msra.mxu0 0
    %908 = vmatprep.subr.bf16.mxu0 0
    %909 = vmatpush2.bf16.msra.mxu0 0
    %910 = vmatprep.subr.bf16.mxu0 0
    %911 = vmatpush2.bf16.msra.mxu0 0
    %912 = vmatprep.subr.bf16.mxu0 0
    %913 = vmatpush2.bf16.msra.mxu0 0
    %914 = vmatprep.mubr.bf16.mxu0 0
    %915 = vmatmul.mubr.bf16.gmra.mxu0 %v878
    %v916 = vpop.f32.mrf.mxu0
    %v917 = vadd.f32 0.0, %v916
    %v918 = vpop.f32.mrf.mxu0
    %v919 = vpop.f32.mrf.mxu0
    %v920 = vpop.f32.mrf.mxu0
    %921 = vdwg.mxu0
    %v923 = vsel %vm785, %v780, 0
    %v925 = vsel %vm789, %v241, 0
    %927 = vmatprep.subr.bf16.mxu0 0
    %928 = vmatpush1.bf16.msra.mxu0 0
    %929 = vmatprep.subr.bf16.mxu0 0
    %930 = vmatpush1.bf16.msra.mxu0 0
    %931 = vmatprep.subr.bf16.mxu0 0
    %932 = vmatpush1.bf16.msra.mxu0 0
    %933 = vmatprep.subr.bf16.mxu0 0
    %934 = vmatpush1.bf16.msra.mxu0 0
    %935 = vmatprep.subr.bf16.mxu0 0
    %936 = vmatpush1.bf16.msra.mxu0 0
    %937 = vmatprep.subr.bf16.mxu0 0
    %938 = vmatpush1.bf16.msra.mxu0 0
    %939 = vmatprep.subr.bf16.mxu0 0
    %940 = vmatpush1.bf16.msra.mxu0 0
    %941 = vmatprep.subr.bf16.mxu0 0
    %942 = vmatpush1.bf16.msra.mxu0 %v925
    %943 = vmatprep.subr.bf16.mxu0 0
    %944 = vmatpush2.bf16.msra.mxu0 0
    %945 = vmatprep.subr.bf16.mxu0 0
    %946 = vmatpush2.bf16.msra.mxu0 0
    %947 = vmatprep.subr.bf16.mxu0 0
    %948 = vmatpush2.bf16.msra.mxu0 0
    %949 = vmatprep.subr.bf16.mxu0 0
    %950 = vmatpush2.bf16.msra.mxu0 0
    %951 = vmatprep.subr.bf16.mxu0 0
    %952 = vmatpush2.bf16.msra.mxu0 0
    %953 = vmatprep.subr.bf16.mxu0 0
    %954 = vmatpush2.bf16.msra.mxu0 0
    %955 = vmatprep.subr.bf16.mxu0 0
    %956 = vmatpush2.bf16.msra.mxu0 0
    %957 = vmatprep.subr.bf16.mxu0 0
    %958 = vmatpush2.bf16.msra.mxu0 0
    %959 = vmatprep.mubr.bf16.mxu0 0
    %960 = vmatmul.mubr.bf16.gmra.mxu0 %v923
    %v961 = vpop.f32.mrf.mxu0
    %v962 = vadd.f32 0.0, %v961
    %v963 = vpop.f32.mrf.mxu0
    %v964 = vpop.f32.mrf.mxu0
    %v965 = vpop.f32.mrf.mxu0
    %966 = vdwg.mxu0
    %v968 = vsel %vm785, %v781, 0
    %v970 = vsel %vm789, %v242, 0
    %972 = vmatprep.subr.bf16.mxu0 0
    %973 = vmatpush1.bf16.msra.mxu0 0
    %974 = vmatprep.subr.bf16.mxu0 0
    %975 = vmatpush1.bf16.msra.mxu0 0
    %976 = vmatprep.subr.bf16.mxu0 0
    %977 = vmatpush1.bf16.msra.mxu0 0
    %978 = vmatprep.subr.bf16.mxu0 0
    %979 = vmatpush1.bf16.msra.mxu0 0
    %980 = vmatprep.subr.bf16.mxu0 0
    %981 = vmatpush1.bf16.msra.mxu0 0
    %982 = vmatprep.subr.bf16.mxu0 0
    %983 = vmatpush1.bf16.msra.mxu0 0
    %984 = vmatprep.subr.bf16.mxu0 0
    %985 = vmatpush1.bf16.msra.mxu0 0
    %986 = vmatprep.subr.bf16.mxu0 0
    %987 = vmatpush1.bf16.msra.mxu0 %v970
    %988 = vmatprep.subr.bf16.mxu0 0
    %989 = vmatpush2.bf16.msra.mxu0 0
    %990 = vmatprep.subr.bf16.mxu0 0
    %991 = vmatpush2.bf16.msra.mxu0 0
    %992 = vmatprep.subr.bf16.mxu0 0
    %993 = vmatpush2.bf16.msra.mxu0 0
    %994 = vmatprep.subr.bf16.mxu0 0
    %995 = vmatpush2.bf16.msra.mxu0 0
    %996 = vmatprep.subr.bf16.mxu0 0
    %997 = vmatpush2.bf16.msra.mxu0 0
    %998 = vmatprep.subr.bf16.mxu0 0
    %999 = vmatpush2.bf16.msra.mxu0 0
    %1000 = vmatprep.subr.bf16.mxu0 0
    %1001 = vmatpush2.bf16.msra.mxu0 0
    %1002 = vmatprep.subr.bf16.mxu0 0
    %1003 = vmatpush2.bf16.msra.mxu0 0
    %1004 = vmatprep.mubr.bf16.mxu0 0
    %1005 = vmatmul.mubr.bf16.gmra.mxu0 %v968
    %v1006 = vpop.f32.mrf.mxu0
    %v1007 = vadd.f32 0.0, %v1006
    %v1008 = vpop.f32.mrf.mxu0
    %v1009 = vpop.f32.mrf.mxu0
    %v1010 = vpop.f32.mrf.mxu0
    %1011 = vdwg.mxu0
    %v1013 = vsel %vm785, %v782, 0
    %v1015 = vsel %vm789, %v243, 0
    %1017 = vmatprep.subr.bf16.mxu0 0
    %1018 = vmatpush1.bf16.msra.mxu0 0
    %1019 = vmatprep.subr.bf16.mxu0 0
    %1020 = vmatpush1.bf16.msra.mxu0 0
    %1021 = vmatprep.subr.bf16.mxu0 0
    %1022 = vmatpush1.bf16.msra.mxu0 0
    %1023 = vmatprep.subr.bf16.mxu0 0
    %1024 = vmatpush1.bf16.msra.mxu0 0
    %1025 = vmatprep.subr.bf16.mxu0 0
    %1026 = vmatpush1.bf16.msra.mxu0 0
    %1027 = vmatprep.subr.bf16.mxu0 0
    %1028 = vmatpush1.bf16.msra.mxu0 0
    %1029 = vmatprep.subr.bf16.mxu0 0
    %1030 = vmatpush1.bf16.msra.mxu0 0
    %1031 = vmatprep.subr.bf16.mxu0 0
    %1032 = vmatpush1.bf16.msra.mxu0 %v1015
    %1033 = vmatprep.subr.bf16.mxu0 0
    %1034 = vmatpush2.bf16.msra.mxu0 0
    %1035 = vmatprep.subr.bf16.mxu0 0
    %1036 = vmatpush2.bf16.msra.mxu0 0
    %1037 = vmatprep.subr.bf16.mxu0 0
    %1038 = vmatpush2.bf16.msra.mxu0 0
    %1039 = vmatprep.subr.bf16.mxu0 0
    %1040 = vmatpush2.bf16.msra.mxu0 0
    %1041 = vmatprep.subr.bf16.mxu0 0
    %1042 = vmatpush2.bf16.msra.mxu0 0
    %1043 = vmatprep.subr.bf16.mxu0 0
    %1044 = vmatpush2.bf16.msra.mxu0 0
    %1045 = vmatprep.subr.bf16.mxu0 0
    %1046 = vmatpush2.bf16.msra.mxu0 0
    %1047 = vmatprep.subr.bf16.mxu0 0
    %1048 = vmatpush2.bf16.msra.mxu0 0
    %1049 = vmatprep.mubr.bf16.mxu0 0
    %1050 = vmatmul.mubr.bf16.gmra.mxu0 %v1013
    %v1051 = vpop.f32.mrf.mxu0
    %v1052 = vadd.f32 0.0, %v1051
    %v1053 = vpop.f32.mrf.mxu0
    %v1054 = vpop.f32.mrf.mxu0
    %v1055 = vpop.f32.mrf.mxu0
    %1056 = vdwg.mxu0
    %v1058 = vsel %vm785, %v783, 0
    %v1060 = vsel %vm789, %v244, 0
    %1062 = vmatprep.subr.bf16.mxu0 0
    %1063 = vmatpush1.bf16.msra.mxu0 0
    %1064 = vmatprep.subr.bf16.mxu0 0
    %1065 = vmatpush1.bf16.msra.mxu0 0
    %1066 = vmatprep.subr.bf16.mxu0 0
    %1067 = vmatpush1.bf16.msra.mxu0 0
    %1068 = vmatprep.subr.bf16.mxu0 0
    %1069 = vmatpush1.bf16.msra.mxu0 0
    %1070 = vmatprep.subr.bf16.mxu0 0
    %1071 = vmatpush1.bf16.msra.mxu0 0
    %1072 = vmatprep.subr.bf16.mxu0 0
    %1073 = vmatpush1.bf16.msra.mxu0 0
    %1074 = vmatprep.subr.bf16.mxu0 0
    %1075 = vmatpush1.bf16.msra.mxu0 0
    %1076 = vmatprep.subr.bf16.mxu0 0
    %1077 = vmatpush1.bf16.msra.mxu0 %v1060
    %1078 = vmatprep.subr.bf16.mxu0 0
    %1079 = vmatpush2.bf16.msra.mxu0 0
    %1080 = vmatprep.subr.bf16.mxu0 0
    %1081 = vmatpush2.bf16.msra.mxu0 0
    %1082 = vmatprep.subr.bf16.mxu0 0
    %1083 = vmatpush2.bf16.msra.mxu0 0
    %1084 = vmatprep.subr.bf16.mxu0 0
    %1085 = vmatpush2.bf16.msra.mxu0 0
    %1086 = vmatprep.subr.bf16.mxu0 0
    %1087 = vmatpush2.bf16.msra.mxu0 0
    %1088 = vmatprep.subr.bf16.mxu0 0
    %1089 = vmatpush2.bf16.msra.mxu0 0
    %1090 = vmatprep.subr.bf16.mxu0 0
    %1091 = vmatpush2.bf16.msra.mxu0 0
    %1092 = vmatprep.subr.bf16.mxu0 0
    %1093 = vmatpush2.bf16.msra.mxu0 0
    %1094 = vmatprep.mubr.bf16.mxu0 0
    %1095 = vmatmul.mubr.bf16.gmra.mxu0 %v1058
    %v1096 = vpop.f32.mrf.mxu0
    %v1097 = vadd.f32 0.0, %v1096
    %v1098 = vpop.f32.mrf.mxu0
    %v1099 = vpop.f32.mrf.mxu0
    %v1100 = vpop.f32.mrf.mxu0
    %1101 = vdwg.mxu0
    %v1103 = vsel %vm785, %v784, 0
    %v1105 = vsel %vm789, %v245, 0
    %1107 = vmatprep.subr.bf16.mxu0 0
    %1108 = vmatpush1.bf16.msra.mxu0 0
    %1109 = vmatprep.subr.bf16.mxu0 0
    %1110 = vmatpush1.bf16.msra.mxu0 0
    %1111 = vmatprep.subr.bf16.mxu0 0
    %1112 = vmatpush1.bf16.msra.mxu0 0
    %1113 = vmatprep.subr.bf16.mxu0 0
    %1114 = vmatpush1.bf16.msra.mxu0 0
    %1115 = vmatprep.subr.bf16.mxu0 0
    %1116 = vmatpush1.bf16.msra.mxu0 0
    %1117 = vmatprep.subr.bf16.mxu0 0
    %1118 = vmatpush1.bf16.msra.mxu0 0
    %1119 = vmatprep.subr.bf16.mxu0 0
    %1120 = vmatpush1.bf16.msra.mxu0 0
    %1121 = vmatprep.subr.bf16.mxu0 0
    %1122 = vmatpush1.bf16.msra.mxu0 %v1105
    %1123 = vmatprep.subr.bf16.mxu0 0
    %1124 = vmatpush2.bf16.msra.mxu0 0
    %1125 = vmatprep.subr.bf16.mxu0 0
    %1126 = vmatpush2.bf16.msra.mxu0 0
    %1127 = vmatprep.subr.bf16.mxu0 0
    %1128 = vmatpush2.bf16.msra.mxu0 0
    %1129 = vmatprep.subr.bf16.mxu0 0
    %1130 = vmatpush2.bf16.msra.mxu0 0
    %1131 = vmatprep.subr.bf16.mxu0 0
    %1132 = vmatpush2.bf16.msra.mxu0 0
    %1133 = vmatprep.subr.bf16.mxu0 0
    %1134 = vmatpush2.bf16.msra.mxu0 0
    %1135 = vmatprep.subr.bf16.mxu0 0
    %1136 = vmatpush2.bf16.msra.mxu0 0
    %1137 = vmatprep.subr.bf16.mxu0 0
    %1138 = vmatpush2.bf16.msra.mxu0 0
    %1139 = vmatprep.mubr.bf16.mxu0 0
    %1140 = vmatmul.mubr.bf16.gmra.mxu0 %v1103
    %v1141 = vpop.f32.mrf.mxu0
    %v1142 = vadd.f32 0.0, %v1141
    %v1143 = vpop.f32.mrf.mxu0
    %v1144 = vpop.f32.mrf.mxu0
    %v1145 = vpop.f32.mrf.mxu0
    %1146 = vdwg.mxu0
    %v1147 = vadd.f32 %v769, 0.0
    %v1148 = vadd.f32 %v770, 0.0
    %v1149 = vadd.f32 %v771, 0.0
    %v1150 = vadd.f32 %v772, 0.0
    %v1151 = vadd.f32 %v773, 0.0
    %v1152 = vadd.f32 %v774, 0.0
    %v1153 = vadd.f32 %v775, 0.0
    %v1154 = vadd.f32 %v776, 0.0
    %v1155 = vadd.f32 %v827, 0.0
    %v1156 = vadd.f32 %v872, 0.0
    %v1157 = vadd.f32 %v917, 0.0
    %v1158 = vadd.f32 %v962, 0.0
    %v1159 = vadd.f32 %v1007, 0.0
    %v1160 = vadd.f32 %v1052, 0.0
    %v1161 = vadd.f32 %v1097, 0.0
    %v1162 = vadd.f32 %v1142, 0.0
    %v1171 = vrot.slane %v1156, 7
    %vm1172 = vcmask 1041409
    %v1173 = vsel %vm1172, %v1171, %v1155
    %v1174 = vrot.slane %v1157, 6
    %vm1175 = vcmask 1042434
    %v1176 = vsel %vm1175, %v1174, %v1173
    %v1177 = vrot.slane %v1158, 5
    %vm1178 = vcmask 1043459
    %v1179 = vsel %vm1178, %v1177, %v1176
    %v1180 = vrot.slane %v1159, 4
    %vm1181 = vcmask 1044484
    %v1182 = vsel %vm1181, %v1180, %v1179
    %v1183 = vrot.slane %v1160, 3
    %vm1184 = vcmask 1045509
    %v1185 = vsel %vm1184, %v1183, %v1182
    %v1186 = vrot.slane %v1161, 2
    %vm1187 = vcmask 1046534
    %v1188 = vsel %vm1187, %v1186, %v1185
    %v1189 = vrot.slane %v1162, 1
    %vm1190 = vcmask 1047559
    %v1191 = vsel %vm1190, %v1189, %v1188
    %1193 = vrot.lane.b32.xlu0 %v209, 32
    %v1194 = vpop.permute.xlu0 %1193
    %v1196 = vsel %vm319, %v1191, %v1194
    %v1197 = vpack.c.bf16 %v1196, %v1196
    %v1198 = vld [vmem:[#allocation7] sm:$0xf]
    %v1199 = vld [vmem:[#allocation7 + $0x4] sm:$0xf]
    %v1200 = vld [vmem:[#allocation7 + $0x8] sm:$0xf]
    %v1201 = vld [vmem:[#allocation7 + $0xc] sm:$0xf]
    %v1202 = vld [vmem:[#allocation7 + $0x10] sm:$0xf]
    %v1203 = vld [vmem:[#allocation7 + $0x14] sm:$0xf]
    %v1204 = vld [vmem:[#allocation8] sm:$0xf]
    %v1205 = vld [vmem:[#allocation8 + $0x4] sm:$0xf]
    %v1206 = vld [vmem:[#allocation8 + $0x8] sm:$0xf]
    %v1207 = vld [vmem:[#allocation8 + $0xc] sm:$0xf]
    %v1208 = vld [vmem:[#allocation8 + $0x10] sm:$0xf]
    %v1209 = vld [vmem:[#allocation8 + $0x14] sm:$0xf]
    %v1210 = vld [vmem:[#allocation8 + $0x18] sm:$0xf]
    %v1211 = vld [vmem:[#allocation8 + $0x1c] sm:$0xf]
    %v1220 = vunpack.c.l.b16 %v1204
    %v1221 = vunpack.c.l.b16 %v1205
    %v1222 = vunpack.c.l.b16 %v1206
    %v1223 = vunpack.c.l.b16 %v1207
    %v1224 = vunpack.c.l.b16 %v1208
    %v1225 = vunpack.c.l.b16 %v1209
    %v1226 = vunpack.c.l.b16 %v1210
    %v1227 = vunpack.c.l.b16 %v1211
    %v1228 = vpack.c.b16 %v1221, %v1220
    %v1229 = vpack.c.b16 %v1223, %v1222
    %v1230 = vpack.c.b16 %v1225, %v1224
    %v1231 = vpack.c.b16 %v1227, %v1226
    %vm1236 = vcmask 523264
    %v1238 = vsel %vm1236, %v1197, 0
    %1240 = vmatprep.subr.bf16.mxu0 0
    %1241 = vmatpush1.bf16.msra.mxu0 0
    %1242 = vmatprep.subr.bf16.mxu0 0
    %1243 = vmatpush1.bf16.msra.mxu0 0
    %1244 = vmatprep.subr.bf16.mxu0 0
    %1245 = vmatpush1.bf16.msra.mxu0 0
    %1246 = vmatprep.subr.bf16.mxu0 0
    %1247 = vmatpush1.bf16.msra.mxu0 0
    %1248 = vmatprep.subr.bf16.mxu0 0
    %1249 = vmatpush1.bf16.msra.mxu0 %v1231
    %1250 = vmatprep.subr.bf16.mxu0 0
    %1251 = vmatpush1.bf16.msra.mxu0 %v1230
    %1252 = vmatprep.subr.bf16.mxu0 0
    %1253 = vmatpush1.bf16.msra.mxu0 %v1229
    %1254 = vmatprep.subr.bf16.mxu0 0
    %1255 = vmatpush1.bf16.msra.mxu0 %v1228
    %1256 = vmatprep.subr.bf16.mxu0 0
    %1257 = vmatpush2.bf16.msra.mxu0 0
    %1258 = vmatprep.subr.bf16.mxu0 0
    %1259 = vmatpush2.bf16.msra.mxu0 0
    %1260 = vmatprep.subr.bf16.mxu0 0
    %1261 = vmatpush2.bf16.msra.mxu0 0
    %1262 = vmatprep.subr.bf16.mxu0 0
    %1263 = vmatpush2.bf16.msra.mxu0 0
    %1264 = vmatprep.subr.bf16.mxu0 0
    %1265 = vmatpush2.bf16.msra.mxu0 0
    %1266 = vmatprep.subr.bf16.mxu0 0
    %1267 = vmatpush2.bf16.msra.mxu0 0
    %1268 = vmatprep.subr.bf16.mxu0 0
    %1269 = vmatpush2.bf16.msra.mxu0 0
    %1270 = vmatprep.subr.bf16.mxu0 0
    %1271 = vmatpush2.bf16.msra.mxu0 0
    %1272 = vmatprep.mubr.bf16.mxu0 0
    %1273 = vmatmul.mubr.bf16.gmra.mxu0 %v1238
    %v1274 = vpop.f32.mrf.mxu0
    %v1275 = vadd.f32 0.0, %v1274
    %v1276 = vpop.f32.mrf.mxu0
    %v1277 = vpop.f32.mrf.mxu0
    %v1278 = vpop.f32.mrf.mxu0
    %1279 = vdwg.mxu0
    %v1286 = vunpack.c.l.b16 %v1198
    %v1287 = vunpack.c.l.b16 %v1199
    %v1288 = vunpack.c.l.b16 %v1200
    %v1289 = vunpack.c.l.b16 %v1201
    %v1290 = vunpack.c.l.b16 %v1202
    %v1291 = vunpack.c.l.b16 %v1203
    %v1292 = vpack.c.b16 %v1287, %v1286
    %v1293 = vpack.c.b16 %v1289, %v1288
    %v1294 = vpack.c.b16 %v1291, %v1290
    %vm1298 = vcmask 392192
    %v1300 = vsel %vm1298, %v237, 0
    %1302 = vmatprep.subr.bf16.mxu0 0
    %1303 = vmatpush1.bf16.msra.mxu0 0
    %1304 = vmatprep.subr.bf16.mxu0 0
    %1305 = vmatpush1.bf16.msra.mxu0 0
    %1306 = vmatprep.subr.bf16.mxu0 0
    %1307 = vmatpush1.bf16.msra.mxu0 0
    %1308 = vmatprep.subr.bf16.mxu0 0
    %1309 = vmatpush1.bf16.msra.mxu0 0
    %1310 = vmatprep.subr.bf16.mxu0 0
    %1311 = vmatpush1.bf16.msra.mxu0 0
    %1312 = vmatprep.subr.bf16.mxu0 0
    %1313 = vmatpush1.bf16.msra.mxu0 %v1294
    %1314 = vmatprep.subr.bf16.mxu0 0
    %1315 = vmatpush1.bf16.msra.mxu0 %v1293
    %1316 = vmatprep.subr.bf16.mxu0 0
    %1317 = vmatpush1.bf16.msra.mxu0 %v1292
    %1318 = vmatprep.subr.bf16.mxu0 0
    %1319 = vmatpush2.bf16.msra.mxu0 0
    %1320 = vmatprep.subr.bf16.mxu0 0
    %1321 = vmatpush2.bf16.msra.mxu0 0
    %1322 = vmatprep.subr.bf16.mxu0 0
    %1323 = vmatpush2.bf16.msra.mxu0 0
    %1324 = vmatprep.subr.bf16.mxu0 0
    %1325 = vmatpush2.bf16.msra.mxu0 0
    %1326 = vmatprep.subr.bf16.mxu0 0
    %1327 = vmatpush2.bf16.msra.mxu0 0
    %1328 = vmatprep.subr.bf16.mxu0 0
    %1329 = vmatpush2.bf16.msra.mxu0 0
    %1330 = vmatprep.subr.bf16.mxu0 0
    %1331 = vmatpush2.bf16.msra.mxu0 0
    %1332 = vmatprep.subr.bf16.mxu0 0
    %1333 = vmatpush2.bf16.msra.mxu0 0
    %1334 = vmatprep.mubr.bf16.mxu0 0
    %1335 = vmatmul.mubr.bf16.gmra.mxu0 %v1300
    %v1336 = vpop.f32.mrf.mxu0
    %v1337 = vadd.f32 %v1275, %v1336
    %v1338 = vpop.f32.mrf.mxu0
    %v1339 = vpop.f32.mrf.mxu0
    %v1340 = vpop.f32.mrf.mxu0
    %1341 = vdwg.mxu0
    %v1342 = vadd.f32 %v1337, %v181
    %v1343 = vxor.u32 %v1342, 2147483648
    %v1344 = vmul.f32 %v1343, 1.442695
    %v1345 = vpow.pop %v1344
    %v1346 = vadd.f32 %v1345, 1.0
    %v1347 = vrcp.pop %v1346
    %v1348 = vmul.f32 1.0, %v1347
    %v1349 = vtanh.pop %v1342
    %1350 = vrot.lane.b32.xlu0 %v215, 32
    %v1351 = vpop.permute.xlu0 %1350
    %v1353 = vmul.f32 %v1348, %v1351
    %1355 = vrot.lane.b32.xlu0 %v1349, 64
    %v1356 = vpop.permute.xlu0 %1355
    %v1358 = vmul.f32 %v1348, %v1356
    %1360 = vrot.lane.b32.xlu0 %v1358, 32
    %v1361 = vpop.permute.xlu0 %1360
    %v1363 = vadd.f32 %v1353, %v1361
    %v1364 = vtanh.pop %v1363
    %1366 = vrot.lane.b32.xlu0 %v1364, 64
    %v1367 = vpop.permute.xlu0 %1366
    %v1369 = vmul.f32 %v1348, %v1367
    %1371 = vrot.lane.b32.xlu0 %v1369, 32
    %v1372 = vpop.permute.xlu0 %1371
    %1374 = vrot.lane.b32.xlu0 %v221, 32
    %v1375 = vpop.permute.xlu0 %1374
    %v1377 = vsel %vm319, %v1372, %v1375
    %v1378 = vpack.c.bf16 %v1377, %v1377
    %v1379 = vld [vmem:[#allocation11] sm:$0xf]
    %v1380 = vld [vmem:[#allocation11 + $0x4] sm:$0xf]
    %v1381 = vld [vmem:[#allocation11 + $0x8] sm:$0xf]
    %v1382 = vld [vmem:[#allocation11 + $0xc] sm:$0xf]
    %v1383 = vld [vmem:[#allocation11 + $0x10] sm:$0xf]
    %v1384 = vld [vmem:[#allocation11 + $0x14] sm:$0xf]
    %v1385 = vld [vmem:[#allocation11 + $0x18] sm:$0xf]
    %v1386 = vld [vmem:[#allocation11 + $0x1c] sm:$0xf]
    %v1395 = vunpack.c.l.b16 %v1379
    %v1396 = vunpack.c.l.b16 %v1380
    %v1397 = vunpack.c.l.b16 %v1381
    %v1398 = vunpack.c.l.b16 %v1382
    %v1399 = vunpack.c.l.b16 %v1383
    %v1400 = vunpack.c.l.b16 %v1384
    %v1401 = vunpack.c.l.b16 %v1385
    %v1402 = vunpack.c.l.b16 %v1386
    %v1403 = vpack.c.b16 %v1396, %v1395
    %v1404 = vpack.c.b16 %v1398, %v1397
    %v1405 = vpack.c.b16 %v1400, %v1399
    %v1406 = vpack.c.b16 %v1402, %v1401
    %v1412 = vsel %vm1236, %v1378, 0
    %1414 = vmatprep.subr.bf16.mxu0 0
    %1415 = vmatpush1.bf16.msra.mxu0 0
    %1416 = vmatprep.subr.bf16.mxu0 0
    %1417 = vmatpush1.bf16.msra.mxu0 0
    %1418 = vmatprep.subr.bf16.mxu0 0
    %1419 = vmatpush1.bf16.msra.mxu0 0
    %1420 = vmatprep.subr.bf16.mxu0 0
    %1421 = vmatpush1.bf16.msra.mxu0 0
    %1422 = vmatprep.subr.bf16.mxu0 0
    %1423 = vmatpush1.bf16.msra.mxu0 %v1406
    %1424 = vmatprep.subr.bf16.mxu0 0
    %1425 = vmatpush1.bf16.msra.mxu0 %v1405
    %1426 = vmatprep.subr.bf16.mxu0 0
    %1427 = vmatpush1.bf16.msra.mxu0 %v1404
    %1428 = vmatprep.subr.bf16.mxu0 0
    %1429 = vmatpush1.bf16.msra.mxu0 %v1403
    %1430 = vmatprep.subr.bf16.mxu0 0
    %1431 = vmatpush2.bf16.msra.mxu0 0
    %1432 = vmatprep.subr.bf16.mxu0 0
    %1433 = vmatpush2.bf16.msra.mxu0 0
    %1434 = vmatprep.subr.bf16.mxu0 0
    %1435 = vmatpush2.bf16.msra.mxu0 0
    %1436 = vmatprep.subr.bf16.mxu0 0
    %1437 = vmatpush2.bf16.msra.mxu0 0
    %1438 = vmatprep.subr.bf16.mxu0 0
    %1439 = vmatpush2.bf16.msra.mxu0 0
    %1440 = vmatprep.subr.bf16.mxu0 0
    %1441 = vmatpush2.bf16.msra.mxu0 0
    %1442 = vmatprep.subr.bf16.mxu0 0
    %1443 = vmatpush2.bf16.msra.mxu0 0
    %1444 = vmatprep.subr.bf16.mxu0 0
    %1445 = vmatpush2.bf16.msra.mxu0 0
    %1446 = vmatprep.mubr.bf16.mxu0 0
    %1447 = vmatmul.mubr.bf16.gmra.mxu0 %v1412
    %v1448 = vpop.f32.mrf.mxu0
    %v1449 = vadd.f32 %v188, %v1448
    %v1450 = vpop.f32.mrf.mxu0
    %v1451 = vpop.f32.mrf.mxu0
    %v1452 = vpop.f32.mrf.mxu0
    %1453 = vdwg.mxu0
    %v1454 = vxor.u32 %v1449, 2147483648
    %v1455 = vmul.f32 %v1454, 1.442695
    %v1456 = vpow.pop %v1455
    %v1457 = vadd.f32 %v1456, 1.0
    %v1458 = vrcp.pop %v1457
    %v1459 = vmul.f32 1.0, %v1458
    %v1460 = vtanh.pop %v1449
    %1461 = vrot.lane.b32.xlu0 %v227, 32
    %v1462 = vpop.permute.xlu0 %1461
    %v1464 = vmul.f32 %v1459, %v1462
    %1466 = vrot.lane.b32.xlu0 %v1460, 64
    %v1467 = vpop.permute.xlu0 %1466
    %v1469 = vmul.f32 %v1459, %v1467
    %1471 = vrot.lane.b32.xlu0 %v1469, 32
    %v1472 = vpop.permute.xlu0 %1471
    %v1474 = vadd.f32 %v1464, %v1472
    %v1475 = vtanh.pop %v1474
    %1477 = vrot.lane.b32.xlu0 %v1475, 64
    %v1478 = vpop.permute.xlu0 %1477
    %v1480 = vmul.f32 %v1459, %v1478
    %1482 = vrot.lane.b32.xlu0 %v1480, 32
    %v1483 = vpop.permute.xlu0 %1482
    %1485 = vrot.lane.b32.xlu0 %v1191, 32
    %v1486 = vpop.permute.xlu0 %1485
    %v1488 = vsel %vm319, %v1483, %v1486
    %v1489 = vpack.c.bf16 %v1488, %v1488
    %v1490 = vld [vmem:[#allocation14] sm:$0xf]
    %v1491 = vld [vmem:[#allocation14 + $0x4] sm:$0xf]
    %v1492 = vld [vmem:[#allocation14 + $0x8] sm:$0xf]
    %v1493 = vld [vmem:[#allocation14 + $0xc] sm:$0xf]
    %v1494 = vld [vmem:[#allocation14 + $0x10] sm:$0xf]
    %v1495 = vld [vmem:[#allocation14 + $0x14] sm:$0xf]
    %v1496 = vld [vmem:[#allocation14 + $0x18] sm:$0xf]
    %v1497 = vld [vmem:[#allocation14 + $0x1c] sm:$0xf]
    %v1506 = vunpack.c.l.b16 %v1490
    %v1507 = vunpack.c.l.b16 %v1491
    %v1508 = vunpack.c.l.b16 %v1492
    %v1509 = vunpack.c.l.b16 %v1493
    %v1510 = vunpack.c.l.b16 %v1494
    %v1511 = vunpack.c.l.b16 %v1495
    %v1512 = vunpack.c.l.b16 %v1496
    %v1513 = vunpack.c.l.b16 %v1497
    %v1514 = vpack.c.b16 %v1507, %v1506
    %v1515 = vpack.c.b16 %v1509, %v1508
    %v1516 = vpack.c.b16 %v1511, %v1510
    %v1517 = vpack.c.b16 %v1513, %v1512
    %v1523 = vsel %vm1236, %v1489, 0
    %1525 = vmatprep.subr.bf16.mxu0 0
    %1526 = vmatpush1.bf16.msra.mxu0 0
    %1527 = vmatprep.subr.bf16.mxu0 0
    %1528 = vmatpush1.bf16.msra.mxu0 0
    %1529 = vmatprep.subr.bf16.mxu0 0
    %1530 = vmatpush1.bf16.msra.mxu0 0
    %1531 = vmatprep.subr.bf16.mxu0 0
    %1532 = vmatpush1.bf16.msra.mxu0 0
    %1533 = vmatprep.subr.bf16.mxu0 0
    %1534 = vmatpush1.bf16.msra.mxu0 %v1517
    %1535 = vmatprep.subr.bf16.mxu0 0
    %1536 = vmatpush1.bf16.msra.mxu0 %v1516
    %1537 = vmatprep.subr.bf16.mxu0 0
    %1538 = vmatpush1.bf16.msra.mxu0 %v1515
    %1539 = vmatprep.subr.bf16.mxu0 0
    %1540 = vmatpush1.bf16.msra.mxu0 %v1514
    %1541 = vmatprep.subr.bf16.mxu0 0
    %1542 = vmatpush2.bf16.msra.mxu0 0
    %1543 = vmatprep.subr.bf16.mxu0 0
    %1544 = vmatpush2.bf16.msra.mxu0 0
    %1545 = vmatprep.subr.bf16.mxu0 0
    %1546 = vmatpush2.bf16.msra.mxu0 0
    %1547 = vmatprep.subr.bf16.mxu0 0
    %1548 = vmatpush2.bf16.msra.mxu0 0
    %1549 = vmatprep.subr.bf16.mxu0 0
    %1550 = vmatpush2.bf16.msra.mxu0 0
    %1551 = vmatprep.subr.bf16.mxu0 0
    %1552 = vmatpush2.bf16.msra.mxu0 0
    %1553 = vmatprep.subr.bf16.mxu0 0
    %1554 = vmatpush2.bf16.msra.mxu0 0
    %1555 = vmatprep.subr.bf16.mxu0 0
    %1556 = vmatpush2.bf16.msra.mxu0 0
    %1557 = vmatprep.mubr.bf16.mxu0 0
    %1558 = vmatmul.mubr.bf16.gmra.mxu0 %v1523
    %v1559 = vpop.f32.mrf.mxu0
    %v1560 = vadd.f32 0.0, %v1559
    %v1561 = vpop.f32.mrf.mxu0
    %v1562 = vpop.f32.mrf.mxu0
    %v1563 = vpop.f32.mrf.mxu0
    %1564 = vdwg.mxu0
    %v1565 = vadd.f32 %v1560, %v195
    %vm1566 = vcmp.gt.f32.partialorder %v1565, 0.0
    %v1567 = vmul.f32 %v1565, 0.2
    %v1568 = vsel %vm1566, %v1565, %v1567
    %v1569 = vpack.c.bf16 %v1568, %v1568
    %v1570 = vld [vmem:[%s9] sm:$0xf]
    %v1571 = vld [vmem:[%s9 + $0x4] sm:$0xf]
    %v1572 = vld [vmem:[%s9 + $0x8] sm:$0xf]
    %v1573 = vld [vmem:[%s9 + $0xc] sm:$0xf]
    %v1578 = vunpack.c.l.b16 %v1570
    %v1579 = vunpack.c.l.b16 %v1571
    %v1580 = vunpack.c.l.b16 %v1572
    %v1581 = vunpack.c.l.b16 %v1573
    %v1582 = vpack.c.b16 %v1579, %v1578
    %v1583 = vpack.c.b16 %v1581, %v1580
    %v1587 = vsel %vm319, %v1569, 0
    %1589 = vmatprep.subr.bf16.mxu0 0
    %1590 = vmatpush1.bf16.msra.mxu0 0
    %1591 = vmatprep.subr.bf16.mxu0 0
    %1592 = vmatpush1.bf16.msra.mxu0 0
    %1593 = vmatprep.subr.bf16.mxu0 0
    %1594 = vmatpush1.bf16.msra.mxu0 0
    %1595 = vmatprep.subr.bf16.mxu0 0
    %1596 = vmatpush1.bf16.msra.mxu0 0
    %1597 = vmatprep.subr.bf16.mxu0 0
    %1598 = vmatpush1.bf16.msra.mxu0 0
    %1599 = vmatprep.subr.bf16.mxu0 0
    %1600 = vmatpush1.bf16.msra.mxu0 0
    %1601 = vmatprep.subr.bf16.mxu0 0
    %1602 = vmatpush1.bf16.msra.mxu0 %v1583
    %1603 = vmatprep.subr.bf16.mxu0 0
    %1604 = vmatpush1.bf16.msra.mxu0 %v1582
    %1605 = vmatprep.subr.bf16.mxu0 0
    %1606 = vmatpush2.bf16.msra.mxu0 0
    %1607 = vmatprep.subr.bf16.mxu0 0
    %1608 = vmatpush2.bf16.msra.mxu0 0
    %1609 = vmatprep.subr.bf16.mxu0 0
    %1610 = vmatpush2.bf16.msra.mxu0 0
    %1611 = vmatprep.subr.bf16.mxu0 0
    %1612 = vmatpush2.bf16.msra.mxu0 0
    %1613 = vmatprep.subr.bf16.mxu0 0
    %1614 = vmatpush2.bf16.msra.mxu0 0
    %1615 = vmatprep.subr.bf16.mxu0 0
    %1616 = vmatpush2.bf16.msra.mxu0 0
    %1617 = vmatprep.subr.bf16.mxu0 0
    %1618 = vmatpush2.bf16.msra.mxu0 0
    %1619 = vmatprep.subr.bf16.mxu0 0
    %1620 = vmatpush2.bf16.msra.mxu0 0
    %1621 = vmatprep.mubr.bf16.mxu0 0
    %1622 = vmatmul.mubr.bf16.gmra.mxu0 %v1587
    %v1623 = vpop.f32.mrf.mxu0
    %v1624 = vadd.f32 %v202, %v1623
    %v1625 = vpop.f32.mrf.mxu0
    %v1626 = vpop.f32.mrf.mxu0
    %v1627 = vpop.f32.mrf.mxu0
    %1628 = vdwg.mxu0
    %1629 = vst.msk [vmem:[#allocation17] sm:$0xff] %vm1298, %v1624
    %v1638 = vrot.slane %v1148, 7
    %v1639 = vsel %vm1172, %v1638, %v1147
    %v1640 = vrot.slane %v1149, 6
    %v1641 = vsel %vm1175, %v1640, %v1639
    %v1642 = vrot.slane %v1150, 5
    %v1643 = vsel %vm1178, %v1642, %v1641
    %v1644 = vrot.slane %v1151, 4
    %v1645 = vsel %vm1181, %v1644, %v1643
    %v1646 = vrot.slane %v1152, 3
    %v1647 = vsel %vm1184, %v1646, %v1645
    %v1648 = vrot.slane %v1153, 2
    %v1649 = vsel %vm1187, %v1648, %v1647
    %v1650 = vrot.slane %v1154, 1
    %v1651 = vsel %vm1190, %v1650, %v1649
    %1653 = vst.msk [vmem:[#allocation18] sm:$0xff] %vm785, %v1651
    %v1654 = vsel %vm1298, %v1624, -inf
    %1655 = vmax.xlane.f32.xlu0 %v1654
    %v1656 = vpop.xlane.xlu0 %1655
    %vm1657 = vcmp.eq.f32.partialorder %v1624, %v1656
    %v1658 = vsel %vm1657, %v175, 48
    %v1659 = vsel %vm1298, %v1658, 2147483647
    %v1660 = vand.u32 %v1659, 65535
    %v1661 = vshra.s32 %v1659, 16
    %v1662 = vcvt.s32.f32 %v1660
    %v1663 = vcvt.s32.f32 %v1661
    %1664 = vmin.xlane.f32.xlu0 %v1663
    %v1665 = vpop.xlane.xlu0 %1664
    %vm1666 = vcmp.eq.f32.partialorder %v1663, %v1665
    %v1667 = vsel %vm1666, %v1662, inf
    %1668 = vmin.xlane.f32.xlu0 %v1667
    %v1669 = vpop.xlane.xlu0 %1668
    %v1670 = vcvt.f32.s32 %v1669
    %v1671 = vcvt.f32.s32 %v1665
    %v1672 = vshll.u32 %v1671, 16
    %v1673 = vadd.s32 %v1672, %v1670
    %vm1674 = vcmp.eq.s32.totalorder %v175, %v1673
    %v1675 = vsel %vm1674, 1, 0
    %v1676 = vcvt.s32.f32 %v1675
    %v1677 = vpack.c.bf16 %v1676, %v1676
    %v1678 = vld [vmem:[#allocation2] sm:$0xf]
    %v1679 = vld [vmem:[#allocation2 + $0x4] sm:$0xf]
    %v1680 = vld [vmem:[#allocation2 + $0x8] sm:$0xf]
    %v1681 = vld [vmem:[#allocation2 + $0xc] sm:$0xf]
    %v1682 = vld [vmem:[#allocation2 + $0x10] sm:$0xf]
    %v1683 = vld [vmem:[#allocation2 + $0x14] sm:$0xf]
    %v1684 = vld [vmem:[#allocation2 + $0x18] sm:$0xf]
    %v1685 = vld [vmem:[#allocation2 + $0x1c] sm:$0xf]
    %v1686 = vld [vmem:[#allocation5] sm:$0x1]
    %v1687 = vld [vmem:[#allocation5 + $0x1] sm:$0x1]
    %v1688 = vld [vmem:[#allocation5 + $0x2] sm:$0x1]
    %v1689 = vld [vmem:[#allocation5 + $0x3] sm:$0x1]
    %v1690 = vld [vmem:[#allocation5 + $0x4] sm:$0x1]
    %v1691 = vld [vmem:[#allocation5 + $0x5] sm:$0x1]
    %v1692 = vld [vmem:[#allocation5 + $0x6] sm:$0x1]
    %v1693 = vld [vmem:[#allocation5 + $0x7] sm:$0x1]
    %v1695 = vcombine.high %v1560, %v1560
    %v1697 = vunpack.c.l.s4 1966171168
    %v1698 = vunpack.c.0.s8 %v1697
    %v1699 = vlaneseq
    %v1700 = vshrl.u32 %v1699, 7
    %v1701 = vsub.s32 %v1698, %v1700
    %v1702 = vrot.slane %v1560, %v1701
    %v1704 = vunpack.c.l.s4 1966171168
    %v1705 = vunpack.c.0.s8 %v1704
    %v1706 = vlaneseq
    %v1707 = vshrl.u32 %v1706, 7
    %v1708 = vsub.s32 %v1705, %v1707
    %v1709 = vrot.slane %v1695, %v1708
    %v1710 = vcombine.high %v1702, %v1702
    %v1711 = vcombine.high %v1709, %v1709
    %v1713 = vunpack.c.l.s4 1966171168
    %v1714 = vunpack.c.0.s8 %v1713
    %v1715 = vlaneseq
    %v1716 = vshrl.u32 %v1715, 7
    %v1717 = vsub.s32 %v1714, %v1716
    %v1718 = vrot.slane %v1702, %v1717
    %v1720 = vunpack.c.l.s4 1966171168
    %v1721 = vunpack.c.0.s8 %v1720
    %v1722 = vlaneseq
    %v1723 = vshrl.u32 %v1722, 7
    %v1724 = vsub.s32 %v1721, %v1723
    %v1725 = vrot.slane %v1709, %v1724
    %v1727 = vunpack.c.l.s4 1966171168
    %v1728 = vunpack.c.0.s8 %v1727
    %v1729 = vlaneseq
    %v1730 = vshrl.u32 %v1729, 7
    %v1731 = vsub.s32 %v1728, %v1730
    %v1732 = vrot.slane %v1710, %v1731
    %v1734 = vunpack.c.l.s4 1966171168
    %v1735 = vunpack.c.0.s8 %v1734
    %v1736 = vlaneseq
    %v1737 = vshrl.u32 %v1736, 7
    %v1738 = vsub.s32 %v1735, %v1737
    %v1739 = vrot.slane %v1711, %v1738
    %v1740 = vcombine.high %v1718, %v1718
    %v1741 = vcombine.high %v1725, %v1725
    %v1742 = vcombine.high %v1732, %v1732
    %v1743 = vcombine.high %v1739, %v1739
    %v1752 = vpack.c.bf16 %v1718, %v1718
    %v1753 = vpack.c.bf16 %v1732, %v1732
    %v1754 = vpack.c.bf16 %v1740, %v1740
    %v1755 = vpack.c.bf16 %v1742, %v1742
    %v1756 = vpack.c.bf16 %v1725, %v1725
    %v1757 = vpack.c.bf16 %v1739, %v1739
    %v1758 = vpack.c.bf16 %v1741, %v1741
    %v1759 = vpack.c.bf16 %v1743, %v1743
    %1761 = vrot.lane.b32.xlu0 %v1752, 96
    %v1762 = vpop.permute.xlu0 %1761
    %v1764 = vsel %vm319, %v1762, 0
    %v1767 = vsel %vm319, %v1678, 0
    %1769 = vmatprep.subr.bf16.mxu0 0
    %1770 = vmatpush1.bf16.xpose.msra.mxu0 0
    %1771 = vmatprep.subr.bf16.mxu0 0
    %1772 = vmatpush1.bf16.xpose.msra.mxu0 0
    %1773 = vmatprep.subr.bf16.mxu0 0
    %1774 = vmatpush1.bf16.xpose.msra.mxu0 0
    %1775 = vmatprep.subr.bf16.mxu0 0
    %1776 = vmatpush1.bf16.xpose.msra.mxu0 0
    %1777 = vmatprep.subr.bf16.mxu0 0
    %1778 = vmatpush1.bf16.xpose.msra.mxu0 0
    %1779 = vmatprep.subr.bf16.mxu0 0
    %1780 = vmatpush1.bf16.xpose.msra.mxu0 0
    %1781 = vmatprep.subr.bf16.mxu0 0
    %1782 = vmatpush1.bf16.xpose.msra.mxu0 0
    %1783 = vmatprep.subr.bf16.mxu0 0
    %1784 = vmatpush1.bf16.xpose.msra.mxu0 %v1767
    %1785 = vmatprep.subr.bf16.mxu0 0
    %1786 = vmatpush2.bf16.xpose.msra.mxu0 0
    %1787 = vmatprep.subr.bf16.mxu0 0
    %1788 = vmatpush2.bf16.xpose.msra.mxu0 0
    %1789 = vmatprep.subr.bf16.mxu0 0
    %1790 = vmatpush2.bf16.xpose.msra.mxu0 0
    %1791 = vmatprep.subr.bf16.mxu0 0
    %1792 = vmatpush2.bf16.xpose.msra.mxu0 0
    %1793 = vmatprep.subr.bf16.mxu0 0
    %1794 = vmatpush2.bf16.xpose.msra.mxu0 0
    %1795 = vmatprep.subr.bf16.mxu0 0
    %1796 = vmatpush2.bf16.xpose.msra.mxu0 0
    %1797 = vmatprep.subr.bf16.mxu0 0
    %1798 = vmatpush2.bf16.xpose.msra.mxu0 0
    %1799 = vmatprep.subr.bf16.mxu0 0
    %1800 = vmatpush2.bf16.xpose.msra.mxu0 0
    %1801 = vmatprep.mubr.bf16.mxu0 0
    %1802 = vmatmul.mubr.bf16.gmra.mxu0 %v1764
    %v1803 = vpop.f32.mrf.mxu0
    %v1804 = vadd.f32 %v1686, %v1803
    %v1805 = vpop.f32.mrf.mxu0
    %v1806 = vpop.f32.mrf.mxu0
    %v1807 = vpop.f32.mrf.mxu0
    %1808 = vdwg.mxu0
    %1810 = vrot.lane.b32.xlu0 %v1753, 96
    %v1811 = vpop.permute.xlu0 %1810
    %v1813 = vsel %vm319, %v1811, 0
    %v1816 = vsel %vm319, %v1679, 0
    %1818 = vmatprep.subr.bf16.mxu0 0
    %1819 = vmatpush1.bf16.xpose.msra.mxu0 0
    %1820 = vmatprep.subr.bf16.mxu0 0
    %1821 = vmatpush1.bf16.xpose.msra.mxu0 0
    %1822 = vmatprep.subr.bf16.mxu0 0
    %1823 = vmatpush1.bf16.xpose.msra.mxu0 0
    %1824 = vmatprep.subr.bf16.mxu0 0
    %1825 = vmatpush1.bf16.xpose.msra.mxu0 0
    %1826 = vmatprep.subr.bf16.mxu0 0
    %1827 = vmatpush1.bf16.xpose.msra.mxu0 0
    %1828 = vmatprep.subr.bf16.mxu0 0
    %1829 = vmatpush1.bf16.xpose.msra.mxu0 0
    %1830 = vmatprep.subr.bf16.mxu0 0
    %1831 = vmatpush1.bf16.xpose.msra.mxu0 0
    %1832 = vmatprep.subr.bf16.mxu0 0
    %1833 = vmatpush1.bf16.xpose.msra.mxu0 %v1816
    %1834 = vmatprep.subr.bf16.mxu0 0
    %1835 = vmatpush2.bf16.xpose.msra.mxu0 0
    %1836 = vmatprep.subr.bf16.mxu0 0
    %1837 = vmatpush2.bf16.xpose.msra.mxu0 0
    %1838 = vmatprep.subr.bf16.mxu0 0
    %1839 = vmatpush2.bf16.xpose.msra.mxu0 0
    %1840 = vmatprep.subr.bf16.mxu0 0
    %1841 = vmatpush2.bf16.xpose.msra.mxu0 0
    %1842 = vmatprep.subr.bf16.mxu0 0
    %1843 = vmatpush2.bf16.xpose.msra.mxu0 0
    %1844 = vmatprep.subr.bf16.mxu0 0
    %1845 = vmatpush2.bf16.xpose.msra.mxu0 0
    %1846 = vmatprep.subr.bf16.mxu0 0
    %1847 = vmatpush2.bf16.xpose.msra.mxu0 0
    %1848 = vmatprep.subr.bf16.mxu0 0
    %1849 = vmatpush2.bf16.xpose.msra.mxu0 0
    %1850 = vmatprep.mubr.bf16.mxu0 0
    %1851 = vmatmul.mubr.bf16.gmra.mxu0 %v1813
    %v1852 = vpop.f32.mrf.mxu0
    %v1853 = vadd.f32 %v1687, %v1852
    %v1854 = vpop.f32.mrf.mxu0
    %v1855 = vpop.f32.mrf.mxu0
    %v1856 = vpop.f32.mrf.mxu0
    %1857 = vdwg.mxu0
    %1859 = vrot.lane.b32.xlu0 %v1754, 96
    %v1860 = vpop.permute.xlu0 %1859
    %v1862 = vsel %vm319, %v1860, 0
    %v1865 = vsel %vm319, %v1680, 0
    %1867 = vmatprep.subr.bf16.mxu0 0
    %1868 = vmatpush1.bf16.xpose.msra.mxu0 0
    %1869 = vmatprep.subr.bf16.mxu0 0
    %1870 = vmatpush1.bf16.xpose.msra.mxu0 0
    %1871 = vmatprep.subr.bf16.mxu0 0
    %1872 = vmatpush1.bf16.xpose.msra.mxu0 0
    %1873 = vmatprep.subr.bf16.mxu0 0
    %1874 = vmatpush1.bf16.xpose.msra.mxu0 0
    %1875 = vmatprep.subr.bf16.mxu0 0
    %1876 = vmatpush1.bf16.xpose.msra.mxu0 0
    %1877 = vmatprep.subr.bf16.mxu0 0
    %1878 = vmatpush1.bf16.xpose.msra.mxu0 0
    %1879 = vmatprep.subr.bf16.mxu0 0
    %1880 = vmatpush1.bf16.xpose.msra.mxu0 0
    %1881 = vmatprep.subr.bf16.mxu0 0
    %1882 = vmatpush1.bf16.xpose.msra.mxu0 %v1865
    %1883 = vmatprep.subr.bf16.mxu0 0
    %1884 = vmatpush2.bf16.xpose.msra.mxu0 0
    %1885 = vmatprep.subr.bf16.mxu0 0
    %1886 = vmatpush2.bf16.xpose.msra.mxu0 0
    %1887 = vmatprep.subr.bf16.mxu0 0
    %1888 = vmatpush2.bf16.xpose.msra.mxu0 0
    %1889 = vmatprep.subr.bf16.mxu0 0
    %1890 = vmatpush2.bf16.xpose.msra.mxu0 0
    %1891 = vmatprep.subr.bf16.mxu0 0
    %1892 = vmatpush2.bf16.xpose.msra.mxu0 0
    %1893 = vmatprep.subr.bf16.mxu0 0
    %1894 = vmatpush2.bf16.xpose.msra.mxu0 0
    %1895 = vmatprep.subr.bf16.mxu0 0
    %1896 = vmatpush2.bf16.xpose.msra.mxu0 0
    %1897 = vmatprep.subr.bf16.mxu0 0
    %1898 = vmatpush2.bf16.xpose.msra.mxu0 0
    %1899 = vmatprep.mubr.bf16.mxu0 0
    %1900 = vmatmul.mubr.bf16.gmra.mxu0 %v1862
    %v1901 = vpop.f32.mrf.mxu0
    %v1902 = vadd.f32 %v1688, %v1901
    %v1903 = vpop.f32.mrf.mxu0
    %v1904 = vpop.f32.mrf.mxu0
    %v1905 = vpop.f32.mrf.mxu0
    %1906 = vdwg.mxu0
    %1908 = vrot.lane.b32.xlu0 %v1755, 96
    %v1909 = vpop.permute.xlu0 %1908
    %v1911 = vsel %vm319, %v1909, 0
    %v1914 = vsel %vm319, %v1681, 0
    %1916 = vmatprep.subr.bf16.mxu0 0
    %1917 = vmatpush1.bf16.xpose.msra.mxu0 0
    %1918 = vmatprep.subr.bf16.mxu0 0
    %1919 = vmatpush1.bf16.xpose.msra.mxu0 0
    %1920 = vmatprep.subr.bf16.mxu0 0
    %1921 = vmatpush1.bf16.xpose.msra.mxu0 0
    %1922 = vmatprep.subr.bf16.mxu0 0
    %1923 = vmatpush1.bf16.xpose.msra.mxu0 0
    %1924 = vmatprep.subr.bf16.mxu0 0
    %1925 = vmatpush1.bf16.xpose.msra.mxu0 0
    %1926 = vmatprep.subr.bf16.mxu0 0
    %1927 = vmatpush1.bf16.xpose.msra.mxu0 0
    %1928 = vmatprep.subr.bf16.mxu0 0
    %1929 = vmatpush1.bf16.xpose.msra.mxu0 0
    %1930 = vmatprep.subr.bf16.mxu0 0
    %1931 = vmatpush1.bf16.xpose.msra.mxu0 %v1914
    %1932 = vmatprep.subr.bf16.mxu0 0
    %1933 = vmatpush2.bf16.xpose.msra.mxu0 0
    %1934 = vmatprep.subr.bf16.mxu0 0
    %1935 = vmatpush2.bf16.xpose.msra.mxu0 0
    %1936 = vmatprep.subr.bf16.mxu0 0
    %1937 = vmatpush2.bf16.xpose.msra.mxu0 0
    %1938 = vmatprep.subr.bf16.mxu0 0
    %1939 = vmatpush2.bf16.xpose.msra.mxu0 0
    %1940 = vmatprep.subr.bf16.mxu0 0
    %1941 = vmatpush2.bf16.xpose.msra.mxu0 0
    %1942 = vmatprep.subr.bf16.mxu0 0
    %1943 = vmatpush2.bf16.xpose.msra.mxu0 0
    %1944 = vmatprep.subr.bf16.mxu0 0
    %1945 = vmatpush2.bf16.xpose.msra.mxu0 0
    %1946 = vmatprep.subr.bf16.mxu0 0
    %1947 = vmatpush2.bf16.xpose.msra.mxu0 0
    %1948 = vmatprep.mubr.bf16.mxu0 0
    %1949 = vmatmul.mubr.bf16.gmra.mxu0 %v1911
    %v1950 = vpop.f32.mrf.mxu0
    %v1951 = vadd.f32 %v1689, %v1950
    %v1952 = vpop.f32.mrf.mxu0
    %v1953 = vpop.f32.mrf.mxu0
    %v1954 = vpop.f32.mrf.mxu0
    %1955 = vdwg.mxu0
    %1957 = vrot.lane.b32.xlu0 %v1756, 96
    %v1958 = vpop.permute.xlu0 %1957
    %v1960 = vsel %vm319, %v1958, 0
    %v1963 = vsel %vm319, %v1682, 0
    %1965 = vmatprep.subr.bf16.mxu0 0
    %1966 = vmatpush1.bf16.xpose.msra.mxu0 0
    %1967 = vmatprep.subr.bf16.mxu0 0
    %1968 = vmatpush1.bf16.xpose.msra.mxu0 0
    %1969 = vmatprep.subr.bf16.mxu0 0
    %1970 = vmatpush1.bf16.xpose.msra.mxu0 0
    %1971 = vmatprep.subr.bf16.mxu0 0
    %1972 = vmatpush1.bf16.xpose.msra.mxu0 0
    %1973 = vmatprep.subr.bf16.mxu0 0
    %1974 = vmatpush1.bf16.xpose.msra.mxu0 0
    %1975 = vmatprep.subr.bf16.mxu0 0
    %1976 = vmatpush1.bf16.xpose.msra.mxu0 0
    %1977 = vmatprep.subr.bf16.mxu0 0
    %1978 = vmatpush1.bf16.xpose.msra.mxu0 0
    %1979 = vmatprep.subr.bf16.mxu0 0
    %1980 = vmatpush1.bf16.xpose.msra.mxu0 %v1963
    %1981 = vmatprep.subr.bf16.mxu0 0
    %1982 = vmatpush2.bf16.xpose.msra.mxu0 0
    %1983 = vmatprep.subr.bf16.mxu0 0
    %1984 = vmatpush2.bf16.xpose.msra.mxu0 0
    %1985 = vmatprep.subr.bf16.mxu0 0
    %1986 = vmatpush2.bf16.xpose.msra.mxu0 0
    %1987 = vmatprep.subr.bf16.mxu0 0
    %1988 = vmatpush2.bf16.xpose.msra.mxu0 0
    %1989 = vmatprep.subr.bf16.mxu0 0
    %1990 = vmatpush2.bf16.xpose.msra.mxu0 0
    %1991 = vmatprep.subr.bf16.mxu0 0
    %1992 = vmatpush2.bf16.xpose.msra.mxu0 0
    %1993 = vmatprep.subr.bf16.mxu0 0
    %1994 = vmatpush2.bf16.xpose.msra.mxu0 0
    %1995 = vmatprep.subr.bf16.mxu0 0
    %1996 = vmatpush2.bf16.xpose.msra.mxu0 0
    %1997 = vmatprep.mubr.bf16.mxu0 0
    %1998 = vmatmul.mubr.bf16.gmra.mxu0 %v1960
    %v1999 = vpop.f32.mrf.mxu0
    %v2000 = vadd.f32 %v1690, %v1999
    %v2001 = vpop.f32.mrf.mxu0
    %v2002 = vpop.f32.mrf.mxu0
    %v2003 = vpop.f32.mrf.mxu0
    %2004 = vdwg.mxu0
    %2006 = vrot.lane.b32.xlu0 %v1757, 96
    %v2007 = vpop.permute.xlu0 %2006
    %v2009 = vsel %vm319, %v2007, 0
    %v2012 = vsel %vm319, %v1683, 0
    %2014 = vmatprep.subr.bf16.mxu0 0
    %2015 = vmatpush1.bf16.xpose.msra.mxu0 0
    %2016 = vmatprep.subr.bf16.mxu0 0
    %2017 = vmatpush1.bf16.xpose.msra.mxu0 0
    %2018 = vmatprep.subr.bf16.mxu0 0
    %2019 = vmatpush1.bf16.xpose.msra.mxu0 0
    %2020 = vmatprep.subr.bf16.mxu0 0
    %2021 = vmatpush1.bf16.xpose.msra.mxu0 0
    %2022 = vmatprep.subr.bf16.mxu0 0
    %2023 = vmatpush1.bf16.xpose.msra.mxu0 0
    %2024 = vmatprep.subr.bf16.mxu0 0
    %2025 = vmatpush1.bf16.xpose.msra.mxu0 0
    %2026 = vmatprep.subr.bf16.mxu0 0
    %2027 = vmatpush1.bf16.xpose.msra.mxu0 0
    %2028 = vmatprep.subr.bf16.mxu0 0
    %2029 = vmatpush1.bf16.xpose.msra.mxu0 %v2012
    %2030 = vmatprep.subr.bf16.mxu0 0
    %2031 = vmatpush2.bf16.xpose.msra.mxu0 0
    %2032 = vmatprep.subr.bf16.mxu0 0
    %2033 = vmatpush2.bf16.xpose.msra.mxu0 0
    %2034 = vmatprep.subr.bf16.mxu0 0
    %2035 = vmatpush2.bf16.xpose.msra.mxu0 0
    %2036 = vmatprep.subr.bf16.mxu0 0
    %2037 = vmatpush2.bf16.xpose.msra.mxu0 0
    %2038 = vmatprep.subr.bf16.mxu0 0
    %2039 = vmatpush2.bf16.xpose.msra.mxu0 0
    %2040 = vmatprep.subr.bf16.mxu0 0
    %2041 = vmatpush2.bf16.xpose.msra.mxu0 0
    %2042 = vmatprep.subr.bf16.mxu0 0
    %2043 = vmatpush2.bf16.xpose.msra.mxu0 0
    %2044 = vmatprep.subr.bf16.mxu0 0
    %2045 = vmatpush2.bf16.xpose.msra.mxu0 0
    %2046 = vmatprep.mubr.bf16.mxu0 0
    %2047 = vmatmul.mubr.bf16.gmra.mxu0 %v2009
    %v2048 = vpop.f32.mrf.mxu0
    %v2049 = vadd.f32 %v1691, %v2048
    %v2050 = vpop.f32.mrf.mxu0
    %v2051 = vpop.f32.mrf.mxu0
    %v2052 = vpop.f32.mrf.mxu0
    %2053 = vdwg.mxu0
    %2055 = vrot.lane.b32.xlu0 %v1758, 96
    %v2056 = vpop.permute.xlu0 %2055
    %v2058 = vsel %vm319, %v2056, 0
    %v2061 = vsel %vm319, %v1684, 0
    %2063 = vmatprep.subr.bf16.mxu0 0
    %2064 = vmatpush1.bf16.xpose.msra.mxu0 0
    %2065 = vmatprep.subr.bf16.mxu0 0
    %2066 = vmatpush1.bf16.xpose.msra.mxu0 0
    %2067 = vmatprep.subr.bf16.mxu0 0
    %2068 = vmatpush1.bf16.xpose.msra.mxu0 0
    %2069 = vmatprep.subr.bf16.mxu0 0
    %2070 = vmatpush1.bf16.xpose.msra.mxu0 0
    %2071 = vmatprep.subr.bf16.mxu0 0
    %2072 = vmatpush1.bf16.xpose.msra.mxu0 0
    %2073 = vmatprep.subr.bf16.mxu0 0
    %2074 = vmatpush1.bf16.xpose.msra.mxu0 0
    %2075 = vmatprep.subr.bf16.mxu0 0
    %2076 = vmatpush1.bf16.xpose.msra.mxu0 0
    %2077 = vmatprep.subr.bf16.mxu0 0
    %2078 = vmatpush1.bf16.xpose.msra.mxu0 %v2061
    %2079 = vmatprep.subr.bf16.mxu0 0
    %2080 = vmatpush2.bf16.xpose.msra.mxu0 0
    %2081 = vmatprep.subr.bf16.mxu0 0
    %2082 = vmatpush2.bf16.xpose.msra.mxu0 0
    %2083 = vmatprep.subr.bf16.mxu0 0
    %2084 = vmatpush2.bf16.xpose.msra.mxu0 0
    %2085 = vmatprep.subr.bf16.mxu0 0
    %2086 = vmatpush2.bf16.xpose.msra.mxu0 0
    %2087 = vmatprep.subr.bf16.mxu0 0
    %2088 = vmatpush2.bf16.xpose.msra.mxu0 0
    %2089 = vmatprep.subr.bf16.mxu0 0
    %2090 = vmatpush2.bf16.xpose.msra.mxu0 0
    %2091 = vmatprep.subr.bf16.mxu0 0
    %2092 = vmatpush2.bf16.xpose.msra.mxu0 0
    %2093 = vmatprep.subr.bf16.mxu0 0
    %2094 = vmatpush2.bf16.xpose.msra.mxu0 0
    %2095 = vmatprep.mubr.bf16.mxu0 0
    %2096 = vmatmul.mubr.bf16.gmra.mxu0 %v2058
    %v2097 = vpop.f32.mrf.mxu0
    %v2098 = vadd.f32 %v1692, %v2097
    %v2099 = vpop.f32.mrf.mxu0
    %v2100 = vpop.f32.mrf.mxu0
    %v2101 = vpop.f32.mrf.mxu0
    %2102 = vdwg.mxu0
    %2104 = vrot.lane.b32.xlu0 %v1759, 96
    %v2105 = vpop.permute.xlu0 %2104
    %v2107 = vsel %vm319, %v2105, 0
    %v2110 = vsel %vm319, %v1685, 0
    %2112 = vmatprep.subr.bf16.mxu0 0
    %2113 = vmatpush1.bf16.xpose.msra.mxu0 0
    %2114 = vmatprep.subr.bf16.mxu0 0
    %2115 = vmatpush1.bf16.xpose.msra.mxu0 0
    %2116 = vmatprep.subr.bf16.mxu0 0
    %2117 = vmatpush1.bf16.xpose.msra.mxu0 0
    %2118 = vmatprep.subr.bf16.mxu0 0
    %2119 = vmatpush1.bf16.xpose.msra.mxu0 0
    %2120 = vmatprep.subr.bf16.mxu0 0
    %2121 = vmatpush1.bf16.xpose.msra.mxu0 0
    %2122 = vmatprep.subr.bf16.mxu0 0
    %2123 = vmatpush1.bf16.xpose.msra.mxu0 0
    %2124 = vmatprep.subr.bf16.mxu0 0
    %2125 = vmatpush1.bf16.xpose.msra.mxu0 0
    %2126 = vmatprep.subr.bf16.mxu0 0
    %2127 = vmatpush1.bf16.xpose.msra.mxu0 %v2110
    %2128 = vmatprep.subr.bf16.mxu0 0
    %2129 = vmatpush2.bf16.xpose.msra.mxu0 0
    %2130 = vmatprep.subr.bf16.mxu0 0
    %2131 = vmatpush2.bf16.xpose.msra.mxu0 0
    %2132 = vmatprep.subr.bf16.mxu0 0
    %2133 = vmatpush2.bf16.xpose.msra.mxu0 0
    %2134 = vmatprep.subr.bf16.mxu0 0
    %2135 = vmatpush2.bf16.xpose.msra.mxu0 0
    %2136 = vmatprep.subr.bf16.mxu0 0
    %2137 = vmatpush2.bf16.xpose.msra.mxu0 0
    %2138 = vmatprep.subr.bf16.mxu0 0
    %2139 = vmatpush2.bf16.xpose.msra.mxu0 0
    %2140 = vmatprep.subr.bf16.mxu0 0
    %2141 = vmatpush2.bf16.xpose.msra.mxu0 0
    %2142 = vmatprep.subr.bf16.mxu0 0
    %2143 = vmatpush2.bf16.xpose.msra.mxu0 0
    %2144 = vmatprep.mubr.bf16.mxu0 0
    %2145 = vmatmul.mubr.bf16.gmra.mxu0 %v2107
    %v2146 = vpop.f32.mrf.mxu0
    %v2147 = vadd.f32 %v1693, %v2146
    %v2148 = vpop.f32.mrf.mxu0
    %v2149 = vpop.f32.mrf.mxu0
    %v2150 = vpop.f32.mrf.mxu0
    %2151 = vdwg.mxu0
    %v2152 = vsel %vm688, %v1804, -inf
    %2153 = vmax.xlane.f32.xlu0 %v2152
    %v2154 = vpop.xlane.xlu0 %2153
    %v2155 = vsel %vm688, %v1853, -inf
    %2156 = vmax.xlane.f32.xlu0 %v2155
    %v2157 = vpop.xlane.xlu0 %2156
    %v2158 = vsel %vm688, %v1902, -inf
    %2159 = vmax.xlane.f32.xlu0 %v2158
    %v2160 = vpop.xlane.xlu0 %2159
    %v2161 = vsel %vm688, %v1951, -inf
    %2162 = vmax.xlane.f32.xlu0 %v2161
    %v2163 = vpop.xlane.xlu0 %2162
    %v2164 = vsel %vm688, %v2000, -inf
    %2165 = vmax.xlane.f32.xlu0 %v2164
    %v2166 = vpop.xlane.xlu0 %2165
    %v2167 = vsel %vm688, %v2049, -inf
    %2168 = vmax.xlane.f32.xlu0 %v2167
    %v2169 = vpop.xlane.xlu0 %2168
    %v2170 = vsel %vm688, %v2098, -inf
    %2171 = vmax.xlane.f32.xlu0 %v2170
    %v2172 = vpop.xlane.xlu0 %2171
    %v2173 = vsel %vm688, %v2147, -inf
    %2174 = vmax.xlane.f32.xlu0 %v2173
    %v2175 = vpop.xlane.xlu0 %2174
    %v2176 = vsub.f32 %v1804, %v2154
    %v2177 = vsub.f32 %v1853, %v2157
    %v2178 = vsub.f32 %v1902, %v2160
    %v2179 = vsub.f32 %v1951, %v2163
    %v2180 = vsub.f32 %v2000, %v2166
    %v2181 = vsub.f32 %v2049, %v2169
    %v2182 = vsub.f32 %v2098, %v2172
    %v2183 = vsub.f32 %v2147, %v2175
    %v2184 = vmul.f32 %v2176, 1.442695
    %v2185 = vpow.pop %v2184
    %v2186 = vmul.f32 %v2177, 1.442695
    %v2187 = vpow.pop %v2186
    %v2188 = vmul.f32 %v2178, 1.442695
    %v2189 = vpow.pop %v2188
    %v2190 = vmul.f32 %v2179, 1.442695
    %v2191 = vpow.pop %v2190
    %v2192 = vmul.f32 %v2180, 1.442695
    %v2193 = vpow.pop %v2192
    %v2194 = vmul.f32 %v2181, 1.442695
    %v2195 = vpow.pop %v2194
    %v2196 = vmul.f32 %v2182, 1.442695
    %v2197 = vpow.pop %v2196
    %v2198 = vmul.f32 %v2183, 1.442695
    %v2199 = vpow.pop %v2198
    %v2200 = vsel %vm688, %v2185, 0.0
    %2201 = vadd.xlane.f32.xlu0 %v2200
    %v2202 = vpop.xlane.xlu0 %2201
    %v2203 = vsel %vm688, %v2187, 0.0
    %2204 = vadd.xlane.f32.xlu0 %v2203
    %v2205 = vpop.xlane.xlu0 %2204
    %v2206 = vsel %vm688, %v2189, 0.0
    %2207 = vadd.xlane.f32.xlu0 %v2206
    %v2208 = vpop.xlane.xlu0 %2207
    %v2209 = vsel %vm688, %v2191, 0.0
    %2210 = vadd.xlane.f32.xlu0 %v2209
    %v2211 = vpop.xlane.xlu0 %2210
    %v2212 = vsel %vm688, %v2193, 0.0
    %2213 = vadd.xlane.f32.xlu0 %v2212
    %v2214 = vpop.xlane.xlu0 %2213
    %v2215 = vsel %vm688, %v2195, 0.0
    %2216 = vadd.xlane.f32.xlu0 %v2215
    %v2217 = vpop.xlane.xlu0 %2216
    %v2218 = vsel %vm688, %v2197, 0.0
    %2219 = vadd.xlane.f32.xlu0 %v2218
    %v2220 = vpop.xlane.xlu0 %2219
    %v2221 = vsel %vm688, %v2199, 0.0
    %2222 = vadd.xlane.f32.xlu0 %v2221
    %v2223 = vpop.xlane.xlu0 %2222
    %v2224 = vrcp.pop %v2202
    %v2225 = vrcp.pop %v2205
    %v2226 = vrcp.pop %v2208
    %v2227 = vrcp.pop %v2211
    %v2228 = vrcp.pop %v2214
    %v2229 = vrcp.pop %v2217
    %v2230 = vrcp.pop %v2220
    %v2231 = vrcp.pop %v2223
    %v2232 = vmul.f32 %v2185, %v2224
    %v2233 = vmul.f32 %v2187, %v2225
    %v2234 = vmul.f32 %v2189, %v2226
    %v2235 = vmul.f32 %v2191, %v2227
    %v2236 = vmul.f32 %v2193, %v2228
    %v2237 = vmul.f32 %v2195, %v2229
    %v2238 = vmul.f32 %v2197, %v2230
    %v2239 = vmul.f32 %v2199, %v2231
    %v2240 = vpack.c.bf16 %v2232, %v2232
    %v2241 = vpack.c.bf16 %v2233, %v2233
    %v2242 = vpack.c.bf16 %v2234, %v2234
    %v2243 = vpack.c.bf16 %v2235, %v2235
    %v2244 = vpack.c.bf16 %v2236, %v2236
    %v2245 = vpack.c.bf16 %v2237, %v2237
    %v2246 = vpack.c.bf16 %v2238, %v2238
    %v2247 = vpack.c.bf16 %v2239, %v2239
    %v2249 = vsel %vm785, %v2240, 0
    %v2251 = vsel %vm789, %v1678, 0
    %2253 = vmatprep.subr.bf16.mxu0 0
    %2254 = vmatpush1.bf16.msra.mxu0 0
    %2255 = vmatprep.subr.bf16.mxu0 0
    %2256 = vmatpush1.bf16.msra.mxu0 0
    %2257 = vmatprep.subr.bf16.mxu0 0
    %2258 = vmatpush1.bf16.msra.mxu0 0
    %2259 = vmatprep.subr.bf16.mxu0 0
    %2260 = vmatpush1.bf16.msra.mxu0 0
    %2261 = vmatprep.subr.bf16.mxu0 0
    %2262 = vmatpush1.bf16.msra.mxu0 0
    %2263 = vmatprep.subr.bf16.mxu0 0
    %2264 = vmatpush1.bf16.msra.mxu0 0
    %2265 = vmatprep.subr.bf16.mxu0 0
    %2266 = vmatpush1.bf16.msra.mxu0 0
    %2267 = vmatprep.subr.bf16.mxu0 0
    %2268 = vmatpush1.bf16.msra.mxu0 %v2251
    %2269 = vmatprep.subr.bf16.mxu0 0
    %2270 = vmatpush2.bf16.msra.mxu0 0
    %2271 = vmatprep.subr.bf16.mxu0 0
    %2272 = vmatpush2.bf16.msra.mxu0 0
    %2273 = vmatprep.subr.bf16.mxu0 0
    %2274 = vmatpush2.bf16.msra.mxu0 0
    %2275 = vmatprep.subr.bf16.mxu0 0
    %2276 = vmatpush2.bf16.msra.mxu0 0
    %2277 = vmatprep.subr.bf16.mxu0 0
    %2278 = vmatpush2.bf16.msra.mxu0 0
    %2279 = vmatprep.subr.bf16.mxu0 0
    %2280 = vmatpush2.bf16.msra.mxu0 0
    %2281 = vmatprep.subr.bf16.mxu0 0
    %2282 = vmatpush2.bf16.msra.mxu0 0
    %2283 = vmatprep.subr.bf16.mxu0 0
    %2284 = vmatpush2.bf16.msra.mxu0 0
    %2285 = vmatprep.mubr.bf16.mxu0 0
    %2286 = vmatmul.mubr.bf16.gmra.mxu0 %v2249
    %v2287 = vpop.f32.mrf.mxu0
    %v2288 = vadd.f32 0.0, %v2287
    %v2289 = vpop.f32.mrf.mxu0
    %v2290 = vpop.f32.mrf.mxu0
    %v2291 = vpop.f32.mrf.mxu0
    %2292 = vdwg.mxu0
    %v2294 = vsel %vm785, %v2241, 0
    %v2296 = vsel %vm789, %v1679, 0
    %2298 = vmatprep.subr.bf16.mxu0 0
    %2299 = vmatpush1.bf16.msra.mxu0 0
    %2300 = vmatprep.subr.bf16.mxu0 0
    %2301 = vmatpush1.bf16.msra.mxu0 0
    %2302 = vmatprep.subr.bf16.mxu0 0
    %2303 = vmatpush1.bf16.msra.mxu0 0
    %2304 = vmatprep.subr.bf16.mxu0 0
    %2305 = vmatpush1.bf16.msra.mxu0 0
    %2306 = vmatprep.subr.bf16.mxu0 0
    %2307 = vmatpush1.bf16.msra.mxu0 0
    %2308 = vmatprep.subr.bf16.mxu0 0
    %2309 = vmatpush1.bf16.msra.mxu0 0
    %2310 = vmatprep.subr.bf16.mxu0 0
    %2311 = vmatpush1.bf16.msra.mxu0 0
    %2312 = vmatprep.subr.bf16.mxu0 0
    %2313 = vmatpush1.bf16.msra.mxu0 %v2296
    %2314 = vmatprep.subr.bf16.mxu0 0
    %2315 = vmatpush2.bf16.msra.mxu0 0
    %2316 = vmatprep.subr.bf16.mxu0 0
    %2317 = vmatpush2.bf16.msra.mxu0 0
    %2318 = vmatprep.subr.bf16.mxu0 0
    %2319 = vmatpush2.bf16.msra.mxu0 0
    %2320 = vmatprep.subr.bf16.mxu0 0
    %2321 = vmatpush2.bf16.msra.mxu0 0
    %2322 = vmatprep.subr.bf16.mxu0 0
    %2323 = vmatpush2.bf16.msra.mxu0 0
    %2324 = vmatprep.subr.bf16.mxu0 0
    %2325 = vmatpush2.bf16.msra.mxu0 0
    %2326 = vmatprep.subr.bf16.mxu0 0
    %2327 = vmatpush2.bf16.msra.mxu0 0
    %2328 = vmatprep.subr.bf16.mxu0 0
    %2329 = vmatpush2.bf16.msra.mxu0 0
    %2330 = vmatprep.mubr.bf16.mxu0 0
    %2331 = vmatmul.mubr.bf16.gmra.mxu0 %v2294
    %v2332 = vpop.f32.mrf.mxu0
    %v2333 = vadd.f32 0.0, %v2332
    %v2334 = vpop.f32.mrf.mxu0
    %v2335 = vpop.f32.mrf.mxu0
    %v2336 = vpop.f32.mrf.mxu0
    %2337 = vdwg.mxu0
    %v2339 = vsel %vm785, %v2242, 0
    %v2341 = vsel %vm789, %v1680, 0
    %2343 = vmatprep.subr.bf16.mxu0 0
    %2344 = vmatpush1.bf16.msra.mxu0 0
    %2345 = vmatprep.subr.bf16.mxu0 0
    %2346 = vmatpush1.bf16.msra.mxu0 0
    %2347 = vmatprep.subr.bf16.mxu0 0
    %2348 = vmatpush1.bf16.msra.mxu0 0
    %2349 = vmatprep.subr.bf16.mxu0 0
    %2350 = vmatpush1.bf16.msra.mxu0 0
    %2351 = vmatprep.subr.bf16.mxu0 0
    %2352 = vmatpush1.bf16.msra.mxu0 0
    %2353 = vmatprep.subr.bf16.mxu0 0
    %2354 = vmatpush1.bf16.msra.mxu0 0
    %2355 = vmatprep.subr.bf16.mxu0 0
    %2356 = vmatpush1.bf16.msra.mxu0 0
    %2357 = vmatprep.subr.bf16.mxu0 0
    %2358 = vmatpush1.bf16.msra.mxu0 %v2341
    %2359 = vmatprep.subr.bf16.mxu0 0
    %2360 = vmatpush2.bf16.msra.mxu0 0
    %2361 = vmatprep.subr.bf16.mxu0 0
    %2362 = vmatpush2.bf16.msra.mxu0 0
    %2363 = vmatprep.subr.bf16.mxu0 0
    %2364 = vmatpush2.bf16.msra.mxu0 0
    %2365 = vmatprep.subr.bf16.mxu0 0
    %2366 = vmatpush2.bf16.msra.mxu0 0
    %2367 = vmatprep.subr.bf16.mxu0 0
    %2368 = vmatpush2.bf16.msra.mxu0 0
    %2369 = vmatprep.subr.bf16.mxu0 0
    %2370 = vmatpush2.bf16.msra.mxu0 0
    %2371 = vmatprep.subr.bf16.mxu0 0
    %2372 = vmatpush2.bf16.msra.mxu0 0
    %2373 = vmatprep.subr.bf16.mxu0 0
    %2374 = vmatpush2.bf16.msra.mxu0 0
    %2375 = vmatprep.mubr.bf16.mxu0 0
    %2376 = vmatmul.mubr.bf16.gmra.mxu0 %v2339
    %v2377 = vpop.f32.mrf.mxu0
    %v2378 = vadd.f32 0.0, %v2377
    %v2379 = vpop.f32.mrf.mxu0
    %v2380 = vpop.f32.mrf.mxu0
    %v2381 = vpop.f32.mrf.mxu0
    %2382 = vdwg.mxu0
    %v2384 = vsel %vm785, %v2243, 0
    %v2386 = vsel %vm789, %v1681, 0
    %2388 = vmatprep.subr.bf16.mxu0 0
    %2389 = vmatpush1.bf16.msra.mxu0 0
    %2390 = vmatprep.subr.bf16.mxu0 0
    %2391 = vmatpush1.bf16.msra.mxu0 0
    %2392 = vmatprep.subr.bf16.mxu0 0
    %2393 = vmatpush1.bf16.msra.mxu0 0
    %2394 = vmatprep.subr.bf16.mxu0 0
    %2395 = vmatpush1.bf16.msra.mxu0 0
    %2396 = vmatprep.subr.bf16.mxu0 0
    %2397 = vmatpush1.bf16.msra.mxu0 0
    %2398 = vmatprep.subr.bf16.mxu0 0
    %2399 = vmatpush1.bf16.msra.mxu0 0
    %2400 = vmatprep.subr.bf16.mxu0 0
    %2401 = vmatpush1.bf16.msra.mxu0 0
    %2402 = vmatprep.subr.bf16.mxu0 0
    %2403 = vmatpush1.bf16.msra.mxu0 %v2386
    %2404 = vmatprep.subr.bf16.mxu0 0
    %2405 = vmatpush2.bf16.msra.mxu0 0
    %2406 = vmatprep.subr.bf16.mxu0 0
    %2407 = vmatpush2.bf16.msra.mxu0 0
    %2408 = vmatprep.subr.bf16.mxu0 0
    %2409 = vmatpush2.bf16.msra.mxu0 0
    %2410 = vmatprep.subr.bf16.mxu0 0
    %2411 = vmatpush2.bf16.msra.mxu0 0
    %2412 = vmatprep.subr.bf16.mxu0 0
    %2413 = vmatpush2.bf16.msra.mxu0 0
    %2414 = vmatprep.subr.bf16.mxu0 0
    %2415 = vmatpush2.bf16.msra.mxu0 0
    %2416 = vmatprep.subr.bf16.mxu0 0
    %2417 = vmatpush2.bf16.msra.mxu0 0
    %2418 = vmatprep.subr.bf16.mxu0 0
    %2419 = vmatpush2.bf16.msra.mxu0 0
    %2420 = vmatprep.mubr.bf16.mxu0 0
    %2421 = vmatmul.mubr.bf16.gmra.mxu0 %v2384
    %v2422 = vpop.f32.mrf.mxu0
    %v2423 = vadd.f32 0.0, %v2422
    %v2424 = vpop.f32.mrf.mxu0
    %v2425 = vpop.f32.mrf.mxu0
    %v2426 = vpop.f32.mrf.mxu0
    %2427 = vdwg.mxu0
    %v2429 = vsel %vm785, %v2244, 0
    %v2431 = vsel %vm789, %v1682, 0
    %2433 = vmatprep.subr.bf16.mxu0 0
    %2434 = vmatpush1.bf16.msra.mxu0 0
    %2435 = vmatprep.subr.bf16.mxu0 0
    %2436 = vmatpush1.bf16.msra.mxu0 0
    %2437 = vmatprep.subr.bf16.mxu0 0
    %2438 = vmatpush1.bf16.msra.mxu0 0
    %2439 = vmatprep.subr.bf16.mxu0 0
    %2440 = vmatpush1.bf16.msra.mxu0 0
    %2441 = vmatprep.subr.bf16.mxu0 0
    %2442 = vmatpush1.bf16.msra.mxu0 0
    %2443 = vmatprep.subr.bf16.mxu0 0
    %2444 = vmatpush1.bf16.msra.mxu0 0
    %2445 = vmatprep.subr.bf16.mxu0 0
    %2446 = vmatpush1.bf16.msra.mxu0 0
    %2447 = vmatprep.subr.bf16.mxu0 0
    %2448 = vmatpush1.bf16.msra.mxu0 %v2431
    %2449 = vmatprep.subr.bf16.mxu0 0
    %2450 = vmatpush2.bf16.msra.mxu0 0
    %2451 = vmatprep.subr.bf16.mxu0 0
    %2452 = vmatpush2.bf16.msra.mxu0 0
    %2453 = vmatprep.subr.bf16.mxu0 0
    %2454 = vmatpush2.bf16.msra.mxu0 0
    %2455 = vmatprep.subr.bf16.mxu0 0
    %2456 = vmatpush2.bf16.msra.mxu0 0
    %2457 = vmatprep.subr.bf16.mxu0 0
    %2458 = vmatpush2.bf16.msra.mxu0 0
    %2459 = vmatprep.subr.bf16.mxu0 0
    %2460 = vmatpush2.bf16.msra.mxu0 0
    %2461 = vmatprep.subr.bf16.mxu0 0
    %2462 = vmatpush2.bf16.msra.mxu0 0
    %2463 = vmatprep.subr.bf16.mxu0 0
    %2464 = vmatpush2.bf16.msra.mxu0 0
    %2465 = vmatprep.mubr.bf16.mxu0 0
    %2466 = vmatmul.mubr.bf16.gmra.mxu0 %v2429
    %v2467 = vpop.f32.mrf.mxu0
    %v2468 = vadd.f32 0.0, %v2467
    %v2469 = vpop.f32.mrf.mxu0
    %v2470 = vpop.f32.mrf.mxu0
    %v2471 = vpop.f32.mrf.mxu0
    %2472 = vdwg.mxu0
    %v2474 = vsel %vm785, %v2245, 0
    %v2476 = vsel %vm789, %v1683, 0
    %2478 = vmatprep.subr.bf16.mxu0 0
    %2479 = vmatpush1.bf16.msra.mxu0 0
    %2480 = vmatprep.subr.bf16.mxu0 0
    %2481 = vmatpush1.bf16.msra.mxu0 0
    %2482 = vmatprep.subr.bf16.mxu0 0
    %2483 = vmatpush1.bf16.msra.mxu0 0
    %2484 = vmatprep.subr.bf16.mxu0 0
    %2485 = vmatpush1.bf16.msra.mxu0 0
    %2486 = vmatprep.subr.bf16.mxu0 0
    %2487 = vmatpush1.bf16.msra.mxu0 0
    %2488 = vmatprep.subr.bf16.mxu0 0
    %2489 = vmatpush1.bf16.msra.mxu0 0
    %2490 = vmatprep.subr.bf16.mxu0 0
    %2491 = vmatpush1.bf16.msra.mxu0 0
    %2492 = vmatprep.subr.bf16.mxu0 0
    %2493 = vmatpush1.bf16.msra.mxu0 %v2476
    %2494 = vmatprep.subr.bf16.mxu0 0
    %2495 = vmatpush2.bf16.msra.mxu0 0
    %2496 = vmatprep.subr.bf16.mxu0 0
    %2497 = vmatpush2.bf16.msra.mxu0 0
    %2498 = vmatprep.subr.bf16.mxu0 0
    %2499 = vmatpush2.bf16.msra.mxu0 0
    %2500 = vmatprep.subr.bf16.mxu0 0
    %2501 = vmatpush2.bf16.msra.mxu0 0
    %2502 = vmatprep.subr.bf16.mxu0 0
    %2503 = vmatpush2.bf16.msra.mxu0 0
    %2504 = vmatprep.subr.bf16.mxu0 0
    %2505 = vmatpush2.bf16.msra.mxu0 0
    %2506 = vmatprep.subr.bf16.mxu0 0
    %2507 = vmatpush2.bf16.msra.mxu0 0
    %2508 = vmatprep.subr.bf16.mxu0 0
    %2509 = vmatpush2.bf16.msra.mxu0 0
    %2510 = vmatprep.mubr.bf16.mxu0 0
    %2511 = vmatmul.mubr.bf16.gmra.mxu0 %v2474
    %v2512 = vpop.f32.mrf.mxu0
    %v2513 = vadd.f32 0.0, %v2512
    %v2514 = vpop.f32.mrf.mxu0
    %v2515 = vpop.f32.mrf.mxu0
    %v2516 = vpop.f32.mrf.mxu0
    %2517 = vdwg.mxu0
    %v2519 = vsel %vm785, %v2246, 0
    %v2521 = vsel %vm789, %v1684, 0
    %2523 = vmatprep.subr.bf16.mxu0 0
    %2524 = vmatpush1.bf16.msra.mxu0 0
    %2525 = vmatprep.subr.bf16.mxu0 0
    %2526 = vmatpush1.bf16.msra.mxu0 0
    %2527 = vmatprep.subr.bf16.mxu0 0
    %2528 = vmatpush1.bf16.msra.mxu0 0
    %2529 = vmatprep.subr.bf16.mxu0 0
    %2530 = vmatpush1.bf16.msra.mxu0 0
    %2531 = vmatprep.subr.bf16.mxu0 0
    %2532 = vmatpush1.bf16.msra.mxu0 0
    %2533 = vmatprep.subr.bf16.mxu0 0
    %2534 = vmatpush1.bf16.msra.mxu0 0
    %2535 = vmatprep.subr.bf16.mxu0 0
    %2536 = vmatpush1.bf16.msra.mxu0 0
    %2537 = vmatprep.subr.bf16.mxu0 0
    %2538 = vmatpush1.bf16.msra.mxu0 %v2521
    %2539 = vmatprep.subr.bf16.mxu0 0
    %2540 = vmatpush2.bf16.msra.mxu0 0
    %2541 = vmatprep.subr.bf16.mxu0 0
    %2542 = vmatpush2.bf16.msra.mxu0 0
    %2543 = vmatprep.subr.bf16.mxu0 0
    %2544 = vmatpush2.bf16.msra.mxu0 0
    %2545 = vmatprep.subr.bf16.mxu0 0
    %2546 = vmatpush2.bf16.msra.mxu0 0
    %2547 = vmatprep.subr.bf16.mxu0 0
    %2548 = vmatpush2.bf16.msra.mxu0 0
    %2549 = vmatprep.subr.bf16.mxu0 0
    %2550 = vmatpush2.bf16.msra.mxu0 0
    %2551 = vmatprep.subr.bf16.mxu0 0
    %2552 = vmatpush2.bf16.msra.mxu0 0
    %2553 = vmatprep.subr.bf16.mxu0 0
    %2554 = vmatpush2.bf16.msra.mxu0 0
    %2555 = vmatprep.mubr.bf16.mxu0 0
    %2556 = vmatmul.mubr.bf16.gmra.mxu0 %v2519
    %v2557 = vpop.f32.mrf.mxu0
    %v2558 = vadd.f32 0.0, %v2557
    %v2559 = vpop.f32.mrf.mxu0
    %v2560 = vpop.f32.mrf.mxu0
    %v2561 = vpop.f32.mrf.mxu0
    %2562 = vdwg.mxu0
    %v2564 = vsel %vm785, %v2247, 0
    %v2566 = vsel %vm789, %v1685, 0
    %2568 = vmatprep.subr.bf16.mxu0 0
    %2569 = vmatpush1.bf16.msra.mxu0 0
    %2570 = vmatprep.subr.bf16.mxu0 0
    %2571 = vmatpush1.bf16.msra.mxu0 0
    %2572 = vmatprep.subr.bf16.mxu0 0
    %2573 = vmatpush1.bf16.msra.mxu0 0
    %2574 = vmatprep.subr.bf16.mxu0 0
    %2575 = vmatpush1.bf16.msra.mxu0 0
    %2576 = vmatprep.subr.bf16.mxu0 0
    %2577 = vmatpush1.bf16.msra.mxu0 0
    %2578 = vmatprep.subr.bf16.mxu0 0
    %2579 = vmatpush1.bf16.msra.mxu0 0
    %2580 = vmatprep.subr.bf16.mxu0 0
    %2581 = vmatpush1.bf16.msra.mxu0 0
    %2582 = vmatprep.subr.bf16.mxu0 0
    %2583 = vmatpush1.bf16.msra.mxu0 %v2566
    %2584 = vmatprep.subr.bf16.mxu0 0
    %2585 = vmatpush2.bf16.msra.mxu0 0
    %2586 = vmatprep.subr.bf16.mxu0 0
    %2587 = vmatpush2.bf16.msra.mxu0 0
    %2588 = vmatprep.subr.bf16.mxu0 0
    %2589 = vmatpush2.bf16.msra.mxu0 0
    %2590 = vmatprep.subr.bf16.mxu0 0
    %2591 = vmatpush2.bf16.msra.mxu0 0
    %2592 = vmatprep.subr.bf16.mxu0 0
    %2593 = vmatpush2.bf16.msra.mxu0 0
    %2594 = vmatprep.subr.bf16.mxu0 0
    %2595 = vmatpush2.bf16.msra.mxu0 0
    %2596 = vmatprep.subr.bf16.mxu0 0
    %2597 = vmatpush2.bf16.msra.mxu0 0
    %2598 = vmatprep.subr.bf16.mxu0 0
    %2599 = vmatpush2.bf16.msra.mxu0 0
    %2600 = vmatprep.mubr.bf16.mxu0 0
    %2601 = vmatmul.mubr.bf16.gmra.mxu0 %v2564
    %v2602 = vpop.f32.mrf.mxu0
    %v2603 = vadd.f32 0.0, %v2602
    %v2604 = vpop.f32.mrf.mxu0
    %v2605 = vpop.f32.mrf.mxu0
    %v2606 = vpop.f32.mrf.mxu0
    %2607 = vdwg.mxu0
    %v2608 = vadd.f32 %v2232, 0.0
    %v2609 = vadd.f32 %v2233, 0.0
    %v2610 = vadd.f32 %v2234, 0.0
    %v2611 = vadd.f32 %v2235, 0.0
    %v2612 = vadd.f32 %v2236, 0.0
    %v2613 = vadd.f32 %v2237, 0.0
    %v2614 = vadd.f32 %v2238, 0.0
    %v2615 = vadd.f32 %v2239, 0.0
    %v2616 = vadd.f32 %v2288, 0.0
    %v2617 = vadd.f32 %v2333, 0.0
    %v2618 = vadd.f32 %v2378, 0.0
    %v2619 = vadd.f32 %v2423, 0.0
    %v2620 = vadd.f32 %v2468, 0.0
    %v2621 = vadd.f32 %v2513, 0.0
    %v2622 = vadd.f32 %v2558, 0.0
    %v2623 = vadd.f32 %v2603, 0.0
    %v2632 = vrot.slane %v2617, 7
    %v2633 = vsel %vm1172, %v2632, %v2616
    %v2634 = vrot.slane %v2618, 6
    %v2635 = vsel %vm1175, %v2634, %v2633
    %v2636 = vrot.slane %v2619, 5
    %v2637 = vsel %vm1178, %v2636, %v2635
    %v2638 = vrot.slane %v2620, 4
    %v2639 = vsel %vm1181, %v2638, %v2637
    %v2640 = vrot.slane %v2621, 3
    %v2641 = vsel %vm1184, %v2640, %v2639
    %v2642 = vrot.slane %v2622, 2
    %v2643 = vsel %vm1187, %v2642, %v2641
    %v2644 = vrot.slane %v2623, 1
    %v2645 = vsel %vm1190, %v2644, %v2643
    %2647 = vrot.lane.b32.xlu0 %v1369, 64
    %v2648 = vpop.permute.xlu0 %2647
    %v2650 = vsel %vm319, %v2645, %v2648
    %v2651 = vpack.c.bf16 %v2650, %v2650
    %v2652 = vld [vmem:[#allocation7] sm:$0xf]
    %v2653 = vld [vmem:[#allocation7 + $0x4] sm:$0xf]
    %v2654 = vld [vmem:[#allocation7 + $0x8] sm:$0xf]
    %v2655 = vld [vmem:[#allocation7 + $0xc] sm:$0xf]
    %v2656 = vld [vmem:[#allocation7 + $0x10] sm:$0xf]
    %v2657 = vld [vmem:[#allocation7 + $0x14] sm:$0xf]
    %v2658 = vld [vmem:[#allocation8] sm:$0xf]
    %v2659 = vld [vmem:[#allocation8 + $0x4] sm:$0xf]
    %v2660 = vld [vmem:[#allocation8 + $0x8] sm:$0xf]
    %v2661 = vld [vmem:[#allocation8 + $0xc] sm:$0xf]
    %v2662 = vld [vmem:[#allocation8 + $0x10] sm:$0xf]
    %v2663 = vld [vmem:[#allocation8 + $0x14] sm:$0xf]
    %v2664 = vld [vmem:[#allocation8 + $0x18] sm:$0xf]
    %v2665 = vld [vmem:[#allocation8 + $0x1c] sm:$0xf]
    %v2674 = vunpack.c.l.b16 %v2658
    %v2675 = vunpack.c.l.b16 %v2659
    %v2676 = vunpack.c.l.b16 %v2660
    %v2677 = vunpack.c.l.b16 %v2661
    %v2678 = vunpack.c.l.b16 %v2662
    %v2679 = vunpack.c.l.b16 %v2663
    %v2680 = vunpack.c.l.b16 %v2664
    %v2681 = vunpack.c.l.b16 %v2665
    %v2682 = vpack.c.b16 %v2675, %v2674
    %v2683 = vpack.c.b16 %v2677, %v2676
    %v2684 = vpack.c.b16 %v2679, %v2678
    %v2685 = vpack.c.b16 %v2681, %v2680
    %v2691 = vsel %vm1236, %v2651, 0
    %2693 = vmatprep.subr.bf16.mxu0 0
    %2694 = vmatpush1.bf16.msra.mxu0 0
    %2695 = vmatprep.subr.bf16.mxu0 0
    %2696 = vmatpush1.bf16.msra.mxu0 0
    %2697 = vmatprep.subr.bf16.mxu0 0
    %2698 = vmatpush1.bf16.msra.mxu0 0
    %2699 = vmatprep.subr.bf16.mxu0 0
    %2700 = vmatpush1.bf16.msra.mxu0 0
    %2701 = vmatprep.subr.bf16.mxu0 0
    %2702 = vmatpush1.bf16.msra.mxu0 %v2685
    %2703 = vmatprep.subr.bf16.mxu0 0
    %2704 = vmatpush1.bf16.msra.mxu0 %v2684
    %2705 = vmatprep.subr.bf16.mxu0 0
    %2706 = vmatpush1.bf16.msra.mxu0 %v2683
    %2707 = vmatprep.subr.bf16.mxu0 0
    %2708 = vmatpush1.bf16.msra.mxu0 %v2682
    %2709 = vmatprep.subr.bf16.mxu0 0
    %2710 = vmatpush2.bf16.msra.mxu0 0
    %2711 = vmatprep.subr.bf16.mxu0 0
    %2712 = vmatpush2.bf16.msra.mxu0 0
    %2713 = vmatprep.subr.bf16.mxu0 0
    %2714 = vmatpush2.bf16.msra.mxu0 0
    %2715 = vmatprep.subr.bf16.mxu0 0
    %2716 = vmatpush2.bf16.msra.mxu0 0
    %2717 = vmatprep.subr.bf16.mxu0 0
    %2718 = vmatpush2.bf16.msra.mxu0 0
    %2719 = vmatprep.subr.bf16.mxu0 0
    %2720 = vmatpush2.bf16.msra.mxu0 0
    %2721 = vmatprep.subr.bf16.mxu0 0
    %2722 = vmatpush2.bf16.msra.mxu0 0
    %2723 = vmatprep.subr.bf16.mxu0 0
    %2724 = vmatpush2.bf16.msra.mxu0 0
    %2725 = vmatprep.mubr.bf16.mxu0 0
    %2726 = vmatmul.mubr.bf16.gmra.mxu0 %v2691
    %v2727 = vpop.f32.mrf.mxu0
    %v2728 = vadd.f32 0.0, %v2727
    %v2729 = vpop.f32.mrf.mxu0
    %v2730 = vpop.f32.mrf.mxu0
    %v2731 = vpop.f32.mrf.mxu0
    %2732 = vdwg.mxu0
    %v2739 = vunpack.c.l.b16 %v2652
    %v2740 = vunpack.c.l.b16 %v2653
    %v2741 = vunpack.c.l.b16 %v2654
    %v2742 = vunpack.c.l.b16 %v2655
    %v2743 = vunpack.c.l.b16 %v2656
    %v2744 = vunpack.c.l.b16 %v2657
    %v2745 = vpack.c.b16 %v2740, %v2739
    %v2746 = vpack.c.b16 %v2742, %v2741
    %v2747 = vpack.c.b16 %v2744, %v2743
    %v2752 = vsel %vm1298, %v1677, 0
    %2754 = vmatprep.subr.bf16.mxu0 0
    %2755 = vmatpush1.bf16.msra.mxu0 0
    %2756 = vmatprep.subr.bf16.mxu0 0
    %2757 = vmatpush1.bf16.msra.mxu0 0
    %2758 = vmatprep.subr.bf16.mxu0 0
    %2759 = vmatpush1.bf16.msra.mxu0 0
    %2760 = vmatprep.subr.bf16.mxu0 0
    %2761 = vmatpush1.bf16.msra.mxu0 0
    %2762 = vmatprep.subr.bf16.mxu0 0
    %2763 = vmatpush1.bf16.msra.mxu0 0
    %2764 = vmatprep.subr.bf16.mxu0 0
    %2765 = vmatpush1.bf16.msra.mxu0 %v2747
    %2766 = vmatprep.subr.bf16.mxu0 0
    %2767 = vmatpush1.bf16.msra.mxu0 %v2746
    %2768 = vmatprep.subr.bf16.mxu0 0
    %2769 = vmatpush1.bf16.msra.mxu0 %v2745
    %2770 = vmatprep.subr.bf16.mxu0 0
    %2771 = vmatpush2.bf16.msra.mxu0 0
    %2772 = vmatprep.subr.bf16.mxu0 0
    %2773 = vmatpush2.bf16.msra.mxu0 0
    %2774 = vmatprep.subr.bf16.mxu0 0
    %2775 = vmatpush2.bf16.msra.mxu0 0
    %2776 = vmatprep.subr.bf16.mxu0 0
    %2777 = vmatpush2.bf16.msra.mxu0 0
    %2778 = vmatprep.subr.bf16.mxu0 0
    %2779 = vmatpush2.bf16.msra.mxu0 0
    %2780 = vmatprep.subr.bf16.mxu0 0
    %2781 = vmatpush2.bf16.msra.mxu0 0
    %2782 = vmatprep.subr.bf16.mxu0 0
    %2783 = vmatpush2.bf16.msra.mxu0 0
    %2784 = vmatprep.subr.bf16.mxu0 0
    %2785 = vmatpush2.bf16.msra.mxu0 0
    %2786 = vmatprep.mubr.bf16.mxu0 0
    %2787 = vmatmul.mubr.bf16.gmra.mxu0 %v2752
    %v2788 = vpop.f32.mrf.mxu0
    %v2789 = vadd.f32 %v2728, %v2788
    %v2790 = vpop.f32.mrf.mxu0
    %v2791 = vpop.f32.mrf.mxu0
    %v2792 = vpop.f32.mrf.mxu0
    %2793 = vdwg.mxu0
    %v2794 = vadd.f32 %v2789, %v181
    %v2795 = vxor.u32 %v2794, 2147483648
    %v2796 = vmul.f32 %v2795, 1.442695
    %v2797 = vpow.pop %v2796
    %v2798 = vadd.f32 %v2797, 1.0
    %v2799 = vrcp.pop %v2798
    %v2800 = vmul.f32 1.0, %v2799
    %v2801 = vtanh.pop %v2794
    %v2802 = vmul.f32 %v2800, %v1363
    %2804 = vrot.lane.b32.xlu0 %v2801, 64
    %v2805 = vpop.permute.xlu0 %2804
    %v2807 = vmul.f32 %v2800, %v2805
    %2809 = vrot.lane.b32.xlu0 %v2807, 32
    %v2810 = vpop.permute.xlu0 %2809
    %v2812 = vadd.f32 %v2802, %v2810
    %v2813 = vtanh.pop %v2812
    %2815 = vrot.lane.b32.xlu0 %v2813, 64
    %v2816 = vpop.permute.xlu0 %2815
    %v2818 = vmul.f32 %v2800, %v2816
    %2820 = vrot.lane.b32.xlu0 %v2818, 32
    %v2821 = vpop.permute.xlu0 %2820
    %2823 = vrot.lane.b32.xlu0 %v1480, 64
    %v2824 = vpop.permute.xlu0 %2823
    %v2826 = vsel %vm319, %v2821, %v2824
    %v2827 = vpack.c.bf16 %v2826, %v2826
    %v2828 = vld [vmem:[#allocation11] sm:$0xf]
    %v2829 = vld [vmem:[#allocation11 + $0x4] sm:$0xf]
    %v2830 = vld [vmem:[#allocation11 + $0x8] sm:$0xf]
    %v2831 = vld [vmem:[#allocation11 + $0xc] sm:$0xf]
    %v2832 = vld [vmem:[#allocation11 + $0x10] sm:$0xf]
    %v2833 = vld [vmem:[#allocation11 + $0x14] sm:$0xf]
    %v2834 = vld [vmem:[#allocation11 + $0x18] sm:$0xf]
    %v2835 = vld [vmem:[#allocation11 + $0x1c] sm:$0xf]
    %v2844 = vunpack.c.l.b16 %v2828
    %v2845 = vunpack.c.l.b16 %v2829
    %v2846 = vunpack.c.l.b16 %v2830
    %v2847 = vunpack.c.l.b16 %v2831
    %v2848 = vunpack.c.l.b16 %v2832
    %v2849 = vunpack.c.l.b16 %v2833
    %v2850 = vunpack.c.l.b16 %v2834
    %v2851 = vunpack.c.l.b16 %v2835
    %v2852 = vpack.c.b16 %v2845, %v2844
    %v2853 = vpack.c.b16 %v2847, %v2846
    %v2854 = vpack.c.b16 %v2849, %v2848
    %v2855 = vpack.c.b16 %v2851, %v2850
    %v2861 = vsel %vm1236, %v2827, 0
    %2863 = vmatprep.subr.bf16.mxu0 0
    %2864 = vmatpush1.bf16.msra.mxu0 0
    %2865 = vmatprep.subr.bf16.mxu0 0
    %2866 = vmatpush1.bf16.msra.mxu0 0
    %2867 = vmatprep.subr.bf16.mxu0 0
    %2868 = vmatpush1.bf16.msra.mxu0 0
    %2869 = vmatprep.subr.bf16.mxu0 0
    %2870 = vmatpush1.bf16.msra.mxu0 0
    %2871 = vmatprep.subr.bf16.mxu0 0
    %2872 = vmatpush1.bf16.msra.mxu0 %v2855
    %2873 = vmatprep.subr.bf16.mxu0 0
    %2874 = vmatpush1.bf16.msra.mxu0 %v2854
    %2875 = vmatprep.subr.bf16.mxu0 0
    %2876 = vmatpush1.bf16.msra.mxu0 %v2853
    %2877 = vmatprep.subr.bf16.mxu0 0
    %2878 = vmatpush1.bf16.msra.mxu0 %v2852
    %2879 = vmatprep.subr.bf16.mxu0 0
    %2880 = vmatpush2.bf16.msra.mxu0 0
    %2881 = vmatprep.subr.bf16.mxu0 0
    %2882 = vmatpush2.bf16.msra.mxu0 0
    %2883 = vmatprep.subr.bf16.mxu0 0
    %2884 = vmatpush2.bf16.msra.mxu0 0
    %2885 = vmatprep.subr.bf16.mxu0 0
    %2886 = vmatpush2.bf16.msra.mxu0 0
    %2887 = vmatprep.subr.bf16.mxu0 0
    %2888 = vmatpush2.bf16.msra.mxu0 0
    %2889 = vmatprep.subr.bf16.mxu0 0
    %2890 = vmatpush2.bf16.msra.mxu0 0
    %2891 = vmatprep.subr.bf16.mxu0 0
    %2892 = vmatpush2.bf16.msra.mxu0 0
    %2893 = vmatprep.subr.bf16.mxu0 0
    %2894 = vmatpush2.bf16.msra.mxu0 0
    %2895 = vmatprep.mubr.bf16.mxu0 0
    %2896 = vmatmul.mubr.bf16.gmra.mxu0 %v2861
    %v2897 = vpop.f32.mrf.mxu0
    %v2898 = vadd.f32 %v188, %v2897
    %v2899 = vpop.f32.mrf.mxu0
    %v2900 = vpop.f32.mrf.mxu0
    %v2901 = vpop.f32.mrf.mxu0
    %2902 = vdwg.mxu0
    %v2903 = vxor.u32 %v2898, 2147483648
    %v2904 = vmul.f32 %v2903, 1.442695
    %v2905 = vpow.pop %v2904
    %v2906 = vadd.f32 %v2905, 1.0
    %v2907 = vrcp.pop %v2906
    %v2908 = vmul.f32 1.0, %v2907
    %v2909 = vtanh.pop %v2898
    %v2910 = vmul.f32 %v2908, %v1474
    %2912 = vrot.lane.b32.xlu0 %v2909, 64
    %v2913 = vpop.permute.xlu0 %2912
    %v2915 = vmul.f32 %v2908, %v2913
    %2917 = vrot.lane.b32.xlu0 %v2915, 32
    %v2918 = vpop.permute.xlu0 %2917
    %v2920 = vadd.f32 %v2910, %v2918
    %v2921 = vtanh.pop %v2920
    %2923 = vrot.lane.b32.xlu0 %v2921, 64
    %v2924 = vpop.permute.xlu0 %2923
    %v2926 = vmul.f32 %v2908, %v2924
    %2928 = vrot.lane.b32.xlu0 %v2926, 32
    %v2929 = vpop.permute.xlu0 %2928
    %2931 = vrot.lane.b32.xlu0 %v2645, 32
    %v2932 = vpop.permute.xlu0 %2931
    %v2934 = vsel %vm319, %v2929, %v2932
    %v2935 = vpack.c.bf16 %v2934, %v2934
    %v2936 = vld [vmem:[#allocation14] sm:$0xf]
    %v2937 = vld [vmem:[#allocation14 + $0x4] sm:$0xf]
    %v2938 = vld [vmem:[#allocation14 + $0x8] sm:$0xf]
    %v2939 = vld [vmem:[#allocation14 + $0xc] sm:$0xf]
    %v2940 = vld [vmem:[#allocation14 + $0x10] sm:$0xf]
    %v2941 = vld [vmem:[#allocation14 + $0x14] sm:$0xf]
    %v2942 = vld [vmem:[#allocation14 + $0x18] sm:$0xf]
    %v2943 = vld [vmem:[#allocation14 + $0x1c] sm:$0xf]
    %v2952 = vunpack.c.l.b16 %v2936
    %v2953 = vunpack.c.l.b16 %v2937
    %v2954 = vunpack.c.l.b16 %v2938
    %v2955 = vunpack.c.l.b16 %v2939
    %v2956 = vunpack.c.l.b16 %v2940
    %v2957 = vunpack.c.l.b16 %v2941
    %v2958 = vunpack.c.l.b16 %v2942
    %v2959 = vunpack.c.l.b16 %v2943
    %v2960 = vpack.c.b16 %v2953, %v2952
    %v2961 = vpack.c.b16 %v2955, %v2954
    %v2962 = vpack.c.b16 %v2957, %v2956
    %v2963 = vpack.c.b16 %v2959, %v2958
    %v2969 = vsel %vm1236, %v2935, 0
    %2971 = vmatprep.subr.bf16.mxu0 0
    %2972 = vmatpush1.bf16.msra.mxu0 0
    %2973 = vmatprep.subr.bf16.mxu0 0
    %2974 = vmatpush1.bf16.msra.mxu0 0
    %2975 = vmatprep.subr.bf16.mxu0 0
    %2976 = vmatpush1.bf16.msra.mxu0 0
    %2977 = vmatprep.subr.bf16.mxu0 0
    %2978 = vmatpush1.bf16.msra.mxu0 0
    %2979 = vmatprep.subr.bf16.mxu0 0
    %2980 = vmatpush1.bf16.msra.mxu0 %v2963
    %2981 = vmatprep.subr.bf16.mxu0 0
    %2982 = vmatpush1.bf16.msra.mxu0 %v2962
    %2983 = vmatprep.subr.bf16.mxu0 0
    %2984 = vmatpush1.bf16.msra.mxu0 %v2961
    %2985 = vmatprep.subr.bf16.mxu0 0
    %2986 = vmatpush1.bf16.msra.mxu0 %v2960
    %2987 = vmatprep.subr.bf16.mxu0 0
    %2988 = vmatpush2.bf16.msra.mxu0 0
    %2989 = vmatprep.subr.bf16.mxu0 0
    %2990 = vmatpush2.bf16.msra.mxu0 0
    %2991 = vmatprep.subr.bf16.mxu0 0
    %2992 = vmatpush2.bf16.msra.mxu0 0
    %2993 = vmatprep.subr.bf16.mxu0 0
    %2994 = vmatpush2.bf16.msra.mxu0 0
    %2995 = vmatprep.subr.bf16.mxu0 0
    %2996 = vmatpush2.bf16.msra.mxu0 0
    %2997 = vmatprep.subr.bf16.mxu0 0
    %2998 = vmatpush2.bf16.msra.mxu0 0
    %2999 = vmatprep.subr.bf16.mxu0 0
    %3000 = vmatpush2.bf16.msra.mxu0 0
    %3001 = vmatprep.subr.bf16.mxu0 0
    %3002 = vmatpush2.bf16.msra.mxu0 0
    %3003 = vmatprep.mubr.bf16.mxu0 0
    %3004 = vmatmul.mubr.bf16.gmra.mxu0 %v2969
    %v3005 = vpop.f32.mrf.mxu0
    %v3006 = vadd.f32 0.0, %v3005
    %v3007 = vpop.f32.mrf.mxu0
    %v3008 = vpop.f32.mrf.mxu0
    %v3009 = vpop.f32.mrf.mxu0
    %3010 = vdwg.mxu0
    %v3011 = vadd.f32 %v3006, %v195
    %vm3012 = vcmp.gt.f32.partialorder %v3011, 0.0
    %v3013 = vmul.f32 %v3011, 0.2
    %v3014 = vsel %vm3012, %v3011, %v3013
    %v3015 = vpack.c.bf16 %v3014, %v3014
    %v3016 = vld [vmem:[%s9] sm:$0xf]
    %v3017 = vld [vmem:[%s9 + $0x4] sm:$0xf]
    %v3018 = vld [vmem:[%s9 + $0x8] sm:$0xf]
    %v3019 = vld [vmem:[%s9 + $0xc] sm:$0xf]
    %v3024 = vunpack.c.l.b16 %v3016
    %v3025 = vunpack.c.l.b16 %v3017
    %v3026 = vunpack.c.l.b16 %v3018
    %v3027 = vunpack.c.l.b16 %v3019
    %v3028 = vpack.c.b16 %v3025, %v3024
    %v3029 = vpack.c.b16 %v3027, %v3026
    %v3033 = vsel %vm319, %v3015, 0
    %3035 = vmatprep.subr.bf16.mxu0 0
    %3036 = vmatpush1.bf16.msra.mxu0 0
    %3037 = vmatprep.subr.bf16.mxu0 0
    %3038 = vmatpush1.bf16.msra.mxu0 0
    %3039 = vmatprep.subr.bf16.mxu0 0
    %3040 = vmatpush1.bf16.msra.mxu0 0
    %3041 = vmatprep.subr.bf16.mxu0 0
    %3042 = vmatpush1.bf16.msra.mxu0 0
    %3043 = vmatprep.subr.bf16.mxu0 0
    %3044 = vmatpush1.bf16.msra.mxu0 0
    %3045 = vmatprep.subr.bf16.mxu0 0
    %3046 = vmatpush1.bf16.msra.mxu0 0
    %3047 = vmatprep.subr.bf16.mxu0 0
    %3048 = vmatpush1.bf16.msra.mxu0 %v3029
    %3049 = vmatprep.subr.bf16.mxu0 0
    %3050 = vmatpush1.bf16.msra.mxu0 %v3028
    %3051 = vmatprep.subr.bf16.mxu0 0
    %3052 = vmatpush2.bf16.msra.mxu0 0
    %3053 = vmatprep.subr.bf16.mxu0 0
    %3054 = vmatpush2.bf16.msra.mxu0 0
    %3055 = vmatprep.subr.bf16.mxu0 0
    %3056 = vmatpush2.bf16.msra.mxu0 0
    %3057 = vmatprep.subr.bf16.mxu0 0
    %3058 = vmatpush2.bf16.msra.mxu0 0
    %3059 = vmatprep.subr.bf16.mxu0 0
    %3060 = vmatpush2.bf16.msra.mxu0 0
    %3061 = vmatprep.subr.bf16.mxu0 0
    %3062 = vmatpush2.bf16.msra.mxu0 0
    %3063 = vmatprep.subr.bf16.mxu0 0
    %3064 = vmatpush2.bf16.msra.mxu0 0
    %3065 = vmatprep.subr.bf16.mxu0 0
    %3066 = vmatpush2.bf16.msra.mxu0 0
    %3067 = vmatprep.mubr.bf16.mxu0 0
    %3068 = vmatmul.mubr.bf16.gmra.mxu0 %v3033
    %v3069 = vpop.f32.mrf.mxu0
    %v3070 = vadd.f32 %v202, %v3069
    %v3071 = vpop.f32.mrf.mxu0
    %v3072 = vpop.f32.mrf.mxu0
    %v3073 = vpop.f32.mrf.mxu0
    %3074 = vdwg.mxu0
    %s3075 = scalar_lea.vmem [#allocation17], 8
    %3076 = vst.msk [vmem:[%s3075] sm:$0xff] %vm1298, %v3070
    %v3085 = vrot.slane %v2609, 7
    %v3086 = vsel %vm1172, %v3085, %v2608
    %v3087 = vrot.slane %v2610, 6
    %v3088 = vsel %vm1175, %v3087, %v3086
    %v3089 = vrot.slane %v2611, 5
    %v3090 = vsel %vm1178, %v3089, %v3088
    %v3091 = vrot.slane %v2612, 4
    %v3092 = vsel %vm1181, %v3091, %v3090
    %v3093 = vrot.slane %v2613, 3
    %v3094 = vsel %vm1184, %v3093, %v3092
    %v3095 = vrot.slane %v2614, 2
    %v3096 = vsel %vm1187, %v3095, %v3094
    %v3097 = vrot.slane %v2615, 1
    %v3098 = vsel %vm1190, %v3097, %v3096
    %s3100 = scalar_lea.vmem [#allocation18], 8
    %3101 = vst.msk [vmem:[%s3100] sm:$0xff] %vm785, %v3098
    %v3102 = vsel %vm1298, %v3070, -inf
    %3103 = vmax.xlane.f32.xlu0 %v3102
    %v3104 = vpop.xlane.xlu0 %3103
    %vm3105 = vcmp.eq.f32.partialorder %v3070, %v3104
    %v3106 = vsel %vm3105, %v175, 48
    %v3107 = vsel %vm1298, %v3106, 2147483647
    %v3108 = vand.u32 %v3107, 65535
    %v3109 = vshra.s32 %v3107, 16
    %v3110 = vcvt.s32.f32 %v3108
    %v3111 = vcvt.s32.f32 %v3109
    %3112 = vmin.xlane.f32.xlu0 %v3111
    %v3113 = vpop.xlane.xlu0 %3112
    %vm3114 = vcmp.eq.f32.partialorder %v3111, %v3113
    %v3115 = vsel %vm3114, %v3110, inf
    %3116 = vmin.xlane.f32.xlu0 %v3115
    %v3117 = vpop.xlane.xlu0 %3116
    %v3118 = vcvt.f32.s32 %v3117
    %v3119 = vcvt.f32.s32 %v3113
    %v3120 = vshll.u32 %v3119, 16
    %v3121 = vadd.s32 %v3120, %v3118
    %vm3122 = vcmp.eq.s32.totalorder %v175, %v3121
    %v3123 = vsel %vm3122, 1, 0
    %v3124 = vcvt.s32.f32 %v3123
    %v3125 = vpack.c.bf16 %v3124, %v3124
    %v3126 = vld [vmem:[#allocation2] sm:$0xf]
    %v3127 = vld [vmem:[#allocation2 + $0x4] sm:$0xf]
    %v3128 = vld [vmem:[#allocation2 + $0x8] sm:$0xf]
    %v3129 = vld [vmem:[#allocation2 + $0xc] sm:$0xf]
    %v3130 = vld [vmem:[#allocation2 + $0x10] sm:$0xf]
    %v3131 = vld [vmem:[#allocation2 + $0x14] sm:$0xf]
    %v3132 = vld [vmem:[#allocation2 + $0x18] sm:$0xf]
    %v3133 = vld [vmem:[#allocation2 + $0x1c] sm:$0xf]
    %v3134 = vld [vmem:[#allocation5] sm:$0x1]
    %v3135 = vld [vmem:[#allocation5 + $0x1] sm:$0x1]
    %v3136 = vld [vmem:[#allocation5 + $0x2] sm:$0x1]
    %v3137 = vld [vmem:[#allocation5 + $0x3] sm:$0x1]
    %v3138 = vld [vmem:[#allocation5 + $0x4] sm:$0x1]
    %v3139 = vld [vmem:[#allocation5 + $0x5] sm:$0x1]
    %v3140 = vld [vmem:[#allocation5 + $0x6] sm:$0x1]
    %v3141 = vld [vmem:[#allocation5 + $0x7] sm:$0x1]
    %v3143 = vcombine.high %v3006, %v3006
    %v3145 = vunpack.c.l.s4 1966171168
    %v3146 = vunpack.c.0.s8 %v3145
    %v3147 = vlaneseq
    %v3148 = vshrl.u32 %v3147, 7
    %v3149 = vsub.s32 %v3146, %v3148
    %v3150 = vrot.slane %v3006, %v3149
    %v3152 = vunpack.c.l.s4 1966171168
    %v3153 = vunpack.c.0.s8 %v3152
    %v3154 = vlaneseq
    %v3155 = vshrl.u32 %v3154, 7
    %v3156 = vsub.s32 %v3153, %v3155
    %v3157 = vrot.slane %v3143, %v3156
    %v3158 = vcombine.high %v3150, %v3150
    %v3159 = vcombine.high %v3157, %v3157
    %v3161 = vunpack.c.l.s4 1966171168
    %v3162 = vunpack.c.0.s8 %v3161
    %v3163 = vlaneseq
    %v3164 = vshrl.u32 %v3163, 7
    %v3165 = vsub.s32 %v3162, %v3164
    %v3166 = vrot.slane %v3150, %v3165
    %v3168 = vunpack.c.l.s4 1966171168
    %v3169 = vunpack.c.0.s8 %v3168
    %v3170 = vlaneseq
    %v3171 = vshrl.u32 %v3170, 7
    %v3172 = vsub.s32 %v3169, %v3171
    %v3173 = vrot.slane %v3157, %v3172
    %v3175 = vunpack.c.l.s4 1966171168
    %v3176 = vunpack.c.0.s8 %v3175
    %v3177 = vlaneseq
    %v3178 = vshrl.u32 %v3177, 7
    %v3179 = vsub.s32 %v3176, %v3178
    %v3180 = vrot.slane %v3158, %v3179
    %v3182 = vunpack.c.l.s4 1966171168
    %v3183 = vunpack.c.0.s8 %v3182
    %v3184 = vlaneseq
    %v3185 = vshrl.u32 %v3184, 7
    %v3186 = vsub.s32 %v3183, %v3185
    %v3187 = vrot.slane %v3159, %v3186
    %v3188 = vcombine.high %v3166, %v3166
    %v3189 = vcombine.high %v3173, %v3173
    %v3190 = vcombine.high %v3180, %v3180
    %v3191 = vcombine.high %v3187, %v3187
    %v3200 = vpack.c.bf16 %v3166, %v3166
    %v3201 = vpack.c.bf16 %v3180, %v3180
    %v3202 = vpack.c.bf16 %v3188, %v3188
    %v3203 = vpack.c.bf16 %v3190, %v3190
    %v3204 = vpack.c.bf16 %v3173, %v3173
    %v3205 = vpack.c.bf16 %v3187, %v3187
    %v3206 = vpack.c.bf16 %v3189, %v3189
    %v3207 = vpack.c.bf16 %v3191, %v3191
    %3209 = vrot.lane.b32.xlu0 %v3200, 96
    %v3210 = vpop.permute.xlu0 %3209
    %v3212 = vsel %vm319, %v3210, 0
    %v3215 = vsel %vm319, %v3126, 0
    %3217 = vmatprep.subr.bf16.mxu0 0
    %3218 = vmatpush1.bf16.xpose.msra.mxu0 0
    %3219 = vmatprep.subr.bf16.mxu0 0
    %3220 = vmatpush1.bf16.xpose.msra.mxu0 0
    %3221 = vmatprep.subr.bf16.mxu0 0
    %3222 = vmatpush1.bf16.xpose.msra.mxu0 0
    %3223 = vmatprep.subr.bf16.mxu0 0
    %3224 = vmatpush1.bf16.xpose.msra.mxu0 0
    %3225 = vmatprep.subr.bf16.mxu0 0
    %3226 = vmatpush1.bf16.xpose.msra.mxu0 0
    %3227 = vmatprep.subr.bf16.mxu0 0
    %3228 = vmatpush1.bf16.xpose.msra.mxu0 0
    %3229 = vmatprep.subr.bf16.mxu0 0
    %3230 = vmatpush1.bf16.xpose.msra.mxu0 0
    %3231 = vmatprep.subr.bf16.mxu0 0
    %3232 = vmatpush1.bf16.xpose.msra.mxu0 %v3215
    %3233 = vmatprep.subr.bf16.mxu0 0
    %3234 = vmatpush2.bf16.xpose.msra.mxu0 0
    %3235 = vmatprep.subr.bf16.mxu0 0
    %3236 = vmatpush2.bf16.xpose.msra.mxu0 0
    %3237 = vmatprep.subr.bf16.mxu0 0
    %3238 = vmatpush2.bf16.xpose.msra.mxu0 0
    %3239 = vmatprep.subr.bf16.mxu0 0
    %3240 = vmatpush2.bf16.xpose.msra.mxu0 0
    %3241 = vmatprep.subr.bf16.mxu0 0
    %3242 = vmatpush2.bf16.xpose.msra.mxu0 0
    %3243 = vmatprep.subr.bf16.mxu0 0
    %3244 = vmatpush2.bf16.xpose.msra.mxu0 0
    %3245 = vmatprep.subr.bf16.mxu0 0
    %3246 = vmatpush2.bf16.xpose.msra.mxu0 0
    %3247 = vmatprep.subr.bf16.mxu0 0
    %3248 = vmatpush2.bf16.xpose.msra.mxu0 0
    %3249 = vmatprep.mubr.bf16.mxu0 0
    %3250 = vmatmul.mubr.bf16.gmra.mxu0 %v3212
    %v3251 = vpop.f32.mrf.mxu0
    %v3252 = vadd.f32 %v3134, %v3251
    %v3253 = vpop.f32.mrf.mxu0
    %v3254 = vpop.f32.mrf.mxu0
    %v3255 = vpop.f32.mrf.mxu0
    %3256 = vdwg.mxu0
    %3258 = vrot.lane.b32.xlu0 %v3201, 96
    %v3259 = vpop.permute.xlu0 %3258
    %v3261 = vsel %vm319, %v3259, 0
    %v3264 = vsel %vm319, %v3127, 0
    %3266 = vmatprep.subr.bf16.mxu0 0
    %3267 = vmatpush1.bf16.xpose.msra.mxu0 0
    %3268 = vmatprep.subr.bf16.mxu0 0
    %3269 = vmatpush1.bf16.xpose.msra.mxu0 0
    %3270 = vmatprep.subr.bf16.mxu0 0
    %3271 = vmatpush1.bf16.xpose.msra.mxu0 0
    %3272 = vmatprep.subr.bf16.mxu0 0
    %3273 = vmatpush1.bf16.xpose.msra.mxu0 0
    %3274 = vmatprep.subr.bf16.mxu0 0
    %3275 = vmatpush1.bf16.xpose.msra.mxu0 0
    %3276 = vmatprep.subr.bf16.mxu0 0
    %3277 = vmatpush1.bf16.xpose.msra.mxu0 0
    %3278 = vmatprep.subr.bf16.mxu0 0
    %3279 = vmatpush1.bf16.xpose.msra.mxu0 0
    %3280 = vmatprep.subr.bf16.mxu0 0
    %3281 = vmatpush1.bf16.xpose.msra.mxu0 %v3264
    %3282 = vmatprep.subr.bf16.mxu0 0
    %3283 = vmatpush2.bf16.xpose.msra.mxu0 0
    %3284 = vmatprep.subr.bf16.mxu0 0
    %3285 = vmatpush2.bf16.xpose.msra.mxu0 0
    %3286 = vmatprep.subr.bf16.mxu0 0
    %3287 = vmatpush2.bf16.xpose.msra.mxu0 0
    %3288 = vmatprep.subr.bf16.mxu0 0
    %3289 = vmatpush2.bf16.xpose.msra.mxu0 0
    %3290 = vmatprep.subr.bf16.mxu0 0
    %3291 = vmatpush2.bf16.xpose.msra.mxu0 0
    %3292 = vmatprep.subr.bf16.mxu0 0
    %3293 = vmatpush2.bf16.xpose.msra.mxu0 0
    %3294 = vmatprep.subr.bf16.mxu0 0
    %3295 = vmatpush2.bf16.xpose.msra.mxu0 0
    %3296 = vmatprep.subr.bf16.mxu0 0
    %3297 = vmatpush2.bf16.xpose.msra.mxu0 0
    %3298 = vmatprep.mubr.bf16.mxu0 0
    %3299 = vmatmul.mubr.bf16.gmra.mxu0 %v3261
    %v3300 = vpop.f32.mrf.mxu0
    %v3301 = vadd.f32 %v3135, %v3300
    %v3302 = vpop.f32.mrf.mxu0
    %v3303 = vpop.f32.mrf.mxu0
    %v3304 = vpop.f32.mrf.mxu0
    %3305 = vdwg.mxu0
    %3307 = vrot.lane.b32.xlu0 %v3202, 96
    %v3308 = vpop.permute.xlu0 %3307
    %v3310 = vsel %vm319, %v3308, 0
    %v3313 = vsel %vm319, %v3128, 0
    %3315 = vmatprep.subr.bf16.mxu0 0
    %3316 = vmatpush1.bf16.xpose.msra.mxu0 0
    %3317 = vmatprep.subr.bf16.mxu0 0
    %3318 = vmatpush1.bf16.xpose.msra.mxu0 0
    %3319 = vmatprep.subr.bf16.mxu0 0
    %3320 = vmatpush1.bf16.xpose.msra.mxu0 0
    %3321 = vmatprep.subr.bf16.mxu0 0
    %3322 = vmatpush1.bf16.xpose.msra.mxu0 0
    %3323 = vmatprep.subr.bf16.mxu0 0
    %3324 = vmatpush1.bf16.xpose.msra.mxu0 0
    %3325 = vmatprep.subr.bf16.mxu0 0
    %3326 = vmatpush1.bf16.xpose.msra.mxu0 0
    %3327 = vmatprep.subr.bf16.mxu0 0
    %3328 = vmatpush1.bf16.xpose.msra.mxu0 0
    %3329 = vmatprep.subr.bf16.mxu0 0
    %3330 = vmatpush1.bf16.xpose.msra.mxu0 %v3313
    %3331 = vmatprep.subr.bf16.mxu0 0
    %3332 = vmatpush2.bf16.xpose.msra.mxu0 0
    %3333 = vmatprep.subr.bf16.mxu0 0
    %3334 = vmatpush2.bf16.xpose.msra.mxu0 0
    %3335 = vmatprep.subr.bf16.mxu0 0
    %3336 = vmatpush2.bf16.xpose.msra.mxu0 0
    %3337 = vmatprep.subr.bf16.mxu0 0
    %3338 = vmatpush2.bf16.xpose.msra.mxu0 0
    %3339 = vmatprep.subr.bf16.mxu0 0
    %3340 = vmatpush2.bf16.xpose.msra.mxu0 0
    %3341 = vmatprep.subr.bf16.mxu0 0
    %3342 = vmatpush2.bf16.xpose.msra.mxu0 0
    %3343 = vmatprep.subr.bf16.mxu0 0
    %3344 = vmatpush2.bf16.xpose.msra.mxu0 0
    %3345 = vmatprep.subr.bf16.mxu0 0
    %3346 = vmatpush2.bf16.xpose.msra.mxu0 0
    %3347 = vmatprep.mubr.bf16.mxu0 0
    %3348 = vmatmul.mubr.bf16.gmra.mxu0 %v3310
    %v3349 = vpop.f32.mrf.mxu0
    %v3350 = vadd.f32 %v3136, %v3349
    %v3351 = vpop.f32.mrf.mxu0
    %v3352 = vpop.f32.mrf.mxu0
    %v3353 = vpop.f32.mrf.mxu0
    %3354 = vdwg.mxu0
    %3356 = vrot.lane.b32.xlu0 %v3203, 96
    %v3357 = vpop.permute.xlu0 %3356
    %v3359 = vsel %vm319, %v3357, 0
    %v3362 = vsel %vm319, %v3129, 0
    %3364 = vmatprep.subr.bf16.mxu0 0
    %3365 = vmatpush1.bf16.xpose.msra.mxu0 0
    %3366 = vmatprep.subr.bf16.mxu0 0
    %3367 = vmatpush1.bf16.xpose.msra.mxu0 0
    %3368 = vmatprep.subr.bf16.mxu0 0
    %3369 = vmatpush1.bf16.xpose.msra.mxu0 0
    %3370 = vmatprep.subr.bf16.mxu0 0
    %3371 = vmatpush1.bf16.xpose.msra.mxu0 0
    %3372 = vmatprep.subr.bf16.mxu0 0
    %3373 = vmatpush1.bf16.xpose.msra.mxu0 0
    %3374 = vmatprep.subr.bf16.mxu0 0
    %3375 = vmatpush1.bf16.xpose.msra.mxu0 0
    %3376 = vmatprep.subr.bf16.mxu0 0
    %3377 = vmatpush1.bf16.xpose.msra.mxu0 0
    %3378 = vmatprep.subr.bf16.mxu0 0
    %3379 = vmatpush1.bf16.xpose.msra.mxu0 %v3362
    %3380 = vmatprep.subr.bf16.mxu0 0
    %3381 = vmatpush2.bf16.xpose.msra.mxu0 0
    %3382 = vmatprep.subr.bf16.mxu0 0
    %3383 = vmatpush2.bf16.xpose.msra.mxu0 0
    %3384 = vmatprep.subr.bf16.mxu0 0
    %3385 = vmatpush2.bf16.xpose.msra.mxu0 0
    %3386 = vmatprep.subr.bf16.mxu0 0
    %3387 = vmatpush2.bf16.xpose.msra.mxu0 0
    %3388 = vmatprep.subr.bf16.mxu0 0
    %3389 = vmatpush2.bf16.xpose.msra.mxu0 0
    %3390 = vmatprep.subr.bf16.mxu0 0
    %3391 = vmatpush2.bf16.xpose.msra.mxu0 0
    %3392 = vmatprep.subr.bf16.mxu0 0
    %3393 = vmatpush2.bf16.xpose.msra.mxu0 0
    %3394 = vmatprep.subr.bf16.mxu0 0
    %3395 = vmatpush2.bf16.xpose.msra.mxu0 0
    %3396 = vmatprep.mubr.bf16.mxu0 0
    %3397 = vmatmul.mubr.bf16.gmra.mxu0 %v3359
    %v3398 = vpop.f32.mrf.mxu0
    %v3399 = vadd.f32 %v3137, %v3398
    %v3400 = vpop.f32.mrf.mxu0
    %v3401 = vpop.f32.mrf.mxu0
    %v3402 = vpop.f32.mrf.mxu0
    %3403 = vdwg.mxu0
    %3405 = vrot.lane.b32.xlu0 %v3204, 96
    %v3406 = vpop.permute.xlu0 %3405
    %v3408 = vsel %vm319, %v3406, 0
    %v3411 = vsel %vm319, %v3130, 0
    %3413 = vmatprep.subr.bf16.mxu0 0
    %3414 = vmatpush1.bf16.xpose.msra.mxu0 0
    %3415 = vmatprep.subr.bf16.mxu0 0
    %3416 = vmatpush1.bf16.xpose.msra.mxu0 0
    %3417 = vmatprep.subr.bf16.mxu0 0
    %3418 = vmatpush1.bf16.xpose.msra.mxu0 0
    %3419 = vmatprep.subr.bf16.mxu0 0
    %3420 = vmatpush1.bf16.xpose.msra.mxu0 0
    %3421 = vmatprep.subr.bf16.mxu0 0
    %3422 = vmatpush1.bf16.xpose.msra.mxu0 0
    %3423 = vmatprep.subr.bf16.mxu0 0
    %3424 = vmatpush1.bf16.xpose.msra.mxu0 0
    %3425 = vmatprep.subr.bf16.mxu0 0
    %3426 = vmatpush1.bf16.xpose.msra.mxu0 0
    %3427 = vmatprep.subr.bf16.mxu0 0
    %3428 = vmatpush1.bf16.xpose.msra.mxu0 %v3411
    %3429 = vmatprep.subr.bf16.mxu0 0
    %3430 = vmatpush2.bf16.xpose.msra.mxu0 0
    %3431 = vmatprep.subr.bf16.mxu0 0
    %3432 = vmatpush2.bf16.xpose.msra.mxu0 0
    %3433 = vmatprep.subr.bf16.mxu0 0
    %3434 = vmatpush2.bf16.xpose.msra.mxu0 0
    %3435 = vmatprep.subr.bf16.mxu0 0
    %3436 = vmatpush2.bf16.xpose.msra.mxu0 0
    %3437 = vmatprep.subr.bf16.mxu0 0
    %3438 = vmatpush2.bf16.xpose.msra.mxu0 0
    %3439 = vmatprep.subr.bf16.mxu0 0
    %3440 = vmatpush2.bf16.xpose.msra.mxu0 0
    %3441 = vmatprep.subr.bf16.mxu0 0
    %3442 = vmatpush2.bf16.xpose.msra.mxu0 0
    %3443 = vmatprep.subr.bf16.mxu0 0
    %3444 = vmatpush2.bf16.xpose.msra.mxu0 0
    %3445 = vmatprep.mubr.bf16.mxu0 0
    %3446 = vmatmul.mubr.bf16.gmra.mxu0 %v3408
    %v3447 = vpop.f32.mrf.mxu0
    %v3448 = vadd.f32 %v3138, %v3447
    %v3449 = vpop.f32.mrf.mxu0
    %v3450 = vpop.f32.mrf.mxu0
    %v3451 = vpop.f32.mrf.mxu0
    %3452 = vdwg.mxu0
    %3454 = vrot.lane.b32.xlu0 %v3205, 96
    %v3455 = vpop.permute.xlu0 %3454
    %v3457 = vsel %vm319, %v3455, 0
    %v3460 = vsel %vm319, %v3131, 0
    %3462 = vmatprep.subr.bf16.mxu0 0
    %3463 = vmatpush1.bf16.xpose.msra.mxu0 0
    %3464 = vmatprep.subr.bf16.mxu0 0
    %3465 = vmatpush1.bf16.xpose.msra.mxu0 0
    %3466 = vmatprep.subr.bf16.mxu0 0
    %3467 = vmatpush1.bf16.xpose.msra.mxu0 0
    %3468 = vmatprep.subr.bf16.mxu0 0
    %3469 = vmatpush1.bf16.xpose.msra.mxu0 0
    %3470 = vmatprep.subr.bf16.mxu0 0
    %3471 = vmatpush1.bf16.xpose.msra.mxu0 0
    %3472 = vmatprep.subr.bf16.mxu0 0
    %3473 = vmatpush1.bf16.xpose.msra.mxu0 0
    %3474 = vmatprep.subr.bf16.mxu0 0
    %3475 = vmatpush1.bf16.xpose.msra.mxu0 0
    %3476 = vmatprep.subr.bf16.mxu0 0
    %3477 = vmatpush1.bf16.xpose.msra.mxu0 %v3460
    %3478 = vmatprep.subr.bf16.mxu0 0
    %3479 = vmatpush2.bf16.xpose.msra.mxu0 0
    %3480 = vmatprep.subr.bf16.mxu0 0
    %3481 = vmatpush2.bf16.xpose.msra.mxu0 0
    %3482 = vmatprep.subr.bf16.mxu0 0
    %3483 = vmatpush2.bf16.xpose.msra.mxu0 0
    %3484 = vmatprep.subr.bf16.mxu0 0
    %3485 = vmatpush2.bf16.xpose.msra.mxu0 0
    %3486 = vmatprep.subr.bf16.mxu0 0
    %3487 = vmatpush2.bf16.xpose.msra.mxu0 0
    %3488 = vmatprep.subr.bf16.mxu0 0
    %3489 = vmatpush2.bf16.xpose.msra.mxu0 0
    %3490 = vmatprep.subr.bf16.mxu0 0
    %3491 = vmatpush2.bf16.xpose.msra.mxu0 0
    %3492 = vmatprep.subr.bf16.mxu0 0
    %3493 = vmatpush2.bf16.xpose.msra.mxu0 0
    %3494 = vmatprep.mubr.bf16.mxu0 0
    %3495 = vmatmul.mubr.bf16.gmra.mxu0 %v3457
    %v3496 = vpop.f32.mrf.mxu0
    %v3497 = vadd.f32 %v3139, %v3496
    %v3498 = vpop.f32.mrf.mxu0
    %v3499 = vpop.f32.mrf.mxu0
    %v3500 = vpop.f32.mrf.mxu0
    %3501 = vdwg.mxu0
    %3503 = vrot.lane.b32.xlu0 %v3206, 96
    %v3504 = vpop.permute.xlu0 %3503
    %v3506 = vsel %vm319, %v3504, 0
    %v3509 = vsel %vm319, %v3132, 0
    %3511 = vmatprep.subr.bf16.mxu0 0
    %3512 = vmatpush1.bf16.xpose.msra.mxu0 0
    %3513 = vmatprep.subr.bf16.mxu0 0
    %3514 = vmatpush1.bf16.xpose.msra.mxu0 0
    %3515 = vmatprep.subr.bf16.mxu0 0
    %3516 = vmatpush1.bf16.xpose.msra.mxu0 0
    %3517 = vmatprep.subr.bf16.mxu0 0
    %3518 = vmatpush1.bf16.xpose.msra.mxu0 0
    %3519 = vmatprep.subr.bf16.mxu0 0
    %3520 = vmatpush1.bf16.xpose.msra.mxu0 0
    %3521 = vmatprep.subr.bf16.mxu0 0
    %3522 = vmatpush1.bf16.xpose.msra.mxu0 0
    %3523 = vmatprep.subr.bf16.mxu0 0
    %3524 = vmatpush1.bf16.xpose.msra.mxu0 0
    %3525 = vmatprep.subr.bf16.mxu0 0
    %3526 = vmatpush1.bf16.xpose.msra.mxu0 %v3509
    %3527 = vmatprep.subr.bf16.mxu0 0
    %3528 = vmatpush2.bf16.xpose.msra.mxu0 0
    %3529 = vmatprep.subr.bf16.mxu0 0
    %3530 = vmatpush2.bf16.xpose.msra.mxu0 0
    %3531 = vmatprep.subr.bf16.mxu0 0
    %3532 = vmatpush2.bf16.xpose.msra.mxu0 0
    %3533 = vmatprep.subr.bf16.mxu0 0
    %3534 = vmatpush2.bf16.xpose.msra.mxu0 0
    %3535 = vmatprep.subr.bf16.mxu0 0
    %3536 = vmatpush2.bf16.xpose.msra.mxu0 0
    %3537 = vmatprep.subr.bf16.mxu0 0
    %3538 = vmatpush2.bf16.xpose.msra.mxu0 0
    %3539 = vmatprep.subr.bf16.mxu0 0
    %3540 = vmatpush2.bf16.xpose.msra.mxu0 0
    %3541 = vmatprep.subr.bf16.mxu0 0
    %3542 = vmatpush2.bf16.xpose.msra.mxu0 0
    %3543 = vmatprep.mubr.bf16.mxu0 0
    %3544 = vmatmul.mubr.bf16.gmra.mxu0 %v3506
    %v3545 = vpop.f32.mrf.mxu0
    %v3546 = vadd.f32 %v3140, %v3545
    %v3547 = vpop.f32.mrf.mxu0
    %v3548 = vpop.f32.mrf.mxu0
    %v3549 = vpop.f32.mrf.mxu0
    %3550 = vdwg.mxu0
    %3552 = vrot.lane.b32.xlu0 %v3207, 96
    %v3553 = vpop.permute.xlu0 %3552
    %v3555 = vsel %vm319, %v3553, 0
    %v3558 = vsel %vm319, %v3133, 0
    %3560 = vmatprep.subr.bf16.mxu0 0
    %3561 = vmatpush1.bf16.xpose.msra.mxu0 0
    %3562 = vmatprep.subr.bf16.mxu0 0
    %3563 = vmatpush1.bf16.xpose.msra.mxu0 0
    %3564 = vmatprep.subr.bf16.mxu0 0
    %3565 = vmatpush1.bf16.xpose.msra.mxu0 0
    %3566 = vmatprep.subr.bf16.mxu0 0
    %3567 = vmatpush1.bf16.xpose.msra.mxu0 0
    %3568 = vmatprep.subr.bf16.mxu0 0
    %3569 = vmatpush1.bf16.xpose.msra.mxu0 0
    %3570 = vmatprep.subr.bf16.mxu0 0
    %3571 = vmatpush1.bf16.xpose.msra.mxu0 0
    %3572 = vmatprep.subr.bf16.mxu0 0
    %3573 = vmatpush1.bf16.xpose.msra.mxu0 0
    %3574 = vmatprep.subr.bf16.mxu0 0
    %3575 = vmatpush1.bf16.xpose.msra.mxu0 %v3558
    %3576 = vmatprep.subr.bf16.mxu0 0
    %3577 = vmatpush2.bf16.xpose.msra.mxu0 0
    %3578 = vmatprep.subr.bf16.mxu0 0
    %3579 = vmatpush2.bf16.xpose.msra.mxu0 0
    %3580 = vmatprep.subr.bf16.mxu0 0
    %3581 = vmatpush2.bf16.xpose.msra.mxu0 0
    %3582 = vmatprep.subr.bf16.mxu0 0
    %3583 = vmatpush2.bf16.xpose.msra.mxu0 0
    %3584 = vmatprep.subr.bf16.mxu0 0
    %3585 = vmatpush2.bf16.xpose.msra.mxu0 0
    %3586 = vmatprep.subr.bf16.mxu0 0
    %3587 = vmatpush2.bf16.xpose.msra.mxu0 0
    %3588 = vmatprep.subr.bf16.mxu0 0
    %3589 = vmatpush2.bf16.xpose.msra.mxu0 0
    %3590 = vmatprep.subr.bf16.mxu0 0
    %3591 = vmatpush2.bf16.xpose.msra.mxu0 0
    %3592 = vmatprep.mubr.bf16.mxu0 0
    %3593 = vmatmul.mubr.bf16.gmra.mxu0 %v3555
    %v3594 = vpop.f32.mrf.mxu0
    %v3595 = vadd.f32 %v3141, %v3594
    %v3596 = vpop.f32.mrf.mxu0
    %v3597 = vpop.f32.mrf.mxu0
    %v3598 = vpop.f32.mrf.mxu0
    %3599 = vdwg.mxu0
    %v3600 = vsel %vm688, %v3252, -inf
    %3601 = vmax.xlane.f32.xlu0 %v3600
    %v3602 = vpop.xlane.xlu0 %3601
    %v3603 = vsel %vm688, %v3301, -inf
    %3604 = vmax.xlane.f32.xlu0 %v3603
    %v3605 = vpop.xlane.xlu0 %3604
    %v3606 = vsel %vm688, %v3350, -inf
    %3607 = vmax.xlane.f32.xlu0 %v3606
    %v3608 = vpop.xlane.xlu0 %3607
    %v3609 = vsel %vm688, %v3399, -inf
    %3610 = vmax.xlane.f32.xlu0 %v3609
    %v3611 = vpop.xlane.xlu0 %3610
    %v3612 = vsel %vm688, %v3448, -inf
    %3613 = vmax.xlane.f32.xlu0 %v3612
    %v3614 = vpop.xlane.xlu0 %3613
    %v3615 = vsel %vm688, %v3497, -inf
    %3616 = vmax.xlane.f32.xlu0 %v3615
    %v3617 = vpop.xlane.xlu0 %3616
    %v3618 = vsel %vm688, %v3546, -inf
    %3619 = vmax.xlane.f32.xlu0 %v3618
    %v3620 = vpop.xlane.xlu0 %3619
    %v3621 = vsel %vm688, %v3595, -inf
    %3622 = vmax.xlane.f32.xlu0 %v3621
    %v3623 = vpop.xlane.xlu0 %3622
    %v3624 = vsub.f32 %v3252, %v3602
    %v3625 = vsub.f32 %v3301, %v3605
    %v3626 = vsub.f32 %v3350, %v3608
    %v3627 = vsub.f32 %v3399, %v3611
    %v3628 = vsub.f32 %v3448, %v3614
    %v3629 = vsub.f32 %v3497, %v3617
    %v3630 = vsub.f32 %v3546, %v3620
    %v3631 = vsub.f32 %v3595, %v3623
    %v3632 = vmul.f32 %v3624, 1.442695
    %v3633 = vpow.pop %v3632
    %v3634 = vmul.f32 %v3625, 1.442695
    %v3635 = vpow.pop %v3634
    %v3636 = vmul.f32 %v3626, 1.442695
    %v3637 = vpow.pop %v3636
    %v3638 = vmul.f32 %v3627, 1.442695
    %v3639 = vpow.pop %v3638
    %v3640 = vmul.f32 %v3628, 1.442695
    %v3641 = vpow.pop %v3640
    %v3642 = vmul.f32 %v3629, 1.442695
    %v3643 = vpow.pop %v3642
    %v3644 = vmul.f32 %v3630, 1.442695
    %v3645 = vpow.pop %v3644
    %v3646 = vmul.f32 %v3631, 1.442695
    %v3647 = vpow.pop %v3646
    %v3648 = vsel %vm688, %v3633, 0.0
    %3649 = vadd.xlane.f32.xlu0 %v3648
    %v3650 = vpop.xlane.xlu0 %3649
    %v3651 = vsel %vm688, %v3635, 0.0
    %3652 = vadd.xlane.f32.xlu0 %v3651
    %v3653 = vpop.xlane.xlu0 %3652
    %v3654 = vsel %vm688, %v3637, 0.0
    %3655 = vadd.xlane.f32.xlu0 %v3654
    %v3656 = vpop.xlane.xlu0 %3655
    %v3657 = vsel %vm688, %v3639, 0.0
    %3658 = vadd.xlane.f32.xlu0 %v3657
    %v3659 = vpop.xlane.xlu0 %3658
    %v3660 = vsel %vm688, %v3641, 0.0
    %3661 = vadd.xlane.f32.xlu0 %v3660
    %v3662 = vpop.xlane.xlu0 %3661
    %v3663 = vsel %vm688, %v3643, 0.0
    %3664 = vadd.xlane.f32.xlu0 %v3663
    %v3665 = vpop.xlane.xlu0 %3664
    %v3666 = vsel %vm688, %v3645, 0.0
    %3667 = vadd.xlane.f32.xlu0 %v3666
    %v3668 = vpop.xlane.xlu0 %3667
    %v3669 = vsel %vm688, %v3647, 0.0
    %3670 = vadd.xlane.f32.xlu0 %v3669
    %v3671 = vpop.xlane.xlu0 %3670
    %v3672 = vrcp.pop %v3650
    %v3673 = vrcp.pop %v3653
    %v3674 = vrcp.pop %v3656
    %v3675 = vrcp.pop %v3659
    %v3676 = vrcp.pop %v3662
    %v3677 = vrcp.pop %v3665
    %v3678 = vrcp.pop %v3668
    %v3679 = vrcp.pop %v3671
    %v3680 = vmul.f32 %v3633, %v3672
    %v3681 = vmul.f32 %v3635, %v3673
    %v3682 = vmul.f32 %v3637, %v3674
    %v3683 = vmul.f32 %v3639, %v3675
    %v3684 = vmul.f32 %v3641, %v3676
    %v3685 = vmul.f32 %v3643, %v3677
    %v3686 = vmul.f32 %v3645, %v3678
    %v3687 = vmul.f32 %v3647, %v3679
    %v3688 = vpack.c.bf16 %v3680, %v3680
    %v3689 = vpack.c.bf16 %v3681, %v3681
    %v3690 = vpack.c.bf16 %v3682, %v3682
    %v3691 = vpack.c.bf16 %v3683, %v3683
    %v3692 = vpack.c.bf16 %v3684, %v3684
    %v3693 = vpack.c.bf16 %v3685, %v3685
    %v3694 = vpack.c.bf16 %v3686, %v3686
    %v3695 = vpack.c.bf16 %v3687, %v3687
    %v3697 = vsel %vm785, %v3688, 0
    %v3699 = vsel %vm789, %v3126, 0
    %3701 = vmatprep.subr.bf16.mxu0 0
    %3702 = vmatpush1.bf16.msra.mxu0 0
    %3703 = vmatprep.subr.bf16.mxu0 0
    %3704 = vmatpush1.bf16.msra.mxu0 0
    %3705 = vmatprep.subr.bf16.mxu0 0
    %3706 = vmatpush1.bf16.msra.mxu0 0
    %3707 = vmatprep.subr.bf16.mxu0 0
    %3708 = vmatpush1.bf16.msra.mxu0 0
    %3709 = vmatprep.subr.bf16.mxu0 0
    %3710 = vmatpush1.bf16.msra.mxu0 0
    %3711 = vmatprep.subr.bf16.mxu0 0
    %3712 = vmatpush1.bf16.msra.mxu0 0
    %3713 = vmatprep.subr.bf16.mxu0 0
    %3714 = vmatpush1.bf16.msra.mxu0 0
    %3715 = vmatprep.subr.bf16.mxu0 0
    %3716 = vmatpush1.bf16.msra.mxu0 %v3699
    %3717 = vmatprep.subr.bf16.mxu0 0
    %3718 = vmatpush2.bf16.msra.mxu0 0
    %3719 = vmatprep.subr.bf16.mxu0 0
    %3720 = vmatpush2.bf16.msra.mxu0 0
    %3721 = vmatprep.subr.bf16.mxu0 0
    %3722 = vmatpush2.bf16.msra.mxu0 0
    %3723 = vmatprep.subr.bf16.mxu0 0
    %3724 = vmatpush2.bf16.msra.mxu0 0
    %3725 = vmatprep.subr.bf16.mxu0 0
    %3726 = vmatpush2.bf16.msra.mxu0 0
    %3727 = vmatprep.subr.bf16.mxu0 0
    %3728 = vmatpush2.bf16.msra.mxu0 0
    %3729 = vmatprep.subr.bf16.mxu0 0
    %3730 = vmatpush2.bf16.msra.mxu0 0
    %3731 = vmatprep.subr.bf16.mxu0 0
    %3732 = vmatpush2.bf16.msra.mxu0 0
    %3733 = vmatprep.mubr.bf16.mxu0 0
    %3734 = vmatmul.mubr.bf16.gmra.mxu0 %v3697
    %v3735 = vpop.f32.mrf.mxu0
    %v3736 = vadd.f32 0.0, %v3735
    %v3737 = vpop.f32.mrf.mxu0
    %v3738 = vpop.f32.mrf.mxu0
    %v3739 = vpop.f32.mrf.mxu0
    %3740 = vdwg.mxu0
    %v3742 = vsel %vm785, %v3689, 0
    %v3744 = vsel %vm789, %v3127, 0
    %3746 = vmatprep.subr.bf16.mxu0 0
    %3747 = vmatpush1.bf16.msra.mxu0 0
    %3748 = vmatprep.subr.bf16.mxu0 0
    %3749 = vmatpush1.bf16.msra.mxu0 0
    %3750 = vmatprep.subr.bf16.mxu0 0
    %3751 = vmatpush1.bf16.msra.mxu0 0
    %3752 = vmatprep.subr.bf16.mxu0 0
    %3753 = vmatpush1.bf16.msra.mxu0 0
    %3754 = vmatprep.subr.bf16.mxu0 0
    %3755 = vmatpush1.bf16.msra.mxu0 0
    %3756 = vmatprep.subr.bf16.mxu0 0
    %3757 = vmatpush1.bf16.msra.mxu0 0
    %3758 = vmatprep.subr.bf16.mxu0 0
    %3759 = vmatpush1.bf16.msra.mxu0 0
    %3760 = vmatprep.subr.bf16.mxu0 0
    %3761 = vmatpush1.bf16.msra.mxu0 %v3744
    %3762 = vmatprep.subr.bf16.mxu0 0
    %3763 = vmatpush2.bf16.msra.mxu0 0
    %3764 = vmatprep.subr.bf16.mxu0 0
    %3765 = vmatpush2.bf16.msra.mxu0 0
    %3766 = vmatprep.subr.bf16.mxu0 0
    %3767 = vmatpush2.bf16.msra.mxu0 0
    %3768 = vmatprep.subr.bf16.mxu0 0
    %3769 = vmatpush2.bf16.msra.mxu0 0
    %3770 = vmatprep.subr.bf16.mxu0 0
    %3771 = vmatpush2.bf16.msra.mxu0 0
    %3772 = vmatprep.subr.bf16.mxu0 0
    %3773 = vmatpush2.bf16.msra.mxu0 0
    %3774 = vmatprep.subr.bf16.mxu0 0
    %3775 = vmatpush2.bf16.msra.mxu0 0
    %3776 = vmatprep.subr.bf16.mxu0 0
    %3777 = vmatpush2.bf16.msra.mxu0 0
    %3778 = vmatprep.mubr.bf16.mxu0 0
    %3779 = vmatmul.mubr.bf16.gmra.mxu0 %v3742
    %v3780 = vpop.f32.mrf.mxu0
    %v3781 = vadd.f32 0.0, %v3780
    %v3782 = vpop.f32.mrf.mxu0
    %v3783 = vpop.f32.mrf.mxu0
    %v3784 = vpop.f32.mrf.mxu0
    %3785 = vdwg.mxu0
    %v3787 = vsel %vm785, %v3690, 0
    %v3789 = vsel %vm789, %v3128, 0
    %3791 = vmatprep.subr.bf16.mxu0 0
    %3792 = vmatpush1.bf16.msra.mxu0 0
    %3793 = vmatprep.subr.bf16.mxu0 0
    %3794 = vmatpush1.bf16.msra.mxu0 0
    %3795 = vmatprep.subr.bf16.mxu0 0
    %3796 = vmatpush1.bf16.msra.mxu0 0
    %3797 = vmatprep.subr.bf16.mxu0 0
    %3798 = vmatpush1.bf16.msra.mxu0 0
    %3799 = vmatprep.subr.bf16.mxu0 0
    %3800 = vmatpush1.bf16.msra.mxu0 0
    %3801 = vmatprep.subr.bf16.mxu0 0
    %3802 = vmatpush1.bf16.msra.mxu0 0
    %3803 = vmatprep.subr.bf16.mxu0 0
    %3804 = vmatpush1.bf16.msra.mxu0 0
    %3805 = vmatprep.subr.bf16.mxu0 0
    %3806 = vmatpush1.bf16.msra.mxu0 %v3789
    %3807 = vmatprep.subr.bf16.mxu0 0
    %3808 = vmatpush2.bf16.msra.mxu0 0
    %3809 = vmatprep.subr.bf16.mxu0 0
    %3810 = vmatpush2.bf16.msra.mxu0 0
    %3811 = vmatprep.subr.bf16.mxu0 0
    %3812 = vmatpush2.bf16.msra.mxu0 0
    %3813 = vmatprep.subr.bf16.mxu0 0
    %3814 = vmatpush2.bf16.msra.mxu0 0
    %3815 = vmatprep.subr.bf16.mxu0 0
    %3816 = vmatpush2.bf16.msra.mxu0 0
    %3817 = vmatprep.subr.bf16.mxu0 0
    %3818 = vmatpush2.bf16.msra.mxu0 0
    %3819 = vmatprep.subr.bf16.mxu0 0
    %3820 = vmatpush2.bf16.msra.mxu0 0
    %3821 = vmatprep.subr.bf16.mxu0 0
    %3822 = vmatpush2.bf16.msra.mxu0 0
    %3823 = vmatprep.mubr.bf16.mxu0 0
    %3824 = vmatmul.mubr.bf16.gmra.mxu0 %v3787
    %v3825 = vpop.f32.mrf.mxu0
    %v3826 = vadd.f32 0.0, %v3825
    %v3827 = vpop.f32.mrf.mxu0
    %v3828 = vpop.f32.mrf.mxu0
    %v3829 = vpop.f32.mrf.mxu0
    %3830 = vdwg.mxu0
    %v3832 = vsel %vm785, %v3691, 0
    %v3834 = vsel %vm789, %v3129, 0
    %3836 = vmatprep.subr.bf16.mxu0 0
    %3837 = vmatpush1.bf16.msra.mxu0 0
    %3838 = vmatprep.subr.bf16.mxu0 0
    %3839 = vmatpush1.bf16.msra.mxu0 0
    %3840 = vmatprep.subr.bf16.mxu0 0
    %3841 = vmatpush1.bf16.msra.mxu0 0
    %3842 = vmatprep.subr.bf16.mxu0 0
    %3843 = vmatpush1.bf16.msra.mxu0 0
    %3844 = vmatprep.subr.bf16.mxu0 0
    %3845 = vmatpush1.bf16.msra.mxu0 0
    %3846 = vmatprep.subr.bf16.mxu0 0
    %3847 = vmatpush1.bf16.msra.mxu0 0
    %3848 = vmatprep.subr.bf16.mxu0 0
    %3849 = vmatpush1.bf16.msra.mxu0 0
    %3850 = vmatprep.subr.bf16.mxu0 0
    %3851 = vmatpush1.bf16.msra.mxu0 %v3834
    %3852 = vmatprep.subr.bf16.mxu0 0
    %3853 = vmatpush2.bf16.msra.mxu0 0
    %3854 = vmatprep.subr.bf16.mxu0 0
    %3855 = vmatpush2.bf16.msra.mxu0 0
    %3856 = vmatprep.subr.bf16.mxu0 0
    %3857 = vmatpush2.bf16.msra.mxu0 0
    %3858 = vmatprep.subr.bf16.mxu0 0
    %3859 = vmatpush2.bf16.msra.mxu0 0
    %3860 = vmatprep.subr.bf16.mxu0 0
    %3861 = vmatpush2.bf16.msra.mxu0 0
    %3862 = vmatprep.subr.bf16.mxu0 0
    %3863 = vmatpush2.bf16.msra.mxu0 0
    %3864 = vmatprep.subr.bf16.mxu0 0
    %3865 = vmatpush2.bf16.msra.mxu0 0
    %3866 = vmatprep.subr.bf16.mxu0 0
    %3867 = vmatpush2.bf16.msra.mxu0 0
    %3868 = vmatprep.mubr.bf16.mxu0 0
    %3869 = vmatmul.mubr.bf16.gmra.mxu0 %v3832
    %v3870 = vpop.f32.mrf.mxu0
    %v3871 = vadd.f32 0.0, %v3870
    %v3872 = vpop.f32.mrf.mxu0
    %v3873 = vpop.f32.mrf.mxu0
    %v3874 = vpop.f32.mrf.mxu0
    %3875 = vdwg.mxu0
    %v3877 = vsel %vm785, %v3692, 0
    %v3879 = vsel %vm789, %v3130, 0
    %3881 = vmatprep.subr.bf16.mxu0 0
    %3882 = vmatpush1.bf16.msra.mxu0 0
    %3883 = vmatprep.subr.bf16.mxu0 0
    %3884 = vmatpush1.bf16.msra.mxu0 0
    %3885 = vmatprep.subr.bf16.mxu0 0
    %3886 = vmatpush1.bf16.msra.mxu0 0
    %3887 = vmatprep.subr.bf16.mxu0 0
    %3888 = vmatpush1.bf16.msra.mxu0 0
    %3889 = vmatprep.subr.bf16.mxu0 0
    %3890 = vmatpush1.bf16.msra.mxu0 0
    %3891 = vmatprep.subr.bf16.mxu0 0
    %3892 = vmatpush1.bf16.msra.mxu0 0
    %3893 = vmatprep.subr.bf16.mxu0 0
    %3894 = vmatpush1.bf16.msra.mxu0 0
    %3895 = vmatprep.subr.bf16.mxu0 0
    %3896 = vmatpush1.bf16.msra.mxu0 %v3879
    %3897 = vmatprep.subr.bf16.mxu0 0
    %3898 = vmatpush2.bf16.msra.mxu0 0
    %3899 = vmatprep.subr.bf16.mxu0 0
    %3900 = vmatpush2.bf16.msra.mxu0 0
    %3901 = vmatprep.subr.bf16.mxu0 0
    %3902 = vmatpush2.bf16.msra.mxu0 0
    %3903 = vmatprep.subr.bf16.mxu0 0
    %3904 = vmatpush2.bf16.msra.mxu0 0
    %3905 = vmatprep.subr.bf16.mxu0 0
    %3906 = vmatpush2.bf16.msra.mxu0 0
    %3907 = vmatprep.subr.bf16.mxu0 0
    %3908 = vmatpush2.bf16.msra.mxu0 0
    %3909 = vmatprep.subr.bf16.mxu0 0
    %3910 = vmatpush2.bf16.msra.mxu0 0
    %3911 = vmatprep.subr.bf16.mxu0 0
    %3912 = vmatpush2.bf16.msra.mxu0 0
    %3913 = vmatprep.mubr.bf16.mxu0 0
    %3914 = vmatmul.mubr.bf16.gmra.mxu0 %v3877
    %v3915 = vpop.f32.mrf.mxu0
    %v3916 = vadd.f32 0.0, %v3915
    %v3917 = vpop.f32.mrf.mxu0
    %v3918 = vpop.f32.mrf.mxu0
    %v3919 = vpop.f32.mrf.mxu0
    %3920 = vdwg.mxu0
    %v3922 = vsel %vm785, %v3693, 0
    %v3924 = vsel %vm789, %v3131, 0
    %3926 = vmatprep.subr.bf16.mxu0 0
    %3927 = vmatpush1.bf16.msra.mxu0 0
    %3928 = vmatprep.subr.bf16.mxu0 0
    %3929 = vmatpush1.bf16.msra.mxu0 0
    %3930 = vmatprep.subr.bf16.mxu0 0
    %3931 = vmatpush1.bf16.msra.mxu0 0
    %3932 = vmatprep.subr.bf16.mxu0 0
    %3933 = vmatpush1.bf16.msra.mxu0 0
    %3934 = vmatprep.subr.bf16.mxu0 0
    %3935 = vmatpush1.bf16.msra.mxu0 0
    %3936 = vmatprep.subr.bf16.mxu0 0
    %3937 = vmatpush1.bf16.msra.mxu0 0
    %3938 = vmatprep.subr.bf16.mxu0 0
    %3939 = vmatpush1.bf16.msra.mxu0 0
    %3940 = vmatprep.subr.bf16.mxu0 0
    %3941 = vmatpush1.bf16.msra.mxu0 %v3924
    %3942 = vmatprep.subr.bf16.mxu0 0
    %3943 = vmatpush2.bf16.msra.mxu0 0
    %3944 = vmatprep.subr.bf16.mxu0 0
    %3945 = vmatpush2.bf16.msra.mxu0 0
    %3946 = vmatprep.subr.bf16.mxu0 0
    %3947 = vmatpush2.bf16.msra.mxu0 0
    %3948 = vmatprep.subr.bf16.mxu0 0
    %3949 = vmatpush2.bf16.msra.mxu0 0
    %3950 = vmatprep.subr.bf16.mxu0 0
    %3951 = vmatpush2.bf16.msra.mxu0 0
    %3952 = vmatprep.subr.bf16.mxu0 0
    %3953 = vmatpush2.bf16.msra.mxu0 0
    %3954 = vmatprep.subr.bf16.mxu0 0
    %3955 = vmatpush2.bf16.msra.mxu0 0
    %3956 = vmatprep.subr.bf16.mxu0 0
    %3957 = vmatpush2.bf16.msra.mxu0 0
    %3958 = vmatprep.mubr.bf16.mxu0 0
    %3959 = vmatmul.mubr.bf16.gmra.mxu0 %v3922
    %v3960 = vpop.f32.mrf.mxu0
    %v3961 = vadd.f32 0.0, %v3960
    %v3962 = vpop.f32.mrf.mxu0
    %v3963 = vpop.f32.mrf.mxu0
    %v3964 = vpop.f32.mrf.mxu0
    %3965 = vdwg.mxu0
    %v3967 = vsel %vm785, %v3694, 0
    %v3969 = vsel %vm789, %v3132, 0
    %3971 = vmatprep.subr.bf16.mxu0 0
    %3972 = vmatpush1.bf16.msra.mxu0 0
    %3973 = vmatprep.subr.bf16.mxu0 0
    %3974 = vmatpush1.bf16.msra.mxu0 0
    %3975 = vmatprep.subr.bf16.mxu0 0
    %3976 = vmatpush1.bf16.msra.mxu0 0
    %3977 = vmatprep.subr.bf16.mxu0 0
    %3978 = vmatpush1.bf16.msra.mxu0 0
    %3979 = vmatprep.subr.bf16.mxu0 0
    %3980 = vmatpush1.bf16.msra.mxu0 0
    %3981 = vmatprep.subr.bf16.mxu0 0
    %3982 = vmatpush1.bf16.msra.mxu0 0
    %3983 = vmatprep.subr.bf16.mxu0 0
    %3984 = vmatpush1.bf16.msra.mxu0 0
    %3985 = vmatprep.subr.bf16.mxu0 0
    %3986 = vmatpush1.bf16.msra.mxu0 %v3969
    %3987 = vmatprep.subr.bf16.mxu0 0
    %3988 = vmatpush2.bf16.msra.mxu0 0
    %3989 = vmatprep.subr.bf16.mxu0 0
    %3990 = vmatpush2.bf16.msra.mxu0 0
    %3991 = vmatprep.subr.bf16.mxu0 0
    %3992 = vmatpush2.bf16.msra.mxu0 0
    %3993 = vmatprep.subr.bf16.mxu0 0
    %3994 = vmatpush2.bf16.msra.mxu0 0
    %3995 = vmatprep.subr.bf16.mxu0 0
    %3996 = vmatpush2.bf16.msra.mxu0 0
    %3997 = vmatprep.subr.bf16.mxu0 0
    %3998 = vmatpush2.bf16.msra.mxu0 0
    %3999 = vmatprep.subr.bf16.mxu0 0
    %4000 = vmatpush2.bf16.msra.mxu0 0
    %4001 = vmatprep.subr.bf16.mxu0 0
    %4002 = vmatpush2.bf16.msra.mxu0 0
    %4003 = vmatprep.mubr.bf16.mxu0 0
    %4004 = vmatmul.mubr.bf16.gmra.mxu0 %v3967
    %v4005 = vpop.f32.mrf.mxu0
    %v4006 = vadd.f32 0.0, %v4005
    %v4007 = vpop.f32.mrf.mxu0
    %v4008 = vpop.f32.mrf.mxu0
    %v4009 = vpop.f32.mrf.mxu0
    %4010 = vdwg.mxu0
    %v4012 = vsel %vm785, %v3695, 0
    %v4014 = vsel %vm789, %v3133, 0
    %4016 = vmatprep.subr.bf16.mxu0 0
    %4017 = vmatpush1.bf16.msra.mxu0 0
    %4018 = vmatprep.subr.bf16.mxu0 0
    %4019 = vmatpush1.bf16.msra.mxu0 0
    %4020 = vmatprep.subr.bf16.mxu0 0
    %4021 = vmatpush1.bf16.msra.mxu0 0
    %4022 = vmatprep.subr.bf16.mxu0 0
    %4023 = vmatpush1.bf16.msra.mxu0 0
    %4024 = vmatprep.subr.bf16.mxu0 0
    %4025 = vmatpush1.bf16.msra.mxu0 0
    %4026 = vmatprep.subr.bf16.mxu0 0
    %4027 = vmatpush1.bf16.msra.mxu0 0
    %4028 = vmatprep.subr.bf16.mxu0 0
    %4029 = vmatpush1.bf16.msra.mxu0 0
    %4030 = vmatprep.subr.bf16.mxu0 0
    %4031 = vmatpush1.bf16.msra.mxu0 %v4014
    %4032 = vmatprep.subr.bf16.mxu0 0
    %4033 = vmatpush2.bf16.msra.mxu0 0
    %4034 = vmatprep.subr.bf16.mxu0 0
    %4035 = vmatpush2.bf16.msra.mxu0 0
    %4036 = vmatprep.subr.bf16.mxu0 0
    %4037 = vmatpush2.bf16.msra.mxu0 0
    %4038 = vmatprep.subr.bf16.mxu0 0
    %4039 = vmatpush2.bf16.msra.mxu0 0
    %4040 = vmatprep.subr.bf16.mxu0 0
    %4041 = vmatpush2.bf16.msra.mxu0 0
    %4042 = vmatprep.subr.bf16.mxu0 0
    %4043 = vmatpush2.bf16.msra.mxu0 0
    %4044 = vmatprep.subr.bf16.mxu0 0
    %4045 = vmatpush2.bf16.msra.mxu0 0
    %4046 = vmatprep.subr.bf16.mxu0 0
    %4047 = vmatpush2.bf16.msra.mxu0 0
    %4048 = vmatprep.mubr.bf16.mxu0 0
    %4049 = vmatmul.mubr.bf16.gmra.mxu0 %v4012
    %v4050 = vpop.f32.mrf.mxu0
    %v4051 = vadd.f32 0.0, %v4050
    %v4052 = vpop.f32.mrf.mxu0
    %v4053 = vpop.f32.mrf.mxu0
    %v4054 = vpop.f32.mrf.mxu0
    %4055 = vdwg.mxu0
    %v4056 = vadd.f32 %v3680, 0.0
    %v4057 = vadd.f32 %v3681, 0.0
    %v4058 = vadd.f32 %v3682, 0.0
    %v4059 = vadd.f32 %v3683, 0.0
    %v4060 = vadd.f32 %v3684, 0.0
    %v4061 = vadd.f32 %v3685, 0.0
    %v4062 = vadd.f32 %v3686, 0.0
    %v4063 = vadd.f32 %v3687, 0.0
    %v4064 = vadd.f32 %v3736, 0.0
    %v4065 = vadd.f32 %v3781, 0.0
    %v4066 = vadd.f32 %v3826, 0.0
    %v4067 = vadd.f32 %v3871, 0.0
    %v4068 = vadd.f32 %v3916, 0.0
    %v4069 = vadd.f32 %v3961, 0.0
    %v4070 = vadd.f32 %v4006, 0.0
    %v4071 = vadd.f32 %v4051, 0.0
    %v4080 = vrot.slane %v4065, 7
    %v4081 = vsel %vm1172, %v4080, %v4064
    %v4082 = vrot.slane %v4066, 6
    %v4083 = vsel %vm1175, %v4082, %v4081
    %v4084 = vrot.slane %v4067, 5
    %v4085 = vsel %vm1178, %v4084, %v4083
    %v4086 = vrot.slane %v4068, 4
    %v4087 = vsel %vm1181, %v4086, %v4085
    %v4088 = vrot.slane %v4069, 3
    %v4089 = vsel %vm1184, %v4088, %v4087
    %v4090 = vrot.slane %v4070, 2
    %v4091 = vsel %vm1187, %v4090, %v4089
    %v4092 = vrot.slane %v4071, 1
    %v4093 = vsel %vm1190, %v4092, %v4091
    %4095 = vrot.lane.b32.xlu0 %v2818, 64
    %v4096 = vpop.permute.xlu0 %4095
    %v4098 = vsel %vm319, %v4093, %v4096
    %v4099 = vpack.c.bf16 %v4098, %v4098
    %v4100 = vld [vmem:[#allocation7] sm:$0xf]
    %v4101 = vld [vmem:[#allocation7 + $0x4] sm:$0xf]
    %v4102 = vld [vmem:[#allocation7 + $0x8] sm:$0xf]
    %v4103 = vld [vmem:[#allocation7 + $0xc] sm:$0xf]
    %v4104 = vld [vmem:[#allocation7 + $0x10] sm:$0xf]
    %v4105 = vld [vmem:[#allocation7 + $0x14] sm:$0xf]
    %v4106 = vld [vmem:[#allocation8] sm:$0xf]
    %v4107 = vld [vmem:[#allocation8 + $0x4] sm:$0xf]
    %v4108 = vld [vmem:[#allocation8 + $0x8] sm:$0xf]
    %v4109 = vld [vmem:[#allocation8 + $0xc] sm:$0xf]
    %v4110 = vld [vmem:[#allocation8 + $0x10] sm:$0xf]
    %v4111 = vld [vmem:[#allocation8 + $0x14] sm:$0xf]
    %v4112 = vld [vmem:[#allocation8 + $0x18] sm:$0xf]
    %v4113 = vld [vmem:[#allocation8 + $0x1c] sm:$0xf]
    %v4122 = vunpack.c.l.b16 %v4106
    %v4123 = vunpack.c.l.b16 %v4107
    %v4124 = vunpack.c.l.b16 %v4108
    %v4125 = vunpack.c.l.b16 %v4109
    %v4126 = vunpack.c.l.b16 %v4110
    %v4127 = vunpack.c.l.b16 %v4111
    %v4128 = vunpack.c.l.b16 %v4112
    %v4129 = vunpack.c.l.b16 %v4113
    %v4130 = vpack.c.b16 %v4123, %v4122
    %v4131 = vpack.c.b16 %v4125, %v4124
    %v4132 = vpack.c.b16 %v4127, %v4126
    %v4133 = vpack.c.b16 %v4129, %v4128
    %v4139 = vsel %vm1236, %v4099, 0
    %4141 = vmatprep.subr.bf16.mxu0 0
    %4142 = vmatpush1.bf16.msra.mxu0 0
    %4143 = vmatprep.subr.bf16.mxu0 0
    %4144 = vmatpush1.bf16.msra.mxu0 0
    %4145 = vmatprep.subr.bf16.mxu0 0
    %4146 = vmatpush1.bf16.msra.mxu0 0
    %4147 = vmatprep.subr.bf16.mxu0 0
    %4148 = vmatpush1.bf16.msra.mxu0 0
    %4149 = vmatprep.subr.bf16.mxu0 0
    %4150 = vmatpush1.bf16.msra.mxu0 %v4133
    %4151 = vmatprep.subr.bf16.mxu0 0
    %4152 = vmatpush1.bf16.msra.mxu0 %v4132
    %4153 = vmatprep.subr.bf16.mxu0 0
    %4154 = vmatpush1.bf16.msra.mxu0 %v4131
    %4155 = vmatprep.subr.bf16.mxu0 0
    %4156 = vmatpush1.bf16.msra.mxu0 %v4130
    %4157 = vmatprep.subr.bf16.mxu0 0
    %4158 = vmatpush2.bf16.msra.mxu0 0
    %4159 = vmatprep.subr.bf16.mxu0 0
    %4160 = vmatpush2.bf16.msra.mxu0 0
    %4161 = vmatprep.subr.bf16.mxu0 0
    %4162 = vmatpush2.bf16.msra.mxu0 0
    %4163 = vmatprep.subr.bf16.mxu0 0
    %4164 = vmatpush2.bf16.msra.mxu0 0
    %4165 = vmatprep.subr.bf16.mxu0 0
    %4166 = vmatpush2.bf16.msra.mxu0 0
    %4167 = vmatprep.subr.bf16.mxu0 0
    %4168 = vmatpush2.bf16.msra.mxu0 0
    %4169 = vmatprep.subr.bf16.mxu0 0
    %4170 = vmatpush2.bf16.msra.mxu0 0
    %4171 = vmatprep.subr.bf16.mxu0 0
    %4172 = vmatpush2.bf16.msra.mxu0 0
    %4173 = vmatprep.mubr.bf16.mxu0 0
    %4174 = vmatmul.mubr.bf16.gmra.mxu0 %v4139
    %v4175 = vpop.f32.mrf.mxu0
    %v4176 = vadd.f32 0.0, %v4175
    %v4177 = vpop.f32.mrf.mxu0
    %v4178 = vpop.f32.mrf.mxu0
    %v4179 = vpop.f32.mrf.mxu0
    %4180 = vdwg.mxu0
    %v4187 = vunpack.c.l.b16 %v4100
    %v4188 = vunpack.c.l.b16 %v4101
    %v4189 = vunpack.c.l.b16 %v4102
    %v4190 = vunpack.c.l.b16 %v4103
    %v4191 = vunpack.c.l.b16 %v4104
    %v4192 = vunpack.c.l.b16 %v4105
    %v4193 = vpack.c.b16 %v4188, %v4187
    %v4194 = vpack.c.b16 %v4190, %v4189
    %v4195 = vpack.c.b16 %v4192, %v4191
    %v4200 = vsel %vm1298, %v3125, 0
    %4202 = vmatprep.subr.bf16.mxu0 0
    %4203 = vmatpush1.bf16.msra.mxu0 0
    %4204 = vmatprep.subr.bf16.mxu0 0
    %4205 = vmatpush1.bf16.msra.mxu0 0
    %4206 = vmatprep.subr.bf16.mxu0 0
    %4207 = vmatpush1.bf16.msra.mxu0 0
    %4208 = vmatprep.subr.bf16.mxu0 0
    %4209 = vmatpush1.bf16.msra.mxu0 0
    %4210 = vmatprep.subr.bf16.mxu0 0
    %4211 = vmatpush1.bf16.msra.mxu0 0
    %4212 = vmatprep.subr.bf16.mxu0 0
    %4213 = vmatpush1.bf16.msra.mxu0 %v4195
    %4214 = vmatprep.subr.bf16.mxu0 0
    %4215 = vmatpush1.bf16.msra.mxu0 %v4194
    %4216 = vmatprep.subr.bf16.mxu0 0
    %4217 = vmatpush1.bf16.msra.mxu0 %v4193
    %4218 = vmatprep.subr.bf16.mxu0 0
    %4219 = vmatpush2.bf16.msra.mxu0 0
    %4220 = vmatprep.subr.bf16.mxu0 0
    %4221 = vmatpush2.bf16.msra.mxu0 0
    %4222 = vmatprep.subr.bf16.mxu0 0
    %4223 = vmatpush2.bf16.msra.mxu0 0
    %4224 = vmatprep.subr.bf16.mxu0 0
    %4225 = vmatpush2.bf16.msra.mxu0 0
    %4226 = vmatprep.subr.bf16.mxu0 0
    %4227 = vmatpush2.bf16.msra.mxu0 0
    %4228 = vmatprep.subr.bf16.mxu0 0
    %4229 = vmatpush2.bf16.msra.mxu0 0
    %4230 = vmatprep.subr.bf16.mxu0 0
    %4231 = vmatpush2.bf16.msra.mxu0 0
    %4232 = vmatprep.subr.bf16.mxu0 0
    %4233 = vmatpush2.bf16.msra.mxu0 0
    %4234 = vmatprep.mubr.bf16.mxu0 0
    %4235 = vmatmul.mubr.bf16.gmra.mxu0 %v4200
    %v4236 = vpop.f32.mrf.mxu0
    %v4237 = vadd.f32 %v4176, %v4236
    %v4238 = vpop.f32.mrf.mxu0
    %v4239 = vpop.f32.mrf.mxu0
    %v4240 = vpop.f32.mrf.mxu0
    %4241 = vdwg.mxu0
    %v4242 = vadd.f32 %v4237, %v181
    %v4243 = vxor.u32 %v4242, 2147483648
    %v4244 = vmul.f32 %v4243, 1.442695
    %v4245 = vpow.pop %v4244
    %v4246 = vadd.f32 %v4245, 1.0
    %v4247 = vrcp.pop %v4246
    %v4248 = vmul.f32 1.0, %v4247
    %v4249 = vtanh.pop %v4242
    %v4250 = vmul.f32 %v4248, %v2812
    %4252 = vrot.lane.b32.xlu0 %v4249, 64
    %v4253 = vpop.permute.xlu0 %4252
    %v4255 = vmul.f32 %v4248, %v4253
    %4257 = vrot.lane.b32.xlu0 %v4255, 32
    %v4258 = vpop.permute.xlu0 %4257
    %v4260 = vadd.f32 %v4250, %v4258
    %v4261 = vtanh.pop %v4260
    %4263 = vrot.lane.b32.xlu0 %v4261, 64
    %v4264 = vpop.permute.xlu0 %4263
    %v4266 = vmul.f32 %v4248, %v4264
    %4268 = vrot.lane.b32.xlu0 %v4266, 32
    %v4269 = vpop.permute.xlu0 %4268
    %4271 = vrot.lane.b32.xlu0 %v2926, 64
    %v4272 = vpop.permute.xlu0 %4271
    %v4274 = vsel %vm319, %v4269, %v4272
    %v4275 = vpack.c.bf16 %v4274, %v4274
    %v4276 = vld [vmem:[#allocation11] sm:$0xf]
    %v4277 = vld [vmem:[#allocation11 + $0x4] sm:$0xf]
    %v4278 = vld [vmem:[#allocation11 + $0x8] sm:$0xf]
    %v4279 = vld [vmem:[#allocation11 + $0xc] sm:$0xf]
    %v4280 = vld [vmem:[#allocation11 + $0x10] sm:$0xf]
    %v4281 = vld [vmem:[#allocation11 + $0x14] sm:$0xf]
    %v4282 = vld [vmem:[#allocation11 + $0x18] sm:$0xf]
    %v4283 = vld [vmem:[#allocation11 + $0x1c] sm:$0xf]
    %v4292 = vunpack.c.l.b16 %v4276
    %v4293 = vunpack.c.l.b16 %v4277
    %v4294 = vunpack.c.l.b16 %v4278
    %v4295 = vunpack.c.l.b16 %v4279
    %v4296 = vunpack.c.l.b16 %v4280
    %v4297 = vunpack.c.l.b16 %v4281
    %v4298 = vunpack.c.l.b16 %v4282
    %v4299 = vunpack.c.l.b16 %v4283
    %v4300 = vpack.c.b16 %v4293, %v4292
    %v4301 = vpack.c.b16 %v4295, %v4294
    %v4302 = vpack.c.b16 %v4297, %v4296
    %v4303 = vpack.c.b16 %v4299, %v4298
    %v4309 = vsel %vm1236, %v4275, 0
    %4311 = vmatprep.subr.bf16.mxu0 0
    %4312 = vmatpush1.bf16.msra.mxu0 0
    %4313 = vmatprep.subr.bf16.mxu0 0
    %4314 = vmatpush1.bf16.msra.mxu0 0
    %4315 = vmatprep.subr.bf16.mxu0 0
    %4316 = vmatpush1.bf16.msra.mxu0 0
    %4317 = vmatprep.subr.bf16.mxu0 0
    %4318 = vmatpush1.bf16.msra.mxu0 0
    %4319 = vmatprep.subr.bf16.mxu0 0
    %4320 = vmatpush1.bf16.msra.mxu0 %v4303
    %4321 = vmatprep.subr.bf16.mxu0 0
    %4322 = vmatpush1.bf16.msra.mxu0 %v4302
    %4323 = vmatprep.subr.bf16.mxu0 0
    %4324 = vmatpush1.bf16.msra.mxu0 %v4301
    %4325 = vmatprep.subr.bf16.mxu0 0
    %4326 = vmatpush1.bf16.msra.mxu0 %v4300
    %4327 = vmatprep.subr.bf16.mxu0 0
    %4328 = vmatpush2.bf16.msra.mxu0 0
    %4329 = vmatprep.subr.bf16.mxu0 0
    %4330 = vmatpush2.bf16.msra.mxu0 0
    %4331 = vmatprep.subr.bf16.mxu0 0
    %4332 = vmatpush2.bf16.msra.mxu0 0
    %4333 = vmatprep.subr.bf16.mxu0 0
    %4334 = vmatpush2.bf16.msra.mxu0 0
    %4335 = vmatprep.subr.bf16.mxu0 0
    %4336 = vmatpush2.bf16.msra.mxu0 0
    %4337 = vmatprep.subr.bf16.mxu0 0
    %4338 = vmatpush2.bf16.msra.mxu0 0
    %4339 = vmatprep.subr.bf16.mxu0 0
    %4340 = vmatpush2.bf16.msra.mxu0 0
    %4341 = vmatprep.subr.bf16.mxu0 0
    %4342 = vmatpush2.bf16.msra.mxu0 0
    %4343 = vmatprep.mubr.bf16.mxu0 0
    %4344 = vmatmul.mubr.bf16.gmra.mxu0 %v4309
    %v4345 = vpop.f32.mrf.mxu0
    %v4346 = vadd.f32 %v188, %v4345
    %v4347 = vpop.f32.mrf.mxu0
    %v4348 = vpop.f32.mrf.mxu0
    %v4349 = vpop.f32.mrf.mxu0
    %4350 = vdwg.mxu0
    %v4351 = vxor.u32 %v4346, 2147483648
    %v4352 = vmul.f32 %v4351, 1.442695
    %v4353 = vpow.pop %v4352
    %v4354 = vadd.f32 %v4353, 1.0
    %v4355 = vrcp.pop %v4354
    %v4356 = vmul.f32 1.0, %v4355
    %v4357 = vtanh.pop %v4346
    %v4358 = vmul.f32 %v4356, %v2920
    %4360 = vrot.lane.b32.xlu0 %v4357, 64
    %v4361 = vpop.permute.xlu0 %4360
    %v4363 = vmul.f32 %v4356, %v4361
    %4365 = vrot.lane.b32.xlu0 %v4363, 32
    %v4366 = vpop.permute.xlu0 %4365
    %v4368 = vadd.f32 %v4358, %v4366
    %v4369 = vtanh.pop %v4368
    %4371 = vrot.lane.b32.xlu0 %v4369, 64
    %v4372 = vpop.permute.xlu0 %4371
    %v4374 = vmul.f32 %v4356, %v4372
    %4376 = vrot.lane.b32.xlu0 %v4374, 32
    %v4377 = vpop.permute.xlu0 %4376
    %4379 = vrot.lane.b32.xlu0 %v4093, 32
    %v4380 = vpop.permute.xlu0 %4379
    %v4382 = vsel %vm319, %v4377, %v4380
    %v4383 = vpack.c.bf16 %v4382, %v4382
    %v4384 = vld [vmem:[#allocation14] sm:$0xf]
    %v4385 = vld [vmem:[#allocation14 + $0x4] sm:$0xf]
    %v4386 = vld [vmem:[#allocation14 + $0x8] sm:$0xf]
    %v4387 = vld [vmem:[#allocation14 + $0xc] sm:$0xf]
    %v4388 = vld [vmem:[#allocation14 + $0x10] sm:$0xf]
    %v4389 = vld [vmem:[#allocation14 + $0x14] sm:$0xf]
    %v4390 = vld [vmem:[#allocation14 + $0x18] sm:$0xf]
    %v4391 = vld [vmem:[#allocation14 + $0x1c] sm:$0xf]
    %v4400 = vunpack.c.l.b16 %v4384
    %v4401 = vunpack.c.l.b16 %v4385
    %v4402 = vunpack.c.l.b16 %v4386
    %v4403 = vunpack.c.l.b16 %v4387
    %v4404 = vunpack.c.l.b16 %v4388
    %v4405 = vunpack.c.l.b16 %v4389
    %v4406 = vunpack.c.l.b16 %v4390
    %v4407 = vunpack.c.l.b16 %v4391
    %v4408 = vpack.c.b16 %v4401, %v4400
    %v4409 = vpack.c.b16 %v4403, %v4402
    %v4410 = vpack.c.b16 %v4405, %v4404
    %v4411 = vpack.c.b16 %v4407, %v4406
    %v4417 = vsel %vm1236, %v4383, 0
    %4419 = vmatprep.subr.bf16.mxu0 0
    %4420 = vmatpush1.bf16.msra.mxu0 0
    %4421 = vmatprep.subr.bf16.mxu0 0
    %4422 = vmatpush1.bf16.msra.mxu0 0
    %4423 = vmatprep.subr.bf16.mxu0 0
    %4424 = vmatpush1.bf16.msra.mxu0 0
    %4425 = vmatprep.subr.bf16.mxu0 0
    %4426 = vmatpush1.bf16.msra.mxu0 0
    %4427 = vmatprep.subr.bf16.mxu0 0
    %4428 = vmatpush1.bf16.msra.mxu0 %v4411
    %4429 = vmatprep.subr.bf16.mxu0 0
    %4430 = vmatpush1.bf16.msra.mxu0 %v4410
    %4431 = vmatprep.subr.bf16.mxu0 0
    %4432 = vmatpush1.bf16.msra.mxu0 %v4409
    %4433 = vmatprep.subr.bf16.mxu0 0
    %4434 = vmatpush1.bf16.msra.mxu0 %v4408
    %4435 = vmatprep.subr.bf16.mxu0 0
    %4436 = vmatpush2.bf16.msra.mxu0 0
    %4437 = vmatprep.subr.bf16.mxu0 0
    %4438 = vmatpush2.bf16.msra.mxu0 0
    %4439 = vmatprep.subr.bf16.mxu0 0
    %4440 = vmatpush2.bf16.msra.mxu0 0
    %4441 = vmatprep.subr.bf16.mxu0 0
    %4442 = vmatpush2.bf16.msra.mxu0 0
    %4443 = vmatprep.subr.bf16.mxu0 0
    %4444 = vmatpush2.bf16.msra.mxu0 0
    %4445 = vmatprep.subr.bf16.mxu0 0
    %4446 = vmatpush2.bf16.msra.mxu0 0
    %4447 = vmatprep.subr.bf16.mxu0 0
    %4448 = vmatpush2.bf16.msra.mxu0 0
    %4449 = vmatprep.subr.bf16.mxu0 0
    %4450 = vmatpush2.bf16.msra.mxu0 0
    %4451 = vmatprep.mubr.bf16.mxu0 0
    %4452 = vmatmul.mubr.bf16.gmra.mxu0 %v4417
    %v4453 = vpop.f32.mrf.mxu0
    %v4454 = vadd.f32 0.0, %v4453
    %v4455 = vpop.f32.mrf.mxu0
    %v4456 = vpop.f32.mrf.mxu0
    %v4457 = vpop.f32.mrf.mxu0
    %4458 = vdwg.mxu0
    %v4459 = vadd.f32 %v4454, %v195
    %vm4460 = vcmp.gt.f32.partialorder %v4459, 0.0
    %v4461 = vmul.f32 %v4459, 0.2
    %v4462 = vsel %vm4460, %v4459, %v4461
    %v4463 = vpack.c.bf16 %v4462, %v4462
    %v4464 = vld [vmem:[%s9] sm:$0xf]
    %v4465 = vld [vmem:[%s9 + $0x4] sm:$0xf]
    %v4466 = vld [vmem:[%s9 + $0x8] sm:$0xf]
    %v4467 = vld [vmem:[%s9 + $0xc] sm:$0xf]
    %v4472 = vunpack.c.l.b16 %v4464
    %v4473 = vunpack.c.l.b16 %v4465
    %v4474 = vunpack.c.l.b16 %v4466
    %v4475 = vunpack.c.l.b16 %v4467
    %v4476 = vpack.c.b16 %v4473, %v4472
    %v4477 = vpack.c.b16 %v4475, %v4474
    %v4481 = vsel %vm319, %v4463, 0
    %4483 = vmatprep.subr.bf16.mxu0 0
    %4484 = vmatpush1.bf16.msra.mxu0 0
    %4485 = vmatprep.subr.bf16.mxu0 0
    %4486 = vmatpush1.bf16.msra.mxu0 0
    %4487 = vmatprep.subr.bf16.mxu0 0
    %4488 = vmatpush1.bf16.msra.mxu0 0
    %4489 = vmatprep.subr.bf16.mxu0 0
    %4490 = vmatpush1.bf16.msra.mxu0 0
    %4491 = vmatprep.subr.bf16.mxu0 0
    %4492 = vmatpush1.bf16.msra.mxu0 0
    %4493 = vmatprep.subr.bf16.mxu0 0
    %4494 = vmatpush1.bf16.msra.mxu0 0
    %4495 = vmatprep.subr.bf16.mxu0 0
    %4496 = vmatpush1.bf16.msra.mxu0 %v4477
    %4497 = vmatprep.subr.bf16.mxu0 0
    %4498 = vmatpush1.bf16.msra.mxu0 %v4476
    %4499 = vmatprep.subr.bf16.mxu0 0
    %4500 = vmatpush2.bf16.msra.mxu0 0
    %4501 = vmatprep.subr.bf16.mxu0 0
    %4502 = vmatpush2.bf16.msra.mxu0 0
    %4503 = vmatprep.subr.bf16.mxu0 0
    %4504 = vmatpush2.bf16.msra.mxu0 0
    %4505 = vmatprep.subr.bf16.mxu0 0
    %4506 = vmatpush2.bf16.msra.mxu0 0
    %4507 = vmatprep.subr.bf16.mxu0 0
    %4508 = vmatpush2.bf16.msra.mxu0 0
    %4509 = vmatprep.subr.bf16.mxu0 0
    %4510 = vmatpush2.bf16.msra.mxu0 0
    %4511 = vmatprep.subr.bf16.mxu0 0
    %4512 = vmatpush2.bf16.msra.mxu0 0
    %4513 = vmatprep.subr.bf16.mxu0 0
    %4514 = vmatpush2.bf16.msra.mxu0 0
    %4515 = vmatprep.mubr.bf16.mxu0 0
    %4516 = vmatmul.mubr.bf16.gmra.mxu0 %v4481
    %v4517 = vpop.f32.mrf.mxu0
    %v4518 = vadd.f32 %v202, %v4517
    %v4519 = vpop.f32.mrf.mxu0
    %v4520 = vpop.f32.mrf.mxu0
    %v4521 = vpop.f32.mrf.mxu0
    %4522 = vdwg.mxu0
    %s4523 = scalar_lea.vmem [#allocation17], 16
    %4524 = vst.msk [vmem:[%s4523] sm:$0xff] %vm1298, %v4518
    %v4533 = vrot.slane %v4057, 7
    %v4534 = vsel %vm1172, %v4533, %v4056
    %v4535 = vrot.slane %v4058, 6
    %v4536 = vsel %vm1175, %v4535, %v4534
    %v4537 = vrot.slane %v4059, 5
    %v4538 = vsel %vm1178, %v4537, %v4536
    %v4539 = vrot.slane %v4060, 4
    %v4540 = vsel %vm1181, %v4539, %v4538
    %v4541 = vrot.slane %v4061, 3
    %v4542 = vsel %vm1184, %v4541, %v4540
    %v4543 = vrot.slane %v4062, 2
    %v4544 = vsel %vm1187, %v4543, %v4542
    %v4545 = vrot.slane %v4063, 1
    %v4546 = vsel %vm1190, %v4545, %v4544
    %s4548 = scalar_lea.vmem [#allocation18], 16
    %4549 = vst.msk [vmem:[%s4548] sm:$0xff] %vm785, %v4546
    %v4550 = vsel %vm1298, %v4518, -inf
    %4551 = vmax.xlane.f32.xlu0 %v4550
    %v4552 = vpop.xlane.xlu0 %4551
    %vm4553 = vcmp.eq.f32.partialorder %v4518, %v4552
    %v4554 = vsel %vm4553, %v175, 48
    %v4555 = vsel %vm1298, %v4554, 2147483647
    %v4556 = vand.u32 %v4555, 65535
    %v4557 = vshra.s32 %v4555, 16
    %v4558 = vcvt.s32.f32 %v4556
    %v4559 = vcvt.s32.f32 %v4557
    %4560 = vmin.xlane.f32.xlu0 %v4559
    %v4561 = vpop.xlane.xlu0 %4560
    %vm4562 = vcmp.eq.f32.partialorder %v4559, %v4561
    %v4563 = vsel %vm4562, %v4558, inf
    %4564 = vmin.xlane.f32.xlu0 %v4563
    %v4565 = vpop.xlane.xlu0 %4564
    %v4566 = vcvt.f32.s32 %v4565
    %v4567 = vcvt.f32.s32 %v4561
    %v4568 = vshll.u32 %v4567, 16
    %v4569 = vadd.s32 %v4568, %v4566
    %vm4570 = vcmp.eq.s32.totalorder %v175, %v4569
    %v4571 = vsel %vm4570, 1, 0
    %v4572 = vcvt.s32.f32 %v4571
    %v4573 = vpack.c.bf16 %v4572, %v4572
    %v4574 = vld [vmem:[#allocation2] sm:$0xf]
    %v4575 = vld [vmem:[#allocation2 + $0x4] sm:$0xf]
    %v4576 = vld [vmem:[#allocation2 + $0x8] sm:$0xf]
    %v4577 = vld [vmem:[#allocation2 + $0xc] sm:$0xf]
    %v4578 = vld [vmem:[#allocation2 + $0x10] sm:$0xf]
    %v4579 = vld [vmem:[#allocation2 + $0x14] sm:$0xf]
    %v4580 = vld [vmem:[#allocation2 + $0x18] sm:$0xf]
    %v4581 = vld [vmem:[#allocation2 + $0x1c] sm:$0xf]
    %v4582 = vld [vmem:[#allocation5] sm:$0x1]
    %v4583 = vld [vmem:[#allocation5 + $0x1] sm:$0x1]
    %v4584 = vld [vmem:[#allocation5 + $0x2] sm:$0x1]
    %v4585 = vld [vmem:[#allocation5 + $0x3] sm:$0x1]
    %v4586 = vld [vmem:[#allocation5 + $0x4] sm:$0x1]
    %v4587 = vld [vmem:[#allocation5 + $0x5] sm:$0x1]
    %v4588 = vld [vmem:[#allocation5 + $0x6] sm:$0x1]
    %v4589 = vld [vmem:[#allocation5 + $0x7] sm:$0x1]
    %v4591 = vcombine.high %v4454, %v4454
    %v4593 = vunpack.c.l.s4 1966171168
    %v4594 = vunpack.c.0.s8 %v4593
    %v4595 = vlaneseq
    %v4596 = vshrl.u32 %v4595, 7
    %v4597 = vsub.s32 %v4594, %v4596
    %v4598 = vrot.slane %v4454, %v4597
    %v4600 = vunpack.c.l.s4 1966171168
    %v4601 = vunpack.c.0.s8 %v4600
    %v4602 = vlaneseq
    %v4603 = vshrl.u32 %v4602, 7
    %v4604 = vsub.s32 %v4601, %v4603
    %v4605 = vrot.slane %v4591, %v4604
    %v4606 = vcombine.high %v4598, %v4598
    %v4607 = vcombine.high %v4605, %v4605
    %v4609 = vunpack.c.l.s4 1966171168
    %v4610 = vunpack.c.0.s8 %v4609
    %v4611 = vlaneseq
    %v4612 = vshrl.u32 %v4611, 7
    %v4613 = vsub.s32 %v4610, %v4612
    %v4614 = vrot.slane %v4598, %v4613
    %v4616 = vunpack.c.l.s4 1966171168
    %v4617 = vunpack.c.0.s8 %v4616
    %v4618 = vlaneseq
    %v4619 = vshrl.u32 %v4618, 7
    %v4620 = vsub.s32 %v4617, %v4619
    %v4621 = vrot.slane %v4605, %v4620
    %v4623 = vunpack.c.l.s4 1966171168
    %v4624 = vunpack.c.0.s8 %v4623
    %v4625 = vlaneseq
    %v4626 = vshrl.u32 %v4625, 7
    %v4627 = vsub.s32 %v4624, %v4626
    %v4628 = vrot.slane %v4606, %v4627
    %v4630 = vunpack.c.l.s4 1966171168
    %v4631 = vunpack.c.0.s8 %v4630
    %v4632 = vlaneseq
    %v4633 = vshrl.u32 %v4632, 7
    %v4634 = vsub.s32 %v4631, %v4633
    %v4635 = vrot.slane %v4607, %v4634
    %v4636 = vcombine.high %v4614, %v4614
    %v4637 = vcombine.high %v4621, %v4621
    %v4638 = vcombine.high %v4628, %v4628
    %v4639 = vcombine.high %v4635, %v4635
    %v4648 = vpack.c.bf16 %v4614, %v4614
    %v4649 = vpack.c.bf16 %v4628, %v4628
    %v4650 = vpack.c.bf16 %v4636, %v4636
    %v4651 = vpack.c.bf16 %v4638, %v4638
    %v4652 = vpack.c.bf16 %v4621, %v4621
    %v4653 = vpack.c.bf16 %v4635, %v4635
    %v4654 = vpack.c.bf16 %v4637, %v4637
    %v4655 = vpack.c.bf16 %v4639, %v4639
    %4657 = vrot.lane.b32.xlu0 %v4648, 96
    %v4658 = vpop.permute.xlu0 %4657
    %v4660 = vsel %vm319, %v4658, 0
    %v4663 = vsel %vm319, %v4574, 0
    %4665 = vmatprep.subr.bf16.mxu0 0
    %4666 = vmatpush1.bf16.xpose.msra.mxu0 0
    %4667 = vmatprep.subr.bf16.mxu0 0
    %4668 = vmatpush1.bf16.xpose.msra.mxu0 0
    %4669 = vmatprep.subr.bf16.mxu0 0
    %4670 = vmatpush1.bf16.xpose.msra.mxu0 0
    %4671 = vmatprep.subr.bf16.mxu0 0
    %4672 = vmatpush1.bf16.xpose.msra.mxu0 0
    %4673 = vmatprep.subr.bf16.mxu0 0
    %4674 = vmatpush1.bf16.xpose.msra.mxu0 0
    %4675 = vmatprep.subr.bf16.mxu0 0
    %4676 = vmatpush1.bf16.xpose.msra.mxu0 0
    %4677 = vmatprep.subr.bf16.mxu0 0
    %4678 = vmatpush1.bf16.xpose.msra.mxu0 0
    %4679 = vmatprep.subr.bf16.mxu0 0
    %4680 = vmatpush1.bf16.xpose.msra.mxu0 %v4663
    %4681 = vmatprep.subr.bf16.mxu0 0
    %4682 = vmatpush2.bf16.xpose.msra.mxu0 0
    %4683 = vmatprep.subr.bf16.mxu0 0
    %4684 = vmatpush2.bf16.xpose.msra.mxu0 0
    %4685 = vmatprep.subr.bf16.mxu0 0
    %4686 = vmatpush2.bf16.xpose.msra.mxu0 0
    %4687 = vmatprep.subr.bf16.mxu0 0
    %4688 = vmatpush2.bf16.xpose.msra.mxu0 0
    %4689 = vmatprep.subr.bf16.mxu0 0
    %4690 = vmatpush2.bf16.xpose.msra.mxu0 0
    %4691 = vmatprep.subr.bf16.mxu0 0
    %4692 = vmatpush2.bf16.xpose.msra.mxu0 0
    %4693 = vmatprep.subr.bf16.mxu0 0
    %4694 = vmatpush2.bf16.xpose.msra.mxu0 0
    %4695 = vmatprep.subr.bf16.mxu0 0
    %4696 = vmatpush2.bf16.xpose.msra.mxu0 0
    %4697 = vmatprep.mubr.bf16.mxu0 0
    %4698 = vmatmul.mubr.bf16.gmra.mxu0 %v4660
    %v4699 = vpop.f32.mrf.mxu0
    %v4700 = vadd.f32 %v4582, %v4699
    %v4701 = vpop.f32.mrf.mxu0
    %v4702 = vpop.f32.mrf.mxu0
    %v4703 = vpop.f32.mrf.mxu0
    %4704 = vdwg.mxu0
    %4706 = vrot.lane.b32.xlu0 %v4649, 96
    %v4707 = vpop.permute.xlu0 %4706
    %v4709 = vsel %vm319, %v4707, 0
    %v4712 = vsel %vm319, %v4575, 0
    %4714 = vmatprep.subr.bf16.mxu0 0
    %4715 = vmatpush1.bf16.xpose.msra.mxu0 0
    %4716 = vmatprep.subr.bf16.mxu0 0
    %4717 = vmatpush1.bf16.xpose.msra.mxu0 0
    %4718 = vmatprep.subr.bf16.mxu0 0
    %4719 = vmatpush1.bf16.xpose.msra.mxu0 0
    %4720 = vmatprep.subr.bf16.mxu0 0
    %4721 = vmatpush1.bf16.xpose.msra.mxu0 0
    %4722 = vmatprep.subr.bf16.mxu0 0
    %4723 = vmatpush1.bf16.xpose.msra.mxu0 0
    %4724 = vmatprep.subr.bf16.mxu0 0
    %4725 = vmatpush1.bf16.xpose.msra.mxu0 0
    %4726 = vmatprep.subr.bf16.mxu0 0
    %4727 = vmatpush1.bf16.xpose.msra.mxu0 0
    %4728 = vmatprep.subr.bf16.mxu0 0
    %4729 = vmatpush1.bf16.xpose.msra.mxu0 %v4712
    %4730 = vmatprep.subr.bf16.mxu0 0
    %4731 = vmatpush2.bf16.xpose.msra.mxu0 0
    %4732 = vmatprep.subr.bf16.mxu0 0
    %4733 = vmatpush2.bf16.xpose.msra.mxu0 0
    %4734 = vmatprep.subr.bf16.mxu0 0
    %4735 = vmatpush2.bf16.xpose.msra.mxu0 0
    %4736 = vmatprep.subr.bf16.mxu0 0
    %4737 = vmatpush2.bf16.xpose.msra.mxu0 0
    %4738 = vmatprep.subr.bf16.mxu0 0
    %4739 = vmatpush2.bf16.xpose.msra.mxu0 0
    %4740 = vmatprep.subr.bf16.mxu0 0
    %4741 = vmatpush2.bf16.xpose.msra.mxu0 0
    %4742 = vmatprep.subr.bf16.mxu0 0
    %4743 = vmatpush2.bf16.xpose.msra.mxu0 0
    %4744 = vmatprep.subr.bf16.mxu0 0
    %4745 = vmatpush2.bf16.xpose.msra.mxu0 0
    %4746 = vmatprep.mubr.bf16.mxu0 0
    %4747 = vmatmul.mubr.bf16.gmra.mxu0 %v4709
    %v4748 = vpop.f32.mrf.mxu0
    %v4749 = vadd.f32 %v4583, %v4748
    %v4750 = vpop.f32.mrf.mxu0
    %v4751 = vpop.f32.mrf.mxu0
    %v4752 = vpop.f32.mrf.mxu0
    %4753 = vdwg.mxu0
    %4755 = vrot.lane.b32.xlu0 %v4650, 96
    %v4756 = vpop.permute.xlu0 %4755
    %v4758 = vsel %vm319, %v4756, 0
    %v4761 = vsel %vm319, %v4576, 0
    %4763 = vmatprep.subr.bf16.mxu0 0
    %4764 = vmatpush1.bf16.xpose.msra.mxu0 0
    %4765 = vmatprep.subr.bf16.mxu0 0
    %4766 = vmatpush1.bf16.xpose.msra.mxu0 0
    %4767 = vmatprep.subr.bf16.mxu0 0
    %4768 = vmatpush1.bf16.xpose.msra.mxu0 0
    %4769 = vmatprep.subr.bf16.mxu0 0
    %4770 = vmatpush1.bf16.xpose.msra.mxu0 0
    %4771 = vmatprep.subr.bf16.mxu0 0
    %4772 = vmatpush1.bf16.xpose.msra.mxu0 0
    %4773 = vmatprep.subr.bf16.mxu0 0
    %4774 = vmatpush1.bf16.xpose.msra.mxu0 0
    %4775 = vmatprep.subr.bf16.mxu0 0
    %4776 = vmatpush1.bf16.xpose.msra.mxu0 0
    %4777 = vmatprep.subr.bf16.mxu0 0
    %4778 = vmatpush1.bf16.xpose.msra.mxu0 %v4761
    %4779 = vmatprep.subr.bf16.mxu0 0
    %4780 = vmatpush2.bf16.xpose.msra.mxu0 0
    %4781 = vmatprep.subr.bf16.mxu0 0
    %4782 = vmatpush2.bf16.xpose.msra.mxu0 0
    %4783 = vmatprep.subr.bf16.mxu0 0
    %4784 = vmatpush2.bf16.xpose.msra.mxu0 0
    %4785 = vmatprep.subr.bf16.mxu0 0
    %4786 = vmatpush2.bf16.xpose.msra.mxu0 0
    %4787 = vmatprep.subr.bf16.mxu0 0
    %4788 = vmatpush2.bf16.xpose.msra.mxu0 0
    %4789 = vmatprep.subr.bf16.mxu0 0
    %4790 = vmatpush2.bf16.xpose.msra.mxu0 0
    %4791 = vmatprep.subr.bf16.mxu0 0
    %4792 = vmatpush2.bf16.xpose.msra.mxu0 0
    %4793 = vmatprep.subr.bf16.mxu0 0
    %4794 = vmatpush2.bf16.xpose.msra.mxu0 0
    %4795 = vmatprep.mubr.bf16.mxu0 0
    %4796 = vmatmul.mubr.bf16.gmra.mxu0 %v4758
    %v4797 = vpop.f32.mrf.mxu0
    %v4798 = vadd.f32 %v4584, %v4797
    %v4799 = vpop.f32.mrf.mxu0
    %v4800 = vpop.f32.mrf.mxu0
    %v4801 = vpop.f32.mrf.mxu0
    %4802 = vdwg.mxu0
    %4804 = vrot.lane.b32.xlu0 %v4651, 96
    %v4805 = vpop.permute.xlu0 %4804
    %v4807 = vsel %vm319, %v4805, 0
    %v4810 = vsel %vm319, %v4577, 0
    %4812 = vmatprep.subr.bf16.mxu0 0
    %4813 = vmatpush1.bf16.xpose.msra.mxu0 0
    %4814 = vmatprep.subr.bf16.mxu0 0
    %4815 = vmatpush1.bf16.xpose.msra.mxu0 0
    %4816 = vmatprep.subr.bf16.mxu0 0
    %4817 = vmatpush1.bf16.xpose.msra.mxu0 0
    %4818 = vmatprep.subr.bf16.mxu0 0
    %4819 = vmatpush1.bf16.xpose.msra.mxu0 0
    %4820 = vmatprep.subr.bf16.mxu0 0
    %4821 = vmatpush1.bf16.xpose.msra.mxu0 0
    %4822 = vmatprep.subr.bf16.mxu0 0
    %4823 = vmatpush1.bf16.xpose.msra.mxu0 0
    %4824 = vmatprep.subr.bf16.mxu0 0
    %4825 = vmatpush1.bf16.xpose.msra.mxu0 0
    %4826 = vmatprep.subr.bf16.mxu0 0
    %4827 = vmatpush1.bf16.xpose.msra.mxu0 %v4810
    %4828 = vmatprep.subr.bf16.mxu0 0
    %4829 = vmatpush2.bf16.xpose.msra.mxu0 0
    %4830 = vmatprep.subr.bf16.mxu0 0
    %4831 = vmatpush2.bf16.xpose.msra.mxu0 0
    %4832 = vmatprep.subr.bf16.mxu0 0
    %4833 = vmatpush2.bf16.xpose.msra.mxu0 0
    %4834 = vmatprep.subr.bf16.mxu0 0
    %4835 = vmatpush2.bf16.xpose.msra.mxu0 0
    %4836 = vmatprep.subr.bf16.mxu0 0
    %4837 = vmatpush2.bf16.xpose.msra.mxu0 0
    %4838 = vmatprep.subr.bf16.mxu0 0
    %4839 = vmatpush2.bf16.xpose.msra.mxu0 0
    %4840 = vmatprep.subr.bf16.mxu0 0
    %4841 = vmatpush2.bf16.xpose.msra.mxu0 0
    %4842 = vmatprep.subr.bf16.mxu0 0
    %4843 = vmatpush2.bf16.xpose.msra.mxu0 0
    %4844 = vmatprep.mubr.bf16.mxu0 0
    %4845 = vmatmul.mubr.bf16.gmra.mxu0 %v4807
    %v4846 = vpop.f32.mrf.mxu0
    %v4847 = vadd.f32 %v4585, %v4846
    %v4848 = vpop.f32.mrf.mxu0
    %v4849 = vpop.f32.mrf.mxu0
    %v4850 = vpop.f32.mrf.mxu0
    %4851 = vdwg.mxu0
    %4853 = vrot.lane.b32.xlu0 %v4652, 96
    %v4854 = vpop.permute.xlu0 %4853
    %v4856 = vsel %vm319, %v4854, 0
    %v4859 = vsel %vm319, %v4578, 0
    %4861 = vmatprep.subr.bf16.mxu0 0
    %4862 = vmatpush1.bf16.xpose.msra.mxu0 0
    %4863 = vmatprep.subr.bf16.mxu0 0
    %4864 = vmatpush1.bf16.xpose.msra.mxu0 0
    %4865 = vmatprep.subr.bf16.mxu0 0
    %4866 = vmatpush1.bf16.xpose.msra.mxu0 0
    %4867 = vmatprep.subr.bf16.mxu0 0
    %4868 = vmatpush1.bf16.xpose.msra.mxu0 0
    %4869 = vmatprep.subr.bf16.mxu0 0
    %4870 = vmatpush1.bf16.xpose.msra.mxu0 0
    %4871 = vmatprep.subr.bf16.mxu0 0
    %4872 = vmatpush1.bf16.xpose.msra.mxu0 0
    %4873 = vmatprep.subr.bf16.mxu0 0
    %4874 = vmatpush1.bf16.xpose.msra.mxu0 0
    %4875 = vmatprep.subr.bf16.mxu0 0
    %4876 = vmatpush1.bf16.xpose.msra.mxu0 %v4859
    %4877 = vmatprep.subr.bf16.mxu0 0
    %4878 = vmatpush2.bf16.xpose.msra.mxu0 0
    %4879 = vmatprep.subr.bf16.mxu0 0
    %4880 = vmatpush2.bf16.xpose.msra.mxu0 0
    %4881 = vmatprep.subr.bf16.mxu0 0
    %4882 = vmatpush2.bf16.xpose.msra.mxu0 0
    %4883 = vmatprep.subr.bf16.mxu0 0
    %4884 = vmatpush2.bf16.xpose.msra.mxu0 0
    %4885 = vmatprep.subr.bf16.mxu0 0
    %4886 = vmatpush2.bf16.xpose.msra.mxu0 0
    %4887 = vmatprep.subr.bf16.mxu0 0
    %4888 = vmatpush2.bf16.xpose.msra.mxu0 0
    %4889 = vmatprep.subr.bf16.mxu0 0
    %4890 = vmatpush2.bf16.xpose.msra.mxu0 0
    %4891 = vmatprep.subr.bf16.mxu0 0
    %4892 = vmatpush2.bf16.xpose.msra.mxu0 0
    %4893 = vmatprep.mubr.bf16.mxu0 0
    %4894 = vmatmul.mubr.bf16.gmra.mxu0 %v4856
    %v4895 = vpop.f32.mrf.mxu0
    %v4896 = vadd.f32 %v4586, %v4895
    %v4897 = vpop.f32.mrf.mxu0
    %v4898 = vpop.f32.mrf.mxu0
    %v4899 = vpop.f32.mrf.mxu0
    %4900 = vdwg.mxu0
    %4902 = vrot.lane.b32.xlu0 %v4653, 96
    %v4903 = vpop.permute.xlu0 %4902
    %v4905 = vsel %vm319, %v4903, 0
    %v4908 = vsel %vm319, %v4579, 0
    %4910 = vmatprep.subr.bf16.mxu0 0
    %4911 = vmatpush1.bf16.xpose.msra.mxu0 0
    %4912 = vmatprep.subr.bf16.mxu0 0
    %4913 = vmatpush1.bf16.xpose.msra.mxu0 0
    %4914 = vmatprep.subr.bf16.mxu0 0
    %4915 = vmatpush1.bf16.xpose.msra.mxu0 0
    %4916 = vmatprep.subr.bf16.mxu0 0
    %4917 = vmatpush1.bf16.xpose.msra.mxu0 0
    %4918 = vmatprep.subr.bf16.mxu0 0
    %4919 = vmatpush1.bf16.xpose.msra.mxu0 0
    %4920 = vmatprep.subr.bf16.mxu0 0
    %4921 = vmatpush1.bf16.xpose.msra.mxu0 0
    %4922 = vmatprep.subr.bf16.mxu0 0
    %4923 = vmatpush1.bf16.xpose.msra.mxu0 0
    %4924 = vmatprep.subr.bf16.mxu0 0
    %4925 = vmatpush1.bf16.xpose.msra.mxu0 %v4908
    %4926 = vmatprep.subr.bf16.mxu0 0
    %4927 = vmatpush2.bf16.xpose.msra.mxu0 0
    %4928 = vmatprep.subr.bf16.mxu0 0
    %4929 = vmatpush2.bf16.xpose.msra.mxu0 0
    %4930 = vmatprep.subr.bf16.mxu0 0
    %4931 = vmatpush2.bf16.xpose.msra.mxu0 0
    %4932 = vmatprep.subr.bf16.mxu0 0
    %4933 = vmatpush2.bf16.xpose.msra.mxu0 0
    %4934 = vmatprep.subr.bf16.mxu0 0
    %4935 = vmatpush2.bf16.xpose.msra.mxu0 0
    %4936 = vmatprep.subr.bf16.mxu0 0
    %4937 = vmatpush2.bf16.xpose.msra.mxu0 0
    %4938 = vmatprep.subr.bf16.mxu0 0
    %4939 = vmatpush2.bf16.xpose.msra.mxu0 0
    %4940 = vmatprep.subr.bf16.mxu0 0
    %4941 = vmatpush2.bf16.xpose.msra.mxu0 0
    %4942 = vmatprep.mubr.bf16.mxu0 0
    %4943 = vmatmul.mubr.bf16.gmra.mxu0 %v4905
    %v4944 = vpop.f32.mrf.mxu0
    %v4945 = vadd.f32 %v4587, %v4944
    %v4946 = vpop.f32.mrf.mxu0
    %v4947 = vpop.f32.mrf.mxu0
    %v4948 = vpop.f32.mrf.mxu0
    %4949 = vdwg.mxu0
    %4951 = vrot.lane.b32.xlu0 %v4654, 96
    %v4952 = vpop.permute.xlu0 %4951
    %v4954 = vsel %vm319, %v4952, 0
    %v4957 = vsel %vm319, %v4580, 0
    %4959 = vmatprep.subr.bf16.mxu0 0
    %4960 = vmatpush1.bf16.xpose.msra.mxu0 0
    %4961 = vmatprep.subr.bf16.mxu0 0
    %4962 = vmatpush1.bf16.xpose.msra.mxu0 0
    %4963 = vmatprep.subr.bf16.mxu0 0
    %4964 = vmatpush1.bf16.xpose.msra.mxu0 0
    %4965 = vmatprep.subr.bf16.mxu0 0
    %4966 = vmatpush1.bf16.xpose.msra.mxu0 0
    %4967 = vmatprep.subr.bf16.mxu0 0
    %4968 = vmatpush1.bf16.xpose.msra.mxu0 0
    %4969 = vmatprep.subr.bf16.mxu0 0
    %4970 = vmatpush1.bf16.xpose.msra.mxu0 0
    %4971 = vmatprep.subr.bf16.mxu0 0
    %4972 = vmatpush1.bf16.xpose.msra.mxu0 0
    %4973 = vmatprep.subr.bf16.mxu0 0
    %4974 = vmatpush1.bf16.xpose.msra.mxu0 %v4957
    %4975 = vmatprep.subr.bf16.mxu0 0
    %4976 = vmatpush2.bf16.xpose.msra.mxu0 0
    %4977 = vmatprep.subr.bf16.mxu0 0
    %4978 = vmatpush2.bf16.xpose.msra.mxu0 0
    %4979 = vmatprep.subr.bf16.mxu0 0
    %4980 = vmatpush2.bf16.xpose.msra.mxu0 0
    %4981 = vmatprep.subr.bf16.mxu0 0
    %4982 = vmatpush2.bf16.xpose.msra.mxu0 0
    %4983 = vmatprep.subr.bf16.mxu0 0
    %4984 = vmatpush2.bf16.xpose.msra.mxu0 0
    %4985 = vmatprep.subr.bf16.mxu0 0
    %4986 = vmatpush2.bf16.xpose.msra.mxu0 0
    %4987 = vmatprep.subr.bf16.mxu0 0
    %4988 = vmatpush2.bf16.xpose.msra.mxu0 0
    %4989 = vmatprep.subr.bf16.mxu0 0
    %4990 = vmatpush2.bf16.xpose.msra.mxu0 0
    %4991 = vmatprep.mubr.bf16.mxu0 0
    %4992 = vmatmul.mubr.bf16.gmra.mxu0 %v4954
    %v4993 = vpop.f32.mrf.mxu0
    %v4994 = vadd.f32 %v4588, %v4993
    %v4995 = vpop.f32.mrf.mxu0
    %v4996 = vpop.f32.mrf.mxu0
    %v4997 = vpop.f32.mrf.mxu0
    %4998 = vdwg.mxu0
    %5000 = vrot.lane.b32.xlu0 %v4655, 96
    %v5001 = vpop.permute.xlu0 %5000
    %v5003 = vsel %vm319, %v5001, 0
    %v5006 = vsel %vm319, %v4581, 0
    %5008 = vmatprep.subr.bf16.mxu0 0
    %5009 = vmatpush1.bf16.xpose.msra.mxu0 0
    %5010 = vmatprep.subr.bf16.mxu0 0
    %5011 = vmatpush1.bf16.xpose.msra.mxu0 0
    %5012 = vmatprep.subr.bf16.mxu0 0
    %5013 = vmatpush1.bf16.xpose.msra.mxu0 0
    %5014 = vmatprep.subr.bf16.mxu0 0
    %5015 = vmatpush1.bf16.xpose.msra.mxu0 0
    %5016 = vmatprep.subr.bf16.mxu0 0
    %5017 = vmatpush1.bf16.xpose.msra.mxu0 0
    %5018 = vmatprep.subr.bf16.mxu0 0
    %5019 = vmatpush1.bf16.xpose.msra.mxu0 0
    %5020 = vmatprep.subr.bf16.mxu0 0
    %5021 = vmatpush1.bf16.xpose.msra.mxu0 0
    %5022 = vmatprep.subr.bf16.mxu0 0
    %5023 = vmatpush1.bf16.xpose.msra.mxu0 %v5006
    %5024 = vmatprep.subr.bf16.mxu0 0
    %5025 = vmatpush2.bf16.xpose.msra.mxu0 0
    %5026 = vmatprep.subr.bf16.mxu0 0
    %5027 = vmatpush2.bf16.xpose.msra.mxu0 0
    %5028 = vmatprep.subr.bf16.mxu0 0
    %5029 = vmatpush2.bf16.xpose.msra.mxu0 0
    %5030 = vmatprep.subr.bf16.mxu0 0
    %5031 = vmatpush2.bf16.xpose.msra.mxu0 0
    %5032 = vmatprep.subr.bf16.mxu0 0
    %5033 = vmatpush2.bf16.xpose.msra.mxu0 0
    %5034 = vmatprep.subr.bf16.mxu0 0
    %5035 = vmatpush2.bf16.xpose.msra.mxu0 0
    %5036 = vmatprep.subr.bf16.mxu0 0
    %5037 = vmatpush2.bf16.xpose.msra.mxu0 0
    %5038 = vmatprep.subr.bf16.mxu0 0
    %5039 = vmatpush2.bf16.xpose.msra.mxu0 0
    %5040 = vmatprep.mubr.bf16.mxu0 0
    %5041 = vmatmul.mubr.bf16.gmra.mxu0 %v5003
    %v5042 = vpop.f32.mrf.mxu0
    %v5043 = vadd.f32 %v4589, %v5042
    %v5044 = vpop.f32.mrf.mxu0
    %v5045 = vpop.f32.mrf.mxu0
    %v5046 = vpop.f32.mrf.mxu0
    %5047 = vdwg.mxu0
    %v5048 = vsel %vm688, %v4700, -inf
    %5049 = vmax.xlane.f32.xlu0 %v5048
    %v5050 = vpop.xlane.xlu0 %5049
    %v5051 = vsel %vm688, %v4749, -inf
    %5052 = vmax.xlane.f32.xlu0 %v5051
    %v5053 = vpop.xlane.xlu0 %5052
    %v5054 = vsel %vm688, %v4798, -inf
    %5055 = vmax.xlane.f32.xlu0 %v5054
    %v5056 = vpop.xlane.xlu0 %5055
    %v5057 = vsel %vm688, %v4847, -inf
    %5058 = vmax.xlane.f32.xlu0 %v5057
    %v5059 = vpop.xlane.xlu0 %5058
    %v5060 = vsel %vm688, %v4896, -inf
    %5061 = vmax.xlane.f32.xlu0 %v5060
    %v5062 = vpop.xlane.xlu0 %5061
    %v5063 = vsel %vm688, %v4945, -inf
    %5064 = vmax.xlane.f32.xlu0 %v5063
    %v5065 = vpop.xlane.xlu0 %5064
    %v5066 = vsel %vm688, %v4994, -inf
    %5067 = vmax.xlane.f32.xlu0 %v5066
    %v5068 = vpop.xlane.xlu0 %5067
    %v5069 = vsel %vm688, %v5043, -inf
    %5070 = vmax.xlane.f32.xlu0 %v5069
    %v5071 = vpop.xlane.xlu0 %5070
    %v5072 = vsub.f32 %v4700, %v5050
    %v5073 = vsub.f32 %v4749, %v5053
    %v5074 = vsub.f32 %v4798, %v5056
    %v5075 = vsub.f32 %v4847, %v5059
    %v5076 = vsub.f32 %v4896, %v5062
    %v5077 = vsub.f32 %v4945, %v5065
    %v5078 = vsub.f32 %v4994, %v5068
    %v5079 = vsub.f32 %v5043, %v5071
    %v5080 = vmul.f32 %v5072, 1.442695
    %v5081 = vpow.pop %v5080
    %v5082 = vmul.f32 %v5073, 1.442695
    %v5083 = vpow.pop %v5082
    %v5084 = vmul.f32 %v5074, 1.442695
    %v5085 = vpow.pop %v5084
    %v5086 = vmul.f32 %v5075, 1.442695
    %v5087 = vpow.pop %v5086
    %v5088 = vmul.f32 %v5076, 1.442695
    %v5089 = vpow.pop %v5088
    %v5090 = vmul.f32 %v5077, 1.442695
    %v5091 = vpow.pop %v5090
    %v5092 = vmul.f32 %v5078, 1.442695
    %v5093 = vpow.pop %v5092
    %v5094 = vmul.f32 %v5079, 1.442695
    %v5095 = vpow.pop %v5094
    %v5096 = vsel %vm688, %v5081, 0.0
    %5097 = vadd.xlane.f32.xlu0 %v5096
    %v5098 = vpop.xlane.xlu0 %5097
    %v5099 = vsel %vm688, %v5083, 0.0
    %5100 = vadd.xlane.f32.xlu0 %v5099
    %v5101 = vpop.xlane.xlu0 %5100
    %v5102 = vsel %vm688, %v5085, 0.0
    %5103 = vadd.xlane.f32.xlu0 %v5102
    %v5104 = vpop.xlane.xlu0 %5103
    %v5105 = vsel %vm688, %v5087, 0.0
    %5106 = vadd.xlane.f32.xlu0 %v5105
    %v5107 = vpop.xlane.xlu0 %5106
    %v5108 = vsel %vm688, %v5089, 0.0
    %5109 = vadd.xlane.f32.xlu0 %v5108
    %v5110 = vpop.xlane.xlu0 %5109
    %v5111 = vsel %vm688, %v5091, 0.0
    %5112 = vadd.xlane.f32.xlu0 %v5111
    %v5113 = vpop.xlane.xlu0 %5112
    %v5114 = vsel %vm688, %v5093, 0.0
    %5115 = vadd.xlane.f32.xlu0 %v5114
    %v5116 = vpop.xlane.xlu0 %5115
    %v5117 = vsel %vm688, %v5095, 0.0
    %5118 = vadd.xlane.f32.xlu0 %v5117
    %v5119 = vpop.xlane.xlu0 %5118
    %v5120 = vrcp.pop %v5098
    %v5121 = vrcp.pop %v5101
    %v5122 = vrcp.pop %v5104
    %v5123 = vrcp.pop %v5107
    %v5124 = vrcp.pop %v5110
    %v5125 = vrcp.pop %v5113
    %v5126 = vrcp.pop %v5116
    %v5127 = vrcp.pop %v5119
    %v5128 = vmul.f32 %v5081, %v5120
    %v5129 = vmul.f32 %v5083, %v5121
    %v5130 = vmul.f32 %v5085, %v5122
    %v5131 = vmul.f32 %v5087, %v5123
    %v5132 = vmul.f32 %v5089, %v5124
    %v5133 = vmul.f32 %v5091, %v5125
    %v5134 = vmul.f32 %v5093, %v5126
    %v5135 = vmul.f32 %v5095, %v5127
    %v5136 = vpack.c.bf16 %v5128, %v5128
    %v5137 = vpack.c.bf16 %v5129, %v5129
    %v5138 = vpack.c.bf16 %v5130, %v5130
    %v5139 = vpack.c.bf16 %v5131, %v5131
    %v5140 = vpack.c.bf16 %v5132, %v5132
    %v5141 = vpack.c.bf16 %v5133, %v5133
    %v5142 = vpack.c.bf16 %v5134, %v5134
    %v5143 = vpack.c.bf16 %v5135, %v5135
    %v5145 = vsel %vm785, %v5136, 0
    %v5147 = vsel %vm789, %v4574, 0
    %5149 = vmatprep.subr.bf16.mxu0 0
    %5150 = vmatpush1.bf16.msra.mxu0 0
    %5151 = vmatprep.subr.bf16.mxu0 0
    %5152 = vmatpush1.bf16.msra.mxu0 0
    %5153 = vmatprep.subr.bf16.mxu0 0
    %5154 = vmatpush1.bf16.msra.mxu0 0
    %5155 = vmatprep.subr.bf16.mxu0 0
    %5156 = vmatpush1.bf16.msra.mxu0 0
    %5157 = vmatprep.subr.bf16.mxu0 0
    %5158 = vmatpush1.bf16.msra.mxu0 0
    %5159 = vmatprep.subr.bf16.mxu0 0
    %5160 = vmatpush1.bf16.msra.mxu0 0
    %5161 = vmatprep.subr.bf16.mxu0 0
    %5162 = vmatpush1.bf16.msra.mxu0 0
    %5163 = vmatprep.subr.bf16.mxu0 0
    %5164 = vmatpush1.bf16.msra.mxu0 %v5147
    %5165 = vmatprep.subr.bf16.mxu0 0
    %5166 = vmatpush2.bf16.msra.mxu0 0
    %5167 = vmatprep.subr.bf16.mxu0 0
    %5168 = vmatpush2.bf16.msra.mxu0 0
    %5169 = vmatprep.subr.bf16.mxu0 0
    %5170 = vmatpush2.bf16.msra.mxu0 0
    %5171 = vmatprep.subr.bf16.mxu0 0
    %5172 = vmatpush2.bf16.msra.mxu0 0
    %5173 = vmatprep.subr.bf16.mxu0 0
    %5174 = vmatpush2.bf16.msra.mxu0 0
    %5175 = vmatprep.subr.bf16.mxu0 0
    %5176 = vmatpush2.bf16.msra.mxu0 0
    %5177 = vmatprep.subr.bf16.mxu0 0
    %5178 = vmatpush2.bf16.msra.mxu0 0
    %5179 = vmatprep.subr.bf16.mxu0 0
    %5180 = vmatpush2.bf16.msra.mxu0 0
    %5181 = vmatprep.mubr.bf16.mxu0 0
    %5182 = vmatmul.mubr.bf16.gmra.mxu0 %v5145
    %v5183 = vpop.f32.mrf.mxu0
    %v5184 = vadd.f32 0.0, %v5183
    %v5185 = vpop.f32.mrf.mxu0
    %v5186 = vpop.f32.mrf.mxu0
    %v5187 = vpop.f32.mrf.mxu0
    %5188 = vdwg.mxu0
    %v5190 = vsel %vm785, %v5137, 0
    %v5192 = vsel %vm789, %v4575, 0
    %5194 = vmatprep.subr.bf16.mxu0 0
    %5195 = vmatpush1.bf16.msra.mxu0 0
    %5196 = vmatprep.subr.bf16.mxu0 0
    %5197 = vmatpush1.bf16.msra.mxu0 0
    %5198 = vmatprep.subr.bf16.mxu0 0
    %5199 = vmatpush1.bf16.msra.mxu0 0
    %5200 = vmatprep.subr.bf16.mxu0 0
    %5201 = vmatpush1.bf16.msra.mxu0 0
    %5202 = vmatprep.subr.bf16.mxu0 0
    %5203 = vmatpush1.bf16.msra.mxu0 0
    %5204 = vmatprep.subr.bf16.mxu0 0
    %5205 = vmatpush1.bf16.msra.mxu0 0
    %5206 = vmatprep.subr.bf16.mxu0 0
    %5207 = vmatpush1.bf16.msra.mxu0 0
    %5208 = vmatprep.subr.bf16.mxu0 0
    %5209 = vmatpush1.bf16.msra.mxu0 %v5192
    %5210 = vmatprep.subr.bf16.mxu0 0
    %5211 = vmatpush2.bf16.msra.mxu0 0
    %5212 = vmatprep.subr.bf16.mxu0 0
    %5213 = vmatpush2.bf16.msra.mxu0 0
    %5214 = vmatprep.subr.bf16.mxu0 0
    %5215 = vmatpush2.bf16.msra.mxu0 0
    %5216 = vmatprep.subr.bf16.mxu0 0
    %5217 = vmatpush2.bf16.msra.mxu0 0
    %5218 = vmatprep.subr.bf16.mxu0 0
    %5219 = vmatpush2.bf16.msra.mxu0 0
    %5220 = vmatprep.subr.bf16.mxu0 0
    %5221 = vmatpush2.bf16.msra.mxu0 0
    %5222 = vmatprep.subr.bf16.mxu0 0
    %5223 = vmatpush2.bf16.msra.mxu0 0
    %5224 = vmatprep.subr.bf16.mxu0 0
    %5225 = vmatpush2.bf16.msra.mxu0 0
    %5226 = vmatprep.mubr.bf16.mxu0 0
    %5227 = vmatmul.mubr.bf16.gmra.mxu0 %v5190
    %v5228 = vpop.f32.mrf.mxu0
    %v5229 = vadd.f32 0.0, %v5228
    %v5230 = vpop.f32.mrf.mxu0
    %v5231 = vpop.f32.mrf.mxu0
    %v5232 = vpop.f32.mrf.mxu0
    %5233 = vdwg.mxu0
    %v5235 = vsel %vm785, %v5138, 0
    %v5237 = vsel %vm789, %v4576, 0
    %5239 = vmatprep.subr.bf16.mxu0 0
    %5240 = vmatpush1.bf16.msra.mxu0 0
    %5241 = vmatprep.subr.bf16.mxu0 0
    %5242 = vmatpush1.bf16.msra.mxu0 0
    %5243 = vmatprep.subr.bf16.mxu0 0
    %5244 = vmatpush1.bf16.msra.mxu0 0
    %5245 = vmatprep.subr.bf16.mxu0 0
    %5246 = vmatpush1.bf16.msra.mxu0 0
    %5247 = vmatprep.subr.bf16.mxu0 0
    %5248 = vmatpush1.bf16.msra.mxu0 0
    %5249 = vmatprep.subr.bf16.mxu0 0
    %5250 = vmatpush1.bf16.msra.mxu0 0
    %5251 = vmatprep.subr.bf16.mxu0 0
    %5252 = vmatpush1.bf16.msra.mxu0 0
    %5253 = vmatprep.subr.bf16.mxu0 0
    %5254 = vmatpush1.bf16.msra.mxu0 %v5237
    %5255 = vmatprep.subr.bf16.mxu0 0
    %5256 = vmatpush2.bf16.msra.mxu0 0
    %5257 = vmatprep.subr.bf16.mxu0 0
    %5258 = vmatpush2.bf16.msra.mxu0 0
    %5259 = vmatprep.subr.bf16.mxu0 0
    %5260 = vmatpush2.bf16.msra.mxu0 0
    %5261 = vmatprep.subr.bf16.mxu0 0
    %5262 = vmatpush2.bf16.msra.mxu0 0
    %5263 = vmatprep.subr.bf16.mxu0 0
    %5264 = vmatpush2.bf16.msra.mxu0 0
    %5265 = vmatprep.subr.bf16.mxu0 0
    %5266 = vmatpush2.bf16.msra.mxu0 0
    %5267 = vmatprep.subr.bf16.mxu0 0
    %5268 = vmatpush2.bf16.msra.mxu0 0
    %5269 = vmatprep.subr.bf16.mxu0 0
    %5270 = vmatpush2.bf16.msra.mxu0 0
    %5271 = vmatprep.mubr.bf16.mxu0 0
    %5272 = vmatmul.mubr.bf16.gmra.mxu0 %v5235
    %v5273 = vpop.f32.mrf.mxu0
    %v5274 = vadd.f32 0.0, %v5273
    %v5275 = vpop.f32.mrf.mxu0
    %v5276 = vpop.f32.mrf.mxu0
    %v5277 = vpop.f32.mrf.mxu0
    %5278 = vdwg.mxu0
    %v5280 = vsel %vm785, %v5139, 0
    %v5282 = vsel %vm789, %v4577, 0
    %5284 = vmatprep.subr.bf16.mxu0 0
    %5285 = vmatpush1.bf16.msra.mxu0 0
    %5286 = vmatprep.subr.bf16.mxu0 0
    %5287 = vmatpush1.bf16.msra.mxu0 0
    %5288 = vmatprep.subr.bf16.mxu0 0
    %5289 = vmatpush1.bf16.msra.mxu0 0
    %5290 = vmatprep.subr.bf16.mxu0 0
    %5291 = vmatpush1.bf16.msra.mxu0 0
    %5292 = vmatprep.subr.bf16.mxu0 0
    %5293 = vmatpush1.bf16.msra.mxu0 0
    %5294 = vmatprep.subr.bf16.mxu0 0
    %5295 = vmatpush1.bf16.msra.mxu0 0
    %5296 = vmatprep.subr.bf16.mxu0 0
    %5297 = vmatpush1.bf16.msra.mxu0 0
    %5298 = vmatprep.subr.bf16.mxu0 0
    %5299 = vmatpush1.bf16.msra.mxu0 %v5282
    %5300 = vmatprep.subr.bf16.mxu0 0
    %5301 = vmatpush2.bf16.msra.mxu0 0
    %5302 = vmatprep.subr.bf16.mxu0 0
    %5303 = vmatpush2.bf16.msra.mxu0 0
    %5304 = vmatprep.subr.bf16.mxu0 0
    %5305 = vmatpush2.bf16.msra.mxu0 0
    %5306 = vmatprep.subr.bf16.mxu0 0
    %5307 = vmatpush2.bf16.msra.mxu0 0
    %5308 = vmatprep.subr.bf16.mxu0 0
    %5309 = vmatpush2.bf16.msra.mxu0 0
    %5310 = vmatprep.subr.bf16.mxu0 0
    %5311 = vmatpush2.bf16.msra.mxu0 0
    %5312 = vmatprep.subr.bf16.mxu0 0
    %5313 = vmatpush2.bf16.msra.mxu0 0
    %5314 = vmatprep.subr.bf16.mxu0 0
    %5315 = vmatpush2.bf16.msra.mxu0 0
    %5316 = vmatprep.mubr.bf16.mxu0 0
    %5317 = vmatmul.mubr.bf16.gmra.mxu0 %v5280
    %v5318 = vpop.f32.mrf.mxu0
    %v5319 = vadd.f32 0.0, %v5318
    %v5320 = vpop.f32.mrf.mxu0
    %v5321 = vpop.f32.mrf.mxu0
    %v5322 = vpop.f32.mrf.mxu0
    %5323 = vdwg.mxu0
    %v5325 = vsel %vm785, %v5140, 0
    %v5327 = vsel %vm789, %v4578, 0
    %5329 = vmatprep.subr.bf16.mxu0 0
    %5330 = vmatpush1.bf16.msra.mxu0 0
    %5331 = vmatprep.subr.bf16.mxu0 0
    %5332 = vmatpush1.bf16.msra.mxu0 0
    %5333 = vmatprep.subr.bf16.mxu0 0
    %5334 = vmatpush1.bf16.msra.mxu0 0
    %5335 = vmatprep.subr.bf16.mxu0 0
    %5336 = vmatpush1.bf16.msra.mxu0 0
    %5337 = vmatprep.subr.bf16.mxu0 0
    %5338 = vmatpush1.bf16.msra.mxu0 0
    %5339 = vmatprep.subr.bf16.mxu0 0
    %5340 = vmatpush1.bf16.msra.mxu0 0
    %5341 = vmatprep.subr.bf16.mxu0 0
    %5342 = vmatpush1.bf16.msra.mxu0 0
    %5343 = vmatprep.subr.bf16.mxu0 0
    %5344 = vmatpush1.bf16.msra.mxu0 %v5327
    %5345 = vmatprep.subr.bf16.mxu0 0
    %5346 = vmatpush2.bf16.msra.mxu0 0
    %5347 = vmatprep.subr.bf16.mxu0 0
    %5348 = vmatpush2.bf16.msra.mxu0 0
    %5349 = vmatprep.subr.bf16.mxu0 0
    %5350 = vmatpush2.bf16.msra.mxu0 0
    %5351 = vmatprep.subr.bf16.mxu0 0
    %5352 = vmatpush2.bf16.msra.mxu0 0
    %5353 = vmatprep.subr.bf16.mxu0 0
    %5354 = vmatpush2.bf16.msra.mxu0 0
    %5355 = vmatprep.subr.bf16.mxu0 0
    %5356 = vmatpush2.bf16.msra.mxu0 0
    %5357 = vmatprep.subr.bf16.mxu0 0
    %5358 = vmatpush2.bf16.msra.mxu0 0
    %5359 = vmatprep.subr.bf16.mxu0 0
    %5360 = vmatpush2.bf16.msra.mxu0 0
    %5361 = vmatprep.mubr.bf16.mxu0 0
    %5362 = vmatmul.mubr.bf16.gmra.mxu0 %v5325
    %v5363 = vpop.f32.mrf.mxu0
    %v5364 = vadd.f32 0.0, %v5363
    %v5365 = vpop.f32.mrf.mxu0
    %v5366 = vpop.f32.mrf.mxu0
    %v5367 = vpop.f32.mrf.mxu0
    %5368 = vdwg.mxu0
    %v5370 = vsel %vm785, %v5141, 0
    %v5372 = vsel %vm789, %v4579, 0
    %5374 = vmatprep.subr.bf16.mxu0 0
    %5375 = vmatpush1.bf16.msra.mxu0 0
    %5376 = vmatprep.subr.bf16.mxu0 0
    %5377 = vmatpush1.bf16.msra.mxu0 0
    %5378 = vmatprep.subr.bf16.mxu0 0
    %5379 = vmatpush1.bf16.msra.mxu0 0
    %5380 = vmatprep.subr.bf16.mxu0 0
    %5381 = vmatpush1.bf16.msra.mxu0 0
    %5382 = vmatprep.subr.bf16.mxu0 0
    %5383 = vmatpush1.bf16.msra.mxu0 0
    %5384 = vmatprep.subr.bf16.mxu0 0
    %5385 = vmatpush1.bf16.msra.mxu0 0
    %5386 = vmatprep.subr.bf16.mxu0 0
    %5387 = vmatpush1.bf16.msra.mxu0 0
    %5388 = vmatprep.subr.bf16.mxu0 0
    %5389 = vmatpush1.bf16.msra.mxu0 %v5372
    %5390 = vmatprep.subr.bf16.mxu0 0
    %5391 = vmatpush2.bf16.msra.mxu0 0
    %5392 = vmatprep.subr.bf16.mxu0 0
    %5393 = vmatpush2.bf16.msra.mxu0 0
    %5394 = vmatprep.subr.bf16.mxu0 0
    %5395 = vmatpush2.bf16.msra.mxu0 0
    %5396 = vmatprep.subr.bf16.mxu0 0
    %5397 = vmatpush2.bf16.msra.mxu0 0
    %5398 = vmatprep.subr.bf16.mxu0 0
    %5399 = vmatpush2.bf16.msra.mxu0 0
    %5400 = vmatprep.subr.bf16.mxu0 0
    %5401 = vmatpush2.bf16.msra.mxu0 0
    %5402 = vmatprep.subr.bf16.mxu0 0
    %5403 = vmatpush2.bf16.msra.mxu0 0
    %5404 = vmatprep.subr.bf16.mxu0 0
    %5405 = vmatpush2.bf16.msra.mxu0 0
    %5406 = vmatprep.mubr.bf16.mxu0 0
    %5407 = vmatmul.mubr.bf16.gmra.mxu0 %v5370
    %v5408 = vpop.f32.mrf.mxu0
    %v5409 = vadd.f32 0.0, %v5408
    %v5410 = vpop.f32.mrf.mxu0
    %v5411 = vpop.f32.mrf.mxu0
    %v5412 = vpop.f32.mrf.mxu0
    %5413 = vdwg.mxu0
    %v5415 = vsel %vm785, %v5142, 0
    %v5417 = vsel %vm789, %v4580, 0
    %5419 = vmatprep.subr.bf16.mxu0 0
    %5420 = vmatpush1.bf16.msra.mxu0 0
    %5421 = vmatprep.subr.bf16.mxu0 0
    %5422 = vmatpush1.bf16.msra.mxu0 0
    %5423 = vmatprep.subr.bf16.mxu0 0
    %5424 = vmatpush1.bf16.msra.mxu0 0
    %5425 = vmatprep.subr.bf16.mxu0 0
    %5426 = vmatpush1.bf16.msra.mxu0 0
    %5427 = vmatprep.subr.bf16.mxu0 0
    %5428 = vmatpush1.bf16.msra.mxu0 0
    %5429 = vmatprep.subr.bf16.mxu0 0
    %5430 = vmatpush1.bf16.msra.mxu0 0
    %5431 = vmatprep.subr.bf16.mxu0 0
    %5432 = vmatpush1.bf16.msra.mxu0 0
    %5433 = vmatprep.subr.bf16.mxu0 0
    %5434 = vmatpush1.bf16.msra.mxu0 %v5417
    %5435 = vmatprep.subr.bf16.mxu0 0
    %5436 = vmatpush2.bf16.msra.mxu0 0
    %5437 = vmatprep.subr.bf16.mxu0 0
    %5438 = vmatpush2.bf16.msra.mxu0 0
    %5439 = vmatprep.subr.bf16.mxu0 0
    %5440 = vmatpush2.bf16.msra.mxu0 0
    %5441 = vmatprep.subr.bf16.mxu0 0
    %5442 = vmatpush2.bf16.msra.mxu0 0
    %5443 = vmatprep.subr.bf16.mxu0 0
    %5444 = vmatpush2.bf16.msra.mxu0 0
    %5445 = vmatprep.subr.bf16.mxu0 0
    %5446 = vmatpush2.bf16.msra.mxu0 0
    %5447 = vmatprep.subr.bf16.mxu0 0
    %5448 = vmatpush2.bf16.msra.mxu0 0
    %5449 = vmatprep.subr.bf16.mxu0 0
    %5450 = vmatpush2.bf16.msra.mxu0 0
    %5451 = vmatprep.mubr.bf16.mxu0 0
    %5452 = vmatmul.mubr.bf16.gmra.mxu0 %v5415
    %v5453 = vpop.f32.mrf.mxu0
    %v5454 = vadd.f32 0.0, %v5453
    %v5455 = vpop.f32.mrf.mxu0
    %v5456 = vpop.f32.mrf.mxu0
    %v5457 = vpop.f32.mrf.mxu0
    %5458 = vdwg.mxu0
    %v5460 = vsel %vm785, %v5143, 0
    %v5462 = vsel %vm789, %v4581, 0
    %5464 = vmatprep.subr.bf16.mxu0 0
    %5465 = vmatpush1.bf16.msra.mxu0 0
    %5466 = vmatprep.subr.bf16.mxu0 0
    %5467 = vmatpush1.bf16.msra.mxu0 0
    %5468 = vmatprep.subr.bf16.mxu0 0
    %5469 = vmatpush1.bf16.msra.mxu0 0
    %5470 = vmatprep.subr.bf16.mxu0 0
    %5471 = vmatpush1.bf16.msra.mxu0 0
    %5472 = vmatprep.subr.bf16.mxu0 0
    %5473 = vmatpush1.bf16.msra.mxu0 0
    %5474 = vmatprep.subr.bf16.mxu0 0
    %5475 = vmatpush1.bf16.msra.mxu0 0
    %5476 = vmatprep.subr.bf16.mxu0 0
    %5477 = vmatpush1.bf16.msra.mxu0 0
    %5478 = vmatprep.subr.bf16.mxu0 0
    %5479 = vmatpush1.bf16.msra.mxu0 %v5462
    %5480 = vmatprep.subr.bf16.mxu0 0
    %5481 = vmatpush2.bf16.msra.mxu0 0
    %5482 = vmatprep.subr.bf16.mxu0 0
    %5483 = vmatpush2.bf16.msra.mxu0 0
    %5484 = vmatprep.subr.bf16.mxu0 0
    %5485 = vmatpush2.bf16.msra.mxu0 0
    %5486 = vmatprep.subr.bf16.mxu0 0
    %5487 = vmatpush2.bf16.msra.mxu0 0
    %5488 = vmatprep.subr.bf16.mxu0 0
    %5489 = vmatpush2.bf16.msra.mxu0 0
    %5490 = vmatprep.subr.bf16.mxu0 0
    %5491 = vmatpush2.bf16.msra.mxu0 0
    %5492 = vmatprep.subr.bf16.mxu0 0
    %5493 = vmatpush2.bf16.msra.mxu0 0
    %5494 = vmatprep.subr.bf16.mxu0 0
    %5495 = vmatpush2.bf16.msra.mxu0 0
    %5496 = vmatprep.mubr.bf16.mxu0 0
    %5497 = vmatmul.mubr.bf16.gmra.mxu0 %v5460
    %v5498 = vpop.f32.mrf.mxu0
    %v5499 = vadd.f32 0.0, %v5498
    %v5500 = vpop.f32.mrf.mxu0
    %v5501 = vpop.f32.mrf.mxu0
    %v5502 = vpop.f32.mrf.mxu0
    %5503 = vdwg.mxu0
    %v5504 = vadd.f32 %v5128, 0.0
    %v5505 = vadd.f32 %v5129, 0.0
    %v5506 = vadd.f32 %v5130, 0.0
    %v5507 = vadd.f32 %v5131, 0.0
    %v5508 = vadd.f32 %v5132, 0.0
    %v5509 = vadd.f32 %v5133, 0.0
    %v5510 = vadd.f32 %v5134, 0.0
    %v5511 = vadd.f32 %v5135, 0.0
    %v5512 = vadd.f32 %v5184, 0.0
    %v5513 = vadd.f32 %v5229, 0.0
    %v5514 = vadd.f32 %v5274, 0.0
    %v5515 = vadd.f32 %v5319, 0.0
    %v5516 = vadd.f32 %v5364, 0.0
    %v5517 = vadd.f32 %v5409, 0.0
    %v5518 = vadd.f32 %v5454, 0.0
    %v5519 = vadd.f32 %v5499, 0.0
    %v5528 = vrot.slane %v5513, 7
    %v5529 = vsel %vm1172, %v5528, %v5512
    %v5530 = vrot.slane %v5514, 6
    %v5531 = vsel %vm1175, %v5530, %v5529
    %v5532 = vrot.slane %v5515, 5
    %v5533 = vsel %vm1178, %v5532, %v5531
    %v5534 = vrot.slane %v5516, 4
    %v5535 = vsel %vm1181, %v5534, %v5533
    %v5536 = vrot.slane %v5517, 3
    %v5537 = vsel %vm1184, %v5536, %v5535
    %v5538 = vrot.slane %v5518, 2
    %v5539 = vsel %vm1187, %v5538, %v5537
    %v5540 = vrot.slane %v5519, 1
    %v5541 = vsel %vm1190, %v5540, %v5539
    %5543 = vrot.lane.b32.xlu0 %v4266, 64
    %v5544 = vpop.permute.xlu0 %5543
    %v5546 = vsel %vm319, %v5541, %v5544
    %v5547 = vpack.c.bf16 %v5546, %v5546
    %v5548 = vld [vmem:[#allocation7] sm:$0xf]
    %v5549 = vld [vmem:[#allocation7 + $0x4] sm:$0xf]
    %v5550 = vld [vmem:[#allocation7 + $0x8] sm:$0xf]
    %v5551 = vld [vmem:[#allocation7 + $0xc] sm:$0xf]
    %v5552 = vld [vmem:[#allocation7 + $0x10] sm:$0xf]
    %v5553 = vld [vmem:[#allocation7 + $0x14] sm:$0xf]
    %v5554 = vld [vmem:[#allocation8] sm:$0xf]
    %v5555 = vld [vmem:[#allocation8 + $0x4] sm:$0xf]
    %v5556 = vld [vmem:[#allocation8 + $0x8] sm:$0xf]
    %v5557 = vld [vmem:[#allocation8 + $0xc] sm:$0xf]
    %v5558 = vld [vmem:[#allocation8 + $0x10] sm:$0xf]
    %v5559 = vld [vmem:[#allocation8 + $0x14] sm:$0xf]
    %v5560 = vld [vmem:[#allocation8 + $0x18] sm:$0xf]
    %v5561 = vld [vmem:[#allocation8 + $0x1c] sm:$0xf]
    %v5570 = vunpack.c.l.b16 %v5554
    %v5571 = vunpack.c.l.b16 %v5555
    %v5572 = vunpack.c.l.b16 %v5556
    %v5573 = vunpack.c.l.b16 %v5557
    %v5574 = vunpack.c.l.b16 %v5558
    %v5575 = vunpack.c.l.b16 %v5559
    %v5576 = vunpack.c.l.b16 %v5560
    %v5577 = vunpack.c.l.b16 %v5561
    %v5578 = vpack.c.b16 %v5571, %v5570
    %v5579 = vpack.c.b16 %v5573, %v5572
    %v5580 = vpack.c.b16 %v5575, %v5574
    %v5581 = vpack.c.b16 %v5577, %v5576
    %v5587 = vsel %vm1236, %v5547, 0
    %5589 = vmatprep.subr.bf16.mxu0 0
    %5590 = vmatpush1.bf16.msra.mxu0 0
    %5591 = vmatprep.subr.bf16.mxu0 0
    %5592 = vmatpush1.bf16.msra.mxu0 0
    %5593 = vmatprep.subr.bf16.mxu0 0
    %5594 = vmatpush1.bf16.msra.mxu0 0
    %5595 = vmatprep.subr.bf16.mxu0 0
    %5596 = vmatpush1.bf16.msra.mxu0 0
    %5597 = vmatprep.subr.bf16.mxu0 0
    %5598 = vmatpush1.bf16.msra.mxu0 %v5581
    %5599 = vmatprep.subr.bf16.mxu0 0
    %5600 = vmatpush1.bf16.msra.mxu0 %v5580
    %5601 = vmatprep.subr.bf16.mxu0 0
    %5602 = vmatpush1.bf16.msra.mxu0 %v5579
    %5603 = vmatprep.subr.bf16.mxu0 0
    %5604 = vmatpush1.bf16.msra.mxu0 %v5578
    %5605 = vmatprep.subr.bf16.mxu0 0
    %5606 = vmatpush2.bf16.msra.mxu0 0
    %5607 = vmatprep.subr.bf16.mxu0 0
    %5608 = vmatpush2.bf16.msra.mxu0 0
    %5609 = vmatprep.subr.bf16.mxu0 0
    %5610 = vmatpush2.bf16.msra.mxu0 0
    %5611 = vmatprep.subr.bf16.mxu0 0
    %5612 = vmatpush2.bf16.msra.mxu0 0
    %5613 = vmatprep.subr.bf16.mxu0 0
    %5614 = vmatpush2.bf16.msra.mxu0 0
    %5615 = vmatprep.subr.bf16.mxu0 0
    %5616 = vmatpush2.bf16.msra.mxu0 0
    %5617 = vmatprep.subr.bf16.mxu0 0
    %5618 = vmatpush2.bf16.msra.mxu0 0
    %5619 = vmatprep.subr.bf16.mxu0 0
    %5620 = vmatpush2.bf16.msra.mxu0 0
    %5621 = vmatprep.mubr.bf16.mxu0 0
    %5622 = vmatmul.mubr.bf16.gmra.mxu0 %v5587
    %v5623 = vpop.f32.mrf.mxu0
    %v5624 = vadd.f32 0.0, %v5623
    %v5625 = vpop.f32.mrf.mxu0
    %v5626 = vpop.f32.mrf.mxu0
    %v5627 = vpop.f32.mrf.mxu0
    %5628 = vdwg.mxu0
    %v5635 = vunpack.c.l.b16 %v5548
    %v5636 = vunpack.c.l.b16 %v5549
    %v5637 = vunpack.c.l.b16 %v5550
    %v5638 = vunpack.c.l.b16 %v5551
    %v5639 = vunpack.c.l.b16 %v5552
    %v5640 = vunpack.c.l.b16 %v5553
    %v5641 = vpack.c.b16 %v5636, %v5635
    %v5642 = vpack.c.b16 %v5638, %v5637
    %v5643 = vpack.c.b16 %v5640, %v5639
    %v5648 = vsel %vm1298, %v4573, 0
    %5650 = vmatprep.subr.bf16.mxu0 0
    %5651 = vmatpush1.bf16.msra.mxu0 0
    %5652 = vmatprep.subr.bf16.mxu0 0
    %5653 = vmatpush1.bf16.msra.mxu0 0
    %5654 = vmatprep.subr.bf16.mxu0 0
    %5655 = vmatpush1.bf16.msra.mxu0 0
    %5656 = vmatprep.subr.bf16.mxu0 0
    %5657 = vmatpush1.bf16.msra.mxu0 0
    %5658 = vmatprep.subr.bf16.mxu0 0
    %5659 = vmatpush1.bf16.msra.mxu0 0
    %5660 = vmatprep.subr.bf16.mxu0 0
    %5661 = vmatpush1.bf16.msra.mxu0 %v5643
    %5662 = vmatprep.subr.bf16.mxu0 0
    %5663 = vmatpush1.bf16.msra.mxu0 %v5642
    %5664 = vmatprep.subr.bf16.mxu0 0
    %5665 = vmatpush1.bf16.msra.mxu0 %v5641
    %5666 = vmatprep.subr.bf16.mxu0 0
    %5667 = vmatpush2.bf16.msra.mxu0 0
    %5668 = vmatprep.subr.bf16.mxu0 0
    %5669 = vmatpush2.bf16.msra.mxu0 0
    %5670 = vmatprep.subr.bf16.mxu0 0
    %5671 = vmatpush2.bf16.msra.mxu0 0
    %5672 = vmatprep.subr.bf16.mxu0 0
    %5673 = vmatpush2.bf16.msra.mxu0 0
    %5674 = vmatprep.subr.bf16.mxu0 0
    %5675 = vmatpush2.bf16.msra.mxu0 0
    %5676 = vmatprep.subr.bf16.mxu0 0
    %5677 = vmatpush2.bf16.msra.mxu0 0
    %5678 = vmatprep.subr.bf16.mxu0 0
    %5679 = vmatpush2.bf16.msra.mxu0 0
    %5680 = vmatprep.subr.bf16.mxu0 0
    %5681 = vmatpush2.bf16.msra.mxu0 0
    %5682 = vmatprep.mubr.bf16.mxu0 0
    %5683 = vmatmul.mubr.bf16.gmra.mxu0 %v5648
    %v5684 = vpop.f32.mrf.mxu0
    %v5685 = vadd.f32 %v5624, %v5684
    %v5686 = vpop.f32.mrf.mxu0
    %v5687 = vpop.f32.mrf.mxu0
    %v5688 = vpop.f32.mrf.mxu0
    %5689 = vdwg.mxu0
    %v5690 = vadd.f32 %v5685, %v181
    %v5691 = vxor.u32 %v5690, 2147483648
    %v5692 = vmul.f32 %v5691, 1.442695
    %v5693 = vpow.pop %v5692
    %v5694 = vadd.f32 %v5693, 1.0
    %v5695 = vrcp.pop %v5694
    %v5696 = vmul.f32 1.0, %v5695
    %v5697 = vtanh.pop %v5690
    %v5698 = vmul.f32 %v5696, %v4260
    %5700 = vrot.lane.b32.xlu0 %v5697, 64
    %v5701 = vpop.permute.xlu0 %5700
    %v5703 = vmul.f32 %v5696, %v5701
    %5705 = vrot.lane.b32.xlu0 %v5703, 32
    %v5706 = vpop.permute.xlu0 %5705
    %v5708 = vadd.f32 %v5698, %v5706
    %v5709 = vtanh.pop %v5708
    %5711 = vrot.lane.b32.xlu0 %v5709, 64
    %v5712 = vpop.permute.xlu0 %5711
    %v5714 = vmul.f32 %v5696, %v5712
    %5716 = vrot.lane.b32.xlu0 %v5714, 32
    %v5717 = vpop.permute.xlu0 %5716
    %5719 = vrot.lane.b32.xlu0 %v4374, 64
    %v5720 = vpop.permute.xlu0 %5719
    %v5722 = vsel %vm319, %v5717, %v5720
    %v5723 = vpack.c.bf16 %v5722, %v5722
    %v5724 = vld [vmem:[#allocation11] sm:$0xf]
    %v5725 = vld [vmem:[#allocation11 + $0x4] sm:$0xf]
    %v5726 = vld [vmem:[#allocation11 + $0x8] sm:$0xf]
    %v5727 = vld [vmem:[#allocation11 + $0xc] sm:$0xf]
    %v5728 = vld [vmem:[#allocation11 + $0x10] sm:$0xf]
    %v5729 = vld [vmem:[#allocation11 + $0x14] sm:$0xf]
    %v5730 = vld [vmem:[#allocation11 + $0x18] sm:$0xf]
    %v5731 = vld [vmem:[#allocation11 + $0x1c] sm:$0xf]
    %v5740 = vunpack.c.l.b16 %v5724
    %v5741 = vunpack.c.l.b16 %v5725
    %v5742 = vunpack.c.l.b16 %v5726
    %v5743 = vunpack.c.l.b16 %v5727
    %v5744 = vunpack.c.l.b16 %v5728
    %v5745 = vunpack.c.l.b16 %v5729
    %v5746 = vunpack.c.l.b16 %v5730
    %v5747 = vunpack.c.l.b16 %v5731
    %v5748 = vpack.c.b16 %v5741, %v5740
    %v5749 = vpack.c.b16 %v5743, %v5742
    %v5750 = vpack.c.b16 %v5745, %v5744
    %v5751 = vpack.c.b16 %v5747, %v5746
    %v5757 = vsel %vm1236, %v5723, 0
    %5759 = vmatprep.subr.bf16.mxu0 0
    %5760 = vmatpush1.bf16.msra.mxu0 0
    %5761 = vmatprep.subr.bf16.mxu0 0
    %5762 = vmatpush1.bf16.msra.mxu0 0
    %5763 = vmatprep.subr.bf16.mxu0 0
    %5764 = vmatpush1.bf16.msra.mxu0 0
    %5765 = vmatprep.subr.bf16.mxu0 0
    %5766 = vmatpush1.bf16.msra.mxu0 0
    %5767 = vmatprep.subr.bf16.mxu0 0
    %5768 = vmatpush1.bf16.msra.mxu0 %v5751
    %5769 = vmatprep.subr.bf16.mxu0 0
    %5770 = vmatpush1.bf16.msra.mxu0 %v5750
    %5771 = vmatprep.subr.bf16.mxu0 0
    %5772 = vmatpush1.bf16.msra.mxu0 %v5749
    %5773 = vmatprep.subr.bf16.mxu0 0
    %5774 = vmatpush1.bf16.msra.mxu0 %v5748
    %5775 = vmatprep.subr.bf16.mxu0 0
    %5776 = vmatpush2.bf16.msra.mxu0 0
    %5777 = vmatprep.subr.bf16.mxu0 0
    %5778 = vmatpush2.bf16.msra.mxu0 0
    %5779 = vmatprep.subr.bf16.mxu0 0
    %5780 = vmatpush2.bf16.msra.mxu0 0
    %5781 = vmatprep.subr.bf16.mxu0 0
    %5782 = vmatpush2.bf16.msra.mxu0 0
    %5783 = vmatprep.subr.bf16.mxu0 0
    %5784 = vmatpush2.bf16.msra.mxu0 0
    %5785 = vmatprep.subr.bf16.mxu0 0
    %5786 = vmatpush2.bf16.msra.mxu0 0
    %5787 = vmatprep.subr.bf16.mxu0 0
    %5788 = vmatpush2.bf16.msra.mxu0 0
    %5789 = vmatprep.subr.bf16.mxu0 0
    %5790 = vmatpush2.bf16.msra.mxu0 0
    %5791 = vmatprep.mubr.bf16.mxu0 0
    %5792 = vmatmul.mubr.bf16.gmra.mxu0 %v5757
    %v5793 = vpop.f32.mrf.mxu0
    %v5794 = vadd.f32 %v188, %v5793
    %v5795 = vpop.f32.mrf.mxu0
    %v5796 = vpop.f32.mrf.mxu0
    %v5797 = vpop.f32.mrf.mxu0
    %5798 = vdwg.mxu0
    %v5799 = vxor.u32 %v5794, 2147483648
    %v5800 = vmul.f32 %v5799, 1.442695
    %v5801 = vpow.pop %v5800
    %v5802 = vadd.f32 %v5801, 1.0
    %v5803 = vrcp.pop %v5802
    %v5804 = vmul.f32 1.0, %v5803
    %v5805 = vtanh.pop %v5794
    %v5806 = vmul.f32 %v5804, %v4368
    %5808 = vrot.lane.b32.xlu0 %v5805, 64
    %v5809 = vpop.permute.xlu0 %5808
    %v5811 = vmul.f32 %v5804, %v5809
    %5813 = vrot.lane.b32.xlu0 %v5811, 32
    %v5814 = vpop.permute.xlu0 %5813
    %v5816 = vadd.f32 %v5806, %v5814
    %v5817 = vtanh.pop %v5816
    %5819 = vrot.lane.b32.xlu0 %v5817, 64
    %v5820 = vpop.permute.xlu0 %5819
    %v5822 = vmul.f32 %v5804, %v5820
    %5824 = vrot.lane.b32.xlu0 %v5822, 32
    %v5825 = vpop.permute.xlu0 %5824
    %5827 = vrot.lane.b32.xlu0 %v5541, 32
    %v5828 = vpop.permute.xlu0 %5827
    %v5830 = vsel %vm319, %v5825, %v5828
    %v5831 = vpack.c.bf16 %v5830, %v5830
    %v5832 = vld [vmem:[#allocation14] sm:$0xf]
    %v5833 = vld [vmem:[#allocation14 + $0x4] sm:$0xf]
    %v5834 = vld [vmem:[#allocation14 + $0x8] sm:$0xf]
    %v5835 = vld [vmem:[#allocation14 + $0xc] sm:$0xf]
    %v5836 = vld [vmem:[#allocation14 + $0x10] sm:$0xf]
    %v5837 = vld [vmem:[#allocation14 + $0x14] sm:$0xf]
    %v5838 = vld [vmem:[#allocation14 + $0x18] sm:$0xf]
    %v5839 = vld [vmem:[#allocation14 + $0x1c] sm:$0xf]
    %v5848 = vunpack.c.l.b16 %v5832
    %v5849 = vunpack.c.l.b16 %v5833
    %v5850 = vunpack.c.l.b16 %v5834
    %v5851 = vunpack.c.l.b16 %v5835
    %v5852 = vunpack.c.l.b16 %v5836
    %v5853 = vunpack.c.l.b16 %v5837
    %v5854 = vunpack.c.l.b16 %v5838
    %v5855 = vunpack.c.l.b16 %v5839
    %v5856 = vpack.c.b16 %v5849, %v5848
    %v5857 = vpack.c.b16 %v5851, %v5850
    %v5858 = vpack.c.b16 %v5853, %v5852
    %v5859 = vpack.c.b16 %v5855, %v5854
    %v5865 = vsel %vm1236, %v5831, 0
    %5867 = vmatprep.subr.bf16.mxu0 0
    %5868 = vmatpush1.bf16.msra.mxu0 0
    %5869 = vmatprep.subr.bf16.mxu0 0
    %5870 = vmatpush1.bf16.msra.mxu0 0
    %5871 = vmatprep.subr.bf16.mxu0 0
    %5872 = vmatpush1.bf16.msra.mxu0 0
    %5873 = vmatprep.subr.bf16.mxu0 0
    %5874 = vmatpush1.bf16.msra.mxu0 0
    %5875 = vmatprep.subr.bf16.mxu0 0
    %5876 = vmatpush1.bf16.msra.mxu0 %v5859
    %5877 = vmatprep.subr.bf16.mxu0 0
    %5878 = vmatpush1.bf16.msra.mxu0 %v5858
    %5879 = vmatprep.subr.bf16.mxu0 0
    %5880 = vmatpush1.bf16.msra.mxu0 %v5857
    %5881 = vmatprep.subr.bf16.mxu0 0
    %5882 = vmatpush1.bf16.msra.mxu0 %v5856
    %5883 = vmatprep.subr.bf16.mxu0 0
    %5884 = vmatpush2.bf16.msra.mxu0 0
    %5885 = vmatprep.subr.bf16.mxu0 0
    %5886 = vmatpush2.bf16.msra.mxu0 0
    %5887 = vmatprep.subr.bf16.mxu0 0
    %5888 = vmatpush2.bf16.msra.mxu0 0
    %5889 = vmatprep.subr.bf16.mxu0 0
    %5890 = vmatpush2.bf16.msra.mxu0 0
    %5891 = vmatprep.subr.bf16.mxu0 0
    %5892 = vmatpush2.bf16.msra.mxu0 0
    %5893 = vmatprep.subr.bf16.mxu0 0
    %5894 = vmatpush2.bf16.msra.mxu0 0
    %5895 = vmatprep.subr.bf16.mxu0 0
    %5896 = vmatpush2.bf16.msra.mxu0 0
    %5897 = vmatprep.subr.bf16.mxu0 0
    %5898 = vmatpush2.bf16.msra.mxu0 0
    %5899 = vmatprep.mubr.bf16.mxu0 0
    %5900 = vmatmul.mubr.bf16.gmra.mxu0 %v5865
    %v5901 = vpop.f32.mrf.mxu0
    %v5902 = vadd.f32 0.0, %v5901
    %v5903 = vpop.f32.mrf.mxu0
    %v5904 = vpop.f32.mrf.mxu0
    %v5905 = vpop.f32.mrf.mxu0
    %5906 = vdwg.mxu0
    %v5907 = vadd.f32 %v5902, %v195
    %vm5908 = vcmp.gt.f32.partialorder %v5907, 0.0
    %v5909 = vmul.f32 %v5907, 0.2
    %v5910 = vsel %vm5908, %v5907, %v5909
    %v5911 = vpack.c.bf16 %v5910, %v5910
    %v5912 = vld [vmem:[%s9] sm:$0xf]
    %v5913 = vld [vmem:[%s9 + $0x4] sm:$0xf]
    %v5914 = vld [vmem:[%s9 + $0x8] sm:$0xf]
    %v5915 = vld [vmem:[%s9 + $0xc] sm:$0xf]
    %v5920 = vunpack.c.l.b16 %v5912
    %v5921 = vunpack.c.l.b16 %v5913
    %v5922 = vunpack.c.l.b16 %v5914
    %v5923 = vunpack.c.l.b16 %v5915
    %v5924 = vpack.c.b16 %v5921, %v5920
    %v5925 = vpack.c.b16 %v5923, %v5922
    %v5929 = vsel %vm319, %v5911, 0
    %5931 = vmatprep.subr.bf16.mxu0 0
    %5932 = vmatpush1.bf16.msra.mxu0 0
    %5933 = vmatprep.subr.bf16.mxu0 0
    %5934 = vmatpush1.bf16.msra.mxu0 0
    %5935 = vmatprep.subr.bf16.mxu0 0
    %5936 = vmatpush1.bf16.msra.mxu0 0
    %5937 = vmatprep.subr.bf16.mxu0 0
    %5938 = vmatpush1.bf16.msra.mxu0 0
    %5939 = vmatprep.subr.bf16.mxu0 0
    %5940 = vmatpush1.bf16.msra.mxu0 0
    %5941 = vmatprep.subr.bf16.mxu0 0
    %5942 = vmatpush1.bf16.msra.mxu0 0
    %5943 = vmatprep.subr.bf16.mxu0 0
    %5944 = vmatpush1.bf16.msra.mxu0 %v5925
    %5945 = vmatprep.subr.bf16.mxu0 0
    %5946 = vmatpush1.bf16.msra.mxu0 %v5924
    %5947 = vmatprep.subr.bf16.mxu0 0
    %5948 = vmatpush2.bf16.msra.mxu0 0
    %5949 = vmatprep.subr.bf16.mxu0 0
    %5950 = vmatpush2.bf16.msra.mxu0 0
    %5951 = vmatprep.subr.bf16.mxu0 0
    %5952 = vmatpush2.bf16.msra.mxu0 0
    %5953 = vmatprep.subr.bf16.mxu0 0
    %5954 = vmatpush2.bf16.msra.mxu0 0
    %5955 = vmatprep.subr.bf16.mxu0 0
    %5956 = vmatpush2.bf16.msra.mxu0 0
    %5957 = vmatprep.subr.bf16.mxu0 0
    %5958 = vmatpush2.bf16.msra.mxu0 0
    %5959 = vmatprep.subr.bf16.mxu0 0
    %5960 = vmatpush2.bf16.msra.mxu0 0
    %5961 = vmatprep.subr.bf16.mxu0 0
    %5962 = vmatpush2.bf16.msra.mxu0 0
    %5963 = vmatprep.mubr.bf16.mxu0 0
    %5964 = vmatmul.mubr.bf16.gmra.mxu0 %v5929
    %v5965 = vpop.f32.mrf.mxu0
    %v5966 = vadd.f32 %v202, %v5965
    %v5967 = vpop.f32.mrf.mxu0
    %v5968 = vpop.f32.mrf.mxu0
    %v5969 = vpop.f32.mrf.mxu0
    %5970 = vdwg.mxu0
    %s5971 = scalar_lea.vmem [#allocation17], 24
    %5972 = vst.msk [vmem:[%s5971] sm:$0xff] %vm1298, %v5966
    %v5981 = vrot.slane %v5505, 7
    %v5982 = vsel %vm1172, %v5981, %v5504
    %v5983 = vrot.slane %v5506, 6
    %v5984 = vsel %vm1175, %v5983, %v5982
    %v5985 = vrot.slane %v5507, 5
    %v5986 = vsel %vm1178, %v5985, %v5984
    %v5987 = vrot.slane %v5508, 4
    %v5988 = vsel %vm1181, %v5987, %v5986
    %v5989 = vrot.slane %v5509, 3
    %v5990 = vsel %vm1184, %v5989, %v5988
    %v5991 = vrot.slane %v5510, 2
    %v5992 = vsel %vm1187, %v5991, %v5990
    %v5993 = vrot.slane %v5511, 1
    %v5994 = vsel %vm1190, %v5993, %v5992
    %s5996 = scalar_lea.vmem [#allocation18], 24
    %5997 = vst.msk [vmem:[%s5996] sm:$0xff] %vm785, %v5994
    %v5998 = vsel %vm1298, %v5966, -inf
    %5999 = vmax.xlane.f32.xlu0 %v5998
    %v6000 = vpop.xlane.xlu0 %5999
    %vm6001 = vcmp.eq.f32.partialorder %v5966, %v6000
    %v6002 = vsel %vm6001, %v175, 48
    %v6003 = vsel %vm1298, %v6002, 2147483647
    %v6004 = vand.u32 %v6003, 65535
    %v6005 = vshra.s32 %v6003, 16
    %v6006 = vcvt.s32.f32 %v6004
    %v6007 = vcvt.s32.f32 %v6005
    %6008 = vmin.xlane.f32.xlu0 %v6007
    %v6009 = vpop.xlane.xlu0 %6008
    %vm6010 = vcmp.eq.f32.partialorder %v6007, %v6009
    %v6011 = vsel %vm6010, %v6006, inf
    %6012 = vmin.xlane.f32.xlu0 %v6011
    %v6013 = vpop.xlane.xlu0 %6012
    %v6014 = vcvt.f32.s32 %v6013
    %v6015 = vcvt.f32.s32 %v6009
    %v6016 = vshll.u32 %v6015, 16
    %v6017 = vadd.s32 %v6016, %v6014
    %vm6018 = vcmp.eq.s32.totalorder %v175, %v6017
    %v6019 = vsel %vm6018, 1, 0
    %v6020 = vcvt.s32.f32 %v6019
    %v6021 = vpack.c.bf16 %v6020, %v6020
    %v6022 = vld [vmem:[#allocation2] sm:$0xf]
    %v6023 = vld [vmem:[#allocation2 + $0x4] sm:$0xf]
    %v6024 = vld [vmem:[#allocation2 + $0x8] sm:$0xf]
    %v6025 = vld [vmem:[#allocation2 + $0xc] sm:$0xf]
    %v6026 = vld [vmem:[#allocation2 + $0x10] sm:$0xf]
    %v6027 = vld [vmem:[#allocation2 + $0x14] sm:$0xf]
    %v6028 = vld [vmem:[#allocation2 + $0x18] sm:$0xf]
    %v6029 = vld [vmem:[#allocation2 + $0x1c] sm:$0xf]
    %v6030 = vld [vmem:[#allocation5] sm:$0x1]
    %v6031 = vld [vmem:[#allocation5 + $0x1] sm:$0x1]
    %v6032 = vld [vmem:[#allocation5 + $0x2] sm:$0x1]
    %v6033 = vld [vmem:[#allocation5 + $0x3] sm:$0x1]
    %v6034 = vld [vmem:[#allocation5 + $0x4] sm:$0x1]
    %v6035 = vld [vmem:[#allocation5 + $0x5] sm:$0x1]
    %v6036 = vld [vmem:[#allocation5 + $0x6] sm:$0x1]
    %v6037 = vld [vmem:[#allocation5 + $0x7] sm:$0x1]
    %v6039 = vcombine.high %v5902, %v5902
    %v6041 = vunpack.c.l.s4 1966171168
    %v6042 = vunpack.c.0.s8 %v6041
    %v6043 = vlaneseq
    %v6044 = vshrl.u32 %v6043, 7
    %v6045 = vsub.s32 %v6042, %v6044
    %v6046 = vrot.slane %v5902, %v6045
    %v6048 = vunpack.c.l.s4 1966171168
    %v6049 = vunpack.c.0.s8 %v6048
    %v6050 = vlaneseq
    %v6051 = vshrl.u32 %v6050, 7
    %v6052 = vsub.s32 %v6049, %v6051
    %v6053 = vrot.slane %v6039, %v6052
    %v6054 = vcombine.high %v6046, %v6046
    %v6055 = vcombine.high %v6053, %v6053
    %v6057 = vunpack.c.l.s4 1966171168
    %v6058 = vunpack.c.0.s8 %v6057
    %v6059 = vlaneseq
    %v6060 = vshrl.u32 %v6059, 7
    %v6061 = vsub.s32 %v6058, %v6060
    %v6062 = vrot.slane %v6046, %v6061
    %v6064 = vunpack.c.l.s4 1966171168
    %v6065 = vunpack.c.0.s8 %v6064
    %v6066 = vlaneseq
    %v6067 = vshrl.u32 %v6066, 7
    %v6068 = vsub.s32 %v6065, %v6067
    %v6069 = vrot.slane %v6053, %v6068
    %v6071 = vunpack.c.l.s4 1966171168
    %v6072 = vunpack.c.0.s8 %v6071
    %v6073 = vlaneseq
    %v6074 = vshrl.u32 %v6073, 7
    %v6075 = vsub.s32 %v6072, %v6074
    %v6076 = vrot.slane %v6054, %v6075
    %v6078 = vunpack.c.l.s4 1966171168
    %v6079 = vunpack.c.0.s8 %v6078
    %v6080 = vlaneseq
    %v6081 = vshrl.u32 %v6080, 7
    %v6082 = vsub.s32 %v6079, %v6081
    %v6083 = vrot.slane %v6055, %v6082
    %v6084 = vcombine.high %v6062, %v6062
    %v6085 = vcombine.high %v6069, %v6069
    %v6086 = vcombine.high %v6076, %v6076
    %v6087 = vcombine.high %v6083, %v6083
    %v6096 = vpack.c.bf16 %v6062, %v6062
    %v6097 = vpack.c.bf16 %v6076, %v6076
    %v6098 = vpack.c.bf16 %v6084, %v6084
    %v6099 = vpack.c.bf16 %v6086, %v6086
    %v6100 = vpack.c.bf16 %v6069, %v6069
    %v6101 = vpack.c.bf16 %v6083, %v6083
    %v6102 = vpack.c.bf16 %v6085, %v6085
    %v6103 = vpack.c.bf16 %v6087, %v6087
    %6105 = vrot.lane.b32.xlu0 %v6096, 96
    %v6106 = vpop.permute.xlu0 %6105
    %v6108 = vsel %vm319, %v6106, 0
    %v6111 = vsel %vm319, %v6022, 0
    %6113 = vmatprep.subr.bf16.mxu0 0
    %6114 = vmatpush1.bf16.xpose.msra.mxu0 0
    %6115 = vmatprep.subr.bf16.mxu0 0
    %6116 = vmatpush1.bf16.xpose.msra.mxu0 0
    %6117 = vmatprep.subr.bf16.mxu0 0
    %6118 = vmatpush1.bf16.xpose.msra.mxu0 0
    %6119 = vmatprep.subr.bf16.mxu0 0
    %6120 = vmatpush1.bf16.xpose.msra.mxu0 0
    %6121 = vmatprep.subr.bf16.mxu0 0
    %6122 = vmatpush1.bf16.xpose.msra.mxu0 0
    %6123 = vmatprep.subr.bf16.mxu0 0
    %6124 = vmatpush1.bf16.xpose.msra.mxu0 0
    %6125 = vmatprep.subr.bf16.mxu0 0
    %6126 = vmatpush1.bf16.xpose.msra.mxu0 0
    %6127 = vmatprep.subr.bf16.mxu0 0
    %6128 = vmatpush1.bf16.xpose.msra.mxu0 %v6111
    %6129 = vmatprep.subr.bf16.mxu0 0
    %6130 = vmatpush2.bf16.xpose.msra.mxu0 0
    %6131 = vmatprep.subr.bf16.mxu0 0
    %6132 = vmatpush2.bf16.xpose.msra.mxu0 0
    %6133 = vmatprep.subr.bf16.mxu0 0
    %6134 = vmatpush2.bf16.xpose.msra.mxu0 0
    %6135 = vmatprep.subr.bf16.mxu0 0
    %6136 = vmatpush2.bf16.xpose.msra.mxu0 0
    %6137 = vmatprep.subr.bf16.mxu0 0
    %6138 = vmatpush2.bf16.xpose.msra.mxu0 0
    %6139 = vmatprep.subr.bf16.mxu0 0
    %6140 = vmatpush2.bf16.xpose.msra.mxu0 0
    %6141 = vmatprep.subr.bf16.mxu0 0
    %6142 = vmatpush2.bf16.xpose.msra.mxu0 0
    %6143 = vmatprep.subr.bf16.mxu0 0
    %6144 = vmatpush2.bf16.xpose.msra.mxu0 0
    %6145 = vmatprep.mubr.bf16.mxu0 0
    %6146 = vmatmul.mubr.bf16.gmra.mxu0 %v6108
    %v6147 = vpop.f32.mrf.mxu0
    %v6148 = vadd.f32 %v6030, %v6147
    %v6149 = vpop.f32.mrf.mxu0
    %v6150 = vpop.f32.mrf.mxu0
    %v6151 = vpop.f32.mrf.mxu0
    %6152 = vdwg.mxu0
    %6154 = vrot.lane.b32.xlu0 %v6097, 96
    %v6155 = vpop.permute.xlu0 %6154
    %v6157 = vsel %vm319, %v6155, 0
    %v6160 = vsel %vm319, %v6023, 0
    %6162 = vmatprep.subr.bf16.mxu0 0
    %6163 = vmatpush1.bf16.xpose.msra.mxu0 0
    %6164 = vmatprep.subr.bf16.mxu0 0
    %6165 = vmatpush1.bf16.xpose.msra.mxu0 0
    %6166 = vmatprep.subr.bf16.mxu0 0
    %6167 = vmatpush1.bf16.xpose.msra.mxu0 0
    %6168 = vmatprep.subr.bf16.mxu0 0
    %6169 = vmatpush1.bf16.xpose.msra.mxu0 0
    %6170 = vmatprep.subr.bf16.mxu0 0
    %6171 = vmatpush1.bf16.xpose.msra.mxu0 0
    %6172 = vmatprep.subr.bf16.mxu0 0
    %6173 = vmatpush1.bf16.xpose.msra.mxu0 0
    %6174 = vmatprep.subr.bf16.mxu0 0
    %6175 = vmatpush1.bf16.xpose.msra.mxu0 0
    %6176 = vmatprep.subr.bf16.mxu0 0
    %6177 = vmatpush1.bf16.xpose.msra.mxu0 %v6160
    %6178 = vmatprep.subr.bf16.mxu0 0
    %6179 = vmatpush2.bf16.xpose.msra.mxu0 0
    %6180 = vmatprep.subr.bf16.mxu0 0
    %6181 = vmatpush2.bf16.xpose.msra.mxu0 0
    %6182 = vmatprep.subr.bf16.mxu0 0
    %6183 = vmatpush2.bf16.xpose.msra.mxu0 0
    %6184 = vmatprep.subr.bf16.mxu0 0
    %6185 = vmatpush2.bf16.xpose.msra.mxu0 0
    %6186 = vmatprep.subr.bf16.mxu0 0
    %6187 = vmatpush2.bf16.xpose.msra.mxu0 0
    %6188 = vmatprep.subr.bf16.mxu0 0
    %6189 = vmatpush2.bf16.xpose.msra.mxu0 0
    %6190 = vmatprep.subr.bf16.mxu0 0
    %6191 = vmatpush2.bf16.xpose.msra.mxu0 0
    %6192 = vmatprep.subr.bf16.mxu0 0
    %6193 = vmatpush2.bf16.xpose.msra.mxu0 0
    %6194 = vmatprep.mubr.bf16.mxu0 0
    %6195 = vmatmul.mubr.bf16.gmra.mxu0 %v6157
    %v6196 = vpop.f32.mrf.mxu0
    %v6197 = vadd.f32 %v6031, %v6196
    %v6198 = vpop.f32.mrf.mxu0
    %v6199 = vpop.f32.mrf.mxu0
    %v6200 = vpop.f32.mrf.mxu0
    %6201 = vdwg.mxu0
    %6203 = vrot.lane.b32.xlu0 %v6098, 96
    %v6204 = vpop.permute.xlu0 %6203
    %v6206 = vsel %vm319, %v6204, 0
    %v6209 = vsel %vm319, %v6024, 0
    %6211 = vmatprep.subr.bf16.mxu0 0
    %6212 = vmatpush1.bf16.xpose.msra.mxu0 0
    %6213 = vmatprep.subr.bf16.mxu0 0
    %6214 = vmatpush1.bf16.xpose.msra.mxu0 0
    %6215 = vmatprep.subr.bf16.mxu0 0
    %6216 = vmatpush1.bf16.xpose.msra.mxu0 0
    %6217 = vmatprep.subr.bf16.mxu0 0
    %6218 = vmatpush1.bf16.xpose.msra.mxu0 0
    %6219 = vmatprep.subr.bf16.mxu0 0
    %6220 = vmatpush1.bf16.xpose.msra.mxu0 0
    %6221 = vmatprep.subr.bf16.mxu0 0
    %6222 = vmatpush1.bf16.xpose.msra.mxu0 0
    %6223 = vmatprep.subr.bf16.mxu0 0
    %6224 = vmatpush1.bf16.xpose.msra.mxu0 0
    %6225 = vmatprep.subr.bf16.mxu0 0
    %6226 = vmatpush1.bf16.xpose.msra.mxu0 %v6209
    %6227 = vmatprep.subr.bf16.mxu0 0
    %6228 = vmatpush2.bf16.xpose.msra.mxu0 0
    %6229 = vmatprep.subr.bf16.mxu0 0
    %6230 = vmatpush2.bf16.xpose.msra.mxu0 0
    %6231 = vmatprep.subr.bf16.mxu0 0
    %6232 = vmatpush2.bf16.xpose.msra.mxu0 0
    %6233 = vmatprep.subr.bf16.mxu0 0
    %6234 = vmatpush2.bf16.xpose.msra.mxu0 0
    %6235 = vmatprep.subr.bf16.mxu0 0
    %6236 = vmatpush2.bf16.xpose.msra.mxu0 0
    %6237 = vmatprep.subr.bf16.mxu0 0
    %6238 = vmatpush2.bf16.xpose.msra.mxu0 0
    %6239 = vmatprep.subr.bf16.mxu0 0
    %6240 = vmatpush2.bf16.xpose.msra.mxu0 0
    %6241 = vmatprep.subr.bf16.mxu0 0
    %6242 = vmatpush2.bf16.xpose.msra.mxu0 0
    %6243 = vmatprep.mubr.bf16.mxu0 0
    %6244 = vmatmul.mubr.bf16.gmra.mxu0 %v6206
    %v6245 = vpop.f32.mrf.mxu0
    %v6246 = vadd.f32 %v6032, %v6245
    %v6247 = vpop.f32.mrf.mxu0
    %v6248 = vpop.f32.mrf.mxu0
    %v6249 = vpop.f32.mrf.mxu0
    %6250 = vdwg.mxu0
    %6252 = vrot.lane.b32.xlu0 %v6099, 96
    %v6253 = vpop.permute.xlu0 %6252
    %v6255 = vsel %vm319, %v6253, 0
    %v6258 = vsel %vm319, %v6025, 0
    %6260 = vmatprep.subr.bf16.mxu0 0
    %6261 = vmatpush1.bf16.xpose.msra.mxu0 0
    %6262 = vmatprep.subr.bf16.mxu0 0
    %6263 = vmatpush1.bf16.xpose.msra.mxu0 0
    %6264 = vmatprep.subr.bf16.mxu0 0
    %6265 = vmatpush1.bf16.xpose.msra.mxu0 0
    %6266 = vmatprep.subr.bf16.mxu0 0
    %6267 = vmatpush1.bf16.xpose.msra.mxu0 0
    %6268 = vmatprep.subr.bf16.mxu0 0
    %6269 = vmatpush1.bf16.xpose.msra.mxu0 0
    %6270 = vmatprep.subr.bf16.mxu0 0
    %6271 = vmatpush1.bf16.xpose.msra.mxu0 0
    %6272 = vmatprep.subr.bf16.mxu0 0
    %6273 = vmatpush1.bf16.xpose.msra.mxu0 0
    %6274 = vmatprep.subr.bf16.mxu0 0
    %6275 = vmatpush1.bf16.xpose.msra.mxu0 %v6258
    %6276 = vmatprep.subr.bf16.mxu0 0
    %6277 = vmatpush2.bf16.xpose.msra.mxu0 0
    %6278 = vmatprep.subr.bf16.mxu0 0
    %6279 = vmatpush2.bf16.xpose.msra.mxu0 0
    %6280 = vmatprep.subr.bf16.mxu0 0
    %6281 = vmatpush2.bf16.xpose.msra.mxu0 0
    %6282 = vmatprep.subr.bf16.mxu0 0
    %6283 = vmatpush2.bf16.xpose.msra.mxu0 0
    %6284 = vmatprep.subr.bf16.mxu0 0
    %6285 = vmatpush2.bf16.xpose.msra.mxu0 0
    %6286 = vmatprep.subr.bf16.mxu0 0
    %6287 = vmatpush2.bf16.xpose.msra.mxu0 0
    %6288 = vmatprep.subr.bf16.mxu0 0
    %6289 = vmatpush2.bf16.xpose.msra.mxu0 0
    %6290 = vmatprep.subr.bf16.mxu0 0
    %6291 = vmatpush2.bf16.xpose.msra.mxu0 0
    %6292 = vmatprep.mubr.bf16.mxu0 0
    %6293 = vmatmul.mubr.bf16.gmra.mxu0 %v6255
    %v6294 = vpop.f32.mrf.mxu0
    %v6295 = vadd.f32 %v6033, %v6294
    %v6296 = vpop.f32.mrf.mxu0
    %v6297 = vpop.f32.mrf.mxu0
    %v6298 = vpop.f32.mrf.mxu0
    %6299 = vdwg.mxu0
    %6301 = vrot.lane.b32.xlu0 %v6100, 96
    %v6302 = vpop.permute.xlu0 %6301
    %v6304 = vsel %vm319, %v6302, 0
    %v6307 = vsel %vm319, %v6026, 0
    %6309 = vmatprep.subr.bf16.mxu0 0
    %6310 = vmatpush1.bf16.xpose.msra.mxu0 0
    %6311 = vmatprep.subr.bf16.mxu0 0
    %6312 = vmatpush1.bf16.xpose.msra.mxu0 0
    %6313 = vmatprep.subr.bf16.mxu0 0
    %6314 = vmatpush1.bf16.xpose.msra.mxu0 0
    %6315 = vmatprep.subr.bf16.mxu0 0
    %6316 = vmatpush1.bf16.xpose.msra.mxu0 0
    %6317 = vmatprep.subr.bf16.mxu0 0
    %6318 = vmatpush1.bf16.xpose.msra.mxu0 0
    %6319 = vmatprep.subr.bf16.mxu0 0
    %6320 = vmatpush1.bf16.xpose.msra.mxu0 0
    %6321 = vmatprep.subr.bf16.mxu0 0
    %6322 = vmatpush1.bf16.xpose.msra.mxu0 0
    %6323 = vmatprep.subr.bf16.mxu0 0
    %6324 = vmatpush1.bf16.xpose.msra.mxu0 %v6307
    %6325 = vmatprep.subr.bf16.mxu0 0
    %6326 = vmatpush2.bf16.xpose.msra.mxu0 0
    %6327 = vmatprep.subr.bf16.mxu0 0
    %6328 = vmatpush2.bf16.xpose.msra.mxu0 0
    %6329 = vmatprep.subr.bf16.mxu0 0
    %6330 = vmatpush2.bf16.xpose.msra.mxu0 0
    %6331 = vmatprep.subr.bf16.mxu0 0
    %6332 = vmatpush2.bf16.xpose.msra.mxu0 0
    %6333 = vmatprep.subr.bf16.mxu0 0
    %6334 = vmatpush2.bf16.xpose.msra.mxu0 0
    %6335 = vmatprep.subr.bf16.mxu0 0
    %6336 = vmatpush2.bf16.xpose.msra.mxu0 0
    %6337 = vmatprep.subr.bf16.mxu0 0
    %6338 = vmatpush2.bf16.xpose.msra.mxu0 0
    %6339 = vmatprep.subr.bf16.mxu0 0
    %6340 = vmatpush2.bf16.xpose.msra.mxu0 0
    %6341 = vmatprep.mubr.bf16.mxu0 0
    %6342 = vmatmul.mubr.bf16.gmra.mxu0 %v6304
    %v6343 = vpop.f32.mrf.mxu0
    %v6344 = vadd.f32 %v6034, %v6343
    %v6345 = vpop.f32.mrf.mxu0
    %v6346 = vpop.f32.mrf.mxu0
    %v6347 = vpop.f32.mrf.mxu0
    %6348 = vdwg.mxu0
    %6350 = vrot.lane.b32.xlu0 %v6101, 96
    %v6351 = vpop.permute.xlu0 %6350
    %v6353 = vsel %vm319, %v6351, 0
    %v6356 = vsel %vm319, %v6027, 0
    %6358 = vmatprep.subr.bf16.mxu0 0
    %6359 = vmatpush1.bf16.xpose.msra.mxu0 0
    %6360 = vmatprep.subr.bf16.mxu0 0
    %6361 = vmatpush1.bf16.xpose.msra.mxu0 0
    %6362 = vmatprep.subr.bf16.mxu0 0
    %6363 = vmatpush1.bf16.xpose.msra.mxu0 0
    %6364 = vmatprep.subr.bf16.mxu0 0
    %6365 = vmatpush1.bf16.xpose.msra.mxu0 0
    %6366 = vmatprep.subr.bf16.mxu0 0
    %6367 = vmatpush1.bf16.xpose.msra.mxu0 0
    %6368 = vmatprep.subr.bf16.mxu0 0
    %6369 = vmatpush1.bf16.xpose.msra.mxu0 0
    %6370 = vmatprep.subr.bf16.mxu0 0
    %6371 = vmatpush1.bf16.xpose.msra.mxu0 0
    %6372 = vmatprep.subr.bf16.mxu0 0
    %6373 = vmatpush1.bf16.xpose.msra.mxu0 %v6356
    %6374 = vmatprep.subr.bf16.mxu0 0
    %6375 = vmatpush2.bf16.xpose.msra.mxu0 0
    %6376 = vmatprep.subr.bf16.mxu0 0
    %6377 = vmatpush2.bf16.xpose.msra.mxu0 0
    %6378 = vmatprep.subr.bf16.mxu0 0
    %6379 = vmatpush2.bf16.xpose.msra.mxu0 0
    %6380 = vmatprep.subr.bf16.mxu0 0
    %6381 = vmatpush2.bf16.xpose.msra.mxu0 0
    %6382 = vmatprep.subr.bf16.mxu0 0
    %6383 = vmatpush2.bf16.xpose.msra.mxu0 0
    %6384 = vmatprep.subr.bf16.mxu0 0
    %6385 = vmatpush2.bf16.xpose.msra.mxu0 0
    %6386 = vmatprep.subr.bf16.mxu0 0
    %6387 = vmatpush2.bf16.xpose.msra.mxu0 0
    %6388 = vmatprep.subr.bf16.mxu0 0
    %6389 = vmatpush2.bf16.xpose.msra.mxu0 0
    %6390 = vmatprep.mubr.bf16.mxu0 0
    %6391 = vmatmul.mubr.bf16.gmra.mxu0 %v6353
    %v6392 = vpop.f32.mrf.mxu0
    %v6393 = vadd.f32 %v6035, %v6392
    %v6394 = vpop.f32.mrf.mxu0
    %v6395 = vpop.f32.mrf.mxu0
    %v6396 = vpop.f32.mrf.mxu0
    %6397 = vdwg.mxu0
    %6399 = vrot.lane.b32.xlu0 %v6102, 96
    %v6400 = vpop.permute.xlu0 %6399
    %v6402 = vsel %vm319, %v6400, 0
    %v6405 = vsel %vm319, %v6028, 0
    %6407 = vmatprep.subr.bf16.mxu0 0
    %6408 = vmatpush1.bf16.xpose.msra.mxu0 0
    %6409 = vmatprep.subr.bf16.mxu0 0
    %6410 = vmatpush1.bf16.xpose.msra.mxu0 0
    %6411 = vmatprep.subr.bf16.mxu0 0
    %6412 = vmatpush1.bf16.xpose.msra.mxu0 0
    %6413 = vmatprep.subr.bf16.mxu0 0
    %6414 = vmatpush1.bf16.xpose.msra.mxu0 0
    %6415 = vmatprep.subr.bf16.mxu0 0
    %6416 = vmatpush1.bf16.xpose.msra.mxu0 0
    %6417 = vmatprep.subr.bf16.mxu0 0
    %6418 = vmatpush1.bf16.xpose.msra.mxu0 0
    %6419 = vmatprep.subr.bf16.mxu0 0
    %6420 = vmatpush1.bf16.xpose.msra.mxu0 0
    %6421 = vmatprep.subr.bf16.mxu0 0
    %6422 = vmatpush1.bf16.xpose.msra.mxu0 %v6405
    %6423 = vmatprep.subr.bf16.mxu0 0
    %6424 = vmatpush2.bf16.xpose.msra.mxu0 0
    %6425 = vmatprep.subr.bf16.mxu0 0
    %6426 = vmatpush2.bf16.xpose.msra.mxu0 0
    %6427 = vmatprep.subr.bf16.mxu0 0
    %6428 = vmatpush2.bf16.xpose.msra.mxu0 0
    %6429 = vmatprep.subr.bf16.mxu0 0
    %6430 = vmatpush2.bf16.xpose.msra.mxu0 0
    %6431 = vmatprep.subr.bf16.mxu0 0
    %6432 = vmatpush2.bf16.xpose.msra.mxu0 0
    %6433 = vmatprep.subr.bf16.mxu0 0
    %6434 = vmatpush2.bf16.xpose.msra.mxu0 0
    %6435 = vmatprep.subr.bf16.mxu0 0
    %6436 = vmatpush2.bf16.xpose.msra.mxu0 0
    %6437 = vmatprep.subr.bf16.mxu0 0
    %6438 = vmatpush2.bf16.xpose.msra.mxu0 0
    %6439 = vmatprep.mubr.bf16.mxu0 0
    %6440 = vmatmul.mubr.bf16.gmra.mxu0 %v6402
    %v6441 = vpop.f32.mrf.mxu0
    %v6442 = vadd.f32 %v6036, %v6441
    %v6443 = vpop.f32.mrf.mxu0
    %v6444 = vpop.f32.mrf.mxu0
    %v6445 = vpop.f32.mrf.mxu0
    %6446 = vdwg.mxu0
    %6448 = vrot.lane.b32.xlu0 %v6103, 96
    %v6449 = vpop.permute.xlu0 %6448
    %v6451 = vsel %vm319, %v6449, 0
    %v6454 = vsel %vm319, %v6029, 0
    %6456 = vmatprep.subr.bf16.mxu0 0
    %6457 = vmatpush1.bf16.xpose.msra.mxu0 0
    %6458 = vmatprep.subr.bf16.mxu0 0
    %6459 = vmatpush1.bf16.xpose.msra.mxu0 0
    %6460 = vmatprep.subr.bf16.mxu0 0
    %6461 = vmatpush1.bf16.xpose.msra.mxu0 0
    %6462 = vmatprep.subr.bf16.mxu0 0
    %6463 = vmatpush1.bf16.xpose.msra.mxu0 0
    %6464 = vmatprep.subr.bf16.mxu0 0
    %6465 = vmatpush1.bf16.xpose.msra.mxu0 0
    %6466 = vmatprep.subr.bf16.mxu0 0
    %6467 = vmatpush1.bf16.xpose.msra.mxu0 0
    %6468 = vmatprep.subr.bf16.mxu0 0
    %6469 = vmatpush1.bf16.xpose.msra.mxu0 0
    %6470 = vmatprep.subr.bf16.mxu0 0
    %6471 = vmatpush1.bf16.xpose.msra.mxu0 %v6454
    %6472 = vmatprep.subr.bf16.mxu0 0
    %6473 = vmatpush2.bf16.xpose.msra.mxu0 0
    %6474 = vmatprep.subr.bf16.mxu0 0
    %6475 = vmatpush2.bf16.xpose.msra.mxu0 0
    %6476 = vmatprep.subr.bf16.mxu0 0
    %6477 = vmatpush2.bf16.xpose.msra.mxu0 0
    %6478 = vmatprep.subr.bf16.mxu0 0
    %6479 = vmatpush2.bf16.xpose.msra.mxu0 0
    %6480 = vmatprep.subr.bf16.mxu0 0
    %6481 = vmatpush2.bf16.xpose.msra.mxu0 0
    %6482 = vmatprep.subr.bf16.mxu0 0
    %6483 = vmatpush2.bf16.xpose.msra.mxu0 0
    %6484 = vmatprep.subr.bf16.mxu0 0
    %6485 = vmatpush2.bf16.xpose.msra.mxu0 0
    %6486 = vmatprep.subr.bf16.mxu0 0
    %6487 = vmatpush2.bf16.xpose.msra.mxu0 0
    %6488 = vmatprep.mubr.bf16.mxu0 0
    %6489 = vmatmul.mubr.bf16.gmra.mxu0 %v6451
    %v6490 = vpop.f32.mrf.mxu0
    %v6491 = vadd.f32 %v6037, %v6490
    %v6492 = vpop.f32.mrf.mxu0
    %v6493 = vpop.f32.mrf.mxu0
    %v6494 = vpop.f32.mrf.mxu0
    %6495 = vdwg.mxu0
    %v6496 = vsel %vm688, %v6148, -inf
    %6497 = vmax.xlane.f32.xlu0 %v6496
    %v6498 = vpop.xlane.xlu0 %6497
    %v6499 = vsel %vm688, %v6197, -inf
    %6500 = vmax.xlane.f32.xlu0 %v6499
    %v6501 = vpop.xlane.xlu0 %6500
    %v6502 = vsel %vm688, %v6246, -inf
    %6503 = vmax.xlane.f32.xlu0 %v6502
    %v6504 = vpop.xlane.xlu0 %6503
    %v6505 = vsel %vm688, %v6295, -inf
    %6506 = vmax.xlane.f32.xlu0 %v6505
    %v6507 = vpop.xlane.xlu0 %6506
    %v6508 = vsel %vm688, %v6344, -inf
    %6509 = vmax.xlane.f32.xlu0 %v6508
    %v6510 = vpop.xlane.xlu0 %6509
    %v6511 = vsel %vm688, %v6393, -inf
    %6512 = vmax.xlane.f32.xlu0 %v6511
    %v6513 = vpop.xlane.xlu0 %6512
    %v6514 = vsel %vm688, %v6442, -inf
    %6515 = vmax.xlane.f32.xlu0 %v6514
    %v6516 = vpop.xlane.xlu0 %6515
    %v6517 = vsel %vm688, %v6491, -inf
    %6518 = vmax.xlane.f32.xlu0 %v6517
    %v6519 = vpop.xlane.xlu0 %6518
    %v6520 = vsub.f32 %v6148, %v6498
    %v6521 = vsub.f32 %v6197, %v6501
    %v6522 = vsub.f32 %v6246, %v6504
    %v6523 = vsub.f32 %v6295, %v6507
    %v6524 = vsub.f32 %v6344, %v6510
    %v6525 = vsub.f32 %v6393, %v6513
    %v6526 = vsub.f32 %v6442, %v6516
    %v6527 = vsub.f32 %v6491, %v6519
    %v6528 = vmul.f32 %v6520, 1.442695
    %v6529 = vpow.pop %v6528
    %v6530 = vmul.f32 %v6521, 1.442695
    %v6531 = vpow.pop %v6530
    %v6532 = vmul.f32 %v6522, 1.442695
    %v6533 = vpow.pop %v6532
    %v6534 = vmul.f32 %v6523, 1.442695
    %v6535 = vpow.pop %v6534
    %v6536 = vmul.f32 %v6524, 1.442695
    %v6537 = vpow.pop %v6536
    %v6538 = vmul.f32 %v6525, 1.442695
    %v6539 = vpow.pop %v6538
    %v6540 = vmul.f32 %v6526, 1.442695
    %v6541 = vpow.pop %v6540
    %v6542 = vmul.f32 %v6527, 1.442695
    %v6543 = vpow.pop %v6542
    %v6544 = vsel %vm688, %v6529, 0.0
    %6545 = vadd.xlane.f32.xlu0 %v6544
    %v6546 = vpop.xlane.xlu0 %6545
    %v6547 = vsel %vm688, %v6531, 0.0
    %6548 = vadd.xlane.f32.xlu0 %v6547
    %v6549 = vpop.xlane.xlu0 %6548
    %v6550 = vsel %vm688, %v6533, 0.0
    %6551 = vadd.xlane.f32.xlu0 %v6550
    %v6552 = vpop.xlane.xlu0 %6551
    %v6553 = vsel %vm688, %v6535, 0.0
    %6554 = vadd.xlane.f32.xlu0 %v6553
    %v6555 = vpop.xlane.xlu0 %6554
    %v6556 = vsel %vm688, %v6537, 0.0
    %6557 = vadd.xlane.f32.xlu0 %v6556
    %v6558 = vpop.xlane.xlu0 %6557
    %v6559 = vsel %vm688, %v6539, 0.0
    %6560 = vadd.xlane.f32.xlu0 %v6559
    %v6561 = vpop.xlane.xlu0 %6560
    %v6562 = vsel %vm688, %v6541, 0.0
    %6563 = vadd.xlane.f32.xlu0 %v6562
    %v6564 = vpop.xlane.xlu0 %6563
    %v6565 = vsel %vm688, %v6543, 0.0
    %6566 = vadd.xlane.f32.xlu0 %v6565
    %v6567 = vpop.xlane.xlu0 %6566
    %v6568 = vrcp.pop %v6546
    %v6569 = vrcp.pop %v6549
    %v6570 = vrcp.pop %v6552
    %v6571 = vrcp.pop %v6555
    %v6572 = vrcp.pop %v6558
    %v6573 = vrcp.pop %v6561
    %v6574 = vrcp.pop %v6564
    %v6575 = vrcp.pop %v6567
    %v6576 = vmul.f32 %v6529, %v6568
    %v6577 = vmul.f32 %v6531, %v6569
    %v6578 = vmul.f32 %v6533, %v6570
    %v6579 = vmul.f32 %v6535, %v6571
    %v6580 = vmul.f32 %v6537, %v6572
    %v6581 = vmul.f32 %v6539, %v6573
    %v6582 = vmul.f32 %v6541, %v6574
    %v6583 = vmul.f32 %v6543, %v6575
    %v6584 = vpack.c.bf16 %v6576, %v6576
    %v6585 = vpack.c.bf16 %v6577, %v6577
    %v6586 = vpack.c.bf16 %v6578, %v6578
    %v6587 = vpack.c.bf16 %v6579, %v6579
    %v6588 = vpack.c.bf16 %v6580, %v6580
    %v6589 = vpack.c.bf16 %v6581, %v6581
    %v6590 = vpack.c.bf16 %v6582, %v6582
    %v6591 = vpack.c.bf16 %v6583, %v6583
    %v6593 = vsel %vm785, %v6584, 0
    %v6595 = vsel %vm789, %v6022, 0
    %6597 = vmatprep.subr.bf16.mxu0 0
    %6598 = vmatpush1.bf16.msra.mxu0 0
    %6599 = vmatprep.subr.bf16.mxu0 0
    %6600 = vmatpush1.bf16.msra.mxu0 0
    %6601 = vmatprep.subr.bf16.mxu0 0
    %6602 = vmatpush1.bf16.msra.mxu0 0
    %6603 = vmatprep.subr.bf16.mxu0 0
    %6604 = vmatpush1.bf16.msra.mxu0 0
    %6605 = vmatprep.subr.bf16.mxu0 0
    %6606 = vmatpush1.bf16.msra.mxu0 0
    %6607 = vmatprep.subr.bf16.mxu0 0
    %6608 = vmatpush1.bf16.msra.mxu0 0
    %6609 = vmatprep.subr.bf16.mxu0 0
    %6610 = vmatpush1.bf16.msra.mxu0 0
    %6611 = vmatprep.subr.bf16.mxu0 0
    %6612 = vmatpush1.bf16.msra.mxu0 %v6595
    %6613 = vmatprep.subr.bf16.mxu0 0
    %6614 = vmatpush2.bf16.msra.mxu0 0
    %6615 = vmatprep.subr.bf16.mxu0 0
    %6616 = vmatpush2.bf16.msra.mxu0 0
    %6617 = vmatprep.subr.bf16.mxu0 0
    %6618 = vmatpush2.bf16.msra.mxu0 0
    %6619 = vmatprep.subr.bf16.mxu0 0
    %6620 = vmatpush2.bf16.msra.mxu0 0
    %6621 = vmatprep.subr.bf16.mxu0 0
    %6622 = vmatpush2.bf16.msra.mxu0 0
    %6623 = vmatprep.subr.bf16.mxu0 0
    %6624 = vmatpush2.bf16.msra.mxu0 0
    %6625 = vmatprep.subr.bf16.mxu0 0
    %6626 = vmatpush2.bf16.msra.mxu0 0
    %6627 = vmatprep.subr.bf16.mxu0 0
    %6628 = vmatpush2.bf16.msra.mxu0 0
    %6629 = vmatprep.mubr.bf16.mxu0 0
    %6630 = vmatmul.mubr.bf16.gmra.mxu0 %v6593
    %v6631 = vpop.f32.mrf.mxu0
    %v6632 = vadd.f32 0.0, %v6631
    %v6633 = vpop.f32.mrf.mxu0
    %v6634 = vpop.f32.mrf.mxu0
    %v6635 = vpop.f32.mrf.mxu0
    %6636 = vdwg.mxu0
    %v6638 = vsel %vm785, %v6585, 0
    %v6640 = vsel %vm789, %v6023, 0
    %6642 = vmatprep.subr.bf16.mxu0 0
    %6643 = vmatpush1.bf16.msra.mxu0 0
    %6644 = vmatprep.subr.bf16.mxu0 0
    %6645 = vmatpush1.bf16.msra.mxu0 0
    %6646 = vmatprep.subr.bf16.mxu0 0
    %6647 = vmatpush1.bf16.msra.mxu0 0
    %6648 = vmatprep.subr.bf16.mxu0 0
    %6649 = vmatpush1.bf16.msra.mxu0 0
    %6650 = vmatprep.subr.bf16.mxu0 0
    %6651 = vmatpush1.bf16.msra.mxu0 0
    %6652 = vmatprep.subr.bf16.mxu0 0
    %6653 = vmatpush1.bf16.msra.mxu0 0
    %6654 = vmatprep.subr.bf16.mxu0 0
    %6655 = vmatpush1.bf16.msra.mxu0 0
    %6656 = vmatprep.subr.bf16.mxu0 0
    %6657 = vmatpush1.bf16.msra.mxu0 %v6640
    %6658 = vmatprep.subr.bf16.mxu0 0
    %6659 = vmatpush2.bf16.msra.mxu0 0
    %6660 = vmatprep.subr.bf16.mxu0 0
    %6661 = vmatpush2.bf16.msra.mxu0 0
    %6662 = vmatprep.subr.bf16.mxu0 0
    %6663 = vmatpush2.bf16.msra.mxu0 0
    %6664 = vmatprep.subr.bf16.mxu0 0
    %6665 = vmatpush2.bf16.msra.mxu0 0
    %6666 = vmatprep.subr.bf16.mxu0 0
    %6667 = vmatpush2.bf16.msra.mxu0 0
    %6668 = vmatprep.subr.bf16.mxu0 0
    %6669 = vmatpush2.bf16.msra.mxu0 0
    %6670 = vmatprep.subr.bf16.mxu0 0
    %6671 = vmatpush2.bf16.msra.mxu0 0
    %6672 = vmatprep.subr.bf16.mxu0 0
    %6673 = vmatpush2.bf16.msra.mxu0 0
    %6674 = vmatprep.mubr.bf16.mxu0 0
    %6675 = vmatmul.mubr.bf16.gmra.mxu0 %v6638
    %v6676 = vpop.f32.mrf.mxu0
    %v6677 = vadd.f32 0.0, %v6676
    %v6678 = vpop.f32.mrf.mxu0
    %v6679 = vpop.f32.mrf.mxu0
    %v6680 = vpop.f32.mrf.mxu0
    %6681 = vdwg.mxu0
    %v6683 = vsel %vm785, %v6586, 0
    %v6685 = vsel %vm789, %v6024, 0
    %6687 = vmatprep.subr.bf16.mxu0 0
    %6688 = vmatpush1.bf16.msra.mxu0 0
    %6689 = vmatprep.subr.bf16.mxu0 0
    %6690 = vmatpush1.bf16.msra.mxu0 0
    %6691 = vmatprep.subr.bf16.mxu0 0
    %6692 = vmatpush1.bf16.msra.mxu0 0
    %6693 = vmatprep.subr.bf16.mxu0 0
    %6694 = vmatpush1.bf16.msra.mxu0 0
    %6695 = vmatprep.subr.bf16.mxu0 0
    %6696 = vmatpush1.bf16.msra.mxu0 0
    %6697 = vmatprep.subr.bf16.mxu0 0
    %6698 = vmatpush1.bf16.msra.mxu0 0
    %6699 = vmatprep.subr.bf16.mxu0 0
    %6700 = vmatpush1.bf16.msra.mxu0 0
    %6701 = vmatprep.subr.bf16.mxu0 0
    %6702 = vmatpush1.bf16.msra.mxu0 %v6685
    %6703 = vmatprep.subr.bf16.mxu0 0
    %6704 = vmatpush2.bf16.msra.mxu0 0
    %6705 = vmatprep.subr.bf16.mxu0 0
    %6706 = vmatpush2.bf16.msra.mxu0 0
    %6707 = vmatprep.subr.bf16.mxu0 0
    %6708 = vmatpush2.bf16.msra.mxu0 0
    %6709 = vmatprep.subr.bf16.mxu0 0
    %6710 = vmatpush2.bf16.msra.mxu0 0
    %6711 = vmatprep.subr.bf16.mxu0 0
    %6712 = vmatpush2.bf16.msra.mxu0 0
    %6713 = vmatprep.subr.bf16.mxu0 0
    %6714 = vmatpush2.bf16.msra.mxu0 0
    %6715 = vmatprep.subr.bf16.mxu0 0
    %6716 = vmatpush2.bf16.msra.mxu0 0
    %6717 = vmatprep.subr.bf16.mxu0 0
    %6718 = vmatpush2.bf16.msra.mxu0 0
    %6719 = vmatprep.mubr.bf16.mxu0 0
    %6720 = vmatmul.mubr.bf16.gmra.mxu0 %v6683
    %v6721 = vpop.f32.mrf.mxu0
    %v6722 = vadd.f32 0.0, %v6721
    %v6723 = vpop.f32.mrf.mxu0
    %v6724 = vpop.f32.mrf.mxu0
    %v6725 = vpop.f32.mrf.mxu0
    %6726 = vdwg.mxu0
    %v6728 = vsel %vm785, %v6587, 0
    %v6730 = vsel %vm789, %v6025, 0
    %6732 = vmatprep.subr.bf16.mxu0 0
    %6733 = vmatpush1.bf16.msra.mxu0 0
    %6734 = vmatprep.subr.bf16.mxu0 0
    %6735 = vmatpush1.bf16.msra.mxu0 0
    %6736 = vmatprep.subr.bf16.mxu0 0
    %6737 = vmatpush1.bf16.msra.mxu0 0
    %6738 = vmatprep.subr.bf16.mxu0 0
    %6739 = vmatpush1.bf16.msra.mxu0 0
    %6740 = vmatprep.subr.bf16.mxu0 0
    %6741 = vmatpush1.bf16.msra.mxu0 0
    %6742 = vmatprep.subr.bf16.mxu0 0
    %6743 = vmatpush1.bf16.msra.mxu0 0
    %6744 = vmatprep.subr.bf16.mxu0 0
    %6745 = vmatpush1.bf16.msra.mxu0 0
    %6746 = vmatprep.subr.bf16.mxu0 0
    %6747 = vmatpush1.bf16.msra.mxu0 %v6730
    %6748 = vmatprep.subr.bf16.mxu0 0
    %6749 = vmatpush2.bf16.msra.mxu0 0
    %6750 = vmatprep.subr.bf16.mxu0 0
    %6751 = vmatpush2.bf16.msra.mxu0 0
    %6752 = vmatprep.subr.bf16.mxu0 0
    %6753 = vmatpush2.bf16.msra.mxu0 0
    %6754 = vmatprep.subr.bf16.mxu0 0
    %6755 = vmatpush2.bf16.msra.mxu0 0
    %6756 = vmatprep.subr.bf16.mxu0 0
    %6757 = vmatpush2.bf16.msra.mxu0 0
    %6758 = vmatprep.subr.bf16.mxu0 0
    %6759 = vmatpush2.bf16.msra.mxu0 0
    %6760 = vmatprep.subr.bf16.mxu0 0
    %6761 = vmatpush2.bf16.msra.mxu0 0
    %6762 = vmatprep.subr.bf16.mxu0 0
    %6763 = vmatpush2.bf16.msra.mxu0 0
    %6764 = vmatprep.mubr.bf16.mxu0 0
    %6765 = vmatmul.mubr.bf16.gmra.mxu0 %v6728
    %v6766 = vpop.f32.mrf.mxu0
    %v6767 = vadd.f32 0.0, %v6766
    %v6768 = vpop.f32.mrf.mxu0
    %v6769 = vpop.f32.mrf.mxu0
    %v6770 = vpop.f32.mrf.mxu0
    %6771 = vdwg.mxu0
    %v6773 = vsel %vm785, %v6588, 0
    %v6775 = vsel %vm789, %v6026, 0
    %6777 = vmatprep.subr.bf16.mxu0 0
    %6778 = vmatpush1.bf16.msra.mxu0 0
    %6779 = vmatprep.subr.bf16.mxu0 0
    %6780 = vmatpush1.bf16.msra.mxu0 0
    %6781 = vmatprep.subr.bf16.mxu0 0
    %6782 = vmatpush1.bf16.msra.mxu0 0
    %6783 = vmatprep.subr.bf16.mxu0 0
    %6784 = vmatpush1.bf16.msra.mxu0 0
    %6785 = vmatprep.subr.bf16.mxu0 0
    %6786 = vmatpush1.bf16.msra.mxu0 0
    %6787 = vmatprep.subr.bf16.mxu0 0
    %6788 = vmatpush1.bf16.msra.mxu0 0
    %6789 = vmatprep.subr.bf16.mxu0 0
    %6790 = vmatpush1.bf16.msra.mxu0 0
    %6791 = vmatprep.subr.bf16.mxu0 0
    %6792 = vmatpush1.bf16.msra.mxu0 %v6775
    %6793 = vmatprep.subr.bf16.mxu0 0
    %6794 = vmatpush2.bf16.msra.mxu0 0
    %6795 = vmatprep.subr.bf16.mxu0 0
    %6796 = vmatpush2.bf16.msra.mxu0 0
    %6797 = vmatprep.subr.bf16.mxu0 0
    %6798 = vmatpush2.bf16.msra.mxu0 0
    %6799 = vmatprep.subr.bf16.mxu0 0
    %6800 = vmatpush2.bf16.msra.mxu0 0
    %6801 = vmatprep.subr.bf16.mxu0 0
    %6802 = vmatpush2.bf16.msra.mxu0 0
    %6803 = vmatprep.subr.bf16.mxu0 0
    %6804 = vmatpush2.bf16.msra.mxu0 0
    %6805 = vmatprep.subr.bf16.mxu0 0
    %6806 = vmatpush2.bf16.msra.mxu0 0
    %6807 = vmatprep.subr.bf16.mxu0 0
    %6808 = vmatpush2.bf16.msra.mxu0 0
    %6809 = vmatprep.mubr.bf16.mxu0 0
    %6810 = vmatmul.mubr.bf16.gmra.mxu0 %v6773
    %v6811 = vpop.f32.mrf.mxu0
    %v6812 = vadd.f32 0.0, %v6811
    %v6813 = vpop.f32.mrf.mxu0
    %v6814 = vpop.f32.mrf.mxu0
    %v6815 = vpop.f32.mrf.mxu0
    %6816 = vdwg.mxu0
    %v6818 = vsel %vm785, %v6589, 0
    %v6820 = vsel %vm789, %v6027, 0
    %6822 = vmatprep.subr.bf16.mxu0 0
    %6823 = vmatpush1.bf16.msra.mxu0 0
    %6824 = vmatprep.subr.bf16.mxu0 0
    %6825 = vmatpush1.bf16.msra.mxu0 0
    %6826 = vmatprep.subr.bf16.mxu0 0
    %6827 = vmatpush1.bf16.msra.mxu0 0
    %6828 = vmatprep.subr.bf16.mxu0 0
    %6829 = vmatpush1.bf16.msra.mxu0 0
    %6830 = vmatprep.subr.bf16.mxu0 0
    %6831 = vmatpush1.bf16.msra.mxu0 0
    %6832 = vmatprep.subr.bf16.mxu0 0
    %6833 = vmatpush1.bf16.msra.mxu0 0
    %6834 = vmatprep.subr.bf16.mxu0 0
    %6835 = vmatpush1.bf16.msra.mxu0 0
    %6836 = vmatprep.subr.bf16.mxu0 0
    %6837 = vmatpush1.bf16.msra.mxu0 %v6820
    %6838 = vmatprep.subr.bf16.mxu0 0
    %6839 = vmatpush2.bf16.msra.mxu0 0
    %6840 = vmatprep.subr.bf16.mxu0 0
    %6841 = vmatpush2.bf16.msra.mxu0 0
    %6842 = vmatprep.subr.bf16.mxu0 0
    %6843 = vmatpush2.bf16.msra.mxu0 0
    %6844 = vmatprep.subr.bf16.mxu0 0
    %6845 = vmatpush2.bf16.msra.mxu0 0
    %6846 = vmatprep.subr.bf16.mxu0 0
    %6847 = vmatpush2.bf16.msra.mxu0 0
    %6848 = vmatprep.subr.bf16.mxu0 0
    %6849 = vmatpush2.bf16.msra.mxu0 0
    %6850 = vmatprep.subr.bf16.mxu0 0
    %6851 = vmatpush2.bf16.msra.mxu0 0
    %6852 = vmatprep.subr.bf16.mxu0 0
    %6853 = vmatpush2.bf16.msra.mxu0 0
    %6854 = vmatprep.mubr.bf16.mxu0 0
    %6855 = vmatmul.mubr.bf16.gmra.mxu0 %v6818
    %v6856 = vpop.f32.mrf.mxu0
    %v6857 = vadd.f32 0.0, %v6856
    %v6858 = vpop.f32.mrf.mxu0
    %v6859 = vpop.f32.mrf.mxu0
    %v6860 = vpop.f32.mrf.mxu0
    %6861 = vdwg.mxu0
    %v6863 = vsel %vm785, %v6590, 0
    %v6865 = vsel %vm789, %v6028, 0
    %6867 = vmatprep.subr.bf16.mxu0 0
    %6868 = vmatpush1.bf16.msra.mxu0 0
    %6869 = vmatprep.subr.bf16.mxu0 0
    %6870 = vmatpush1.bf16.msra.mxu0 0
    %6871 = vmatprep.subr.bf16.mxu0 0
    %6872 = vmatpush1.bf16.msra.mxu0 0
    %6873 = vmatprep.subr.bf16.mxu0 0
    %6874 = vmatpush1.bf16.msra.mxu0 0
    %6875 = vmatprep.subr.bf16.mxu0 0
    %6876 = vmatpush1.bf16.msra.mxu0 0
    %6877 = vmatprep.subr.bf16.mxu0 0
    %6878 = vmatpush1.bf16.msra.mxu0 0
    %6879 = vmatprep.subr.bf16.mxu0 0
    %6880 = vmatpush1.bf16.msra.mxu0 0
    %6881 = vmatprep.subr.bf16.mxu0 0
    %6882 = vmatpush1.bf16.msra.mxu0 %v6865
    %6883 = vmatprep.subr.bf16.mxu0 0
    %6884 = vmatpush2.bf16.msra.mxu0 0
    %6885 = vmatprep.subr.bf16.mxu0 0
    %6886 = vmatpush2.bf16.msra.mxu0 0
    %6887 = vmatprep.subr.bf16.mxu0 0
    %6888 = vmatpush2.bf16.msra.mxu0 0
    %6889 = vmatprep.subr.bf16.mxu0 0
    %6890 = vmatpush2.bf16.msra.mxu0 0
    %6891 = vmatprep.subr.bf16.mxu0 0
    %6892 = vmatpush2.bf16.msra.mxu0 0
    %6893 = vmatprep.subr.bf16.mxu0 0
    %6894 = vmatpush2.bf16.msra.mxu0 0
    %6895 = vmatprep.subr.bf16.mxu0 0
    %6896 = vmatpush2.bf16.msra.mxu0 0
    %6897 = vmatprep.subr.bf16.mxu0 0
    %6898 = vmatpush2.bf16.msra.mxu0 0
    %6899 = vmatprep.mubr.bf16.mxu0 0
    %6900 = vmatmul.mubr.bf16.gmra.mxu0 %v6863
    %v6901 = vpop.f32.mrf.mxu0
    %v6902 = vadd.f32 0.0, %v6901
    %v6903 = vpop.f32.mrf.mxu0
    %v6904 = vpop.f32.mrf.mxu0
    %v6905 = vpop.f32.mrf.mxu0
    %6906 = vdwg.mxu0
    %v6908 = vsel %vm785, %v6591, 0
    %v6910 = vsel %vm789, %v6029, 0
    %6912 = vmatprep.subr.bf16.mxu0 0
    %6913 = vmatpush1.bf16.msra.mxu0 0
    %6914 = vmatprep.subr.bf16.mxu0 0
    %6915 = vmatpush1.bf16.msra.mxu0 0
    %6916 = vmatprep.subr.bf16.mxu0 0
    %6917 = vmatpush1.bf16.msra.mxu0 0
    %6918 = vmatprep.subr.bf16.mxu0 0
    %6919 = vmatpush1.bf16.msra.mxu0 0
    %6920 = vmatprep.subr.bf16.mxu0 0
    %6921 = vmatpush1.bf16.msra.mxu0 0
    %6922 = vmatprep.subr.bf16.mxu0 0
    %6923 = vmatpush1.bf16.msra.mxu0 0
    %6924 = vmatprep.subr.bf16.mxu0 0
    %6925 = vmatpush1.bf16.msra.mxu0 0
    %6926 = vmatprep.subr.bf16.mxu0 0
    %6927 = vmatpush1.bf16.msra.mxu0 %v6910
    %6928 = vmatprep.subr.bf16.mxu0 0
    %6929 = vmatpush2.bf16.msra.mxu0 0
    %6930 = vmatprep.subr.bf16.mxu0 0
    %6931 = vmatpush2.bf16.msra.mxu0 0
    %6932 = vmatprep.subr.bf16.mxu0 0
    %6933 = vmatpush2.bf16.msra.mxu0 0
    %6934 = vmatprep.subr.bf16.mxu0 0
    %6935 = vmatpush2.bf16.msra.mxu0 0
    %6936 = vmatprep.subr.bf16.mxu0 0
    %6937 = vmatpush2.bf16.msra.mxu0 0
    %6938 = vmatprep.subr.bf16.mxu0 0
    %6939 = vmatpush2.bf16.msra.mxu0 0
    %6940 = vmatprep.subr.bf16.mxu0 0
    %6941 = vmatpush2.bf16.msra.mxu0 0
    %6942 = vmatprep.subr.bf16.mxu0 0
    %6943 = vmatpush2.bf16.msra.mxu0 0
    %6944 = vmatprep.mubr.bf16.mxu0 0
    %6945 = vmatmul.mubr.bf16.gmra.mxu0 %v6908
    %v6946 = vpop.f32.mrf.mxu0
    %v6947 = vadd.f32 0.0, %v6946
    %v6948 = vpop.f32.mrf.mxu0
    %v6949 = vpop.f32.mrf.mxu0
    %v6950 = vpop.f32.mrf.mxu0
    %6951 = vdwg.mxu0
    %v6952 = vadd.f32 %v6576, 0.0
    %v6953 = vadd.f32 %v6577, 0.0
    %v6954 = vadd.f32 %v6578, 0.0
    %v6955 = vadd.f32 %v6579, 0.0
    %v6956 = vadd.f32 %v6580, 0.0
    %v6957 = vadd.f32 %v6581, 0.0
    %v6958 = vadd.f32 %v6582, 0.0
    %v6959 = vadd.f32 %v6583, 0.0
    %v6960 = vadd.f32 %v6632, 0.0
    %v6961 = vadd.f32 %v6677, 0.0
    %v6962 = vadd.f32 %v6722, 0.0
    %v6963 = vadd.f32 %v6767, 0.0
    %v6964 = vadd.f32 %v6812, 0.0
    %v6965 = vadd.f32 %v6857, 0.0
    %v6966 = vadd.f32 %v6902, 0.0
    %v6967 = vadd.f32 %v6947, 0.0
    %v6976 = vrot.slane %v6961, 7
    %v6977 = vsel %vm1172, %v6976, %v6960
    %v6978 = vrot.slane %v6962, 6
    %v6979 = vsel %vm1175, %v6978, %v6977
    %v6980 = vrot.slane %v6963, 5
    %v6981 = vsel %vm1178, %v6980, %v6979
    %v6982 = vrot.slane %v6964, 4
    %v6983 = vsel %vm1181, %v6982, %v6981
    %v6984 = vrot.slane %v6965, 3
    %v6985 = vsel %vm1184, %v6984, %v6983
    %v6986 = vrot.slane %v6966, 2
    %v6987 = vsel %vm1187, %v6986, %v6985
    %v6988 = vrot.slane %v6967, 1
    %v6989 = vsel %vm1190, %v6988, %v6987
    %6991 = vrot.lane.b32.xlu0 %v5714, 64
    %v6992 = vpop.permute.xlu0 %6991
    %v6994 = vsel %vm319, %v6989, %v6992
    %v6995 = vpack.c.bf16 %v6994, %v6994
    %v6996 = vld [vmem:[#allocation7] sm:$0xf]
    %v6997 = vld [vmem:[#allocation7 + $0x4] sm:$0xf]
    %v6998 = vld [vmem:[#allocation7 + $0x8] sm:$0xf]
    %v6999 = vld [vmem:[#allocation7 + $0xc] sm:$0xf]
    %v7000 = vld [vmem:[#allocation7 + $0x10] sm:$0xf]
    %v7001 = vld [vmem:[#allocation7 + $0x14] sm:$0xf]
    %v7002 = vld [vmem:[#allocation8] sm:$0xf]
    %v7003 = vld [vmem:[#allocation8 + $0x4] sm:$0xf]
    %v7004 = vld [vmem:[#allocation8 + $0x8] sm:$0xf]
    %v7005 = vld [vmem:[#allocation8 + $0xc] sm:$0xf]
    %v7006 = vld [vmem:[#allocation8 + $0x10] sm:$0xf]
    %v7007 = vld [vmem:[#allocation8 + $0x14] sm:$0xf]
    %v7008 = vld [vmem:[#allocation8 + $0x18] sm:$0xf]
    %v7009 = vld [vmem:[#allocation8 + $0x1c] sm:$0xf]
    %v7018 = vunpack.c.l.b16 %v7002
    %v7019 = vunpack.c.l.b16 %v7003
    %v7020 = vunpack.c.l.b16 %v7004
    %v7021 = vunpack.c.l.b16 %v7005
    %v7022 = vunpack.c.l.b16 %v7006
    %v7023 = vunpack.c.l.b16 %v7007
    %v7024 = vunpack.c.l.b16 %v7008
    %v7025 = vunpack.c.l.b16 %v7009
    %v7026 = vpack.c.b16 %v7019, %v7018
    %v7027 = vpack.c.b16 %v7021, %v7020
    %v7028 = vpack.c.b16 %v7023, %v7022
    %v7029 = vpack.c.b16 %v7025, %v7024
    %v7035 = vsel %vm1236, %v6995, 0
    %7037 = vmatprep.subr.bf16.mxu0 0
    %7038 = vmatpush1.bf16.msra.mxu0 0
    %7039 = vmatprep.subr.bf16.mxu0 0
    %7040 = vmatpush1.bf16.msra.mxu0 0
    %7041 = vmatprep.subr.bf16.mxu0 0
    %7042 = vmatpush1.bf16.msra.mxu0 0
    %7043 = vmatprep.subr.bf16.mxu0 0
    %7044 = vmatpush1.bf16.msra.mxu0 0
    %7045 = vmatprep.subr.bf16.mxu0 0
    %7046 = vmatpush1.bf16.msra.mxu0 %v7029
    %7047 = vmatprep.subr.bf16.mxu0 0
    %7048 = vmatpush1.bf16.msra.mxu0 %v7028
    %7049 = vmatprep.subr.bf16.mxu0 0
    %7050 = vmatpush1.bf16.msra.mxu0 %v7027
    %7051 = vmatprep.subr.bf16.mxu0 0
    %7052 = vmatpush1.bf16.msra.mxu0 %v7026
    %7053 = vmatprep.subr.bf16.mxu0 0
    %7054 = vmatpush2.bf16.msra.mxu0 0
    %7055 = vmatprep.subr.bf16.mxu0 0
    %7056 = vmatpush2.bf16.msra.mxu0 0
    %7057 = vmatprep.subr.bf16.mxu0 0
    %7058 = vmatpush2.bf16.msra.mxu0 0
    %7059 = vmatprep.subr.bf16.mxu0 0
    %7060 = vmatpush2.bf16.msra.mxu0 0
    %7061 = vmatprep.subr.bf16.mxu0 0
    %7062 = vmatpush2.bf16.msra.mxu0 0
    %7063 = vmatprep.subr.bf16.mxu0 0
    %7064 = vmatpush2.bf16.msra.mxu0 0
    %7065 = vmatprep.subr.bf16.mxu0 0
    %7066 = vmatpush2.bf16.msra.mxu0 0
    %7067 = vmatprep.subr.bf16.mxu0 0
    %7068 = vmatpush2.bf16.msra.mxu0 0
    %7069 = vmatprep.mubr.bf16.mxu0 0
    %7070 = vmatmul.mubr.bf16.gmra.mxu0 %v7035
    %v7071 = vpop.f32.mrf.mxu0
    %v7072 = vadd.f32 0.0, %v7071
    %v7073 = vpop.f32.mrf.mxu0
    %v7074 = vpop.f32.mrf.mxu0
    %v7075 = vpop.f32.mrf.mxu0
    %7076 = vdwg.mxu0
    %v7083 = vunpack.c.l.b16 %v6996
    %v7084 = vunpack.c.l.b16 %v6997
    %v7085 = vunpack.c.l.b16 %v6998
    %v7086 = vunpack.c.l.b16 %v6999
    %v7087 = vunpack.c.l.b16 %v7000
    %v7088 = vunpack.c.l.b16 %v7001
    %v7089 = vpack.c.b16 %v7084, %v7083
    %v7090 = vpack.c.b16 %v7086, %v7085
    %v7091 = vpack.c.b16 %v7088, %v7087
    %v7096 = vsel %vm1298, %v6021, 0
    %7098 = vmatprep.subr.bf16.mxu0 0
    %7099 = vmatpush1.bf16.msra.mxu0 0
    %7100 = vmatprep.subr.bf16.mxu0 0
    %7101 = vmatpush1.bf16.msra.mxu0 0
    %7102 = vmatprep.subr.bf16.mxu0 0
    %7103 = vmatpush1.bf16.msra.mxu0 0
    %7104 = vmatprep.subr.bf16.mxu0 0
    %7105 = vmatpush1.bf16.msra.mxu0 0
    %7106 = vmatprep.subr.bf16.mxu0 0
    %7107 = vmatpush1.bf16.msra.mxu0 0
    %7108 = vmatprep.subr.bf16.mxu0 0
    %7109 = vmatpush1.bf16.msra.mxu0 %v7091
    %7110 = vmatprep.subr.bf16.mxu0 0
    %7111 = vmatpush1.bf16.msra.mxu0 %v7090
    %7112 = vmatprep.subr.bf16.mxu0 0
    %7113 = vmatpush1.bf16.msra.mxu0 %v7089
    %7114 = vmatprep.subr.bf16.mxu0 0
    %7115 = vmatpush2.bf16.msra.mxu0 0
    %7116 = vmatprep.subr.bf16.mxu0 0
    %7117 = vmatpush2.bf16.msra.mxu0 0
    %7118 = vmatprep.subr.bf16.mxu0 0
    %7119 = vmatpush2.bf16.msra.mxu0 0
    %7120 = vmatprep.subr.bf16.mxu0 0
    %7121 = vmatpush2.bf16.msra.mxu0 0
    %7122 = vmatprep.subr.bf16.mxu0 0
    %7123 = vmatpush2.bf16.msra.mxu0 0
    %7124 = vmatprep.subr.bf16.mxu0 0
    %7125 = vmatpush2.bf16.msra.mxu0 0
    %7126 = vmatprep.subr.bf16.mxu0 0
    %7127 = vmatpush2.bf16.msra.mxu0 0
    %7128 = vmatprep.subr.bf16.mxu0 0
    %7129 = vmatpush2.bf16.msra.mxu0 0
    %7130 = vmatprep.mubr.bf16.mxu0 0
    %7131 = vmatmul.mubr.bf16.gmra.mxu0 %v7096
    %v7132 = vpop.f32.mrf.mxu0
    %v7133 = vadd.f32 %v7072, %v7132
    %v7134 = vpop.f32.mrf.mxu0
    %v7135 = vpop.f32.mrf.mxu0
    %v7136 = vpop.f32.mrf.mxu0
    %7137 = vdwg.mxu0
    %v7138 = vadd.f32 %v7133, %v181
    %v7139 = vxor.u32 %v7138, 2147483648
    %v7140 = vmul.f32 %v7139, 1.442695
    %v7141 = vpow.pop %v7140
    %v7142 = vadd.f32 %v7141, 1.0
    %v7143 = vrcp.pop %v7142
    %v7144 = vmul.f32 1.0, %v7143
    %v7145 = vtanh.pop %v7138
    %v7146 = vmul.f32 %v7144, %v5708
    %7148 = vrot.lane.b32.xlu0 %v7145, 64
    %v7149 = vpop.permute.xlu0 %7148
    %v7151 = vmul.f32 %v7144, %v7149
    %7153 = vrot.lane.b32.xlu0 %v7151, 32
    %v7154 = vpop.permute.xlu0 %7153
    %v7156 = vadd.f32 %v7146, %v7154
    %v7157 = vtanh.pop %v7156
    %7159 = vrot.lane.b32.xlu0 %v7157, 64
    %v7160 = vpop.permute.xlu0 %7159
    %v7162 = vmul.f32 %v7144, %v7160
    %7164 = vrot.lane.b32.xlu0 %v7162, 32
    %v7165 = vpop.permute.xlu0 %7164
    %7167 = vrot.lane.b32.xlu0 %v5822, 64
    %v7168 = vpop.permute.xlu0 %7167
    %v7170 = vsel %vm319, %v7165, %v7168
    %v7171 = vpack.c.bf16 %v7170, %v7170
    %v7172 = vld [vmem:[#allocation11] sm:$0xf]
    %v7173 = vld [vmem:[#allocation11 + $0x4] sm:$0xf]
    %v7174 = vld [vmem:[#allocation11 + $0x8] sm:$0xf]
    %v7175 = vld [vmem:[#allocation11 + $0xc] sm:$0xf]
    %v7176 = vld [vmem:[#allocation11 + $0x10] sm:$0xf]
    %v7177 = vld [vmem:[#allocation11 + $0x14] sm:$0xf]
    %v7178 = vld [vmem:[#allocation11 + $0x18] sm:$0xf]
    %v7179 = vld [vmem:[#allocation11 + $0x1c] sm:$0xf]
    %v7188 = vunpack.c.l.b16 %v7172
    %v7189 = vunpack.c.l.b16 %v7173
    %v7190 = vunpack.c.l.b16 %v7174
    %v7191 = vunpack.c.l.b16 %v7175
    %v7192 = vunpack.c.l.b16 %v7176
    %v7193 = vunpack.c.l.b16 %v7177
    %v7194 = vunpack.c.l.b16 %v7178
    %v7195 = vunpack.c.l.b16 %v7179
    %v7196 = vpack.c.b16 %v7189, %v7188
    %v7197 = vpack.c.b16 %v7191, %v7190
    %v7198 = vpack.c.b16 %v7193, %v7192
    %v7199 = vpack.c.b16 %v7195, %v7194
    %v7205 = vsel %vm1236, %v7171, 0
    %7207 = vmatprep.subr.bf16.mxu0 0
    %7208 = vmatpush1.bf16.msra.mxu0 0
    %7209 = vmatprep.subr.bf16.mxu0 0
    %7210 = vmatpush1.bf16.msra.mxu0 0
    %7211 = vmatprep.subr.bf16.mxu0 0
    %7212 = vmatpush1.bf16.msra.mxu0 0
    %7213 = vmatprep.subr.bf16.mxu0 0
    %7214 = vmatpush1.bf16.msra.mxu0 0
    %7215 = vmatprep.subr.bf16.mxu0 0
    %7216 = vmatpush1.bf16.msra.mxu0 %v7199
    %7217 = vmatprep.subr.bf16.mxu0 0
    %7218 = vmatpush1.bf16.msra.mxu0 %v7198
    %7219 = vmatprep.subr.bf16.mxu0 0
    %7220 = vmatpush1.bf16.msra.mxu0 %v7197
    %7221 = vmatprep.subr.bf16.mxu0 0
    %7222 = vmatpush1.bf16.msra.mxu0 %v7196
    %7223 = vmatprep.subr.bf16.mxu0 0
    %7224 = vmatpush2.bf16.msra.mxu0 0
    %7225 = vmatprep.subr.bf16.mxu0 0
    %7226 = vmatpush2.bf16.msra.mxu0 0
    %7227 = vmatprep.subr.bf16.mxu0 0
    %7228 = vmatpush2.bf16.msra.mxu0 0
    %7229 = vmatprep.subr.bf16.mxu0 0
    %7230 = vmatpush2.bf16.msra.mxu0 0
    %7231 = vmatprep.subr.bf16.mxu0 0
    %7232 = vmatpush2.bf16.msra.mxu0 0
    %7233 = vmatprep.subr.bf16.mxu0 0
    %7234 = vmatpush2.bf16.msra.mxu0 0
    %7235 = vmatprep.subr.bf16.mxu0 0
    %7236 = vmatpush2.bf16.msra.mxu0 0
    %7237 = vmatprep.subr.bf16.mxu0 0
    %7238 = vmatpush2.bf16.msra.mxu0 0
    %7239 = vmatprep.mubr.bf16.mxu0 0
    %7240 = vmatmul.mubr.bf16.gmra.mxu0 %v7205
    %v7241 = vpop.f32.mrf.mxu0
    %v7242 = vadd.f32 %v188, %v7241
    %v7243 = vpop.f32.mrf.mxu0
    %v7244 = vpop.f32.mrf.mxu0
    %v7245 = vpop.f32.mrf.mxu0
    %7246 = vdwg.mxu0
    %v7247 = vxor.u32 %v7242, 2147483648
    %v7248 = vmul.f32 %v7247, 1.442695
    %v7249 = vpow.pop %v7248
    %v7250 = vadd.f32 %v7249, 1.0
    %v7251 = vrcp.pop %v7250
    %v7252 = vmul.f32 1.0, %v7251
    %v7253 = vtanh.pop %v7242
    %v7254 = vmul.f32 %v7252, %v5816
    %7256 = vrot.lane.b32.xlu0 %v7253, 64
    %v7257 = vpop.permute.xlu0 %7256
    %v7259 = vmul.f32 %v7252, %v7257
    %7261 = vrot.lane.b32.xlu0 %v7259, 32
    %v7262 = vpop.permute.xlu0 %7261
    %v7264 = vadd.f32 %v7254, %v7262
    %v7265 = vtanh.pop %v7264
    %7267 = vrot.lane.b32.xlu0 %v7265, 64
    %v7268 = vpop.permute.xlu0 %7267
    %v7270 = vmul.f32 %v7252, %v7268
    %7272 = vrot.lane.b32.xlu0 %v7270, 32
    %v7273 = vpop.permute.xlu0 %7272
    %7275 = vrot.lane.b32.xlu0 %v6989, 32
    %v7276 = vpop.permute.xlu0 %7275
    %v7278 = vsel %vm319, %v7273, %v7276
    %v7279 = vpack.c.bf16 %v7278, %v7278
    %v7280 = vld [vmem:[#allocation14] sm:$0xf]
    %v7281 = vld [vmem:[#allocation14 + $0x4] sm:$0xf]
    %v7282 = vld [vmem:[#allocation14 + $0x8] sm:$0xf]
    %v7283 = vld [vmem:[#allocation14 + $0xc] sm:$0xf]
    %v7284 = vld [vmem:[#allocation14 + $0x10] sm:$0xf]
    %v7285 = vld [vmem:[#allocation14 + $0x14] sm:$0xf]
    %v7286 = vld [vmem:[#allocation14 + $0x18] sm:$0xf]
    %v7287 = vld [vmem:[#allocation14 + $0x1c] sm:$0xf]
    %v7296 = vunpack.c.l.b16 %v7280
    %v7297 = vunpack.c.l.b16 %v7281
    %v7298 = vunpack.c.l.b16 %v7282
    %v7299 = vunpack.c.l.b16 %v7283
    %v7300 = vunpack.c.l.b16 %v7284
    %v7301 = vunpack.c.l.b16 %v7285
    %v7302 = vunpack.c.l.b16 %v7286
    %v7303 = vunpack.c.l.b16 %v7287
    %v7304 = vpack.c.b16 %v7297, %v7296
    %v7305 = vpack.c.b16 %v7299, %v7298
    %v7306 = vpack.c.b16 %v7301, %v7300
    %v7307 = vpack.c.b16 %v7303, %v7302
    %v7313 = vsel %vm1236, %v7279, 0
    %7315 = vmatprep.subr.bf16.mxu0 0
    %7316 = vmatpush1.bf16.msra.mxu0 0
    %7317 = vmatprep.subr.bf16.mxu0 0
    %7318 = vmatpush1.bf16.msra.mxu0 0
    %7319 = vmatprep.subr.bf16.mxu0 0
    %7320 = vmatpush1.bf16.msra.mxu0 0
    %7321 = vmatprep.subr.bf16.mxu0 0
    %7322 = vmatpush1.bf16.msra.mxu0 0
    %7323 = vmatprep.subr.bf16.mxu0 0
    %7324 = vmatpush1.bf16.msra.mxu0 %v7307
    %7325 = vmatprep.subr.bf16.mxu0 0
    %7326 = vmatpush1.bf16.msra.mxu0 %v7306
    %7327 = vmatprep.subr.bf16.mxu0 0
    %7328 = vmatpush1.bf16.msra.mxu0 %v7305
    %7329 = vmatprep.subr.bf16.mxu0 0
    %7330 = vmatpush1.bf16.msra.mxu0 %v7304
    %7331 = vmatprep.subr.bf16.mxu0 0
    %7332 = vmatpush2.bf16.msra.mxu0 0
    %7333 = vmatprep.subr.bf16.mxu0 0
    %7334 = vmatpush2.bf16.msra.mxu0 0
    %7335 = vmatprep.subr.bf16.mxu0 0
    %7336 = vmatpush2.bf16.msra.mxu0 0
    %7337 = vmatprep.subr.bf16.mxu0 0
    %7338 = vmatpush2.bf16.msra.mxu0 0
    %7339 = vmatprep.subr.bf16.mxu0 0
    %7340 = vmatpush2.bf16.msra.mxu0 0
    %7341 = vmatprep.subr.bf16.mxu0 0
    %7342 = vmatpush2.bf16.msra.mxu0 0
    %7343 = vmatprep.subr.bf16.mxu0 0
    %7344 = vmatpush2.bf16.msra.mxu0 0
    %7345 = vmatprep.subr.bf16.mxu0 0
    %7346 = vmatpush2.bf16.msra.mxu0 0
    %7347 = vmatprep.mubr.bf16.mxu0 0
    %7348 = vmatmul.mubr.bf16.gmra.mxu0 %v7313
    %v7349 = vpop.f32.mrf.mxu0
    %v7350 = vadd.f32 0.0, %v7349
    %v7351 = vpop.f32.mrf.mxu0
    %v7352 = vpop.f32.mrf.mxu0
    %v7353 = vpop.f32.mrf.mxu0
    %7354 = vdwg.mxu0
    %v7355 = vadd.f32 %v7350, %v195
    %vm7356 = vcmp.gt.f32.partialorder %v7355, 0.0
    %v7357 = vmul.f32 %v7355, 0.2
    %v7358 = vsel %vm7356, %v7355, %v7357
    %v7359 = vpack.c.bf16 %v7358, %v7358
    %v7360 = vld [vmem:[%s9] sm:$0xf]
    %v7361 = vld [vmem:[%s9 + $0x4] sm:$0xf]
    %v7362 = vld [vmem:[%s9 + $0x8] sm:$0xf]
    %v7363 = vld [vmem:[%s9 + $0xc] sm:$0xf]
    %v7368 = vunpack.c.l.b16 %v7360
    %v7369 = vunpack.c.l.b16 %v7361
    %v7370 = vunpack.c.l.b16 %v7362
    %v7371 = vunpack.c.l.b16 %v7363
    %v7372 = vpack.c.b16 %v7369, %v7368
    %v7373 = vpack.c.b16 %v7371, %v7370
    %v7377 = vsel %vm319, %v7359, 0
    %7379 = vmatprep.subr.bf16.mxu0 0
    %7380 = vmatpush1.bf16.msra.mxu0 0
    %7381 = vmatprep.subr.bf16.mxu0 0
    %7382 = vmatpush1.bf16.msra.mxu0 0
    %7383 = vmatprep.subr.bf16.mxu0 0
    %7384 = vmatpush1.bf16.msra.mxu0 0
    %7385 = vmatprep.subr.bf16.mxu0 0
    %7386 = vmatpush1.bf16.msra.mxu0 0
    %7387 = vmatprep.subr.bf16.mxu0 0
    %7388 = vmatpush1.bf16.msra.mxu0 0
    %7389 = vmatprep.subr.bf16.mxu0 0
    %7390 = vmatpush1.bf16.msra.mxu0 0
    %7391 = vmatprep.subr.bf16.mxu0 0
    %7392 = vmatpush1.bf16.msra.mxu0 %v7373
    %7393 = vmatprep.subr.bf16.mxu0 0
    %7394 = vmatpush1.bf16.msra.mxu0 %v7372
    %7395 = vmatprep.subr.bf16.mxu0 0
    %7396 = vmatpush2.bf16.msra.mxu0 0
    %7397 = vmatprep.subr.bf16.mxu0 0
    %7398 = vmatpush2.bf16.msra.mxu0 0
    %7399 = vmatprep.subr.bf16.mxu0 0
    %7400 = vmatpush2.bf16.msra.mxu0 0
    %7401 = vmatprep.subr.bf16.mxu0 0
    %7402 = vmatpush2.bf16.msra.mxu0 0
    %7403 = vmatprep.subr.bf16.mxu0 0
    %7404 = vmatpush2.bf16.msra.mxu0 0
    %7405 = vmatprep.subr.bf16.mxu0 0
    %7406 = vmatpush2.bf16.msra.mxu0 0
    %7407 = vmatprep.subr.bf16.mxu0 0
    %7408 = vmatpush2.bf16.msra.mxu0 0
    %7409 = vmatprep.subr.bf16.mxu0 0
    %7410 = vmatpush2.bf16.msra.mxu0 0
    %7411 = vmatprep.mubr.bf16.mxu0 0
    %7412 = vmatmul.mubr.bf16.gmra.mxu0 %v7377
    %v7413 = vpop.f32.mrf.mxu0
    %v7414 = vadd.f32 %v202, %v7413
    %v7415 = vpop.f32.mrf.mxu0
    %v7416 = vpop.f32.mrf.mxu0
    %v7417 = vpop.f32.mrf.mxu0
    %7418 = vdwg.mxu0
    %s7419 = scalar_lea.vmem [#allocation17], 32
    %7420 = vst.msk [vmem:[%s7419] sm:$0xff] %vm1298, %v7414
    %v7429 = vrot.slane %v6953, 7
    %v7430 = vsel %vm1172, %v7429, %v6952
    %v7431 = vrot.slane %v6954, 6
    %v7432 = vsel %vm1175, %v7431, %v7430
    %v7433 = vrot.slane %v6955, 5
    %v7434 = vsel %vm1178, %v7433, %v7432
    %v7435 = vrot.slane %v6956, 4
    %v7436 = vsel %vm1181, %v7435, %v7434
    %v7437 = vrot.slane %v6957, 3
    %v7438 = vsel %vm1184, %v7437, %v7436
    %v7439 = vrot.slane %v6958, 2
    %v7440 = vsel %vm1187, %v7439, %v7438
    %v7441 = vrot.slane %v6959, 1
    %v7442 = vsel %vm1190, %v7441, %v7440
    %s7444 = scalar_lea.vmem [#allocation18], 32
    %7445 = vst.msk [vmem:[%s7444] sm:$0xff] %vm785, %v7442
    %v7446 = vsel %vm1298, %v7414, -inf
    %7447 = vmax.xlane.f32.xlu0 %v7446
    %v7448 = vpop.xlane.xlu0 %7447
    %vm7449 = vcmp.eq.f32.partialorder %v7414, %v7448
    %v7450 = vsel %vm7449, %v175, 48
    %v7451 = vsel %vm1298, %v7450, 2147483647
    %v7452 = vand.u32 %v7451, 65535
    %v7453 = vshra.s32 %v7451, 16
    %v7454 = vcvt.s32.f32 %v7452
    %v7455 = vcvt.s32.f32 %v7453
    %7456 = vmin.xlane.f32.xlu0 %v7455
    %v7457 = vpop.xlane.xlu0 %7456
    %vm7458 = vcmp.eq.f32.partialorder %v7455, %v7457
    %v7459 = vsel %vm7458, %v7454, inf
    %7460 = vmin.xlane.f32.xlu0 %v7459
    %v7461 = vpop.xlane.xlu0 %7460
    %v7462 = vcvt.f32.s32 %v7461
    %v7463 = vcvt.f32.s32 %v7457
    %v7464 = vshll.u32 %v7463, 16
    %v7465 = vadd.s32 %v7464, %v7462
    %vm7466 = vcmp.eq.s32.totalorder %v175, %v7465
    %v7467 = vsel %vm7466, 1, 0
    %v7468 = vcvt.s32.f32 %v7467
    %v7469 = vpack.c.bf16 %v7468, %v7468
    %v7470 = vld [vmem:[#allocation2] sm:$0xf]
    %v7471 = vld [vmem:[#allocation2 + $0x4] sm:$0xf]
    %v7472 = vld [vmem:[#allocation2 + $0x8] sm:$0xf]
    %v7473 = vld [vmem:[#allocation2 + $0xc] sm:$0xf]
    %v7474 = vld [vmem:[#allocation2 + $0x10] sm:$0xf]
    %v7475 = vld [vmem:[#allocation2 + $0x14] sm:$0xf]
    %v7476 = vld [vmem:[#allocation2 + $0x18] sm:$0xf]
    %v7477 = vld [vmem:[#allocation2 + $0x1c] sm:$0xf]
    %v7478 = vld [vmem:[#allocation5] sm:$0x1]
    %v7479 = vld [vmem:[#allocation5 + $0x1] sm:$0x1]
    %v7480 = vld [vmem:[#allocation5 + $0x2] sm:$0x1]
    %v7481 = vld [vmem:[#allocation5 + $0x3] sm:$0x1]
    %v7482 = vld [vmem:[#allocation5 + $0x4] sm:$0x1]
    %v7483 = vld [vmem:[#allocation5 + $0x5] sm:$0x1]
    %v7484 = vld [vmem:[#allocation5 + $0x6] sm:$0x1]
    %v7485 = vld [vmem:[#allocation5 + $0x7] sm:$0x1]
    %v7487 = vcombine.high %v7350, %v7350
    %v7489 = vunpack.c.l.s4 1966171168
    %v7490 = vunpack.c.0.s8 %v7489
    %v7491 = vlaneseq
    %v7492 = vshrl.u32 %v7491, 7
    %v7493 = vsub.s32 %v7490, %v7492
    %v7494 = vrot.slane %v7350, %v7493
    %v7496 = vunpack.c.l.s4 1966171168
    %v7497 = vunpack.c.0.s8 %v7496
    %v7498 = vlaneseq
    %v7499 = vshrl.u32 %v7498, 7
    %v7500 = vsub.s32 %v7497, %v7499
    %v7501 = vrot.slane %v7487, %v7500
    %v7502 = vcombine.high %v7494, %v7494
    %v7503 = vcombine.high %v7501, %v7501
    %v7505 = vunpack.c.l.s4 1966171168
    %v7506 = vunpack.c.0.s8 %v7505
    %v7507 = vlaneseq
    %v7508 = vshrl.u32 %v7507, 7
    %v7509 = vsub.s32 %v7506, %v7508
    %v7510 = vrot.slane %v7494, %v7509
    %v7512 = vunpack.c.l.s4 1966171168
    %v7513 = vunpack.c.0.s8 %v7512
    %v7514 = vlaneseq
    %v7515 = vshrl.u32 %v7514, 7
    %v7516 = vsub.s32 %v7513, %v7515
    %v7517 = vrot.slane %v7501, %v7516
    %v7519 = vunpack.c.l.s4 1966171168
    %v7520 = vunpack.c.0.s8 %v7519
    %v7521 = vlaneseq
    %v7522 = vshrl.u32 %v7521, 7
    %v7523 = vsub.s32 %v7520, %v7522
    %v7524 = vrot.slane %v7502, %v7523
    %v7526 = vunpack.c.l.s4 1966171168
    %v7527 = vunpack.c.0.s8 %v7526
    %v7528 = vlaneseq
    %v7529 = vshrl.u32 %v7528, 7
    %v7530 = vsub.s32 %v7527, %v7529
    %v7531 = vrot.slane %v7503, %v7530
    %v7532 = vcombine.high %v7510, %v7510
    %v7533 = vcombine.high %v7517, %v7517
    %v7534 = vcombine.high %v7524, %v7524
    %v7535 = vcombine.high %v7531, %v7531
    %v7544 = vpack.c.bf16 %v7510, %v7510
    %v7545 = vpack.c.bf16 %v7524, %v7524
    %v7546 = vpack.c.bf16 %v7532, %v7532
    %v7547 = vpack.c.bf16 %v7534, %v7534
    %v7548 = vpack.c.bf16 %v7517, %v7517
    %v7549 = vpack.c.bf16 %v7531, %v7531
    %v7550 = vpack.c.bf16 %v7533, %v7533
    %v7551 = vpack.c.bf16 %v7535, %v7535
    %7553 = vrot.lane.b32.xlu0 %v7544, 96
    %v7554 = vpop.permute.xlu0 %7553
    %v7556 = vsel %vm319, %v7554, 0
    %v7559 = vsel %vm319, %v7470, 0
    %7561 = vmatprep.subr.bf16.mxu0 0
    %7562 = vmatpush1.bf16.xpose.msra.mxu0 0
    %7563 = vmatprep.subr.bf16.mxu0 0
    %7564 = vmatpush1.bf16.xpose.msra.mxu0 0
    %7565 = vmatprep.subr.bf16.mxu0 0
    %7566 = vmatpush1.bf16.xpose.msra.mxu0 0
    %7567 = vmatprep.subr.bf16.mxu0 0
    %7568 = vmatpush1.bf16.xpose.msra.mxu0 0
    %7569 = vmatprep.subr.bf16.mxu0 0
    %7570 = vmatpush1.bf16.xpose.msra.mxu0 0
    %7571 = vmatprep.subr.bf16.mxu0 0
    %7572 = vmatpush1.bf16.xpose.msra.mxu0 0
    %7573 = vmatprep.subr.bf16.mxu0 0
    %7574 = vmatpush1.bf16.xpose.msra.mxu0 0
    %7575 = vmatprep.subr.bf16.mxu0 0
    %7576 = vmatpush1.bf16.xpose.msra.mxu0 %v7559
    %7577 = vmatprep.subr.bf16.mxu0 0
    %7578 = vmatpush2.bf16.xpose.msra.mxu0 0
    %7579 = vmatprep.subr.bf16.mxu0 0
    %7580 = vmatpush2.bf16.xpose.msra.mxu0 0
    %7581 = vmatprep.subr.bf16.mxu0 0
    %7582 = vmatpush2.bf16.xpose.msra.mxu0 0
    %7583 = vmatprep.subr.bf16.mxu0 0
    %7584 = vmatpush2.bf16.xpose.msra.mxu0 0
    %7585 = vmatprep.subr.bf16.mxu0 0
    %7586 = vmatpush2.bf16.xpose.msra.mxu0 0
    %7587 = vmatprep.subr.bf16.mxu0 0
    %7588 = vmatpush2.bf16.xpose.msra.mxu0 0
    %7589 = vmatprep.subr.bf16.mxu0 0
    %7590 = vmatpush2.bf16.xpose.msra.mxu0 0
    %7591 = vmatprep.subr.bf16.mxu0 0
    %7592 = vmatpush2.bf16.xpose.msra.mxu0 0
    %7593 = vmatprep.mubr.bf16.mxu0 0
    %7594 = vmatmul.mubr.bf16.gmra.mxu0 %v7556
    %v7595 = vpop.f32.mrf.mxu0
    %v7596 = vadd.f32 %v7478, %v7595
    %v7597 = vpop.f32.mrf.mxu0
    %v7598 = vpop.f32.mrf.mxu0
    %v7599 = vpop.f32.mrf.mxu0
    %7600 = vdwg.mxu0
    %7602 = vrot.lane.b32.xlu0 %v7545, 96
    %v7603 = vpop.permute.xlu0 %7602
    %v7605 = vsel %vm319, %v7603, 0
    %v7608 = vsel %vm319, %v7471, 0
    %7610 = vmatprep.subr.bf16.mxu0 0
    %7611 = vmatpush1.bf16.xpose.msra.mxu0 0
    %7612 = vmatprep.subr.bf16.mxu0 0
    %7613 = vmatpush1.bf16.xpose.msra.mxu0 0
    %7614 = vmatprep.subr.bf16.mxu0 0
    %7615 = vmatpush1.bf16.xpose.msra.mxu0 0
    %7616 = vmatprep.subr.bf16.mxu0 0
    %7617 = vmatpush1.bf16.xpose.msra.mxu0 0
    %7618 = vmatprep.subr.bf16.mxu0 0
    %7619 = vmatpush1.bf16.xpose.msra.mxu0 0
    %7620 = vmatprep.subr.bf16.mxu0 0
    %7621 = vmatpush1.bf16.xpose.msra.mxu0 0
    %7622 = vmatprep.subr.bf16.mxu0 0
    %7623 = vmatpush1.bf16.xpose.msra.mxu0 0
    %7624 = vmatprep.subr.bf16.mxu0 0
    %7625 = vmatpush1.bf16.xpose.msra.mxu0 %v7608
    %7626 = vmatprep.subr.bf16.mxu0 0
    %7627 = vmatpush2.bf16.xpose.msra.mxu0 0
    %7628 = vmatprep.subr.bf16.mxu0 0
    %7629 = vmatpush2.bf16.xpose.msra.mxu0 0
    %7630 = vmatprep.subr.bf16.mxu0 0
    %7631 = vmatpush2.bf16.xpose.msra.mxu0 0
    %7632 = vmatprep.subr.bf16.mxu0 0
    %7633 = vmatpush2.bf16.xpose.msra.mxu0 0
    %7634 = vmatprep.subr.bf16.mxu0 0
    %7635 = vmatpush2.bf16.xpose.msra.mxu0 0
    %7636 = vmatprep.subr.bf16.mxu0 0
    %7637 = vmatpush2.bf16.xpose.msra.mxu0 0
    %7638 = vmatprep.subr.bf16.mxu0 0
    %7639 = vmatpush2.bf16.xpose.msra.mxu0 0
    %7640 = vmatprep.subr.bf16.mxu0 0
    %7641 = vmatpush2.bf16.xpose.msra.mxu0 0
    %7642 = vmatprep.mubr.bf16.mxu0 0
    %7643 = vmatmul.mubr.bf16.gmra.mxu0 %v7605
    %v7644 = vpop.f32.mrf.mxu0
    %v7645 = vadd.f32 %v7479, %v7644
    %v7646 = vpop.f32.mrf.mxu0
    %v7647 = vpop.f32.mrf.mxu0
    %v7648 = vpop.f32.mrf.mxu0
    %7649 = vdwg.mxu0
    %7651 = vrot.lane.b32.xlu0 %v7546, 96
    %v7652 = vpop.permute.xlu0 %7651
    %v7654 = vsel %vm319, %v7652, 0
    %v7657 = vsel %vm319, %v7472, 0
    %7659 = vmatprep.subr.bf16.mxu0 0
    %7660 = vmatpush1.bf16.xpose.msra.mxu0 0
    %7661 = vmatprep.subr.bf16.mxu0 0
    %7662 = vmatpush1.bf16.xpose.msra.mxu0 0
    %7663 = vmatprep.subr.bf16.mxu0 0
    %7664 = vmatpush1.bf16.xpose.msra.mxu0 0
    %7665 = vmatprep.subr.bf16.mxu0 0
    %7666 = vmatpush1.bf16.xpose.msra.mxu0 0
    %7667 = vmatprep.subr.bf16.mxu0 0
    %7668 = vmatpush1.bf16.xpose.msra.mxu0 0
    %7669 = vmatprep.subr.bf16.mxu0 0
    %7670 = vmatpush1.bf16.xpose.msra.mxu0 0
    %7671 = vmatprep.subr.bf16.mxu0 0
    %7672 = vmatpush1.bf16.xpose.msra.mxu0 0
    %7673 = vmatprep.subr.bf16.mxu0 0
    %7674 = vmatpush1.bf16.xpose.msra.mxu0 %v7657
    %7675 = vmatprep.subr.bf16.mxu0 0
    %7676 = vmatpush2.bf16.xpose.msra.mxu0 0
    %7677 = vmatprep.subr.bf16.mxu0 0
    %7678 = vmatpush2.bf16.xpose.msra.mxu0 0
    %7679 = vmatprep.subr.bf16.mxu0 0
    %7680 = vmatpush2.bf16.xpose.msra.mxu0 0
    %7681 = vmatprep.subr.bf16.mxu0 0
    %7682 = vmatpush2.bf16.xpose.msra.mxu0 0
    %7683 = vmatprep.subr.bf16.mxu0 0
    %7684 = vmatpush2.bf16.xpose.msra.mxu0 0
    %7685 = vmatprep.subr.bf16.mxu0 0
    %7686 = vmatpush2.bf16.xpose.msra.mxu0 0
    %7687 = vmatprep.subr.bf16.mxu0 0
    %7688 = vmatpush2.bf16.xpose.msra.mxu0 0
    %7689 = vmatprep.subr.bf16.mxu0 0
    %7690 = vmatpush2.bf16.xpose.msra.mxu0 0
    %7691 = vmatprep.mubr.bf16.mxu0 0
    %7692 = vmatmul.mubr.bf16.gmra.mxu0 %v7654
    %v7693 = vpop.f32.mrf.mxu0
    %v7694 = vadd.f32 %v7480, %v7693
    %v7695 = vpop.f32.mrf.mxu0
    %v7696 = vpop.f32.mrf.mxu0
    %v7697 = vpop.f32.mrf.mxu0
    %7698 = vdwg.mxu0
    %7700 = vrot.lane.b32.xlu0 %v7547, 96
    %v7701 = vpop.permute.xlu0 %7700
    %v7703 = vsel %vm319, %v7701, 0
    %v7706 = vsel %vm319, %v7473, 0
    %7708 = vmatprep.subr.bf16.mxu0 0
    %7709 = vmatpush1.bf16.xpose.msra.mxu0 0
    %7710 = vmatprep.subr.bf16.mxu0 0
    %7711 = vmatpush1.bf16.xpose.msra.mxu0 0
    %7712 = vmatprep.subr.bf16.mxu0 0
    %7713 = vmatpush1.bf16.xpose.msra.mxu0 0
    %7714 = vmatprep.subr.bf16.mxu0 0
    %7715 = vmatpush1.bf16.xpose.msra.mxu0 0
    %7716 = vmatprep.subr.bf16.mxu0 0
    %7717 = vmatpush1.bf16.xpose.msra.mxu0 0
    %7718 = vmatprep.subr.bf16.mxu0 0
    %7719 = vmatpush1.bf16.xpose.msra.mxu0 0
    %7720 = vmatprep.subr.bf16.mxu0 0
    %7721 = vmatpush1.bf16.xpose.msra.mxu0 0
    %7722 = vmatprep.subr.bf16.mxu0 0
    %7723 = vmatpush1.bf16.xpose.msra.mxu0 %v7706
    %7724 = vmatprep.subr.bf16.mxu0 0
    %7725 = vmatpush2.bf16.xpose.msra.mxu0 0
    %7726 = vmatprep.subr.bf16.mxu0 0
    %7727 = vmatpush2.bf16.xpose.msra.mxu0 0
    %7728 = vmatprep.subr.bf16.mxu0 0
    %7729 = vmatpush2.bf16.xpose.msra.mxu0 0
    %7730 = vmatprep.subr.bf16.mxu0 0
    %7731 = vmatpush2.bf16.xpose.msra.mxu0 0
    %7732 = vmatprep.subr.bf16.mxu0 0
    %7733 = vmatpush2.bf16.xpose.msra.mxu0 0
    %7734 = vmatprep.subr.bf16.mxu0 0
    %7735 = vmatpush2.bf16.xpose.msra.mxu0 0
    %7736 = vmatprep.subr.bf16.mxu0 0
    %7737 = vmatpush2.bf16.xpose.msra.mxu0 0
    %7738 = vmatprep.subr.bf16.mxu0 0
    %7739 = vmatpush2.bf16.xpose.msra.mxu0 0
    %7740 = vmatprep.mubr.bf16.mxu0 0
    %7741 = vmatmul.mubr.bf16.gmra.mxu0 %v7703
    %v7742 = vpop.f32.mrf.mxu0
    %v7743 = vadd.f32 %v7481, %v7742
    %v7744 = vpop.f32.mrf.mxu0
    %v7745 = vpop.f32.mrf.mxu0
    %v7746 = vpop.f32.mrf.mxu0
    %7747 = vdwg.mxu0
    %7749 = vrot.lane.b32.xlu0 %v7548, 96
    %v7750 = vpop.permute.xlu0 %7749
    %v7752 = vsel %vm319, %v7750, 0
    %v7755 = vsel %vm319, %v7474, 0
    %7757 = vmatprep.subr.bf16.mxu0 0
    %7758 = vmatpush1.bf16.xpose.msra.mxu0 0
    %7759 = vmatprep.subr.bf16.mxu0 0
    %7760 = vmatpush1.bf16.xpose.msra.mxu0 0
    %7761 = vmatprep.subr.bf16.mxu0 0
    %7762 = vmatpush1.bf16.xpose.msra.mxu0 0
    %7763 = vmatprep.subr.bf16.mxu0 0
    %7764 = vmatpush1.bf16.xpose.msra.mxu0 0
    %7765 = vmatprep.subr.bf16.mxu0 0
    %7766 = vmatpush1.bf16.xpose.msra.mxu0 0
    %7767 = vmatprep.subr.bf16.mxu0 0
    %7768 = vmatpush1.bf16.xpose.msra.mxu0 0
    %7769 = vmatprep.subr.bf16.mxu0 0
    %7770 = vmatpush1.bf16.xpose.msra.mxu0 0
    %7771 = vmatprep.subr.bf16.mxu0 0
    %7772 = vmatpush1.bf16.xpose.msra.mxu0 %v7755
    %7773 = vmatprep.subr.bf16.mxu0 0
    %7774 = vmatpush2.bf16.xpose.msra.mxu0 0
    %7775 = vmatprep.subr.bf16.mxu0 0
    %7776 = vmatpush2.bf16.xpose.msra.mxu0 0
    %7777 = vmatprep.subr.bf16.mxu0 0
    %7778 = vmatpush2.bf16.xpose.msra.mxu0 0
    %7779 = vmatprep.subr.bf16.mxu0 0
    %7780 = vmatpush2.bf16.xpose.msra.mxu0 0
    %7781 = vmatprep.subr.bf16.mxu0 0
    %7782 = vmatpush2.bf16.xpose.msra.mxu0 0
    %7783 = vmatprep.subr.bf16.mxu0 0
    %7784 = vmatpush2.bf16.xpose.msra.mxu0 0
    %7785 = vmatprep.subr.bf16.mxu0 0
    %7786 = vmatpush2.bf16.xpose.msra.mxu0 0
    %7787 = vmatprep.subr.bf16.mxu0 0
    %7788 = vmatpush2.bf16.xpose.msra.mxu0 0
    %7789 = vmatprep.mubr.bf16.mxu0 0
    %7790 = vmatmul.mubr.bf16.gmra.mxu0 %v7752
    %v7791 = vpop.f32.mrf.mxu0
    %v7792 = vadd.f32 %v7482, %v7791
    %v7793 = vpop.f32.mrf.mxu0
    %v7794 = vpop.f32.mrf.mxu0
    %v7795 = vpop.f32.mrf.mxu0
    %7796 = vdwg.mxu0
    %7798 = vrot.lane.b32.xlu0 %v7549, 96
    %v7799 = vpop.permute.xlu0 %7798
    %v7801 = vsel %vm319, %v7799, 0
    %v7804 = vsel %vm319, %v7475, 0
    %7806 = vmatprep.subr.bf16.mxu0 0
    %7807 = vmatpush1.bf16.xpose.msra.mxu0 0
    %7808 = vmatprep.subr.bf16.mxu0 0
    %7809 = vmatpush1.bf16.xpose.msra.mxu0 0
    %7810 = vmatprep.subr.bf16.mxu0 0
    %7811 = vmatpush1.bf16.xpose.msra.mxu0 0
    %7812 = vmatprep.subr.bf16.mxu0 0
    %7813 = vmatpush1.bf16.xpose.msra.mxu0 0
    %7814 = vmatprep.subr.bf16.mxu0 0
    %7815 = vmatpush1.bf16.xpose.msra.mxu0 0
    %7816 = vmatprep.subr.bf16.mxu0 0
    %7817 = vmatpush1.bf16.xpose.msra.mxu0 0
    %7818 = vmatprep.subr.bf16.mxu0 0
    %7819 = vmatpush1.bf16.xpose.msra.mxu0 0
    %7820 = vmatprep.subr.bf16.mxu0 0
    %7821 = vmatpush1.bf16.xpose.msra.mxu0 %v7804
    %7822 = vmatprep.subr.bf16.mxu0 0
    %7823 = vmatpush2.bf16.xpose.msra.mxu0 0
    %7824 = vmatprep.subr.bf16.mxu0 0
    %7825 = vmatpush2.bf16.xpose.msra.mxu0 0
    %7826 = vmatprep.subr.bf16.mxu0 0
    %7827 = vmatpush2.bf16.xpose.msra.mxu0 0
    %7828 = vmatprep.subr.bf16.mxu0 0
    %7829 = vmatpush2.bf16.xpose.msra.mxu0 0
    %7830 = vmatprep.subr.bf16.mxu0 0
    %7831 = vmatpush2.bf16.xpose.msra.mxu0 0
    %7832 = vmatprep.subr.bf16.mxu0 0
    %7833 = vmatpush2.bf16.xpose.msra.mxu0 0
    %7834 = vmatprep.subr.bf16.mxu0 0
    %7835 = vmatpush2.bf16.xpose.msra.mxu0 0
    %7836 = vmatprep.subr.bf16.mxu0 0
    %7837 = vmatpush2.bf16.xpose.msra.mxu0 0
    %7838 = vmatprep.mubr.bf16.mxu0 0
    %7839 = vmatmul.mubr.bf16.gmra.mxu0 %v7801
    %v7840 = vpop.f32.mrf.mxu0
    %v7841 = vadd.f32 %v7483, %v7840
    %v7842 = vpop.f32.mrf.mxu0
    %v7843 = vpop.f32.mrf.mxu0
    %v7844 = vpop.f32.mrf.mxu0
    %7845 = vdwg.mxu0
    %7847 = vrot.lane.b32.xlu0 %v7550, 96
    %v7848 = vpop.permute.xlu0 %7847
    %v7850 = vsel %vm319, %v7848, 0
    %v7853 = vsel %vm319, %v7476, 0
    %7855 = vmatprep.subr.bf16.mxu0 0
    %7856 = vmatpush1.bf16.xpose.msra.mxu0 0
    %7857 = vmatprep.subr.bf16.mxu0 0
    %7858 = vmatpush1.bf16.xpose.msra.mxu0 0
    %7859 = vmatprep.subr.bf16.mxu0 0
    %7860 = vmatpush1.bf16.xpose.msra.mxu0 0
    %7861 = vmatprep.subr.bf16.mxu0 0
    %7862 = vmatpush1.bf16.xpose.msra.mxu0 0
    %7863 = vmatprep.subr.bf16.mxu0 0
    %7864 = vmatpush1.bf16.xpose.msra.mxu0 0
    %7865 = vmatprep.subr.bf16.mxu0 0
    %7866 = vmatpush1.bf16.xpose.msra.mxu0 0
    %7867 = vmatprep.subr.bf16.mxu0 0
    %7868 = vmatpush1.bf16.xpose.msra.mxu0 0
    %7869 = vmatprep.subr.bf16.mxu0 0
    %7870 = vmatpush1.bf16.xpose.msra.mxu0 %v7853
    %7871 = vmatprep.subr.bf16.mxu0 0
    %7872 = vmatpush2.bf16.xpose.msra.mxu0 0
    %7873 = vmatprep.subr.bf16.mxu0 0
    %7874 = vmatpush2.bf16.xpose.msra.mxu0 0
    %7875 = vmatprep.subr.bf16.mxu0 0
    %7876 = vmatpush2.bf16.xpose.msra.mxu0 0
    %7877 = vmatprep.subr.bf16.mxu0 0
    %7878 = vmatpush2.bf16.xpose.msra.mxu0 0
    %7879 = vmatprep.subr.bf16.mxu0 0
    %7880 = vmatpush2.bf16.xpose.msra.mxu0 0
    %7881 = vmatprep.subr.bf16.mxu0 0
    %7882 = vmatpush2.bf16.xpose.msra.mxu0 0
    %7883 = vmatprep.subr.bf16.mxu0 0
    %7884 = vmatpush2.bf16.xpose.msra.mxu0 0
    %7885 = vmatprep.subr.bf16.mxu0 0
    %7886 = vmatpush2.bf16.xpose.msra.mxu0 0
    %7887 = vmatprep.mubr.bf16.mxu0 0
    %7888 = vmatmul.mubr.bf16.gmra.mxu0 %v7850
    %v7889 = vpop.f32.mrf.mxu0
    %v7890 = vadd.f32 %v7484, %v7889
    %v7891 = vpop.f32.mrf.mxu0
    %v7892 = vpop.f32.mrf.mxu0
    %v7893 = vpop.f32.mrf.mxu0
    %7894 = vdwg.mxu0
    %7896 = vrot.lane.b32.xlu0 %v7551, 96
    %v7897 = vpop.permute.xlu0 %7896
    %v7899 = vsel %vm319, %v7897, 0
    %v7902 = vsel %vm319, %v7477, 0
    %7904 = vmatprep.subr.bf16.mxu0 0
    %7905 = vmatpush1.bf16.xpose.msra.mxu0 0
    %7906 = vmatprep.subr.bf16.mxu0 0
    %7907 = vmatpush1.bf16.xpose.msra.mxu0 0
    %7908 = vmatprep.subr.bf16.mxu0 0
    %7909 = vmatpush1.bf16.xpose.msra.mxu0 0
    %7910 = vmatprep.subr.bf16.mxu0 0
    %7911 = vmatpush1.bf16.xpose.msra.mxu0 0
    %7912 = vmatprep.subr.bf16.mxu0 0
    %7913 = vmatpush1.bf16.xpose.msra.mxu0 0
    %7914 = vmatprep.subr.bf16.mxu0 0
    %7915 = vmatpush1.bf16.xpose.msra.mxu0 0
    %7916 = vmatprep.subr.bf16.mxu0 0
    %7917 = vmatpush1.bf16.xpose.msra.mxu0 0
    %7918 = vmatprep.subr.bf16.mxu0 0
    %7919 = vmatpush1.bf16.xpose.msra.mxu0 %v7902
    %7920 = vmatprep.subr.bf16.mxu0 0
    %7921 = vmatpush2.bf16.xpose.msra.mxu0 0
    %7922 = vmatprep.subr.bf16.mxu0 0
    %7923 = vmatpush2.bf16.xpose.msra.mxu0 0
    %7924 = vmatprep.subr.bf16.mxu0 0
    %7925 = vmatpush2.bf16.xpose.msra.mxu0 0
    %7926 = vmatprep.subr.bf16.mxu0 0
    %7927 = vmatpush2.bf16.xpose.msra.mxu0 0
    %7928 = vmatprep.subr.bf16.mxu0 0
    %7929 = vmatpush2.bf16.xpose.msra.mxu0 0
    %7930 = vmatprep.subr.bf16.mxu0 0
    %7931 = vmatpush2.bf16.xpose.msra.mxu0 0
    %7932 = vmatprep.subr.bf16.mxu0 0
    %7933 = vmatpush2.bf16.xpose.msra.mxu0 0
    %7934 = vmatprep.subr.bf16.mxu0 0
    %7935 = vmatpush2.bf16.xpose.msra.mxu0 0
    %7936 = vmatprep.mubr.bf16.mxu0 0
    %7937 = vmatmul.mubr.bf16.gmra.mxu0 %v7899
    %v7938 = vpop.f32.mrf.mxu0
    %v7939 = vadd.f32 %v7485, %v7938
    %v7940 = vpop.f32.mrf.mxu0
    %v7941 = vpop.f32.mrf.mxu0
    %v7942 = vpop.f32.mrf.mxu0
    %7943 = vdwg.mxu0
    %v7944 = vsel %vm688, %v7596, -inf
    %7945 = vmax.xlane.f32.xlu0 %v7944
    %v7946 = vpop.xlane.xlu0 %7945
    %v7947 = vsel %vm688, %v7645, -inf
    %7948 = vmax.xlane.f32.xlu0 %v7947
    %v7949 = vpop.xlane.xlu0 %7948
    %v7950 = vsel %vm688, %v7694, -inf
    %7951 = vmax.xlane.f32.xlu0 %v7950
    %v7952 = vpop.xlane.xlu0 %7951
    %v7953 = vsel %vm688, %v7743, -inf
    %7954 = vmax.xlane.f32.xlu0 %v7953
    %v7955 = vpop.xlane.xlu0 %7954
    %v7956 = vsel %vm688, %v7792, -inf
    %7957 = vmax.xlane.f32.xlu0 %v7956
    %v7958 = vpop.xlane.xlu0 %7957
    %v7959 = vsel %vm688, %v7841, -inf
    %7960 = vmax.xlane.f32.xlu0 %v7959
    %v7961 = vpop.xlane.xlu0 %7960
    %v7962 = vsel %vm688, %v7890, -inf
    %7963 = vmax.xlane.f32.xlu0 %v7962
    %v7964 = vpop.xlane.xlu0 %7963
    %v7965 = vsel %vm688, %v7939, -inf
    %7966 = vmax.xlane.f32.xlu0 %v7965
    %v7967 = vpop.xlane.xlu0 %7966
    %v7968 = vsub.f32 %v7596, %v7946
    %v7969 = vsub.f32 %v7645, %v7949
    %v7970 = vsub.f32 %v7694, %v7952
    %v7971 = vsub.f32 %v7743, %v7955
    %v7972 = vsub.f32 %v7792, %v7958
    %v7973 = vsub.f32 %v7841, %v7961
    %v7974 = vsub.f32 %v7890, %v7964
    %v7975 = vsub.f32 %v7939, %v7967
    %v7976 = vmul.f32 %v7968, 1.442695
    %v7977 = vpow.pop %v7976
    %v7978 = vmul.f32 %v7969, 1.442695
    %v7979 = vpow.pop %v7978
    %v7980 = vmul.f32 %v7970, 1.442695
    %v7981 = vpow.pop %v7980
    %v7982 = vmul.f32 %v7971, 1.442695
    %v7983 = vpow.pop %v7982
    %v7984 = vmul.f32 %v7972, 1.442695
    %v7985 = vpow.pop %v7984
    %v7986 = vmul.f32 %v7973, 1.442695
    %v7987 = vpow.pop %v7986
    %v7988 = vmul.f32 %v7974, 1.442695
    %v7989 = vpow.pop %v7988
    %v7990 = vmul.f32 %v7975, 1.442695
    %v7991 = vpow.pop %v7990
    %v7992 = vsel %vm688, %v7977, 0.0
    %7993 = vadd.xlane.f32.xlu0 %v7992
    %v7994 = vpop.xlane.xlu0 %7993
    %v7995 = vsel %vm688, %v7979, 0.0
    %7996 = vadd.xlane.f32.xlu0 %v7995
    %v7997 = vpop.xlane.xlu0 %7996
    %v7998 = vsel %vm688, %v7981, 0.0
    %7999 = vadd.xlane.f32.xlu0 %v7998
    %v8000 = vpop.xlane.xlu0 %7999
    %v8001 = vsel %vm688, %v7983, 0.0
    %8002 = vadd.xlane.f32.xlu0 %v8001
    %v8003 = vpop.xlane.xlu0 %8002
    %v8004 = vsel %vm688, %v7985, 0.0
    %8005 = vadd.xlane.f32.xlu0 %v8004
    %v8006 = vpop.xlane.xlu0 %8005
    %v8007 = vsel %vm688, %v7987, 0.0
    %8008 = vadd.xlane.f32.xlu0 %v8007
    %v8009 = vpop.xlane.xlu0 %8008
    %v8010 = vsel %vm688, %v7989, 0.0
    %8011 = vadd.xlane.f32.xlu0 %v8010
    %v8012 = vpop.xlane.xlu0 %8011
    %v8013 = vsel %vm688, %v7991, 0.0
    %8014 = vadd.xlane.f32.xlu0 %v8013
    %v8015 = vpop.xlane.xlu0 %8014
    %v8016 = vrcp.pop %v7994
    %v8017 = vrcp.pop %v7997
    %v8018 = vrcp.pop %v8000
    %v8019 = vrcp.pop %v8003
    %v8020 = vrcp.pop %v8006
    %v8021 = vrcp.pop %v8009
    %v8022 = vrcp.pop %v8012
    %v8023 = vrcp.pop %v8015
    %v8024 = vmul.f32 %v7977, %v8016
    %v8025 = vmul.f32 %v7979, %v8017
    %v8026 = vmul.f32 %v7981, %v8018
    %v8027 = vmul.f32 %v7983, %v8019
    %v8028 = vmul.f32 %v7985, %v8020
    %v8029 = vmul.f32 %v7987, %v8021
    %v8030 = vmul.f32 %v7989, %v8022
    %v8031 = vmul.f32 %v7991, %v8023
    %v8032 = vpack.c.bf16 %v8024, %v8024
    %v8033 = vpack.c.bf16 %v8025, %v8025
    %v8034 = vpack.c.bf16 %v8026, %v8026
    %v8035 = vpack.c.bf16 %v8027, %v8027
    %v8036 = vpack.c.bf16 %v8028, %v8028
    %v8037 = vpack.c.bf16 %v8029, %v8029
    %v8038 = vpack.c.bf16 %v8030, %v8030
    %v8039 = vpack.c.bf16 %v8031, %v8031
    %v8041 = vsel %vm785, %v8032, 0
    %v8043 = vsel %vm789, %v7470, 0
    %8045 = vmatprep.subr.bf16.mxu0 0
    %8046 = vmatpush1.bf16.msra.mxu0 0
    %8047 = vmatprep.subr.bf16.mxu0 0
    %8048 = vmatpush1.bf16.msra.mxu0 0
    %8049 = vmatprep.subr.bf16.mxu0 0
    %8050 = vmatpush1.bf16.msra.mxu0 0
    %8051 = vmatprep.subr.bf16.mxu0 0
    %8052 = vmatpush1.bf16.msra.mxu0 0
    %8053 = vmatprep.subr.bf16.mxu0 0
    %8054 = vmatpush1.bf16.msra.mxu0 0
    %8055 = vmatprep.subr.bf16.mxu0 0
    %8056 = vmatpush1.bf16.msra.mxu0 0
    %8057 = vmatprep.subr.bf16.mxu0 0
    %8058 = vmatpush1.bf16.msra.mxu0 0
    %8059 = vmatprep.subr.bf16.mxu0 0
    %8060 = vmatpush1.bf16.msra.mxu0 %v8043
    %8061 = vmatprep.subr.bf16.mxu0 0
    %8062 = vmatpush2.bf16.msra.mxu0 0
    %8063 = vmatprep.subr.bf16.mxu0 0
    %8064 = vmatpush2.bf16.msra.mxu0 0
    %8065 = vmatprep.subr.bf16.mxu0 0
    %8066 = vmatpush2.bf16.msra.mxu0 0
    %8067 = vmatprep.subr.bf16.mxu0 0
    %8068 = vmatpush2.bf16.msra.mxu0 0
    %8069 = vmatprep.subr.bf16.mxu0 0
    %8070 = vmatpush2.bf16.msra.mxu0 0
    %8071 = vmatprep.subr.bf16.mxu0 0
    %8072 = vmatpush2.bf16.msra.mxu0 0
    %8073 = vmatprep.subr.bf16.mxu0 0
    %8074 = vmatpush2.bf16.msra.mxu0 0
    %8075 = vmatprep.subr.bf16.mxu0 0
    %8076 = vmatpush2.bf16.msra.mxu0 0
    %8077 = vmatprep.mubr.bf16.mxu0 0
    %8078 = vmatmul.mubr.bf16.gmra.mxu0 %v8041
    %v8079 = vpop.f32.mrf.mxu0
    %v8080 = vadd.f32 0.0, %v8079
    %v8081 = vpop.f32.mrf.mxu0
    %v8082 = vpop.f32.mrf.mxu0
    %v8083 = vpop.f32.mrf.mxu0
    %8084 = vdwg.mxu0
    %v8086 = vsel %vm785, %v8033, 0
    %v8088 = vsel %vm789, %v7471, 0
    %8090 = vmatprep.subr.bf16.mxu0 0
    %8091 = vmatpush1.bf16.msra.mxu0 0
    %8092 = vmatprep.subr.bf16.mxu0 0
    %8093 = vmatpush1.bf16.msra.mxu0 0
    %8094 = vmatprep.subr.bf16.mxu0 0
    %8095 = vmatpush1.bf16.msra.mxu0 0
    %8096 = vmatprep.subr.bf16.mxu0 0
    %8097 = vmatpush1.bf16.msra.mxu0 0
    %8098 = vmatprep.subr.bf16.mxu0 0
    %8099 = vmatpush1.bf16.msra.mxu0 0
    %8100 = vmatprep.subr.bf16.mxu0 0
    %8101 = vmatpush1.bf16.msra.mxu0 0
    %8102 = vmatprep.subr.bf16.mxu0 0
    %8103 = vmatpush1.bf16.msra.mxu0 0
    %8104 = vmatprep.subr.bf16.mxu0 0
    %8105 = vmatpush1.bf16.msra.mxu0 %v8088
    %8106 = vmatprep.subr.bf16.mxu0 0
    %8107 = vmatpush2.bf16.msra.mxu0 0
    %8108 = vmatprep.subr.bf16.mxu0 0
    %8109 = vmatpush2.bf16.msra.mxu0 0
    %8110 = vmatprep.subr.bf16.mxu0 0
    %8111 = vmatpush2.bf16.msra.mxu0 0
    %8112 = vmatprep.subr.bf16.mxu0 0
    %8113 = vmatpush2.bf16.msra.mxu0 0
    %8114 = vmatprep.subr.bf16.mxu0 0
    %8115 = vmatpush2.bf16.msra.mxu0 0
    %8116 = vmatprep.subr.bf16.mxu0 0
    %8117 = vmatpush2.bf16.msra.mxu0 0
    %8118 = vmatprep.subr.bf16.mxu0 0
    %8119 = vmatpush2.bf16.msra.mxu0 0
    %8120 = vmatprep.subr.bf16.mxu0 0
    %8121 = vmatpush2.bf16.msra.mxu0 0
    %8122 = vmatprep.mubr.bf16.mxu0 0
    %8123 = vmatmul.mubr.bf16.gmra.mxu0 %v8086
    %v8124 = vpop.f32.mrf.mxu0
    %v8125 = vadd.f32 0.0, %v8124
    %v8126 = vpop.f32.mrf.mxu0
    %v8127 = vpop.f32.mrf.mxu0
    %v8128 = vpop.f32.mrf.mxu0
    %8129 = vdwg.mxu0
    %v8131 = vsel %vm785, %v8034, 0
    %v8133 = vsel %vm789, %v7472, 0
    %8135 = vmatprep.subr.bf16.mxu0 0
    %8136 = vmatpush1.bf16.msra.mxu0 0
    %8137 = vmatprep.subr.bf16.mxu0 0
    %8138 = vmatpush1.bf16.msra.mxu0 0
    %8139 = vmatprep.subr.bf16.mxu0 0
    %8140 = vmatpush1.bf16.msra.mxu0 0
    %8141 = vmatprep.subr.bf16.mxu0 0
    %8142 = vmatpush1.bf16.msra.mxu0 0
    %8143 = vmatprep.subr.bf16.mxu0 0
    %8144 = vmatpush1.bf16.msra.mxu0 0
    %8145 = vmatprep.subr.bf16.mxu0 0
    %8146 = vmatpush1.bf16.msra.mxu0 0
    %8147 = vmatprep.subr.bf16.mxu0 0
    %8148 = vmatpush1.bf16.msra.mxu0 0
    %8149 = vmatprep.subr.bf16.mxu0 0
    %8150 = vmatpush1.bf16.msra.mxu0 %v8133
    %8151 = vmatprep.subr.bf16.mxu0 0
    %8152 = vmatpush2.bf16.msra.mxu0 0
    %8153 = vmatprep.subr.bf16.mxu0 0
    %8154 = vmatpush2.bf16.msra.mxu0 0
    %8155 = vmatprep.subr.bf16.mxu0 0
    %8156 = vmatpush2.bf16.msra.mxu0 0
    %8157 = vmatprep.subr.bf16.mxu0 0
    %8158 = vmatpush2.bf16.msra.mxu0 0
    %8159 = vmatprep.subr.bf16.mxu0 0
    %8160 = vmatpush2.bf16.msra.mxu0 0
    %8161 = vmatprep.subr.bf16.mxu0 0
    %8162 = vmatpush2.bf16.msra.mxu0 0
    %8163 = vmatprep.subr.bf16.mxu0 0
    %8164 = vmatpush2.bf16.msra.mxu0 0
    %8165 = vmatprep.subr.bf16.mxu0 0
    %8166 = vmatpush2.bf16.msra.mxu0 0
    %8167 = vmatprep.mubr.bf16.mxu0 0
    %8168 = vmatmul.mubr.bf16.gmra.mxu0 %v8131
    %v8169 = vpop.f32.mrf.mxu0
    %v8170 = vadd.f32 0.0, %v8169
    %v8171 = vpop.f32.mrf.mxu0
    %v8172 = vpop.f32.mrf.mxu0
    %v8173 = vpop.f32.mrf.mxu0
    %8174 = vdwg.mxu0
    %v8176 = vsel %vm785, %v8035, 0
    %v8178 = vsel %vm789, %v7473, 0
    %8180 = vmatprep.subr.bf16.mxu0 0
    %8181 = vmatpush1.bf16.msra.mxu0 0
    %8182 = vmatprep.subr.bf16.mxu0 0
    %8183 = vmatpush1.bf16.msra.mxu0 0
    %8184 = vmatprep.subr.bf16.mxu0 0
    %8185 = vmatpush1.bf16.msra.mxu0 0
    %8186 = vmatprep.subr.bf16.mxu0 0
    %8187 = vmatpush1.bf16.msra.mxu0 0
    %8188 = vmatprep.subr.bf16.mxu0 0
    %8189 = vmatpush1.bf16.msra.mxu0 0
    %8190 = vmatprep.subr.bf16.mxu0 0
    %8191 = vmatpush1.bf16.msra.mxu0 0
    %8192 = vmatprep.subr.bf16.mxu0 0
    %8193 = vmatpush1.bf16.msra.mxu0 0
    %8194 = vmatprep.subr.bf16.mxu0 0
    %8195 = vmatpush1.bf16.msra.mxu0 %v8178
    %8196 = vmatprep.subr.bf16.mxu0 0
    %8197 = vmatpush2.bf16.msra.mxu0 0
    %8198 = vmatprep.subr.bf16.mxu0 0
    %8199 = vmatpush2.bf16.msra.mxu0 0
    %8200 = vmatprep.subr.bf16.mxu0 0
    %8201 = vmatpush2.bf16.msra.mxu0 0
    %8202 = vmatprep.subr.bf16.mxu0 0
    %8203 = vmatpush2.bf16.msra.mxu0 0
    %8204 = vmatprep.subr.bf16.mxu0 0
    %8205 = vmatpush2.bf16.msra.mxu0 0
    %8206 = vmatprep.subr.bf16.mxu0 0
    %8207 = vmatpush2.bf16.msra.mxu0 0
    %8208 = vmatprep.subr.bf16.mxu0 0
    %8209 = vmatpush2.bf16.msra.mxu0 0
    %8210 = vmatprep.subr.bf16.mxu0 0
    %8211 = vmatpush2.bf16.msra.mxu0 0
    %8212 = vmatprep.mubr.bf16.mxu0 0
    %8213 = vmatmul.mubr.bf16.gmra.mxu0 %v8176
    %v8214 = vpop.f32.mrf.mxu0
    %v8215 = vadd.f32 0.0, %v8214
    %v8216 = vpop.f32.mrf.mxu0
    %v8217 = vpop.f32.mrf.mxu0
    %v8218 = vpop.f32.mrf.mxu0
    %8219 = vdwg.mxu0
    %v8221 = vsel %vm785, %v8036, 0
    %v8223 = vsel %vm789, %v7474, 0
    %8225 = vmatprep.subr.bf16.mxu0 0
    %8226 = vmatpush1.bf16.msra.mxu0 0
    %8227 = vmatprep.subr.bf16.mxu0 0
    %8228 = vmatpush1.bf16.msra.mxu0 0
    %8229 = vmatprep.subr.bf16.mxu0 0
    %8230 = vmatpush1.bf16.msra.mxu0 0
    %8231 = vmatprep.subr.bf16.mxu0 0
    %8232 = vmatpush1.bf16.msra.mxu0 0
    %8233 = vmatprep.subr.bf16.mxu0 0
    %8234 = vmatpush1.bf16.msra.mxu0 0
    %8235 = vmatprep.subr.bf16.mxu0 0
    %8236 = vmatpush1.bf16.msra.mxu0 0
    %8237 = vmatprep.subr.bf16.mxu0 0
    %8238 = vmatpush1.bf16.msra.mxu0 0
    %8239 = vmatprep.subr.bf16.mxu0 0
    %8240 = vmatpush1.bf16.msra.mxu0 %v8223
    %8241 = vmatprep.subr.bf16.mxu0 0
    %8242 = vmatpush2.bf16.msra.mxu0 0
    %8243 = vmatprep.subr.bf16.mxu0 0
    %8244 = vmatpush2.bf16.msra.mxu0 0
    %8245 = vmatprep.subr.bf16.mxu0 0
    %8246 = vmatpush2.bf16.msra.mxu0 0
    %8247 = vmatprep.subr.bf16.mxu0 0
    %8248 = vmatpush2.bf16.msra.mxu0 0
    %8249 = vmatprep.subr.bf16.mxu0 0
    %8250 = vmatpush2.bf16.msra.mxu0 0
    %8251 = vmatprep.subr.bf16.mxu0 0
    %8252 = vmatpush2.bf16.msra.mxu0 0
    %8253 = vmatprep.subr.bf16.mxu0 0
    %8254 = vmatpush2.bf16.msra.mxu0 0
    %8255 = vmatprep.subr.bf16.mxu0 0
    %8256 = vmatpush2.bf16.msra.mxu0 0
    %8257 = vmatprep.mubr.bf16.mxu0 0
    %8258 = vmatmul.mubr.bf16.gmra.mxu0 %v8221
    %v8259 = vpop.f32.mrf.mxu0
    %v8260 = vadd.f32 0.0, %v8259
    %v8261 = vpop.f32.mrf.mxu0
    %v8262 = vpop.f32.mrf.mxu0
    %v8263 = vpop.f32.mrf.mxu0
    %8264 = vdwg.mxu0
    %v8266 = vsel %vm785, %v8037, 0
    %v8268 = vsel %vm789, %v7475, 0
    %8270 = vmatprep.subr.bf16.mxu0 0
    %8271 = vmatpush1.bf16.msra.mxu0 0
    %8272 = vmatprep.subr.bf16.mxu0 0
    %8273 = vmatpush1.bf16.msra.mxu0 0
    %8274 = vmatprep.subr.bf16.mxu0 0
    %8275 = vmatpush1.bf16.msra.mxu0 0
    %8276 = vmatprep.subr.bf16.mxu0 0
    %8277 = vmatpush1.bf16.msra.mxu0 0
    %8278 = vmatprep.subr.bf16.mxu0 0
    %8279 = vmatpush1.bf16.msra.mxu0 0
    %8280 = vmatprep.subr.bf16.mxu0 0
    %8281 = vmatpush1.bf16.msra.mxu0 0
    %8282 = vmatprep.subr.bf16.mxu0 0
    %8283 = vmatpush1.bf16.msra.mxu0 0
    %8284 = vmatprep.subr.bf16.mxu0 0
    %8285 = vmatpush1.bf16.msra.mxu0 %v8268
    %8286 = vmatprep.subr.bf16.mxu0 0
    %8287 = vmatpush2.bf16.msra.mxu0 0
    %8288 = vmatprep.subr.bf16.mxu0 0
    %8289 = vmatpush2.bf16.msra.mxu0 0
    %8290 = vmatprep.subr.bf16.mxu0 0
    %8291 = vmatpush2.bf16.msra.mxu0 0
    %8292 = vmatprep.subr.bf16.mxu0 0
    %8293 = vmatpush2.bf16.msra.mxu0 0
    %8294 = vmatprep.subr.bf16.mxu0 0
    %8295 = vmatpush2.bf16.msra.mxu0 0
    %8296 = vmatprep.subr.bf16.mxu0 0
    %8297 = vmatpush2.bf16.msra.mxu0 0
    %8298 = vmatprep.subr.bf16.mxu0 0
    %8299 = vmatpush2.bf16.msra.mxu0 0
    %8300 = vmatprep.subr.bf16.mxu0 0
    %8301 = vmatpush2.bf16.msra.mxu0 0
    %8302 = vmatprep.mubr.bf16.mxu0 0
    %8303 = vmatmul.mubr.bf16.gmra.mxu0 %v8266
    %v8304 = vpop.f32.mrf.mxu0
    %v8305 = vadd.f32 0.0, %v8304
    %v8306 = vpop.f32.mrf.mxu0
    %v8307 = vpop.f32.mrf.mxu0
    %v8308 = vpop.f32.mrf.mxu0
    %8309 = vdwg.mxu0
    %v8311 = vsel %vm785, %v8038, 0
    %v8313 = vsel %vm789, %v7476, 0
    %8315 = vmatprep.subr.bf16.mxu0 0
    %8316 = vmatpush1.bf16.msra.mxu0 0
    %8317 = vmatprep.subr.bf16.mxu0 0
    %8318 = vmatpush1.bf16.msra.mxu0 0
    %8319 = vmatprep.subr.bf16.mxu0 0
    %8320 = vmatpush1.bf16.msra.mxu0 0
    %8321 = vmatprep.subr.bf16.mxu0 0
    %8322 = vmatpush1.bf16.msra.mxu0 0
    %8323 = vmatprep.subr.bf16.mxu0 0
    %8324 = vmatpush1.bf16.msra.mxu0 0
    %8325 = vmatprep.subr.bf16.mxu0 0
    %8326 = vmatpush1.bf16.msra.mxu0 0
    %8327 = vmatprep.subr.bf16.mxu0 0
    %8328 = vmatpush1.bf16.msra.mxu0 0
    %8329 = vmatprep.subr.bf16.mxu0 0
    %8330 = vmatpush1.bf16.msra.mxu0 %v8313
    %8331 = vmatprep.subr.bf16.mxu0 0
    %8332 = vmatpush2.bf16.msra.mxu0 0
    %8333 = vmatprep.subr.bf16.mxu0 0
    %8334 = vmatpush2.bf16.msra.mxu0 0
    %8335 = vmatprep.subr.bf16.mxu0 0
    %8336 = vmatpush2.bf16.msra.mxu0 0
    %8337 = vmatprep.subr.bf16.mxu0 0
    %8338 = vmatpush2.bf16.msra.mxu0 0
    %8339 = vmatprep.subr.bf16.mxu0 0
    %8340 = vmatpush2.bf16.msra.mxu0 0
    %8341 = vmatprep.subr.bf16.mxu0 0
    %8342 = vmatpush2.bf16.msra.mxu0 0
    %8343 = vmatprep.subr.bf16.mxu0 0
    %8344 = vmatpush2.bf16.msra.mxu0 0
    %8345 = vmatprep.subr.bf16.mxu0 0
    %8346 = vmatpush2.bf16.msra.mxu0 0
    %8347 = vmatprep.mubr.bf16.mxu0 0
    %8348 = vmatmul.mubr.bf16.gmra.mxu0 %v8311
    %v8349 = vpop.f32.mrf.mxu0
    %v8350 = vadd.f32 0.0, %v8349
    %v8351 = vpop.f32.mrf.mxu0
    %v8352 = vpop.f32.mrf.mxu0
    %v8353 = vpop.f32.mrf.mxu0
    %8354 = vdwg.mxu0
    %v8356 = vsel %vm785, %v8039, 0
    %v8358 = vsel %vm789, %v7477, 0
    %8360 = vmatprep.subr.bf16.mxu0 0
    %8361 = vmatpush1.bf16.msra.mxu0 0
    %8362 = vmatprep.subr.bf16.mxu0 0
    %8363 = vmatpush1.bf16.msra.mxu0 0
    %8364 = vmatprep.subr.bf16.mxu0 0
    %8365 = vmatpush1.bf16.msra.mxu0 0
    %8366 = vmatprep.subr.bf16.mxu0 0
    %8367 = vmatpush1.bf16.msra.mxu0 0
    %8368 = vmatprep.subr.bf16.mxu0 0
    %8369 = vmatpush1.bf16.msra.mxu0 0
    %8370 = vmatprep.subr.bf16.mxu0 0
    %8371 = vmatpush1.bf16.msra.mxu0 0
    %8372 = vmatprep.subr.bf16.mxu0 0
    %8373 = vmatpush1.bf16.msra.mxu0 0
    %8374 = vmatprep.subr.bf16.mxu0 0
    %8375 = vmatpush1.bf16.msra.mxu0 %v8358
    %8376 = vmatprep.subr.bf16.mxu0 0
    %8377 = vmatpush2.bf16.msra.mxu0 0
    %8378 = vmatprep.subr.bf16.mxu0 0
    %8379 = vmatpush2.bf16.msra.mxu0 0
    %8380 = vmatprep.subr.bf16.mxu0 0
    %8381 = vmatpush2.bf16.msra.mxu0 0
    %8382 = vmatprep.subr.bf16.mxu0 0
    %8383 = vmatpush2.bf16.msra.mxu0 0
    %8384 = vmatprep.subr.bf16.mxu0 0
    %8385 = vmatpush2.bf16.msra.mxu0 0
    %8386 = vmatprep.subr.bf16.mxu0 0
    %8387 = vmatpush2.bf16.msra.mxu0 0
    %8388 = vmatprep.subr.bf16.mxu0 0
    %8389 = vmatpush2.bf16.msra.mxu0 0
    %8390 = vmatprep.subr.bf16.mxu0 0
    %8391 = vmatpush2.bf16.msra.mxu0 0
    %8392 = vmatprep.mubr.bf16.mxu0 0
    %8393 = vmatmul.mubr.bf16.gmra.mxu0 %v8356
    %v8394 = vpop.f32.mrf.mxu0
    %v8395 = vadd.f32 0.0, %v8394
    %v8396 = vpop.f32.mrf.mxu0
    %v8397 = vpop.f32.mrf.mxu0
    %v8398 = vpop.f32.mrf.mxu0
    %8399 = vdwg.mxu0
    %v8400 = vadd.f32 %v8024, 0.0
    %v8401 = vadd.f32 %v8025, 0.0
    %v8402 = vadd.f32 %v8026, 0.0
    %v8403 = vadd.f32 %v8027, 0.0
    %v8404 = vadd.f32 %v8028, 0.0
    %v8405 = vadd.f32 %v8029, 0.0
    %v8406 = vadd.f32 %v8030, 0.0
    %v8407 = vadd.f32 %v8031, 0.0
    %v8408 = vadd.f32 %v8080, 0.0
    %v8409 = vadd.f32 %v8125, 0.0
    %v8410 = vadd.f32 %v8170, 0.0
    %v8411 = vadd.f32 %v8215, 0.0
    %v8412 = vadd.f32 %v8260, 0.0
    %v8413 = vadd.f32 %v8305, 0.0
    %v8414 = vadd.f32 %v8350, 0.0
    %v8415 = vadd.f32 %v8395, 0.0
    %v8424 = vrot.slane %v8409, 7
    %v8425 = vsel %vm1172, %v8424, %v8408
    %v8426 = vrot.slane %v8410, 6
    %v8427 = vsel %vm1175, %v8426, %v8425
    %v8428 = vrot.slane %v8411, 5
    %v8429 = vsel %vm1178, %v8428, %v8427
    %v8430 = vrot.slane %v8412, 4
    %v8431 = vsel %vm1181, %v8430, %v8429
    %v8432 = vrot.slane %v8413, 3
    %v8433 = vsel %vm1184, %v8432, %v8431
    %v8434 = vrot.slane %v8414, 2
    %v8435 = vsel %vm1187, %v8434, %v8433
    %v8436 = vrot.slane %v8415, 1
    %v8437 = vsel %vm1190, %v8436, %v8435
    %8439 = vrot.lane.b32.xlu0 %v7162, 64
    %v8440 = vpop.permute.xlu0 %8439
    %v8442 = vsel %vm319, %v8437, %v8440
    %v8443 = vpack.c.bf16 %v8442, %v8442
    %v8444 = vld [vmem:[#allocation7] sm:$0xf]
    %v8445 = vld [vmem:[#allocation7 + $0x4] sm:$0xf]
    %v8446 = vld [vmem:[#allocation7 + $0x8] sm:$0xf]
    %v8447 = vld [vmem:[#allocation7 + $0xc] sm:$0xf]
    %v8448 = vld [vmem:[#allocation7 + $0x10] sm:$0xf]
    %v8449 = vld [vmem:[#allocation7 + $0x14] sm:$0xf]
    %v8450 = vld [vmem:[#allocation8] sm:$0xf]
    %v8451 = vld [vmem:[#allocation8 + $0x4] sm:$0xf]
    %v8452 = vld [vmem:[#allocation8 + $0x8] sm:$0xf]
    %v8453 = vld [vmem:[#allocation8 + $0xc] sm:$0xf]
    %v8454 = vld [vmem:[#allocation8 + $0x10] sm:$0xf]
    %v8455 = vld [vmem:[#allocation8 + $0x14] sm:$0xf]
    %v8456 = vld [vmem:[#allocation8 + $0x18] sm:$0xf]
    %v8457 = vld [vmem:[#allocation8 + $0x1c] sm:$0xf]
    %v8466 = vunpack.c.l.b16 %v8450
    %v8467 = vunpack.c.l.b16 %v8451
    %v8468 = vunpack.c.l.b16 %v8452
    %v8469 = vunpack.c.l.b16 %v8453
    %v8470 = vunpack.c.l.b16 %v8454
    %v8471 = vunpack.c.l.b16 %v8455
    %v8472 = vunpack.c.l.b16 %v8456
    %v8473 = vunpack.c.l.b16 %v8457
    %v8474 = vpack.c.b16 %v8467, %v8466
    %v8475 = vpack.c.b16 %v8469, %v8468
    %v8476 = vpack.c.b16 %v8471, %v8470
    %v8477 = vpack.c.b16 %v8473, %v8472
    %v8483 = vsel %vm1236, %v8443, 0
    %8485 = vmatprep.subr.bf16.mxu0 0
    %8486 = vmatpush1.bf16.msra.mxu0 0
    %8487 = vmatprep.subr.bf16.mxu0 0
    %8488 = vmatpush1.bf16.msra.mxu0 0
    %8489 = vmatprep.subr.bf16.mxu0 0
    %8490 = vmatpush1.bf16.msra.mxu0 0
    %8491 = vmatprep.subr.bf16.mxu0 0
    %8492 = vmatpush1.bf16.msra.mxu0 0
    %8493 = vmatprep.subr.bf16.mxu0 0
    %8494 = vmatpush1.bf16.msra.mxu0 %v8477
    %8495 = vmatprep.subr.bf16.mxu0 0
    %8496 = vmatpush1.bf16.msra.mxu0 %v8476
    %8497 = vmatprep.subr.bf16.mxu0 0
    %8498 = vmatpush1.bf16.msra.mxu0 %v8475
    %8499 = vmatprep.subr.bf16.mxu0 0
    %8500 = vmatpush1.bf16.msra.mxu0 %v8474
    %8501 = vmatprep.subr.bf16.mxu0 0
    %8502 = vmatpush2.bf16.msra.mxu0 0
    %8503 = vmatprep.subr.bf16.mxu0 0
    %8504 = vmatpush2.bf16.msra.mxu0 0
    %8505 = vmatprep.subr.bf16.mxu0 0
    %8506 = vmatpush2.bf16.msra.mxu0 0
    %8507 = vmatprep.subr.bf16.mxu0 0
    %8508 = vmatpush2.bf16.msra.mxu0 0
    %8509 = vmatprep.subr.bf16.mxu0 0
    %8510 = vmatpush2.bf16.msra.mxu0 0
    %8511 = vmatprep.subr.bf16.mxu0 0
    %8512 = vmatpush2.bf16.msra.mxu0 0
    %8513 = vmatprep.subr.bf16.mxu0 0
    %8514 = vmatpush2.bf16.msra.mxu0 0
    %8515 = vmatprep.subr.bf16.mxu0 0
    %8516 = vmatpush2.bf16.msra.mxu0 0
    %8517 = vmatprep.mubr.bf16.mxu0 0
    %8518 = vmatmul.mubr.bf16.gmra.mxu0 %v8483
    %v8519 = vpop.f32.mrf.mxu0
    %v8520 = vadd.f32 0.0, %v8519
    %v8521 = vpop.f32.mrf.mxu0
    %v8522 = vpop.f32.mrf.mxu0
    %v8523 = vpop.f32.mrf.mxu0
    %8524 = vdwg.mxu0
    %v8531 = vunpack.c.l.b16 %v8444
    %v8532 = vunpack.c.l.b16 %v8445
    %v8533 = vunpack.c.l.b16 %v8446
    %v8534 = vunpack.c.l.b16 %v8447
    %v8535 = vunpack.c.l.b16 %v8448
    %v8536 = vunpack.c.l.b16 %v8449
    %v8537 = vpack.c.b16 %v8532, %v8531
    %v8538 = vpack.c.b16 %v8534, %v8533
    %v8539 = vpack.c.b16 %v8536, %v8535
    %v8544 = vsel %vm1298, %v7469, 0
    %8546 = vmatprep.subr.bf16.mxu0 0
    %8547 = vmatpush1.bf16.msra.mxu0 0
    %8548 = vmatprep.subr.bf16.mxu0 0
    %8549 = vmatpush1.bf16.msra.mxu0 0
    %8550 = vmatprep.subr.bf16.mxu0 0
    %8551 = vmatpush1.bf16.msra.mxu0 0
    %8552 = vmatprep.subr.bf16.mxu0 0
    %8553 = vmatpush1.bf16.msra.mxu0 0
    %8554 = vmatprep.subr.bf16.mxu0 0
    %8555 = vmatpush1.bf16.msra.mxu0 0
    %8556 = vmatprep.subr.bf16.mxu0 0
    %8557 = vmatpush1.bf16.msra.mxu0 %v8539
    %8558 = vmatprep.subr.bf16.mxu0 0
    %8559 = vmatpush1.bf16.msra.mxu0 %v8538
    %8560 = vmatprep.subr.bf16.mxu0 0
    %8561 = vmatpush1.bf16.msra.mxu0 %v8537
    %8562 = vmatprep.subr.bf16.mxu0 0
    %8563 = vmatpush2.bf16.msra.mxu0 0
    %8564 = vmatprep.subr.bf16.mxu0 0
    %8565 = vmatpush2.bf16.msra.mxu0 0
    %8566 = vmatprep.subr.bf16.mxu0 0
    %8567 = vmatpush2.bf16.msra.mxu0 0
    %8568 = vmatprep.subr.bf16.mxu0 0
    %8569 = vmatpush2.bf16.msra.mxu0 0
    %8570 = vmatprep.subr.bf16.mxu0 0
    %8571 = vmatpush2.bf16.msra.mxu0 0
    %8572 = vmatprep.subr.bf16.mxu0 0
    %8573 = vmatpush2.bf16.msra.mxu0 0
    %8574 = vmatprep.subr.bf16.mxu0 0
    %8575 = vmatpush2.bf16.msra.mxu0 0
    %8576 = vmatprep.subr.bf16.mxu0 0
    %8577 = vmatpush2.bf16.msra.mxu0 0
    %8578 = vmatprep.mubr.bf16.mxu0 0
    %8579 = vmatmul.mubr.bf16.gmra.mxu0 %v8544
    %v8580 = vpop.f32.mrf.mxu0
    %v8581 = vadd.f32 %v8520, %v8580
    %v8582 = vpop.f32.mrf.mxu0
    %v8583 = vpop.f32.mrf.mxu0
    %v8584 = vpop.f32.mrf.mxu0
    %8585 = vdwg.mxu0
    %v8586 = vadd.f32 %v8581, %v181
    %v8587 = vxor.u32 %v8586, 2147483648
    %v8588 = vmul.f32 %v8587, 1.442695
    %v8589 = vpow.pop %v8588
    %v8590 = vadd.f32 %v8589, 1.0
    %v8591 = vrcp.pop %v8590
    %v8592 = vmul.f32 1.0, %v8591
    %v8593 = vtanh.pop %v8586
    %v8594 = vmul.f32 %v8592, %v7156
    %8596 = vrot.lane.b32.xlu0 %v8593, 64
    %v8597 = vpop.permute.xlu0 %8596
    %v8599 = vmul.f32 %v8592, %v8597
    %8601 = vrot.lane.b32.xlu0 %v8599, 32
    %v8602 = vpop.permute.xlu0 %8601
    %v8604 = vadd.f32 %v8594, %v8602
    %v8605 = vtanh.pop %v8604
    %8607 = vrot.lane.b32.xlu0 %v8605, 64
    %v8608 = vpop.permute.xlu0 %8607
    %v8610 = vmul.f32 %v8592, %v8608
    %8612 = vrot.lane.b32.xlu0 %v8610, 32
    %v8613 = vpop.permute.xlu0 %8612
    %8615 = vrot.lane.b32.xlu0 %v7270, 64
    %v8616 = vpop.permute.xlu0 %8615
    %v8618 = vsel %vm319, %v8613, %v8616
    %v8619 = vpack.c.bf16 %v8618, %v8618
    %v8620 = vld [vmem:[#allocation11] sm:$0xf]
    %v8621 = vld [vmem:[#allocation11 + $0x4] sm:$0xf]
    %v8622 = vld [vmem:[#allocation11 + $0x8] sm:$0xf]
    %v8623 = vld [vmem:[#allocation11 + $0xc] sm:$0xf]
    %v8624 = vld [vmem:[#allocation11 + $0x10] sm:$0xf]
    %v8625 = vld [vmem:[#allocation11 + $0x14] sm:$0xf]
    %v8626 = vld [vmem:[#allocation11 + $0x18] sm:$0xf]
    %v8627 = vld [vmem:[#allocation11 + $0x1c] sm:$0xf]
    %v8636 = vunpack.c.l.b16 %v8620
    %v8637 = vunpack.c.l.b16 %v8621
    %v8638 = vunpack.c.l.b16 %v8622
    %v8639 = vunpack.c.l.b16 %v8623
    %v8640 = vunpack.c.l.b16 %v8624
    %v8641 = vunpack.c.l.b16 %v8625
    %v8642 = vunpack.c.l.b16 %v8626
    %v8643 = vunpack.c.l.b16 %v8627
    %v8644 = vpack.c.b16 %v8637, %v8636
    %v8645 = vpack.c.b16 %v8639, %v8638
    %v8646 = vpack.c.b16 %v8641, %v8640
    %v8647 = vpack.c.b16 %v8643, %v8642
    %v8653 = vsel %vm1236, %v8619, 0
    %8655 = vmatprep.subr.bf16.mxu0 0
    %8656 = vmatpush1.bf16.msra.mxu0 0
    %8657 = vmatprep.subr.bf16.mxu0 0
    %8658 = vmatpush1.bf16.msra.mxu0 0
    %8659 = vmatprep.subr.bf16.mxu0 0
    %8660 = vmatpush1.bf16.msra.mxu0 0
    %8661 = vmatprep.subr.bf16.mxu0 0
    %8662 = vmatpush1.bf16.msra.mxu0 0
    %8663 = vmatprep.subr.bf16.mxu0 0
    %8664 = vmatpush1.bf16.msra.mxu0 %v8647
    %8665 = vmatprep.subr.bf16.mxu0 0
    %8666 = vmatpush1.bf16.msra.mxu0 %v8646
    %8667 = vmatprep.subr.bf16.mxu0 0
    %8668 = vmatpush1.bf16.msra.mxu0 %v8645
    %8669 = vmatprep.subr.bf16.mxu0 0
    %8670 = vmatpush1.bf16.msra.mxu0 %v8644
    %8671 = vmatprep.subr.bf16.mxu0 0
    %8672 = vmatpush2.bf16.msra.mxu0 0
    %8673 = vmatprep.subr.bf16.mxu0 0
    %8674 = vmatpush2.bf16.msra.mxu0 0
    %8675 = vmatprep.subr.bf16.mxu0 0
    %8676 = vmatpush2.bf16.msra.mxu0 0
    %8677 = vmatprep.subr.bf16.mxu0 0
    %8678 = vmatpush2.bf16.msra.mxu0 0
    %8679 = vmatprep.subr.bf16.mxu0 0
    %8680 = vmatpush2.bf16.msra.mxu0 0
    %8681 = vmatprep.subr.bf16.mxu0 0
    %8682 = vmatpush2.bf16.msra.mxu0 0
    %8683 = vmatprep.subr.bf16.mxu0 0
    %8684 = vmatpush2.bf16.msra.mxu0 0
    %8685 = vmatprep.subr.bf16.mxu0 0
    %8686 = vmatpush2.bf16.msra.mxu0 0
    %8687 = vmatprep.mubr.bf16.mxu0 0
    %8688 = vmatmul.mubr.bf16.gmra.mxu0 %v8653
    %v8689 = vpop.f32.mrf.mxu0
    %v8690 = vadd.f32 %v188, %v8689
    %v8691 = vpop.f32.mrf.mxu0
    %v8692 = vpop.f32.mrf.mxu0
    %v8693 = vpop.f32.mrf.mxu0
    %8694 = vdwg.mxu0
    %v8695 = vxor.u32 %v8690, 2147483648
    %v8696 = vmul.f32 %v8695, 1.442695
    %v8697 = vpow.pop %v8696
    %v8698 = vadd.f32 %v8697, 1.0
    %v8699 = vrcp.pop %v8698
    %v8700 = vmul.f32 1.0, %v8699
    %v8701 = vtanh.pop %v8690
    %v8702 = vmul.f32 %v8700, %v7264
    %8704 = vrot.lane.b32.xlu0 %v8701, 64
    %v8705 = vpop.permute.xlu0 %8704
    %v8707 = vmul.f32 %v8700, %v8705
    %8709 = vrot.lane.b32.xlu0 %v8707, 32
    %v8710 = vpop.permute.xlu0 %8709
    %v8712 = vadd.f32 %v8702, %v8710
    %v8713 = vtanh.pop %v8712
    %8715 = vrot.lane.b32.xlu0 %v8713, 64
    %v8716 = vpop.permute.xlu0 %8715
    %v8718 = vmul.f32 %v8700, %v8716
    %8720 = vrot.lane.b32.xlu0 %v8718, 32
    %v8721 = vpop.permute.xlu0 %8720
    %8723 = vrot.lane.b32.xlu0 %v8437, 32
    %v8724 = vpop.permute.xlu0 %8723
    %v8726 = vsel %vm319, %v8721, %v8724
    %v8727 = vpack.c.bf16 %v8726, %v8726
    %v8728 = vld [vmem:[#allocation14] sm:$0xf]
    %v8729 = vld [vmem:[#allocation14 + $0x4] sm:$0xf]
    %v8730 = vld [vmem:[#allocation14 + $0x8] sm:$0xf]
    %v8731 = vld [vmem:[#allocation14 + $0xc] sm:$0xf]
    %v8732 = vld [vmem:[#allocation14 + $0x10] sm:$0xf]
    %v8733 = vld [vmem:[#allocation14 + $0x14] sm:$0xf]
    %v8734 = vld [vmem:[#allocation14 + $0x18] sm:$0xf]
    %v8735 = vld [vmem:[#allocation14 + $0x1c] sm:$0xf]
    %v8744 = vunpack.c.l.b16 %v8728
    %v8745 = vunpack.c.l.b16 %v8729
    %v8746 = vunpack.c.l.b16 %v8730
    %v8747 = vunpack.c.l.b16 %v8731
    %v8748 = vunpack.c.l.b16 %v8732
    %v8749 = vunpack.c.l.b16 %v8733
    %v8750 = vunpack.c.l.b16 %v8734
    %v8751 = vunpack.c.l.b16 %v8735
    %v8752 = vpack.c.b16 %v8745, %v8744
    %v8753 = vpack.c.b16 %v8747, %v8746
    %v8754 = vpack.c.b16 %v8749, %v8748
    %v8755 = vpack.c.b16 %v8751, %v8750
    %v8761 = vsel %vm1236, %v8727, 0
    %8763 = vmatprep.subr.bf16.mxu0 0
    %8764 = vmatpush1.bf16.msra.mxu0 0
    %8765 = vmatprep.subr.bf16.mxu0 0
    %8766 = vmatpush1.bf16.msra.mxu0 0
    %8767 = vmatprep.subr.bf16.mxu0 0
    %8768 = vmatpush1.bf16.msra.mxu0 0
    %8769 = vmatprep.subr.bf16.mxu0 0
    %8770 = vmatpush1.bf16.msra.mxu0 0
    %8771 = vmatprep.subr.bf16.mxu0 0
    %8772 = vmatpush1.bf16.msra.mxu0 %v8755
    %8773 = vmatprep.subr.bf16.mxu0 0
    %8774 = vmatpush1.bf16.msra.mxu0 %v8754
    %8775 = vmatprep.subr.bf16.mxu0 0
    %8776 = vmatpush1.bf16.msra.mxu0 %v8753
    %8777 = vmatprep.subr.bf16.mxu0 0
    %8778 = vmatpush1.bf16.msra.mxu0 %v8752
    %8779 = vmatprep.subr.bf16.mxu0 0
    %8780 = vmatpush2.bf16.msra.mxu0 0
    %8781 = vmatprep.subr.bf16.mxu0 0
    %8782 = vmatpush2.bf16.msra.mxu0 0
    %8783 = vmatprep.subr.bf16.mxu0 0
    %8784 = vmatpush2.bf16.msra.mxu0 0
    %8785 = vmatprep.subr.bf16.mxu0 0
    %8786 = vmatpush2.bf16.msra.mxu0 0
    %8787 = vmatprep.subr.bf16.mxu0 0
    %8788 = vmatpush2.bf16.msra.mxu0 0
    %8789 = vmatprep.subr.bf16.mxu0 0
    %8790 = vmatpush2.bf16.msra.mxu0 0
    %8791 = vmatprep.subr.bf16.mxu0 0
    %8792 = vmatpush2.bf16.msra.mxu0 0
    %8793 = vmatprep.subr.bf16.mxu0 0
    %8794 = vmatpush2.bf16.msra.mxu0 0
    %8795 = vmatprep.mubr.bf16.mxu0 0
    %8796 = vmatmul.mubr.bf16.gmra.mxu0 %v8761
    %v8797 = vpop.f32.mrf.mxu0
    %v8798 = vadd.f32 0.0, %v8797
    %v8799 = vpop.f32.mrf.mxu0
    %v8800 = vpop.f32.mrf.mxu0
    %v8801 = vpop.f32.mrf.mxu0
    %8802 = vdwg.mxu0
    %v8803 = vadd.f32 %v8798, %v195
    %vm8804 = vcmp.gt.f32.partialorder %v8803, 0.0
    %v8805 = vmul.f32 %v8803, 0.2
    %v8806 = vsel %vm8804, %v8803, %v8805
    %v8807 = vpack.c.bf16 %v8806, %v8806
    %v8808 = vld [vmem:[%s9] sm:$0xf]
    %v8809 = vld [vmem:[%s9 + $0x4] sm:$0xf]
    %v8810 = vld [vmem:[%s9 + $0x8] sm:$0xf]
    %v8811 = vld [vmem:[%s9 + $0xc] sm:$0xf]
    %v8816 = vunpack.c.l.b16 %v8808
    %v8817 = vunpack.c.l.b16 %v8809
    %v8818 = vunpack.c.l.b16 %v8810
    %v8819 = vunpack.c.l.b16 %v8811
    %v8820 = vpack.c.b16 %v8817, %v8816
    %v8821 = vpack.c.b16 %v8819, %v8818
    %v8825 = vsel %vm319, %v8807, 0
    %8827 = vmatprep.subr.bf16.mxu0 0
    %8828 = vmatpush1.bf16.msra.mxu0 0
    %8829 = vmatprep.subr.bf16.mxu0 0
    %8830 = vmatpush1.bf16.msra.mxu0 0
    %8831 = vmatprep.subr.bf16.mxu0 0
    %8832 = vmatpush1.bf16.msra.mxu0 0
    %8833 = vmatprep.subr.bf16.mxu0 0
    %8834 = vmatpush1.bf16.msra.mxu0 0
    %8835 = vmatprep.subr.bf16.mxu0 0
    %8836 = vmatpush1.bf16.msra.mxu0 0
    %8837 = vmatprep.subr.bf16.mxu0 0
    %8838 = vmatpush1.bf16.msra.mxu0 0
    %8839 = vmatprep.subr.bf16.mxu0 0
    %8840 = vmatpush1.bf16.msra.mxu0 %v8821
    %8841 = vmatprep.subr.bf16.mxu0 0
    %8842 = vmatpush1.bf16.msra.mxu0 %v8820
    %8843 = vmatprep.subr.bf16.mxu0 0
    %8844 = vmatpush2.bf16.msra.mxu0 0
    %8845 = vmatprep.subr.bf16.mxu0 0
    %8846 = vmatpush2.bf16.msra.mxu0 0
    %8847 = vmatprep.subr.bf16.mxu0 0
    %8848 = vmatpush2.bf16.msra.mxu0 0
    %8849 = vmatprep.subr.bf16.mxu0 0
    %8850 = vmatpush2.bf16.msra.mxu0 0
    %8851 = vmatprep.subr.bf16.mxu0 0
    %8852 = vmatpush2.bf16.msra.mxu0 0
    %8853 = vmatprep.subr.bf16.mxu0 0
    %8854 = vmatpush2.bf16.msra.mxu0 0
    %8855 = vmatprep.subr.bf16.mxu0 0
    %8856 = vmatpush2.bf16.msra.mxu0 0
    %8857 = vmatprep.subr.bf16.mxu0 0
    %8858 = vmatpush2.bf16.msra.mxu0 0
    %8859 = vmatprep.mubr.bf16.mxu0 0
    %8860 = vmatmul.mubr.bf16.gmra.mxu0 %v8825
    %v8861 = vpop.f32.mrf.mxu0
    %v8862 = vadd.f32 %v202, %v8861
    %v8863 = vpop.f32.mrf.mxu0
    %v8864 = vpop.f32.mrf.mxu0
    %v8865 = vpop.f32.mrf.mxu0
    %8866 = vdwg.mxu0
    %s8867 = scalar_lea.vmem [#allocation17], 40
    %8868 = vst.msk [vmem:[%s8867] sm:$0xff] %vm1298, %v8862
    %v8877 = vrot.slane %v8401, 7
    %v8878 = vsel %vm1172, %v8877, %v8400
    %v8879 = vrot.slane %v8402, 6
    %v8880 = vsel %vm1175, %v8879, %v8878
    %v8881 = vrot.slane %v8403, 5
    %v8882 = vsel %vm1178, %v8881, %v8880
    %v8883 = vrot.slane %v8404, 4
    %v8884 = vsel %vm1181, %v8883, %v8882
    %v8885 = vrot.slane %v8405, 3
    %v8886 = vsel %vm1184, %v8885, %v8884
    %v8887 = vrot.slane %v8406, 2
    %v8888 = vsel %vm1187, %v8887, %v8886
    %v8889 = vrot.slane %v8407, 1
    %v8890 = vsel %vm1190, %v8889, %v8888
    %s8892 = scalar_lea.vmem [#allocation18], 40
    %8893 = vst.msk [vmem:[%s8892] sm:$0xff] %vm785, %v8890
    // Predicated region
    $region102: #{tpu_custom_call.1} parent=1 // pred_check
      _
    $region103: #{tpu_custom_call.1} parent=1 // pred_check_branch
      %8895 = sbr.rel (0) target = $region105
    $region104: #{tpu_custom_call.1} parent=1 // pred_region
      %s8897 = ssub.s32 768, 768
      %8898 = vsyncadd [#allocation4], %s8897
      %s8899 = sshll.u32 [#allocation17], 4
      %s8900 = int_to_ptr.vmem [resolvable:$true] %s8899
      %8905 = dma.vmem_to_hbm [thread:$0]  %s8900, 768, %s16, [#allocation4], 128, 128, 8
    $region105: #{tpu_custom_call.1} parent=1 // pred_fallthru
      _
    // Predicated region
    $region106: #{tpu_custom_call.1} parent=1 // pred_check
      _
    $region107: #{tpu_custom_call.1} parent=1 // pred_check_branch
      %8907 = sbr.rel (0) target = $region109
    $region108: #{tpu_custom_call.1} parent=1 // pred_region
      %s8909 = ssub.s32 768, 768
      %8910 = vsyncadd [#allocation19], %s8909
      %s8911 = sshll.u32 [#allocation18], 4
      %s8912 = int_to_ptr.vmem [resolvable:$true] %s8911
      %8917 = dma.vmem_to_hbm [thread:$0]  %s8912, 768, %s17, [#allocation19], 128, 128, 8
    $region109: #{tpu_custom_call.1} parent=1 // pred_fallthru
      _
    // Predicated region
    $region110: #{tpu_custom_call.1} parent=1 // pred_check
      _
    $region111: #{tpu_custom_call.1} parent=1 // pred_check_branch
      %8919 = sbr.rel (0) target = $region113
    $region112: #{tpu_custom_call.1} parent=1 // pred_region
      %8920 = dma.done [#allocation4], 768
    $region113: #{tpu_custom_call.1} parent=1 // pred_fallthru
      _
    // Predicated region
    $region114: #{tpu_custom_call.1} parent=1 // pred_check
      _
    $region115: #{tpu_custom_call.1} parent=1 // pred_check_branch
      %8922 = sbr.rel (0) target = $region117
    $region116: #{tpu_custom_call.1} parent=1 // pred_region
      %8923 = dma.done [#allocation19], 768
    $region117: #{tpu_custom_call.1} parent=1 // pred_fallthru
      _
    %8924 = vsyncpa [#allocation3], 1
    %8925 = vsyncpa [#allocation6], 1
    %8926 = vsyncpa [#allocation9], 1
    %8927 = vsyncpa [#allocation12], 1
    %8928 = vsyncpa [#allocation15], 1
    %8929 = vsyncpa [#allocation4], 1
    %8930 = vsyncpa [#allocation19], 1

</llo_original>
